<compile_context>
chip_gen: v7x
topology: tpu7x:2x2x1
jax: 0.10.0
libtpu: 0.0.40
codegen_flags: <defaults>
</compile_context>

<pallas_src>
import jax
import jax.numpy as jnp
from jax import lax
from jax.experimental import pallas as pl
from jax.experimental.pallas import tpu as pltpu


MATMUL_DTYPE = jnp.bfloat16   # MXU operand dtype; accumulation/gating stay f32.
LANE = 128                    # lane width of the inter-layer h buffer (>= non-last hidden dims)


def _make_fused_kernel(seq_len, batch_pad, hidden_dims):
    """Kernel fusing all layers and all time steps.

    Ref order: x,
               (wx_0, wh_0, b_0), ..., (wx_{L-1}, wh_{L-1}, b_{L-1}),
               h_seq_out, c_last_out,
               [wx_vmem_l, wh_vmem_l for l in 1..L-1],
               [xz_scratch_l for l in 0..L-1],
               hseq_scratch, dma_sem.
    """
    n_layers = len(hidden_dims)

    def kernel(*refs):
        pos = 0
        x_ref = refs[pos]; pos += 1
        wrefs = []
        for _ in range(n_layers):
            wrefs.append(refs[pos:pos + 3]); pos += 3
        h_seq_ref = refs[pos]; pos += 1
        c_last_ref = refs[pos]; pos += 1
        wvmem = [None]
        for _ in range(1, n_layers):
            wvmem.append(refs[pos:pos + 2]); pos += 2
        xz_refs = list(refs[pos:pos + n_layers]); pos += n_layers
        hseq_ref = refs[pos]; pos += 1
        dma_sem = refs[pos]; pos += 1

        def weight_copy(layer, j):
            return pltpu.make_async_copy(wrefs[layer][j], wvmem[layer][j],
                                         dma_sem.at[2 * (layer - 1) + j])

        # Kick off layer>=1 weight DMAs now; they overlap layer-0 compute
        # (grid=(1,) would otherwise serialize all weight DMA in the prologue).
        for layer in range(1, n_layers):
            weight_copy(layer, 0).start()
            weight_copy(layer, 1).start()

        for layer in range(n_layers):
            hdim = hidden_dims[layer]
            is_last = layer == n_layers - 1
            mm_dtype = wrefs[layer][0].dtype          # bf16 (MXU-native)
            bias = wrefs[layer][2][...]               # (1, 4H) f32, i|f|o cols pre-scaled 0.5

            if layer == 0:
                xin = x_ref[...]                      # (S*Bp, Din) f32
                wx = wrefs[0][0][...]                 # (Din, 4H) bf16
                wh_ref = wrefs[0][1]
            else:
                weight_copy(layer, 0).wait()
                weight_copy(layer, 1).wait()
                xin = hseq_ref[...]                   # (S*Bp, LANE) f32 (zero-padded lanes)
                wx = wvmem[layer][0][...]             # (LANE, 4H) bf16 (zero-padded rows)
                wh_ref = wvmem[layer][1]

            # Hoisted input projection + bias: one big lane-dense matmul per layer.
            xz_ref = xz_refs[layer]
            xz_ref[...] = (jnp.dot(xin.astype(mm_dtype), wx,
                                   preferred_element_type=jnp.float32) + bias)

            def step(t, carry):
                h, c = carry
                row = pl.multiple_of(t * batch_pad, batch_pad)
                # Only the recurrent matmul remains on the serial per-step path.
                z = xz_ref[pl.ds(row, batch_pad), :] + jnp.dot(
                    h.astype(mm_dtype), wh_ref[...],
                    preferred_element_type=jnp.float32)           # (Bp, 4H) f32
                tz = jnp.tanh(z)          # ONE EUP slab over all 4 gates
                i_g = 0.5 * tz[:, :hdim] + 0.5                    # sigmoid via tanh trick
                f_g = 0.5 * tz[:, hdim:2 * hdim] + 0.5
                o_g = 0.5 * tz[:, 2 * hdim:3 * hdim] + 0.5
                g_g = tz[:, 3 * hdim:]
                c_n = f_g * c + i_g * g_g
                h_n = o_g * jnp.tanh(c_n)
                if is_last:
                    h_seq_ref[pl.ds(row, batch_pad), :] = h_n     # (8,128) full-tile store
                else:
                    # zero-pad to 128 lanes so stores stay full-tile and the next
                    # layer's (zero-row-padded) Wx multiplies through cleanly.
                    hseq_ref[pl.ds(row, batch_pad), :] = jnp.concatenate(
                        [h_n, jnp.zeros((batch_pad, LANE - hdim), jnp.float32)],
                        axis=-1)
                return h_n, c_n

            init = (jnp.zeros((batch_pad, hdim), jnp.float32),    # init_hidden(): zeros
                    jnp.zeros((batch_pad, hdim), jnp.float32))
            _, c_fin = lax.fori_loop(0, seq_len, step, init, unroll=True)
            if is_last:
                c_last_ref[...] = c_fin

    return kernel


def convlstm_forward(x_bsf, params):
    """x_bsf: (B, S, input_dim), batch_first=True.

    Returns the PyTorch structure (return_all_layers=False):
      ([last_layer_output (B, S, H_last)], [[h (B, H_last, 1), c (B, H_last, 1)]])
    """
    B, S, Din = x_bsf.shape
    n_layers = len(params)
    assert n_layers >= 2
    hidden_dims = [int(b.shape[-1]) // 4 for (_, _, b) in params]
    assert all(h <= LANE for h in hidden_dims[:-1])
    H_last = hidden_dims[-1]
    Bp = max(8, -(-B // 8) * 8)               # pad batch to a full sublane group
    SB = S * Bp

    # time-major, batch padded, flattened to (S*Bp, Din): no reshapes inside the kernel.
    x_tm = jnp.transpose(x_bsf, (1, 0, 2))
    x_tm = jnp.pad(x_tm, ((0, 0), (0, Bp - B), (0, 0)))
    x_flat = x_tm.reshape(SB, Din)

    flat_inputs = [x_flat]
    in_specs = [pl.BlockSpec((SB, Din), lambda i: (0, 0))]
    w_scratch = []
    for layer, (wx, wh, b) in enumerate(params):
        H = hidden_dims[layer]
        # Fold sigmoid(x) = 0.5*tanh(0.5*x)+0.5 into the i|f|o columns (exact in bf16).
        scale = jnp.concatenate([jnp.full((3 * H,), 0.5, jnp.float32),
                                 jnp.ones((H,), jnp.float32)])
        wx_s = (wx * scale).astype(MATMUL_DTYPE)
        wh_s = (wh * scale).astype(MATMUL_DTYPE)
        b_s = (b * scale).reshape(1, 4 * H).astype(jnp.float32)
        if layer == 0:
            in_specs += [pl.BlockSpec(wx_s.shape, lambda i: (0, 0)),
                         pl.BlockSpec(wh_s.shape, lambda i: (0, 0)),
                         pl.BlockSpec(b_s.shape, lambda i: (0, 0))]
        else:
            # Layer>=1 big weights stay in HBM (pl.ANY) and are DMA'd manually
            # inside the kernel, overlapped with the previous layer's recurrence.
            wx_s = jnp.pad(wx_s, ((0, LANE - wx_s.shape[0]), (0, 0)))  # zero rows -> 128 K
            in_specs += [pl.BlockSpec(memory_space=pl.ANY),
                         pl.BlockSpec(memory_space=pl.ANY),
                         pl.BlockSpec(b_s.shape, lambda i: (0, 0))]
            w_scratch += [pltpu.VMEM(wx_s.shape, MATMUL_DTYPE),
                          pltpu.VMEM(wh_s.shape, MATMUL_DTYPE)]
        flat_inputs += [wx_s, wh_s, b_s]

    scratch_shapes = (
        w_scratch
        + [pltpu.VMEM((SB, 4 * H), jnp.float32) for H in hidden_dims]  # hoisted x-projections
        + [pltpu.VMEM((SB, LANE), jnp.float32),                        # inter-layer h sequence
           pltpu.SemaphoreType.DMA((2 * (n_layers - 1),))])

    kernel = _make_fused_kernel(S, Bp, hidden_dims)
    h_seq_flat, c_last = pl.pallas_call(
        kernel,
        out_shape=(jax.ShapeDtypeStruct((SB, H_last), jnp.float32),
                   jax.ShapeDtypeStruct((Bp, H_last), jnp.float32)),
        grid=(1,),                            # whole net in one grid step
        in_specs=in_specs,
        out_specs=(pl.BlockSpec((SB, H_last), lambda i: (0, 0)),
                   pl.BlockSpec((Bp, H_last), lambda i: (0, 0))),
        scratch_shapes=scratch_shapes,
        compiler_params=pltpu.CompilerParams(
            dimension_semantics=("arbitrary",)),   # sequential recurrence, 1 TC
    )(*flat_inputs)

    h_seq = h_seq_flat.reshape(S, Bp, H_last)
    layer_output = jnp.transpose(h_seq[:, :B, :], (1, 0, 2))    # (B, S, H_last)
    h_last = h_seq[-1, :B, :][:, :, None]                       # (B, H_last, 1)
    c_last = c_last[:B, :][:, :, None]                          # (B, H_last, 1)
    return [layer_output], [[h_last, c_last]]


def init_params(key, input_dim, hidden_dims, kernel_sizes):
    """PyTorch Conv1d-shaped init (W: (4H, Din+H, K), b: (4H,)) folded to the
    middle-tap matmul layout: Wx (Din, 4H), Wh (H, 4H), b (4H,); gate order i,f,o,g.
    Weights are kept in f32; bf16 casting happens only on matmul operands."""
    params = []
    cur = input_dim
    for H, K in zip(hidden_dims, kernel_sizes):
        key, wkey, bkey = jax.random.split(key, 3)
        fan_in = (cur + H) * K
        bound = 1.0 / float(fan_in) ** 0.5
        w = jax.random.uniform(wkey, (4 * H, cur + H, K), jnp.float32, -bound, bound)
        bias = jax.random.uniform(bkey, (4 * H,), jnp.float32, -bound, bound)

        mid = w[:, :, K // 2]                          # middle tap (4H, cur+H)
        wx = jnp.transpose(mid[:, :cur])               # (cur, 4H) f32
        wh = jnp.transpose(mid[:, cur:])               # (H,   4H) f32
        params.append((wx, wh, bias))
        cur = H
    return params


def convlstm_reference(x_bsf, params, matmul_dtype=MATMUL_DTYPE):
    """Pure-JAX reference with matching numerics (bf16 dot operands, f32 gating)."""
    B, S, _ = x_bsf.shape
    cur = x_bsf
    h = c = None
    for (wx, wh, b) in params:
        H = int(b.shape[-1]) // 4
        wx_c = wx.astype(matmul_dtype)
        wh_c = wh.astype(matmul_dtype)
        h = jnp.zeros((B, H), jnp.float32)
        c = jnp.zeros((B, H), jnp.float32)
        outs = []
        for t in range(S):
            z = (jnp.dot(cur[:, t, :].astype(matmul_dtype), wx_c,
                         preferred_element_type=jnp.float32)
                 + jnp.dot(h.astype(matmul_dtype), wh_c,
                           preferred_element_type=jnp.float32)
                 + b)
            i = jax.nn.sigmoid(z[:, :H])
            f = jax.nn.sigmoid(z[:, H:2 * H])
            o = jax.nn.sigmoid(z[:, 2 * H:3 * H])
            g = jnp.tanh(z[:, 3 * H:])
            c = f * c + i * g
            h = o * jnp.tanh(c)
            outs.append(h)
        cur = jnp.stack(outs, axis=1)
    return cur, h, c


if __name__ == "__main__":
    INPUT_DIM = 220
    HIDDEN = [64, 96, 128]
    KSIZE = [3, 3, 3]
    B, S = 2, 8

    key = jax.random.PRNGKey(0)
    key, pkey, xkey = jax.random.split(key, 3)
    params = init_params(pkey, INPUT_DIM, HIDDEN, KSIZE)
    x = jax.random.normal(xkey, (B, S, INPUT_DIM), dtype=jnp.float32)

    layer_outputs, last_states = jax.jit(convlstm_forward)(x, params)
    jax.block_until_ready((layer_outputs, last_states))

    assert layer_outputs[0].shape == (B, S, HIDDEN[-1])
    assert last_states[0][0].shape == (B, HIDDEN[-1], 1)
    assert last_states[0][1].shape == (B, HIDDEN[-1], 1)

    # Numerical check against a pure-JAX reference using the same math.
    ref_seq, ref_h, ref_c = jax.jit(convlstm_reference)(x, params)
    err = max(
        float(jnp.max(jnp.abs(layer_outputs[0] - ref_seq))),
        float(jnp.max(jnp.abs(last_states[0][0][..., 0] - ref_h))),
        float(jnp.max(jnp.abs(last_states[0][1][..., 0] - ref_c))),
    )
    assert err < 1e-2, f"max abs error vs reference: {err}"

    print("KERNEL_OK")
</pallas_src>

<mosaic_0001>
module attributes {stable_mosaic.version = 11 : i64} {
  func.func @kernel(%arg0: i32, %arg1: memref<64x220xf32, #tpu.memory_space<vmem>>, %arg2: memref<220x256xbf16, #tpu.memory_space<vmem>>, %arg3: memref<64x256xbf16, #tpu.memory_space<vmem>>, %arg4: memref<1x256xf32, #tpu.memory_space<vmem>>, %arg5: memref<128x384xbf16, #tpu.memory_space<any>>, %arg6: memref<96x384xbf16, #tpu.memory_space<any>>, %arg7: memref<1x384xf32, #tpu.memory_space<vmem>>, %arg8: memref<128x512xbf16, #tpu.memory_space<any>>, %arg9: memref<128x512xbf16, #tpu.memory_space<any>>, %arg10: memref<1x512xf32, #tpu.memory_space<vmem>>, %arg11: memref<64x128xf32, #tpu.memory_space<vmem>>, %arg12: memref<8x128xf32, #tpu.memory_space<vmem>>, %arg13: memref<128x384xbf16, #tpu.memory_space<vmem>>, %arg14: memref<96x384xbf16, #tpu.memory_space<vmem>>, %arg15: memref<128x512xbf16, #tpu.memory_space<vmem>>, %arg16: memref<128x512xbf16, #tpu.memory_space<vmem>>, %arg17: memref<64x256xf32, #tpu.memory_space<vmem>>, %arg18: memref<64x384xf32, #tpu.memory_space<vmem>>, %arg19: memref<64x512xf32, #tpu.memory_space<vmem>>, %arg20: memref<64x128xf32, #tpu.memory_space<vmem>>, %arg21: memref<4x!tpu.dma_semaphore, #tpu.memory_space<semaphore_mem>>) attributes {dimension_semantics = [#tpu.dimension_semantics<arbitrary>], iteration_bounds = array<i64: 1>, scalar_prefetch = 0 : i64, scratch_operands = 9 : i64, tpu.core_type = #tpu.core_type<tc>, window_params = [{pipeline_mode = #tpu.pipeline_mode<synchronous>, transform_indices = @transform_0, window_bounds = array<i64: 64, 220>}, {pipeline_mode = #tpu.pipeline_mode<synchronous>, transform_indices = @transform_1, window_bounds = array<i64: 220, 256>}, {pipeline_mode = #tpu.pipeline_mode<synchronous>, transform_indices = @transform_2, window_bounds = array<i64: 64, 256>}, {pipeline_mode = #tpu.pipeline_mode<synchronous>, transform_indices = @transform_3, window_bounds = array<i64: 1, 256>}, {}, {}, {pipeline_mode = #tpu.pipeline_mode<synchronous>, transform_indices = @transform_6, window_bounds = array<i64: 1, 384>}, {}, {}, {pipeline_mode = #tpu.pipeline_mode<synchronous>, transform_indices = @transform_9, window_bounds = array<i64: 1, 512>}, {pipeline_mode = #tpu.pipeline_mode<synchronous>, transform_indices = @transform_10, window_bounds = array<i64: 64, 128>}, {pipeline_mode = #tpu.pipeline_mode<synchronous>, transform_indices = @transform_11, window_bounds = array<i64: 8, 128>}]} {
    %c0_i32 = arith.constant 0 : i32
    %0 = tpu.memref_slice %arg21[%c0_i32] : memref<4x!tpu.dma_semaphore, #tpu.memory_space<semaphore_mem>> -> memref<1x!tpu.dma_semaphore, #tpu.memory_space<semaphore_mem>>
    %1 = tpu.memref_squeeze %0 : memref<1x!tpu.dma_semaphore, #tpu.memory_space<semaphore_mem>> -> memref<!tpu.dma_semaphore, #tpu.memory_space<semaphore_mem>>
    tpu.enqueue_dma source(%arg5 : memref<128x384xbf16, #tpu.memory_space<any>>) target(%arg13 : memref<128x384xbf16, #tpu.memory_space<vmem>>) target_semaphore(%1 : memref<!tpu.dma_semaphore, #tpu.memory_space<semaphore_mem>>)
    %c1_i32 = arith.constant 1 : i32
    %2 = tpu.memref_slice %arg21[%c1_i32] : memref<4x!tpu.dma_semaphore, #tpu.memory_space<semaphore_mem>> -> memref<1x!tpu.dma_semaphore, #tpu.memory_space<semaphore_mem>>
    %3 = tpu.memref_squeeze %2 : memref<1x!tpu.dma_semaphore, #tpu.memory_space<semaphore_mem>> -> memref<!tpu.dma_semaphore, #tpu.memory_space<semaphore_mem>>
    tpu.enqueue_dma source(%arg6 : memref<96x384xbf16, #tpu.memory_space<any>>) target(%arg14 : memref<96x384xbf16, #tpu.memory_space<vmem>>) target_semaphore(%3 : memref<!tpu.dma_semaphore, #tpu.memory_space<semaphore_mem>>)
    %c2_i32 = arith.constant 2 : i32
    %4 = tpu.memref_slice %arg21[%c2_i32] : memref<4x!tpu.dma_semaphore, #tpu.memory_space<semaphore_mem>> -> memref<1x!tpu.dma_semaphore, #tpu.memory_space<semaphore_mem>>
    %5 = tpu.memref_squeeze %4 : memref<1x!tpu.dma_semaphore, #tpu.memory_space<semaphore_mem>> -> memref<!tpu.dma_semaphore, #tpu.memory_space<semaphore_mem>>
    tpu.enqueue_dma source(%arg8 : memref<128x512xbf16, #tpu.memory_space<any>>) target(%arg15 : memref<128x512xbf16, #tpu.memory_space<vmem>>) target_semaphore(%5 : memref<!tpu.dma_semaphore, #tpu.memory_space<semaphore_mem>>)
    %c3_i32 = arith.constant 3 : i32
    %6 = tpu.memref_slice %arg21[%c3_i32] : memref<4x!tpu.dma_semaphore, #tpu.memory_space<semaphore_mem>> -> memref<1x!tpu.dma_semaphore, #tpu.memory_space<semaphore_mem>>
    %7 = tpu.memref_squeeze %6 : memref<1x!tpu.dma_semaphore, #tpu.memory_space<semaphore_mem>> -> memref<!tpu.dma_semaphore, #tpu.memory_space<semaphore_mem>>
    tpu.enqueue_dma source(%arg9 : memref<128x512xbf16, #tpu.memory_space<any>>) target(%arg16 : memref<128x512xbf16, #tpu.memory_space<vmem>>) target_semaphore(%7 : memref<!tpu.dma_semaphore, #tpu.memory_space<semaphore_mem>>)
    %c0 = arith.constant 0 : index
    %c0_0 = arith.constant 0 : index
    %8 = vector.load %arg4[%c0, %c0_0] : memref<1x256xf32, #tpu.memory_space<vmem>>, vector<1x256xf32>
    %c0_1 = arith.constant 0 : index
    %c0_2 = arith.constant 0 : index
    %9 = vector.load %arg1[%c0_1, %c0_2] : memref<64x220xf32, #tpu.memory_space<vmem>>, vector<64x220xf32>
    %c0_3 = arith.constant 0 : index
    %c0_4 = arith.constant 0 : index
    %10 = vector.load %arg2[%c0_3, %c0_4] : memref<220x256xbf16, #tpu.memory_space<vmem>>, vector<220x256xbf16>
    %11 = arith.truncf %9 : vector<64x220xf32> to vector<64x220xbf16>
    %cst = arith.constant dense<0.000000e+00> : vector<64x256xf32>
    %12 = tpu.matmul %11, %10, %cst {dimension_numbers = #tpu.dot_dimension_numbers<[1], [0], [0], [1], [0, 0, 1, 1], [], []>} : vector<64x220xbf16>, vector<220x256xbf16>, vector<64x256xf32> -> vector<64x256xf32>
    %13 = vector.broadcast %8 : vector<1x256xf32> to vector<64x256xf32>
    %14 = arith.addf %12, %13 : vector<64x256xf32>
    %c0_5 = arith.constant 0 : index
    %c0_6 = arith.constant 0 : index
    %15 = vector.load %arg17[%c0_5, %c0_6] : memref<64x256xf32, #tpu.memory_space<vmem>>, vector<64x256xf32>
    tpu.vector_store %arg17[%c0_5, %c0_6], %14 {strides = array<i32>} : memref<64x256xf32, #tpu.memory_space<vmem>>, vector<64x256xf32>,
    %cst_7 = arith.constant 0.000000e+00 : f32
    %16 = vector.broadcast %cst_7 : f32 to vector<8x64xf32>
    %cst_8 = arith.constant 0.000000e+00 : f32
    %17 = vector.broadcast %cst_8 : f32 to vector<8x64xf32>
    %c0_i32_9 = arith.constant 0 : i32
    %c8_i32 = arith.constant 8 : i32
    %18 = arith.muli %c0_i32_9, %c8_i32 : i32
    %19 = tpu.assume_multiple %18, 8 : i32
    %20 = arith.index_cast %19 : i32 to index
    %c0_10 = arith.constant 0 : index
    %21 = vector.load %arg17[%20, %c0_10] : memref<64x256xf32, #tpu.memory_space<vmem>>, vector<8x256xf32>
    %22 = arith.truncf %16 : vector<8x64xf32> to vector<8x64xbf16>
    %c0_11 = arith.constant 0 : index
    %c0_12 = arith.constant 0 : index
    %23 = vector.load %arg3[%c0_11, %c0_12] : memref<64x256xbf16, #tpu.memory_space<vmem>>, vector<64x256xbf16>
    %cst_13 = arith.constant dense<0.000000e+00> : vector<8x256xf32>
    %24 = tpu.matmul %22, %23, %cst_13 {dimension_numbers = #tpu.dot_dimension_numbers<[1], [0], [0], [1], [0, 0, 1, 1], [], []>} : vector<8x64xbf16>, vector<64x256xbf16>, vector<8x256xf32> -> vector<8x256xf32>
    %25 = arith.addf %21, %24 : vector<8x256xf32>
    %26 = math.tanh %25 : vector<8x256xf32>
    %27 = vector.extract_strided_slice %26 {offsets = [0, 0], sizes = [8, 64], strides = [1, 1]} : vector<8x256xf32> to vector<8x64xf32>
    %cst_14 = arith.constant 5.000000e-01 : f32
    %28 = vector.broadcast %cst_14 : f32 to vector<8x64xf32>
    %29 = arith.mulf %28, %27 : vector<8x64xf32>
    %cst_15 = arith.constant 5.000000e-01 : f32
    %30 = vector.broadcast %cst_15 : f32 to vector<8x64xf32>
    %31 = arith.addf %29, %30 : vector<8x64xf32>
    %32 = vector.extract_strided_slice %26 {offsets = [0, 64], sizes = [8, 64], strides = [1, 1]} : vector<8x256xf32> to vector<8x64xf32>
    %cst_16 = arith.constant 5.000000e-01 : f32
    %33 = vector.broadcast %cst_16 : f32 to vector<8x64xf32>
    %34 = arith.mulf %33, %32 : vector<8x64xf32>
    %cst_17 = arith.constant 5.000000e-01 : f32
    %35 = vector.broadcast %cst_17 : f32 to vector<8x64xf32>
    %36 = arith.addf %34, %35 : vector<8x64xf32>
    %37 = vector.extract_strided_slice %26 {offsets = [0, 128], sizes = [8, 64], strides = [1, 1]} : vector<8x256xf32> to vector<8x64xf32>
    %cst_18 = arith.constant 5.000000e-01 : f32
    %38 = vector.broadcast %cst_18 : f32 to vector<8x64xf32>
    %39 = arith.mulf %38, %37 : vector<8x64xf32>
    %cst_19 = arith.constant 5.000000e-01 : f32
    %40 = vector.broadcast %cst_19 : f32 to vector<8x64xf32>
    %41 = arith.addf %39, %40 : vector<8x64xf32>
    %42 = vector.extract_strided_slice %26 {offsets = [0, 192], sizes = [8, 64], strides = [1, 1]} : vector<8x256xf32> to vector<8x64xf32>
    %43 = arith.mulf %36, %17 : vector<8x64xf32>
    %44 = arith.mulf %31, %42 : vector<8x64xf32>
    %45 = arith.addf %43, %44 : vector<8x64xf32>
    %46 = math.tanh %45 : vector<8x64xf32>
    %47 = arith.mulf %41, %46 : vector<8x64xf32>
    %cst_20 = arith.constant 0.000000e+00 : f32
    %48 = vector.broadcast %cst_20 : f32 to vector<8x64xf32>
    %49 = tpu.concatenate %47, %48 in 1 : vector<8x64xf32>, vector<8x64xf32> -> vector<8x128xf32>
    %50 = arith.index_cast %19 : i32 to index
    %c0_21 = arith.constant 0 : index
    %51 = vector.load %arg20[%50, %c0_21] : memref<64x128xf32, #tpu.memory_space<vmem>>, vector<8x128xf32>
    tpu.vector_store %arg20[%50, %c0_21], %49 {strides = array<i32>} : memref<64x128xf32, #tpu.memory_space<vmem>>, vector<8x128xf32>,
    %c1_i32_22 = arith.constant 1 : i32
    %c8_i32_23 = arith.constant 8 : i32
    %52 = arith.muli %c1_i32_22, %c8_i32_23 : i32
    %53 = tpu.assume_multiple %52, 8 : i32
    %54 = arith.index_cast %53 : i32 to index
    %c0_24 = arith.constant 0 : index
    %55 = vector.load %arg17[%54, %c0_24] : memref<64x256xf32, #tpu.memory_space<vmem>>, vector<8x256xf32>
    %56 = arith.truncf %47 : vector<8x64xf32> to vector<8x64xbf16>
    %c0_25 = arith.constant 0 : index
    %c0_26 = arith.constant 0 : index
    %57 = vector.load %arg3[%c0_25, %c0_26] : memref<64x256xbf16, #tpu.memory_space<vmem>>, vector<64x256xbf16>
    %cst_27 = arith.constant dense<0.000000e+00> : vector<8x256xf32>
    %58 = tpu.matmul %56, %57, %cst_27 {dimension_numbers = #tpu.dot_dimension_numbers<[1], [0], [0], [1], [0, 0, 1, 1], [], []>} : vector<8x64xbf16>, vector<64x256xbf16>, vector<8x256xf32> -> vector<8x256xf32>
    %59 = arith.addf %55, %58 : vector<8x256xf32>
    %60 = math.tanh %59 : vector<8x256xf32>
    %61 = vector.extract_strided_slice %60 {offsets = [0, 0], sizes = [8, 64], strides = [1, 1]} : vector<8x256xf32> to vector<8x64xf32>
    %cst_28 = arith.constant 5.000000e-01 : f32
    %62 = vector.broadcast %cst_28 : f32 to vector<8x64xf32>
    %63 = arith.mulf %62, %61 : vector<8x64xf32>
    %cst_29 = arith.constant 5.000000e-01 : f32
    %64 = vector.broadcast %cst_29 : f32 to vector<8x64xf32>
    %65 = arith.addf %63, %64 : vector<8x64xf32>
    %66 = vector.extract_strided_slice %60 {offsets = [0, 64], sizes = [8, 64], strides = [1, 1]} : vector<8x256xf32> to vector<8x64xf32>
    %cst_30 = arith.constant 5.000000e-01 : f32
    %67 = vector.broadcast %cst_30 : f32 to vector<8x64xf32>
    %68 = arith.mulf %67, %66 : vector<8x64xf32>
    %cst_31 = arith.constant 5.000000e-01 : f32
    %69 = vector.broadcast %cst_31 : f32 to vector<8x64xf32>
    %70 = arith.addf %68, %69 : vector<8x64xf32>
    %71 = vector.extract_strided_slice %60 {offsets = [0, 128], sizes = [8, 64], strides = [1, 1]} : vector<8x256xf32> to vector<8x64xf32>
    %cst_32 = arith.constant 5.000000e-01 : f32
    %72 = vector.broadcast %cst_32 : f32 to vector<8x64xf32>
    %73 = arith.mulf %72, %71 : vector<8x64xf32>
    %cst_33 = arith.constant 5.000000e-01 : f32
    %74 = vector.broadcast %cst_33 : f32 to vector<8x64xf32>
    %75 = arith.addf %73, %74 : vector<8x64xf32>
    %76 = vector.extract_strided_slice %60 {offsets = [0, 192], sizes = [8, 64], strides = [1, 1]} : vector<8x256xf32> to vector<8x64xf32>
    %77 = arith.mulf %70, %45 : vector<8x64xf32>
    %78 = arith.mulf %65, %76 : vector<8x64xf32>
    %79 = arith.addf %77, %78 : vector<8x64xf32>
    %80 = math.tanh %79 : vector<8x64xf32>
    %81 = arith.mulf %75, %80 : vector<8x64xf32>
    %cst_34 = arith.constant 0.000000e+00 : f32
    %82 = vector.broadcast %cst_34 : f32 to vector<8x64xf32>
    %83 = tpu.concatenate %81, %82 in 1 : vector<8x64xf32>, vector<8x64xf32> -> vector<8x128xf32>
    %84 = arith.index_cast %53 : i32 to index
    %c0_35 = arith.constant 0 : index
    %85 = vector.load %arg20[%84, %c0_35] : memref<64x128xf32, #tpu.memory_space<vmem>>, vector<8x128xf32>
    tpu.vector_store %arg20[%84, %c0_35], %83 {strides = array<i32>} : memref<64x128xf32, #tpu.memory_space<vmem>>, vector<8x128xf32>,
    %c2_i32_36 = arith.constant 2 : i32
    %c8_i32_37 = arith.constant 8 : i32
    %86 = arith.muli %c2_i32_36, %c8_i32_37 : i32
    %87 = tpu.assume_multiple %86, 8 : i32
    %88 = arith.index_cast %87 : i32 to index
    %c0_38 = arith.constant 0 : index
    %89 = vector.load %arg17[%88, %c0_38] : memref<64x256xf32, #tpu.memory_space<vmem>>, vector<8x256xf32>
    %90 = arith.truncf %81 : vector<8x64xf32> to vector<8x64xbf16>
    %c0_39 = arith.constant 0 : index
    %c0_40 = arith.constant 0 : index
    %91 = vector.load %arg3[%c0_39, %c0_40] : memref<64x256xbf16, #tpu.memory_space<vmem>>, vector<64x256xbf16>
    %cst_41 = arith.constant dense<0.000000e+00> : vector<8x256xf32>
    %92 = tpu.matmul %90, %91, %cst_41 {dimension_numbers = #tpu.dot_dimension_numbers<[1], [0], [0], [1], [0, 0, 1, 1], [], []>} : vector<8x64xbf16>, vector<64x256xbf16>, vector<8x256xf32> -> vector<8x256xf32>
    %93 = arith.addf %89, %92 : vector<8x256xf32>
    %94 = math.tanh %93 : vector<8x256xf32>
    %95 = vector.extract_strided_slice %94 {offsets = [0, 0], sizes = [8, 64], strides = [1, 1]} : vector<8x256xf32> to vector<8x64xf32>
    %cst_42 = arith.constant 5.000000e-01 : f32
    %96 = vector.broadcast %cst_42 : f32 to vector<8x64xf32>
    %97 = arith.mulf %96, %95 : vector<8x64xf32>
    %cst_43 = arith.constant 5.000000e-01 : f32
    %98 = vector.broadcast %cst_43 : f32 to vector<8x64xf32>
    %99 = arith.addf %97, %98 : vector<8x64xf32>
    %100 = vector.extract_strided_slice %94 {offsets = [0, 64], sizes = [8, 64], strides = [1, 1]} : vector<8x256xf32> to vector<8x64xf32>
    %cst_44 = arith.constant 5.000000e-01 : f32
    %101 = vector.broadcast %cst_44 : f32 to vector<8x64xf32>
    %102 = arith.mulf %101, %100 : vector<8x64xf32>
    %cst_45 = arith.constant 5.000000e-01 : f32
    %103 = vector.broadcast %cst_45 : f32 to vector<8x64xf32>
    %104 = arith.addf %102, %103 : vector<8x64xf32>
    %105 = vector.extract_strided_slice %94 {offsets = [0, 128], sizes = [8, 64], strides = [1, 1]} : vector<8x256xf32> to vector<8x64xf32>
    %cst_46 = arith.constant 5.000000e-01 : f32
    %106 = vector.broadcast %cst_46 : f32 to vector<8x64xf32>
    %107 = arith.mulf %106, %105 : vector<8x64xf32>
    %cst_47 = arith.constant 5.000000e-01 : f32
    %108 = vector.broadcast %cst_47 : f32 to vector<8x64xf32>
    %109 = arith.addf %107, %108 : vector<8x64xf32>
    %110 = vector.extract_strided_slice %94 {offsets = [0, 192], sizes = [8, 64], strides = [1, 1]} : vector<8x256xf32> to vector<8x64xf32>
    %111 = arith.mulf %104, %79 : vector<8x64xf32>
    %112 = arith.mulf %99, %110 : vector<8x64xf32>
    %113 = arith.addf %111, %112 : vector<8x64xf32>
    %114 = math.tanh %113 : vector<8x64xf32>
    %115 = arith.mulf %109, %114 : vector<8x64xf32>
    %cst_48 = arith.constant 0.000000e+00 : f32
    %116 = vector.broadcast %cst_48 : f32 to vector<8x64xf32>
    %117 = tpu.concatenate %115, %116 in 1 : vector<8x64xf32>, vector<8x64xf32> -> vector<8x128xf32>
    %118 = arith.index_cast %87 : i32 to index
    %c0_49 = arith.constant 0 : index
    %119 = vector.load %arg20[%118, %c0_49] : memref<64x128xf32, #tpu.memory_space<vmem>>, vector<8x128xf32>
    tpu.vector_store %arg20[%118, %c0_49], %117 {strides = array<i32>} : memref<64x128xf32, #tpu.memory_space<vmem>>, vector<8x128xf32>,
    %c3_i32_50 = arith.constant 3 : i32
    %c8_i32_51 = arith.constant 8 : i32
    %120 = arith.muli %c3_i32_50, %c8_i32_51 : i32
    %121 = tpu.assume_multiple %120, 8 : i32
    %122 = arith.index_cast %121 : i32 to index
    %c0_52 = arith.constant 0 : index
    %123 = vector.load %arg17[%122, %c0_52] : memref<64x256xf32, #tpu.memory_space<vmem>>, vector<8x256xf32>
    %124 = arith.truncf %115 : vector<8x64xf32> to vector<8x64xbf16>
    %c0_53 = arith.constant 0 : index
    %c0_54 = arith.constant 0 : index
    %125 = vector.load %arg3[%c0_53, %c0_54] : memref<64x256xbf16, #tpu.memory_space<vmem>>, vector<64x256xbf16>
    %cst_55 = arith.constant dense<0.000000e+00> : vector<8x256xf32>
    %126 = tpu.matmul %124, %125, %cst_55 {dimension_numbers = #tpu.dot_dimension_numbers<[1], [0], [0], [1], [0, 0, 1, 1], [], []>} : vector<8x64xbf16>, vector<64x256xbf16>, vector<8x256xf32> -> vector<8x256xf32>
    %127 = arith.addf %123, %126 : vector<8x256xf32>
    %128 = math.tanh %127 : vector<8x256xf32>
    %129 = vector.extract_strided_slice %128 {offsets = [0, 0], sizes = [8, 64], strides = [1, 1]} : vector<8x256xf32> to vector<8x64xf32>
    %cst_56 = arith.constant 5.000000e-01 : f32
    %130 = vector.broadcast %cst_56 : f32 to vector<8x64xf32>
    %131 = arith.mulf %130, %129 : vector<8x64xf32>
    %cst_57 = arith.constant 5.000000e-01 : f32
    %132 = vector.broadcast %cst_57 : f32 to vector<8x64xf32>
    %133 = arith.addf %131, %132 : vector<8x64xf32>
    %134 = vector.extract_strided_slice %128 {offsets = [0, 64], sizes = [8, 64], strides = [1, 1]} : vector<8x256xf32> to vector<8x64xf32>
    %cst_58 = arith.constant 5.000000e-01 : f32
    %135 = vector.broadcast %cst_58 : f32 to vector<8x64xf32>
    %136 = arith.mulf %135, %134 : vector<8x64xf32>
    %cst_59 = arith.constant 5.000000e-01 : f32
    %137 = vector.broadcast %cst_59 : f32 to vector<8x64xf32>
    %138 = arith.addf %136, %137 : vector<8x64xf32>
    %139 = vector.extract_strided_slice %128 {offsets = [0, 128], sizes = [8, 64], strides = [1, 1]} : vector<8x256xf32> to vector<8x64xf32>
    %cst_60 = arith.constant 5.000000e-01 : f32
    %140 = vector.broadcast %cst_60 : f32 to vector<8x64xf32>
    %141 = arith.mulf %140, %139 : vector<8x64xf32>
    %cst_61 = arith.constant 5.000000e-01 : f32
    %142 = vector.broadcast %cst_61 : f32 to vector<8x64xf32>
    %143 = arith.addf %141, %142 : vector<8x64xf32>
    %144 = vector.extract_strided_slice %128 {offsets = [0, 192], sizes = [8, 64], strides = [1, 1]} : vector<8x256xf32> to vector<8x64xf32>
    %145 = arith.mulf %138, %113 : vector<8x64xf32>
    %146 = arith.mulf %133, %144 : vector<8x64xf32>
    %147 = arith.addf %145, %146 : vector<8x64xf32>
    %148 = math.tanh %147 : vector<8x64xf32>
    %149 = arith.mulf %143, %148 : vector<8x64xf32>
    %cst_62 = arith.constant 0.000000e+00 : f32
    %150 = vector.broadcast %cst_62 : f32 to vector<8x64xf32>
    %151 = tpu.concatenate %149, %150 in 1 : vector<8x64xf32>, vector<8x64xf32> -> vector<8x128xf32>
    %152 = arith.index_cast %121 : i32 to index
    %c0_63 = arith.constant 0 : index
    %153 = vector.load %arg20[%152, %c0_63] : memref<64x128xf32, #tpu.memory_space<vmem>>, vector<8x128xf32>
    tpu.vector_store %arg20[%152, %c0_63], %151 {strides = array<i32>} : memref<64x128xf32, #tpu.memory_space<vmem>>, vector<8x128xf32>,
    %c4_i32 = arith.constant 4 : i32
    %c8_i32_64 = arith.constant 8 : i32
    %154 = arith.muli %c4_i32, %c8_i32_64 : i32
    %155 = tpu.assume_multiple %154, 8 : i32
    %156 = arith.index_cast %155 : i32 to index
    %c0_65 = arith.constant 0 : index
    %157 = vector.load %arg17[%156, %c0_65] : memref<64x256xf32, #tpu.memory_space<vmem>>, vector<8x256xf32>
    %158 = arith.truncf %149 : vector<8x64xf32> to vector<8x64xbf16>
    %c0_66 = arith.constant 0 : index
    %c0_67 = arith.constant 0 : index
    %159 = vector.load %arg3[%c0_66, %c0_67] : memref<64x256xbf16, #tpu.memory_space<vmem>>, vector<64x256xbf16>
    %cst_68 = arith.constant dense<0.000000e+00> : vector<8x256xf32>
    %160 = tpu.matmul %158, %159, %cst_68 {dimension_numbers = #tpu.dot_dimension_numbers<[1], [0], [0], [1], [0, 0, 1, 1], [], []>} : vector<8x64xbf16>, vector<64x256xbf16>, vector<8x256xf32> -> vector<8x256xf32>
    %161 = arith.addf %157, %160 : vector<8x256xf32>
    %162 = math.tanh %161 : vector<8x256xf32>
    %163 = vector.extract_strided_slice %162 {offsets = [0, 0], sizes = [8, 64], strides = [1, 1]} : vector<8x256xf32> to vector<8x64xf32>
    %cst_69 = arith.constant 5.000000e-01 : f32
    %164 = vector.broadcast %cst_69 : f32 to vector<8x64xf32>
    %165 = arith.mulf %164, %163 : vector<8x64xf32>
    %cst_70 = arith.constant 5.000000e-01 : f32
    %166 = vector.broadcast %cst_70 : f32 to vector<8x64xf32>
    %167 = arith.addf %165, %166 : vector<8x64xf32>
    %168 = vector.extract_strided_slice %162 {offsets = [0, 64], sizes = [8, 64], strides = [1, 1]} : vector<8x256xf32> to vector<8x64xf32>
    %cst_71 = arith.constant 5.000000e-01 : f32
    %169 = vector.broadcast %cst_71 : f32 to vector<8x64xf32>
    %170 = arith.mulf %169, %168 : vector<8x64xf32>
    %cst_72 = arith.constant 5.000000e-01 : f32
    %171 = vector.broadcast %cst_72 : f32 to vector<8x64xf32>
    %172 = arith.addf %170, %171 : vector<8x64xf32>
    %173 = vector.extract_strided_slice %162 {offsets = [0, 128], sizes = [8, 64], strides = [1, 1]} : vector<8x256xf32> to vector<8x64xf32>
    %cst_73 = arith.constant 5.000000e-01 : f32
    %174 = vector.broadcast %cst_73 : f32 to vector<8x64xf32>
    %175 = arith.mulf %174, %173 : vector<8x64xf32>
    %cst_74 = arith.constant 5.000000e-01 : f32
    %176 = vector.broadcast %cst_74 : f32 to vector<8x64xf32>
    %177 = arith.addf %175, %176 : vector<8x64xf32>
    %178 = vector.extract_strided_slice %162 {offsets = [0, 192], sizes = [8, 64], strides = [1, 1]} : vector<8x256xf32> to vector<8x64xf32>
    %179 = arith.mulf %172, %147 : vector<8x64xf32>
    %180 = arith.mulf %167, %178 : vector<8x64xf32>
    %181 = arith.addf %179, %180 : vector<8x64xf32>
    %182 = math.tanh %181 : vector<8x64xf32>
    %183 = arith.mulf %177, %182 : vector<8x64xf32>
    %cst_75 = arith.constant 0.000000e+00 : f32
    %184 = vector.broadcast %cst_75 : f32 to vector<8x64xf32>
    %185 = tpu.concatenate %183, %184 in 1 : vector<8x64xf32>, vector<8x64xf32> -> vector<8x128xf32>
    %186 = arith.index_cast %155 : i32 to index
    %c0_76 = arith.constant 0 : index
    %187 = vector.load %arg20[%186, %c0_76] : memref<64x128xf32, #tpu.memory_space<vmem>>, vector<8x128xf32>
    tpu.vector_store %arg20[%186, %c0_76], %185 {strides = array<i32>} : memref<64x128xf32, #tpu.memory_space<vmem>>, vector<8x128xf32>,
    %c5_i32 = arith.constant 5 : i32
    %c8_i32_77 = arith.constant 8 : i32
    %188 = arith.muli %c5_i32, %c8_i32_77 : i32
    %189 = tpu.assume_multiple %188, 8 : i32
    %190 = arith.index_cast %189 : i32 to index
    %c0_78 = arith.constant 0 : index
    %191 = vector.load %arg17[%190, %c0_78] : memref<64x256xf32, #tpu.memory_space<vmem>>, vector<8x256xf32>
    %192 = arith.truncf %183 : vector<8x64xf32> to vector<8x64xbf16>
    %c0_79 = arith.constant 0 : index
    %c0_80 = arith.constant 0 : index
    %193 = vector.load %arg3[%c0_79, %c0_80] : memref<64x256xbf16, #tpu.memory_space<vmem>>, vector<64x256xbf16>
    %cst_81 = arith.constant dense<0.000000e+00> : vector<8x256xf32>
    %194 = tpu.matmul %192, %193, %cst_81 {dimension_numbers = #tpu.dot_dimension_numbers<[1], [0], [0], [1], [0, 0, 1, 1], [], []>} : vector<8x64xbf16>, vector<64x256xbf16>, vector<8x256xf32> -> vector<8x256xf32>
    %195 = arith.addf %191, %194 : vector<8x256xf32>
    %196 = math.tanh %195 : vector<8x256xf32>
    %197 = vector.extract_strided_slice %196 {offsets = [0, 0], sizes = [8, 64], strides = [1, 1]} : vector<8x256xf32> to vector<8x64xf32>
    %cst_82 = arith.constant 5.000000e-01 : f32
    %198 = vector.broadcast %cst_82 : f32 to vector<8x64xf32>
    %199 = arith.mulf %198, %197 : vector<8x64xf32>
    %cst_83 = arith.constant 5.000000e-01 : f32
    %200 = vector.broadcast %cst_83 : f32 to vector<8x64xf32>
    %201 = arith.addf %199, %200 : vector<8x64xf32>
    %202 = vector.extract_strided_slice %196 {offsets = [0, 64], sizes = [8, 64], strides = [1, 1]} : vector<8x256xf32> to vector<8x64xf32>
    %cst_84 = arith.constant 5.000000e-01 : f32
    %203 = vector.broadcast %cst_84 : f32 to vector<8x64xf32>
    %204 = arith.mulf %203, %202 : vector<8x64xf32>
    %cst_85 = arith.constant 5.000000e-01 : f32
    %205 = vector.broadcast %cst_85 : f32 to vector<8x64xf32>
    %206 = arith.addf %204, %205 : vector<8x64xf32>
    %207 = vector.extract_strided_slice %196 {offsets = [0, 128], sizes = [8, 64], strides = [1, 1]} : vector<8x256xf32> to vector<8x64xf32>
    %cst_86 = arith.constant 5.000000e-01 : f32
    %208 = vector.broadcast %cst_86 : f32 to vector<8x64xf32>
    %209 = arith.mulf %208, %207 : vector<8x64xf32>
    %cst_87 = arith.constant 5.000000e-01 : f32
    %210 = vector.broadcast %cst_87 : f32 to vector<8x64xf32>
    %211 = arith.addf %209, %210 : vector<8x64xf32>
    %212 = vector.extract_strided_slice %196 {offsets = [0, 192], sizes = [8, 64], strides = [1, 1]} : vector<8x256xf32> to vector<8x64xf32>
    %213 = arith.mulf %206, %181 : vector<8x64xf32>
    %214 = arith.mulf %201, %212 : vector<8x64xf32>
    %215 = arith.addf %213, %214 : vector<8x64xf32>
    %216 = math.tanh %215 : vector<8x64xf32>
    %217 = arith.mulf %211, %216 : vector<8x64xf32>
    %cst_88 = arith.constant 0.000000e+00 : f32
    %218 = vector.broadcast %cst_88 : f32 to vector<8x64xf32>
    %219 = tpu.concatenate %217, %218 in 1 : vector<8x64xf32>, vector<8x64xf32> -> vector<8x128xf32>
    %220 = arith.index_cast %189 : i32 to index
    %c0_89 = arith.constant 0 : index
    %221 = vector.load %arg20[%220, %c0_89] : memref<64x128xf32, #tpu.memory_space<vmem>>, vector<8x128xf32>
    tpu.vector_store %arg20[%220, %c0_89], %219 {strides = array<i32>} : memref<64x128xf32, #tpu.memory_space<vmem>>, vector<8x128xf32>,
    %c6_i32 = arith.constant 6 : i32
    %c8_i32_90 = arith.constant 8 : i32
    %222 = arith.muli %c6_i32, %c8_i32_90 : i32
    %223 = tpu.assume_multiple %222, 8 : i32
    %224 = arith.index_cast %223 : i32 to index
    %c0_91 = arith.constant 0 : index
    %225 = vector.load %arg17[%224, %c0_91] : memref<64x256xf32, #tpu.memory_space<vmem>>, vector<8x256xf32>
    %226 = arith.truncf %217 : vector<8x64xf32> to vector<8x64xbf16>
    %c0_92 = arith.constant 0 : index
    %c0_93 = arith.constant 0 : index
    %227 = vector.load %arg3[%c0_92, %c0_93] : memref<64x256xbf16, #tpu.memory_space<vmem>>, vector<64x256xbf16>
    %cst_94 = arith.constant dense<0.000000e+00> : vector<8x256xf32>
    %228 = tpu.matmul %226, %227, %cst_94 {dimension_numbers = #tpu.dot_dimension_numbers<[1], [0], [0], [1], [0, 0, 1, 1], [], []>} : vector<8x64xbf16>, vector<64x256xbf16>, vector<8x256xf32> -> vector<8x256xf32>
    %229 = arith.addf %225, %228 : vector<8x256xf32>
    %230 = math.tanh %229 : vector<8x256xf32>
    %231 = vector.extract_strided_slice %230 {offsets = [0, 0], sizes = [8, 64], strides = [1, 1]} : vector<8x256xf32> to vector<8x64xf32>
    %cst_95 = arith.constant 5.000000e-01 : f32
    %232 = vector.broadcast %cst_95 : f32 to vector<8x64xf32>
    %233 = arith.mulf %232, %231 : vector<8x64xf32>
    %cst_96 = arith.constant 5.000000e-01 : f32
    %234 = vector.broadcast %cst_96 : f32 to vector<8x64xf32>
    %235 = arith.addf %233, %234 : vector<8x64xf32>
    %236 = vector.extract_strided_slice %230 {offsets = [0, 64], sizes = [8, 64], strides = [1, 1]} : vector<8x256xf32> to vector<8x64xf32>
    %cst_97 = arith.constant 5.000000e-01 : f32
    %237 = vector.broadcast %cst_97 : f32 to vector<8x64xf32>
    %238 = arith.mulf %237, %236 : vector<8x64xf32>
    %cst_98 = arith.constant 5.000000e-01 : f32
    %239 = vector.broadcast %cst_98 : f32 to vector<8x64xf32>
    %240 = arith.addf %238, %239 : vector<8x64xf32>
    %241 = vector.extract_strided_slice %230 {offsets = [0, 128], sizes = [8, 64], strides = [1, 1]} : vector<8x256xf32> to vector<8x64xf32>
    %cst_99 = arith.constant 5.000000e-01 : f32
    %242 = vector.broadcast %cst_99 : f32 to vector<8x64xf32>
    %243 = arith.mulf %242, %241 : vector<8x64xf32>
    %cst_100 = arith.constant 5.000000e-01 : f32
    %244 = vector.broadcast %cst_100 : f32 to vector<8x64xf32>
    %245 = arith.addf %243, %244 : vector<8x64xf32>
    %246 = vector.extract_strided_slice %230 {offsets = [0, 192], sizes = [8, 64], strides = [1, 1]} : vector<8x256xf32> to vector<8x64xf32>
    %247 = arith.mulf %240, %215 : vector<8x64xf32>
    %248 = arith.mulf %235, %246 : vector<8x64xf32>
    %249 = arith.addf %247, %248 : vector<8x64xf32>
    %250 = math.tanh %249 : vector<8x64xf32>
    %251 = arith.mulf %245, %250 : vector<8x64xf32>
    %cst_101 = arith.constant 0.000000e+00 : f32
    %252 = vector.broadcast %cst_101 : f32 to vector<8x64xf32>
    %253 = tpu.concatenate %251, %252 in 1 : vector<8x64xf32>, vector<8x64xf32> -> vector<8x128xf32>
    %254 = arith.index_cast %223 : i32 to index
    %c0_102 = arith.constant 0 : index
    %255 = vector.load %arg20[%254, %c0_102] : memref<64x128xf32, #tpu.memory_space<vmem>>, vector<8x128xf32>
    tpu.vector_store %arg20[%254, %c0_102], %253 {strides = array<i32>} : memref<64x128xf32, #tpu.memory_space<vmem>>, vector<8x128xf32>,
    %c7_i32 = arith.constant 7 : i32
    %c8_i32_103 = arith.constant 8 : i32
    %256 = arith.muli %c7_i32, %c8_i32_103 : i32
    %257 = tpu.assume_multiple %256, 8 : i32
    %258 = arith.index_cast %257 : i32 to index
    %c0_104 = arith.constant 0 : index
    %259 = vector.load %arg17[%258, %c0_104] : memref<64x256xf32, #tpu.memory_space<vmem>>, vector<8x256xf32>
    %260 = arith.truncf %251 : vector<8x64xf32> to vector<8x64xbf16>
    %c0_105 = arith.constant 0 : index
    %c0_106 = arith.constant 0 : index
    %261 = vector.load %arg3[%c0_105, %c0_106] : memref<64x256xbf16, #tpu.memory_space<vmem>>, vector<64x256xbf16>
    %cst_107 = arith.constant dense<0.000000e+00> : vector<8x256xf32>
    %262 = tpu.matmul %260, %261, %cst_107 {dimension_numbers = #tpu.dot_dimension_numbers<[1], [0], [0], [1], [0, 0, 1, 1], [], []>} : vector<8x64xbf16>, vector<64x256xbf16>, vector<8x256xf32> -> vector<8x256xf32>
    %263 = arith.addf %259, %262 : vector<8x256xf32>
    %264 = math.tanh %263 : vector<8x256xf32>
    %265 = vector.extract_strided_slice %264 {offsets = [0, 0], sizes = [8, 64], strides = [1, 1]} : vector<8x256xf32> to vector<8x64xf32>
    %cst_108 = arith.constant 5.000000e-01 : f32
    %266 = vector.broadcast %cst_108 : f32 to vector<8x64xf32>
    %267 = arith.mulf %266, %265 : vector<8x64xf32>
    %cst_109 = arith.constant 5.000000e-01 : f32
    %268 = vector.broadcast %cst_109 : f32 to vector<8x64xf32>
    %269 = arith.addf %267, %268 : vector<8x64xf32>
    %270 = vector.extract_strided_slice %264 {offsets = [0, 64], sizes = [8, 64], strides = [1, 1]} : vector<8x256xf32> to vector<8x64xf32>
    %cst_110 = arith.constant 5.000000e-01 : f32
    %271 = vector.broadcast %cst_110 : f32 to vector<8x64xf32>
    %272 = arith.mulf %271, %270 : vector<8x64xf32>
    %cst_111 = arith.constant 5.000000e-01 : f32
    %273 = vector.broadcast %cst_111 : f32 to vector<8x64xf32>
    %274 = arith.addf %272, %273 : vector<8x64xf32>
    %275 = vector.extract_strided_slice %264 {offsets = [0, 128], sizes = [8, 64], strides = [1, 1]} : vector<8x256xf32> to vector<8x64xf32>
    %cst_112 = arith.constant 5.000000e-01 : f32
    %276 = vector.broadcast %cst_112 : f32 to vector<8x64xf32>
    %277 = arith.mulf %276, %275 : vector<8x64xf32>
    %cst_113 = arith.constant 5.000000e-01 : f32
    %278 = vector.broadcast %cst_113 : f32 to vector<8x64xf32>
    %279 = arith.addf %277, %278 : vector<8x64xf32>
    %280 = vector.extract_strided_slice %264 {offsets = [0, 192], sizes = [8, 64], strides = [1, 1]} : vector<8x256xf32> to vector<8x64xf32>
    %281 = arith.mulf %274, %249 : vector<8x64xf32>
    %282 = arith.mulf %269, %280 : vector<8x64xf32>
    %283 = arith.addf %281, %282 : vector<8x64xf32>
    %284 = math.tanh %283 : vector<8x64xf32>
    %285 = arith.mulf %279, %284 : vector<8x64xf32>
    %cst_114 = arith.constant 0.000000e+00 : f32
    %286 = vector.broadcast %cst_114 : f32 to vector<8x64xf32>
    %287 = tpu.concatenate %285, %286 in 1 : vector<8x64xf32>, vector<8x64xf32> -> vector<8x128xf32>
    %288 = arith.index_cast %257 : i32 to index
    %c0_115 = arith.constant 0 : index
    %289 = vector.load %arg20[%288, %c0_115] : memref<64x128xf32, #tpu.memory_space<vmem>>, vector<8x128xf32>
    tpu.vector_store %arg20[%288, %c0_115], %287 {strides = array<i32>} : memref<64x128xf32, #tpu.memory_space<vmem>>, vector<8x128xf32>,
    %c8_i32_116 = arith.constant 8 : i32
    %c0_117 = arith.constant 0 : index
    %c0_118 = arith.constant 0 : index
    %290 = vector.load %arg7[%c0_117, %c0_118] : memref<1x384xf32, #tpu.memory_space<vmem>>, vector<1x384xf32>
    %c0_i32_119 = arith.constant 0 : i32
    %291 = tpu.memref_slice %arg21[%c0_i32_119] : memref<4x!tpu.dma_semaphore, #tpu.memory_space<semaphore_mem>> -> memref<1x!tpu.dma_semaphore, #tpu.memory_space<semaphore_mem>>
    %292 = tpu.memref_squeeze %291 : memref<1x!tpu.dma_semaphore, #tpu.memory_space<semaphore_mem>> -> memref<!tpu.dma_semaphore, #tpu.memory_space<semaphore_mem>>
    tpu.wait_dma2 semaphore(%292 : memref<!tpu.dma_semaphore, #tpu.memory_space<semaphore_mem>>) src(%arg5 : memref<128x384xbf16, #tpu.memory_space<any>>) dst(%arg13 : memref<128x384xbf16, #tpu.memory_space<vmem>>)
    %c1_i32_120 = arith.constant 1 : i32
    %293 = tpu.memref_slice %arg21[%c1_i32_120] : memref<4x!tpu.dma_semaphore, #tpu.memory_space<semaphore_mem>> -> memref<1x!tpu.dma_semaphore, #tpu.memory_space<semaphore_mem>>
    %294 = tpu.memref_squeeze %293 : memref<1x!tpu.dma_semaphore, #tpu.memory_space<semaphore_mem>> -> memref<!tpu.dma_semaphore, #tpu.memory_space<semaphore_mem>>
    tpu.wait_dma2 semaphore(%294 : memref<!tpu.dma_semaphore, #tpu.memory_space<semaphore_mem>>) src(%arg6 : memref<96x384xbf16, #tpu.memory_space<any>>) dst(%arg14 : memref<96x384xbf16, #tpu.memory_space<vmem>>)
    %c0_121 = arith.constant 0 : index
    %c0_122 = arith.constant 0 : index
    %295 = vector.load %arg20[%c0_121, %c0_122] : memref<64x128xf32, #tpu.memory_space<vmem>>, vector<64x128xf32>
    %c0_123 = arith.constant 0 : index
    %c0_124 = arith.constant 0 : index
    %296 = vector.load %arg13[%c0_123, %c0_124] : memref<128x384xbf16, #tpu.memory_space<vmem>>, vector<128x384xbf16>
    %297 = arith.truncf %295 : vector<64x128xf32> to vector<64x128xbf16>
    %cst_125 = arith.constant dense<0.000000e+00> : vector<64x384xf32>
    %298 = tpu.matmul %297, %296, %cst_125 {dimension_numbers = #tpu.dot_dimension_numbers<[1], [0], [0], [1], [0, 0, 1, 1], [], []>} : vector<64x128xbf16>, vector<128x384xbf16>, vector<64x384xf32> -> vector<64x384xf32>
    %299 = vector.broadcast %290 : vector<1x384xf32> to vector<64x384xf32>
    %300 = arith.addf %298, %299 : vector<64x384xf32>
    %c0_126 = arith.constant 0 : index
    %c0_127 = arith.constant 0 : index
    %301 = vector.load %arg18[%c0_126, %c0_127] : memref<64x384xf32, #tpu.memory_space<vmem>>, vector<64x384xf32>
    tpu.vector_store %arg18[%c0_126, %c0_127], %300 {strides = array<i32>} : memref<64x384xf32, #tpu.memory_space<vmem>>, vector<64x384xf32>,
    %cst_128 = arith.constant 0.000000e+00 : f32
    %302 = vector.broadcast %cst_128 : f32 to vector<8x96xf32>
    %cst_129 = arith.constant 0.000000e+00 : f32
    %303 = vector.broadcast %cst_129 : f32 to vector<8x96xf32>
    %c0_i32_130 = arith.constant 0 : i32
    %c8_i32_131 = arith.constant 8 : i32
    %304 = arith.muli %c0_i32_130, %c8_i32_131 : i32
    %305 = tpu.assume_multiple %304, 8 : i32
    %306 = arith.index_cast %305 : i32 to index
    %c0_132 = arith.constant 0 : index
    %307 = vector.load %arg18[%306, %c0_132] : memref<64x384xf32, #tpu.memory_space<vmem>>, vector<8x384xf32>
    %308 = arith.truncf %302 : vector<8x96xf32> to vector<8x96xbf16>
    %c0_133 = arith.constant 0 : index
    %c0_134 = arith.constant 0 : index
    %309 = vector.load %arg14[%c0_133, %c0_134] : memref<96x384xbf16, #tpu.memory_space<vmem>>, vector<96x384xbf16>
    %cst_135 = arith.constant dense<0.000000e+00> : vector<8x384xf32>
    %310 = tpu.matmul %308, %309, %cst_135 {dimension_numbers = #tpu.dot_dimension_numbers<[1], [0], [0], [1], [0, 0, 1, 1], [], []>} : vector<8x96xbf16>, vector<96x384xbf16>, vector<8x384xf32> -> vector<8x384xf32>
    %311 = arith.addf %307, %310 : vector<8x384xf32>
    %312 = math.tanh %311 : vector<8x384xf32>
    %313 = vector.extract_strided_slice %312 {offsets = [0, 0], sizes = [8, 96], strides = [1, 1]} : vector<8x384xf32> to vector<8x96xf32>
    %cst_136 = arith.constant 5.000000e-01 : f32
    %314 = vector.broadcast %cst_136 : f32 to vector<8x96xf32>
    %315 = arith.mulf %314, %313 : vector<8x96xf32>
    %cst_137 = arith.constant 5.000000e-01 : f32
    %316 = vector.broadcast %cst_137 : f32 to vector<8x96xf32>
    %317 = arith.addf %315, %316 : vector<8x96xf32>
    %318 = vector.extract_strided_slice %312 {offsets = [0, 96], sizes = [8, 96], strides = [1, 1]} : vector<8x384xf32> to vector<8x96xf32>
    %cst_138 = arith.constant 5.000000e-01 : f32
    %319 = vector.broadcast %cst_138 : f32 to vector<8x96xf32>
    %320 = arith.mulf %319, %318 : vector<8x96xf32>
    %cst_139 = arith.constant 5.000000e-01 : f32
    %321 = vector.broadcast %cst_139 : f32 to vector<8x96xf32>
    %322 = arith.addf %320, %321 : vector<8x96xf32>
    %323 = vector.extract_strided_slice %312 {offsets = [0, 192], sizes = [8, 96], strides = [1, 1]} : vector<8x384xf32> to vector<8x96xf32>
    %cst_140 = arith.constant 5.000000e-01 : f32
    %324 = vector.broadcast %cst_140 : f32 to vector<8x96xf32>
    %325 = arith.mulf %324, %323 : vector<8x96xf32>
    %cst_141 = arith.constant 5.000000e-01 : f32
    %326 = vector.broadcast %cst_141 : f32 to vector<8x96xf32>
    %327 = arith.addf %325, %326 : vector<8x96xf32>
    %328 = vector.extract_strided_slice %312 {offsets = [0, 288], sizes = [8, 96], strides = [1, 1]} : vector<8x384xf32> to vector<8x96xf32>
    %329 = arith.mulf %322, %303 : vector<8x96xf32>
    %330 = arith.mulf %317, %328 : vector<8x96xf32>
    %331 = arith.addf %329, %330 : vector<8x96xf32>
    %332 = math.tanh %331 : vector<8x96xf32>
    %333 = arith.mulf %327, %332 : vector<8x96xf32>
    %cst_142 = arith.constant 0.000000e+00 : f32
    %334 = vector.broadcast %cst_142 : f32 to vector<8x32xf32>
    %335 = tpu.concatenate %333, %334 in 1 : vector<8x96xf32>, vector<8x32xf32> -> vector<8x128xf32>
    %336 = arith.index_cast %305 : i32 to index
    %c0_143 = arith.constant 0 : index
    %337 = vector.load %arg20[%336, %c0_143] : memref<64x128xf32, #tpu.memory_space<vmem>>, vector<8x128xf32>
    tpu.vector_store %arg20[%336, %c0_143], %335 {strides = array<i32>} : memref<64x128xf32, #tpu.memory_space<vmem>>, vector<8x128xf32>,
    %c1_i32_144 = arith.constant 1 : i32
    %c8_i32_145 = arith.constant 8 : i32
    %338 = arith.muli %c1_i32_144, %c8_i32_145 : i32
    %339 = tpu.assume_multiple %338, 8 : i32
    %340 = arith.index_cast %339 : i32 to index
    %c0_146 = arith.constant 0 : index
    %341 = vector.load %arg18[%340, %c0_146] : memref<64x384xf32, #tpu.memory_space<vmem>>, vector<8x384xf32>
    %342 = arith.truncf %333 : vector<8x96xf32> to vector<8x96xbf16>
    %c0_147 = arith.constant 0 : index
    %c0_148 = arith.constant 0 : index
    %343 = vector.load %arg14[%c0_147, %c0_148] : memref<96x384xbf16, #tpu.memory_space<vmem>>, vector<96x384xbf16>
    %cst_149 = arith.constant dense<0.000000e+00> : vector<8x384xf32>
    %344 = tpu.matmul %342, %343, %cst_149 {dimension_numbers = #tpu.dot_dimension_numbers<[1], [0], [0], [1], [0, 0, 1, 1], [], []>} : vector<8x96xbf16>, vector<96x384xbf16>, vector<8x384xf32> -> vector<8x384xf32>
    %345 = arith.addf %341, %344 : vector<8x384xf32>
    %346 = math.tanh %345 : vector<8x384xf32>
    %347 = vector.extract_strided_slice %346 {offsets = [0, 0], sizes = [8, 96], strides = [1, 1]} : vector<8x384xf32> to vector<8x96xf32>
    %cst_150 = arith.constant 5.000000e-01 : f32
    %348 = vector.broadcast %cst_150 : f32 to vector<8x96xf32>
    %349 = arith.mulf %348, %347 : vector<8x96xf32>
    %cst_151 = arith.constant 5.000000e-01 : f32
    %350 = vector.broadcast %cst_151 : f32 to vector<8x96xf32>
    %351 = arith.addf %349, %350 : vector<8x96xf32>
    %352 = vector.extract_strided_slice %346 {offsets = [0, 96], sizes = [8, 96], strides = [1, 1]} : vector<8x384xf32> to vector<8x96xf32>
    %cst_152 = arith.constant 5.000000e-01 : f32
    %353 = vector.broadcast %cst_152 : f32 to vector<8x96xf32>
    %354 = arith.mulf %353, %352 : vector<8x96xf32>
    %cst_153 = arith.constant 5.000000e-01 : f32
    %355 = vector.broadcast %cst_153 : f32 to vector<8x96xf32>
    %356 = arith.addf %354, %355 : vector<8x96xf32>
    %357 = vector.extract_strided_slice %346 {offsets = [0, 192], sizes = [8, 96], strides = [1, 1]} : vector<8x384xf32> to vector<8x96xf32>
    %cst_154 = arith.constant 5.000000e-01 : f32
    %358 = vector.broadcast %cst_154 : f32 to vector<8x96xf32>
    %359 = arith.mulf %358, %357 : vector<8x96xf32>
    %cst_155 = arith.constant 5.000000e-01 : f32
    %360 = vector.broadcast %cst_155 : f32 to vector<8x96xf32>
    %361 = arith.addf %359, %360 : vector<8x96xf32>
    %362 = vector.extract_strided_slice %346 {offsets = [0, 288], sizes = [8, 96], strides = [1, 1]} : vector<8x384xf32> to vector<8x96xf32>
    %363 = arith.mulf %356, %331 : vector<8x96xf32>
    %364 = arith.mulf %351, %362 : vector<8x96xf32>
    %365 = arith.addf %363, %364 : vector<8x96xf32>
    %366 = math.tanh %365 : vector<8x96xf32>
    %367 = arith.mulf %361, %366 : vector<8x96xf32>
    %cst_156 = arith.constant 0.000000e+00 : f32
    %368 = vector.broadcast %cst_156 : f32 to vector<8x32xf32>
    %369 = tpu.concatenate %367, %368 in 1 : vector<8x96xf32>, vector<8x32xf32> -> vector<8x128xf32>
    %370 = arith.index_cast %339 : i32 to index
    %c0_157 = arith.constant 0 : index
    %371 = vector.load %arg20[%370, %c0_157] : memref<64x128xf32, #tpu.memory_space<vmem>>, vector<8x128xf32>
    tpu.vector_store %arg20[%370, %c0_157], %369 {strides = array<i32>} : memref<64x128xf32, #tpu.memory_space<vmem>>, vector<8x128xf32>,
    %c2_i32_158 = arith.constant 2 : i32
    %c8_i32_159 = arith.constant 8 : i32
    %372 = arith.muli %c2_i32_158, %c8_i32_159 : i32
    %373 = tpu.assume_multiple %372, 8 : i32
    %374 = arith.index_cast %373 : i32 to index
    %c0_160 = arith.constant 0 : index
    %375 = vector.load %arg18[%374, %c0_160] : memref<64x384xf32, #tpu.memory_space<vmem>>, vector<8x384xf32>
    %376 = arith.truncf %367 : vector<8x96xf32> to vector<8x96xbf16>
    %c0_161 = arith.constant 0 : index
    %c0_162 = arith.constant 0 : index
    %377 = vector.load %arg14[%c0_161, %c0_162] : memref<96x384xbf16, #tpu.memory_space<vmem>>, vector<96x384xbf16>
    %cst_163 = arith.constant dense<0.000000e+00> : vector<8x384xf32>
    %378 = tpu.matmul %376, %377, %cst_163 {dimension_numbers = #tpu.dot_dimension_numbers<[1], [0], [0], [1], [0, 0, 1, 1], [], []>} : vector<8x96xbf16>, vector<96x384xbf16>, vector<8x384xf32> -> vector<8x384xf32>
    %379 = arith.addf %375, %378 : vector<8x384xf32>
    %380 = math.tanh %379 : vector<8x384xf32>
    %381 = vector.extract_strided_slice %380 {offsets = [0, 0], sizes = [8, 96], strides = [1, 1]} : vector<8x384xf32> to vector<8x96xf32>
    %cst_164 = arith.constant 5.000000e-01 : f32
    %382 = vector.broadcast %cst_164 : f32 to vector<8x96xf32>
    %383 = arith.mulf %382, %381 : vector<8x96xf32>
    %cst_165 = arith.constant 5.000000e-01 : f32
    %384 = vector.broadcast %cst_165 : f32 to vector<8x96xf32>
    %385 = arith.addf %383, %384 : vector<8x96xf32>
    %386 = vector.extract_strided_slice %380 {offsets = [0, 96], sizes = [8, 96], strides = [1, 1]} : vector<8x384xf32> to vector<8x96xf32>
    %cst_166 = arith.constant 5.000000e-01 : f32
    %387 = vector.broadcast %cst_166 : f32 to vector<8x96xf32>
    %388 = arith.mulf %387, %386 : vector<8x96xf32>
    %cst_167 = arith.constant 5.000000e-01 : f32
    %389 = vector.broadcast %cst_167 : f32 to vector<8x96xf32>
    %390 = arith.addf %388, %389 : vector<8x96xf32>
    %391 = vector.extract_strided_slice %380 {offsets = [0, 192], sizes = [8, 96], strides = [1, 1]} : vector<8x384xf32> to vector<8x96xf32>
    %cst_168 = arith.constant 5.000000e-01 : f32
    %392 = vector.broadcast %cst_168 : f32 to vector<8x96xf32>
    %393 = arith.mulf %392, %391 : vector<8x96xf32>
    %cst_169 = arith.constant 5.000000e-01 : f32
    %394 = vector.broadcast %cst_169 : f32 to vector<8x96xf32>
    %395 = arith.addf %393, %394 : vector<8x96xf32>
    %396 = vector.extract_strided_slice %380 {offsets = [0, 288], sizes = [8, 96], strides = [1, 1]} : vector<8x384xf32> to vector<8x96xf32>
    %397 = arith.mulf %390, %365 : vector<8x96xf32>
    %398 = arith.mulf %385, %396 : vector<8x96xf32>
    %399 = arith.addf %397, %398 : vector<8x96xf32>
    %400 = math.tanh %399 : vector<8x96xf32>
    %401 = arith.mulf %395, %400 : vector<8x96xf32>
    %cst_170 = arith.constant 0.000000e+00 : f32
    %402 = vector.broadcast %cst_170 : f32 to vector<8x32xf32>
    %403 = tpu.concatenate %401, %402 in 1 : vector<8x96xf32>, vector<8x32xf32> -> vector<8x128xf32>
    %404 = arith.index_cast %373 : i32 to index
    %c0_171 = arith.constant 0 : index
    %405 = vector.load %arg20[%404, %c0_171] : memref<64x128xf32, #tpu.memory_space<vmem>>, vector<8x128xf32>
    tpu.vector_store %arg20[%404, %c0_171], %403 {strides = array<i32>} : memref<64x128xf32, #tpu.memory_space<vmem>>, vector<8x128xf32>,
    %c3_i32_172 = arith.constant 3 : i32
    %c8_i32_173 = arith.constant 8 : i32
    %406 = arith.muli %c3_i32_172, %c8_i32_173 : i32
    %407 = tpu.assume_multiple %406, 8 : i32
    %408 = arith.index_cast %407 : i32 to index
    %c0_174 = arith.constant 0 : index
    %409 = vector.load %arg18[%408, %c0_174] : memref<64x384xf32, #tpu.memory_space<vmem>>, vector<8x384xf32>
    %410 = arith.truncf %401 : vector<8x96xf32> to vector<8x96xbf16>
    %c0_175 = arith.constant 0 : index
    %c0_176 = arith.constant 0 : index
    %411 = vector.load %arg14[%c0_175, %c0_176] : memref<96x384xbf16, #tpu.memory_space<vmem>>, vector<96x384xbf16>
    %cst_177 = arith.constant dense<0.000000e+00> : vector<8x384xf32>
    %412 = tpu.matmul %410, %411, %cst_177 {dimension_numbers = #tpu.dot_dimension_numbers<[1], [0], [0], [1], [0, 0, 1, 1], [], []>} : vector<8x96xbf16>, vector<96x384xbf16>, vector<8x384xf32> -> vector<8x384xf32>
    %413 = arith.addf %409, %412 : vector<8x384xf32>
    %414 = math.tanh %413 : vector<8x384xf32>
    %415 = vector.extract_strided_slice %414 {offsets = [0, 0], sizes = [8, 96], strides = [1, 1]} : vector<8x384xf32> to vector<8x96xf32>
    %cst_178 = arith.constant 5.000000e-01 : f32
    %416 = vector.broadcast %cst_178 : f32 to vector<8x96xf32>
    %417 = arith.mulf %416, %415 : vector<8x96xf32>
    %cst_179 = arith.constant 5.000000e-01 : f32
    %418 = vector.broadcast %cst_179 : f32 to vector<8x96xf32>
    %419 = arith.addf %417, %418 : vector<8x96xf32>
    %420 = vector.extract_strided_slice %414 {offsets = [0, 96], sizes = [8, 96], strides = [1, 1]} : vector<8x384xf32> to vector<8x96xf32>
    %cst_180 = arith.constant 5.000000e-01 : f32
    %421 = vector.broadcast %cst_180 : f32 to vector<8x96xf32>
    %422 = arith.mulf %421, %420 : vector<8x96xf32>
    %cst_181 = arith.constant 5.000000e-01 : f32
    %423 = vector.broadcast %cst_181 : f32 to vector<8x96xf32>
    %424 = arith.addf %422, %423 : vector<8x96xf32>
    %425 = vector.extract_strided_slice %414 {offsets = [0, 192], sizes = [8, 96], strides = [1, 1]} : vector<8x384xf32> to vector<8x96xf32>
    %cst_182 = arith.constant 5.000000e-01 : f32
    %426 = vector.broadcast %cst_182 : f32 to vector<8x96xf32>
    %427 = arith.mulf %426, %425 : vector<8x96xf32>
    %cst_183 = arith.constant 5.000000e-01 : f32
    %428 = vector.broadcast %cst_183 : f32 to vector<8x96xf32>
    %429 = arith.addf %427, %428 : vector<8x96xf32>
    %430 = vector.extract_strided_slice %414 {offsets = [0, 288], sizes = [8, 96], strides = [1, 1]} : vector<8x384xf32> to vector<8x96xf32>
    %431 = arith.mulf %424, %399 : vector<8x96xf32>
    %432 = arith.mulf %419, %430 : vector<8x96xf32>
    %433 = arith.addf %431, %432 : vector<8x96xf32>
    %434 = math.tanh %433 : vector<8x96xf32>
    %435 = arith.mulf %429, %434 : vector<8x96xf32>
    %cst_184 = arith.constant 0.000000e+00 : f32
    %436 = vector.broadcast %cst_184 : f32 to vector<8x32xf32>
    %437 = tpu.concatenate %435, %436 in 1 : vector<8x96xf32>, vector<8x32xf32> -> vector<8x128xf32>
    %438 = arith.index_cast %407 : i32 to index
    %c0_185 = arith.constant 0 : index
    %439 = vector.load %arg20[%438, %c0_185] : memref<64x128xf32, #tpu.memory_space<vmem>>, vector<8x128xf32>
    tpu.vector_store %arg20[%438, %c0_185], %437 {strides = array<i32>} : memref<64x128xf32, #tpu.memory_space<vmem>>, vector<8x128xf32>,
    %c4_i32_186 = arith.constant 4 : i32
    %c8_i32_187 = arith.constant 8 : i32
    %440 = arith.muli %c4_i32_186, %c8_i32_187 : i32
    %441 = tpu.assume_multiple %440, 8 : i32
    %442 = arith.index_cast %441 : i32 to index
    %c0_188 = arith.constant 0 : index
    %443 = vector.load %arg18[%442, %c0_188] : memref<64x384xf32, #tpu.memory_space<vmem>>, vector<8x384xf32>
    %444 = arith.truncf %435 : vector<8x96xf32> to vector<8x96xbf16>
    %c0_189 = arith.constant 0 : index
    %c0_190 = arith.constant 0 : index
    %445 = vector.load %arg14[%c0_189, %c0_190] : memref<96x384xbf16, #tpu.memory_space<vmem>>, vector<96x384xbf16>
    %cst_191 = arith.constant dense<0.000000e+00> : vector<8x384xf32>
    %446 = tpu.matmul %444, %445, %cst_191 {dimension_numbers = #tpu.dot_dimension_numbers<[1], [0], [0], [1], [0, 0, 1, 1], [], []>} : vector<8x96xbf16>, vector<96x384xbf16>, vector<8x384xf32> -> vector<8x384xf32>
    %447 = arith.addf %443, %446 : vector<8x384xf32>
    %448 = math.tanh %447 : vector<8x384xf32>
    %449 = vector.extract_strided_slice %448 {offsets = [0, 0], sizes = [8, 96], strides = [1, 1]} : vector<8x384xf32> to vector<8x96xf32>
    %cst_192 = arith.constant 5.000000e-01 : f32
    %450 = vector.broadcast %cst_192 : f32 to vector<8x96xf32>
    %451 = arith.mulf %450, %449 : vector<8x96xf32>
    %cst_193 = arith.constant 5.000000e-01 : f32
    %452 = vector.broadcast %cst_193 : f32 to vector<8x96xf32>
    %453 = arith.addf %451, %452 : vector<8x96xf32>
    %454 = vector.extract_strided_slice %448 {offsets = [0, 96], sizes = [8, 96], strides = [1, 1]} : vector<8x384xf32> to vector<8x96xf32>
    %cst_194 = arith.constant 5.000000e-01 : f32
    %455 = vector.broadcast %cst_194 : f32 to vector<8x96xf32>
    %456 = arith.mulf %455, %454 : vector<8x96xf32>
    %cst_195 = arith.constant 5.000000e-01 : f32
    %457 = vector.broadcast %cst_195 : f32 to vector<8x96xf32>
    %458 = arith.addf %456, %457 : vector<8x96xf32>
    %459 = vector.extract_strided_slice %448 {offsets = [0, 192], sizes = [8, 96], strides = [1, 1]} : vector<8x384xf32> to vector<8x96xf32>
    %cst_196 = arith.constant 5.000000e-01 : f32
    %460 = vector.broadcast %cst_196 : f32 to vector<8x96xf32>
    %461 = arith.mulf %460, %459 : vector<8x96xf32>
    %cst_197 = arith.constant 5.000000e-01 : f32
    %462 = vector.broadcast %cst_197 : f32 to vector<8x96xf32>
    %463 = arith.addf %461, %462 : vector<8x96xf32>
    %464 = vector.extract_strided_slice %448 {offsets = [0, 288], sizes = [8, 96], strides = [1, 1]} : vector<8x384xf32> to vector<8x96xf32>
    %465 = arith.mulf %458, %433 : vector<8x96xf32>
    %466 = arith.mulf %453, %464 : vector<8x96xf32>
    %467 = arith.addf %465, %466 : vector<8x96xf32>
    %468 = math.tanh %467 : vector<8x96xf32>
    %469 = arith.mulf %463, %468 : vector<8x96xf32>
    %cst_198 = arith.constant 0.000000e+00 : f32
    %470 = vector.broadcast %cst_198 : f32 to vector<8x32xf32>
    %471 = tpu.concatenate %469, %470 in 1 : vector<8x96xf32>, vector<8x32xf32> -> vector<8x128xf32>
    %472 = arith.index_cast %441 : i32 to index
    %c0_199 = arith.constant 0 : index
    %473 = vector.load %arg20[%472, %c0_199] : memref<64x128xf32, #tpu.memory_space<vmem>>, vector<8x128xf32>
    tpu.vector_store %arg20[%472, %c0_199], %471 {strides = array<i32>} : memref<64x128xf32, #tpu.memory_space<vmem>>, vector<8x128xf32>,
    %c5_i32_200 = arith.constant 5 : i32
    %c8_i32_201 = arith.constant 8 : i32
    %474 = arith.muli %c5_i32_200, %c8_i32_201 : i32
    %475 = tpu.assume_multiple %474, 8 : i32
    %476 = arith.index_cast %475 : i32 to index
    %c0_202 = arith.constant 0 : index
    %477 = vector.load %arg18[%476, %c0_202] : memref<64x384xf32, #tpu.memory_space<vmem>>, vector<8x384xf32>
    %478 = arith.truncf %469 : vector<8x96xf32> to vector<8x96xbf16>
    %c0_203 = arith.constant 0 : index
    %c0_204 = arith.constant 0 : index
    %479 = vector.load %arg14[%c0_203, %c0_204] : memref<96x384xbf16, #tpu.memory_space<vmem>>, vector<96x384xbf16>
    %cst_205 = arith.constant dense<0.000000e+00> : vector<8x384xf32>
    %480 = tpu.matmul %478, %479, %cst_205 {dimension_numbers = #tpu.dot_dimension_numbers<[1], [0], [0], [1], [0, 0, 1, 1], [], []>} : vector<8x96xbf16>, vector<96x384xbf16>, vector<8x384xf32> -> vector<8x384xf32>
    %481 = arith.addf %477, %480 : vector<8x384xf32>
    %482 = math.tanh %481 : vector<8x384xf32>
    %483 = vector.extract_strided_slice %482 {offsets = [0, 0], sizes = [8, 96], strides = [1, 1]} : vector<8x384xf32> to vector<8x96xf32>
    %cst_206 = arith.constant 5.000000e-01 : f32
    %484 = vector.broadcast %cst_206 : f32 to vector<8x96xf32>
    %485 = arith.mulf %484, %483 : vector<8x96xf32>
    %cst_207 = arith.constant 5.000000e-01 : f32
    %486 = vector.broadcast %cst_207 : f32 to vector<8x96xf32>
    %487 = arith.addf %485, %486 : vector<8x96xf32>
    %488 = vector.extract_strided_slice %482 {offsets = [0, 96], sizes = [8, 96], strides = [1, 1]} : vector<8x384xf32> to vector<8x96xf32>
    %cst_208 = arith.constant 5.000000e-01 : f32
    %489 = vector.broadcast %cst_208 : f32 to vector<8x96xf32>
    %490 = arith.mulf %489, %488 : vector<8x96xf32>
    %cst_209 = arith.constant 5.000000e-01 : f32
    %491 = vector.broadcast %cst_209 : f32 to vector<8x96xf32>
    %492 = arith.addf %490, %491 : vector<8x96xf32>
    %493 = vector.extract_strided_slice %482 {offsets = [0, 192], sizes = [8, 96], strides = [1, 1]} : vector<8x384xf32> to vector<8x96xf32>
    %cst_210 = arith.constant 5.000000e-01 : f32
    %494 = vector.broadcast %cst_210 : f32 to vector<8x96xf32>
    %495 = arith.mulf %494, %493 : vector<8x96xf32>
    %cst_211 = arith.constant 5.000000e-01 : f32
    %496 = vector.broadcast %cst_211 : f32 to vector<8x96xf32>
    %497 = arith.addf %495, %496 : vector<8x96xf32>
    %498 = vector.extract_strided_slice %482 {offsets = [0, 288], sizes = [8, 96], strides = [1, 1]} : vector<8x384xf32> to vector<8x96xf32>
    %499 = arith.mulf %492, %467 : vector<8x96xf32>
    %500 = arith.mulf %487, %498 : vector<8x96xf32>
    %501 = arith.addf %499, %500 : vector<8x96xf32>
    %502 = math.tanh %501 : vector<8x96xf32>
    %503 = arith.mulf %497, %502 : vector<8x96xf32>
    %cst_212 = arith.constant 0.000000e+00 : f32
    %504 = vector.broadcast %cst_212 : f32 to vector<8x32xf32>
    %505 = tpu.concatenate %503, %504 in 1 : vector<8x96xf32>, vector<8x32xf32> -> vector<8x128xf32>
    %506 = arith.index_cast %475 : i32 to index
    %c0_213 = arith.constant 0 : index
    %507 = vector.load %arg20[%506, %c0_213] : memref<64x128xf32, #tpu.memory_space<vmem>>, vector<8x128xf32>
    tpu.vector_store %arg20[%506, %c0_213], %505 {strides = array<i32>} : memref<64x128xf32, #tpu.memory_space<vmem>>, vector<8x128xf32>,
    %c6_i32_214 = arith.constant 6 : i32
    %c8_i32_215 = arith.constant 8 : i32
    %508 = arith.muli %c6_i32_214, %c8_i32_215 : i32
    %509 = tpu.assume_multiple %508, 8 : i32
    %510 = arith.index_cast %509 : i32 to index
    %c0_216 = arith.constant 0 : index
    %511 = vector.load %arg18[%510, %c0_216] : memref<64x384xf32, #tpu.memory_space<vmem>>, vector<8x384xf32>
    %512 = arith.truncf %503 : vector<8x96xf32> to vector<8x96xbf16>
    %c0_217 = arith.constant 0 : index
    %c0_218 = arith.constant 0 : index
    %513 = vector.load %arg14[%c0_217, %c0_218] : memref<96x384xbf16, #tpu.memory_space<vmem>>, vector<96x384xbf16>
    %cst_219 = arith.constant dense<0.000000e+00> : vector<8x384xf32>
    %514 = tpu.matmul %512, %513, %cst_219 {dimension_numbers = #tpu.dot_dimension_numbers<[1], [0], [0], [1], [0, 0, 1, 1], [], []>} : vector<8x96xbf16>, vector<96x384xbf16>, vector<8x384xf32> -> vector<8x384xf32>
    %515 = arith.addf %511, %514 : vector<8x384xf32>
    %516 = math.tanh %515 : vector<8x384xf32>
    %517 = vector.extract_strided_slice %516 {offsets = [0, 0], sizes = [8, 96], strides = [1, 1]} : vector<8x384xf32> to vector<8x96xf32>
    %cst_220 = arith.constant 5.000000e-01 : f32
    %518 = vector.broadcast %cst_220 : f32 to vector<8x96xf32>
    %519 = arith.mulf %518, %517 : vector<8x96xf32>
    %cst_221 = arith.constant 5.000000e-01 : f32
    %520 = vector.broadcast %cst_221 : f32 to vector<8x96xf32>
    %521 = arith.addf %519, %520 : vector<8x96xf32>
    %522 = vector.extract_strided_slice %516 {offsets = [0, 96], sizes = [8, 96], strides = [1, 1]} : vector<8x384xf32> to vector<8x96xf32>
    %cst_222 = arith.constant 5.000000e-01 : f32
    %523 = vector.broadcast %cst_222 : f32 to vector<8x96xf32>
    %524 = arith.mulf %523, %522 : vector<8x96xf32>
    %cst_223 = arith.constant 5.000000e-01 : f32
    %525 = vector.broadcast %cst_223 : f32 to vector<8x96xf32>
    %526 = arith.addf %524, %525 : vector<8x96xf32>
    %527 = vector.extract_strided_slice %516 {offsets = [0, 192], sizes = [8, 96], strides = [1, 1]} : vector<8x384xf32> to vector<8x96xf32>
    %cst_224 = arith.constant 5.000000e-01 : f32
    %528 = vector.broadcast %cst_224 : f32 to vector<8x96xf32>
    %529 = arith.mulf %528, %527 : vector<8x96xf32>
    %cst_225 = arith.constant 5.000000e-01 : f32
    %530 = vector.broadcast %cst_225 : f32 to vector<8x96xf32>
    %531 = arith.addf %529, %530 : vector<8x96xf32>
    %532 = vector.extract_strided_slice %516 {offsets = [0, 288], sizes = [8, 96], strides = [1, 1]} : vector<8x384xf32> to vector<8x96xf32>
    %533 = arith.mulf %526, %501 : vector<8x96xf32>
    %534 = arith.mulf %521, %532 : vector<8x96xf32>
    %535 = arith.addf %533, %534 : vector<8x96xf32>
    %536 = math.tanh %535 : vector<8x96xf32>
    %537 = arith.mulf %531, %536 : vector<8x96xf32>
    %cst_226 = arith.constant 0.000000e+00 : f32
    %538 = vector.broadcast %cst_226 : f32 to vector<8x32xf32>
    %539 = tpu.concatenate %537, %538 in 1 : vector<8x96xf32>, vector<8x32xf32> -> vector<8x128xf32>
    %540 = arith.index_cast %509 : i32 to index
    %c0_227 = arith.constant 0 : index
    %541 = vector.load %arg20[%540, %c0_227] : memref<64x128xf32, #tpu.memory_space<vmem>>, vector<8x128xf32>
    tpu.vector_store %arg20[%540, %c0_227], %539 {strides = array<i32>} : memref<64x128xf32, #tpu.memory_space<vmem>>, vector<8x128xf32>,
    %c7_i32_228 = arith.constant 7 : i32
    %c8_i32_229 = arith.constant 8 : i32
    %542 = arith.muli %c7_i32_228, %c8_i32_229 : i32
    %543 = tpu.assume_multiple %542, 8 : i32
    %544 = arith.index_cast %543 : i32 to index
    %c0_230 = arith.constant 0 : index
    %545 = vector.load %arg18[%544, %c0_230] : memref<64x384xf32, #tpu.memory_space<vmem>>, vector<8x384xf32>
    %546 = arith.truncf %537 : vector<8x96xf32> to vector<8x96xbf16>
    %c0_231 = arith.constant 0 : index
    %c0_232 = arith.constant 0 : index
    %547 = vector.load %arg14[%c0_231, %c0_232] : memref<96x384xbf16, #tpu.memory_space<vmem>>, vector<96x384xbf16>
    %cst_233 = arith.constant dense<0.000000e+00> : vector<8x384xf32>
    %548 = tpu.matmul %546, %547, %cst_233 {dimension_numbers = #tpu.dot_dimension_numbers<[1], [0], [0], [1], [0, 0, 1, 1], [], []>} : vector<8x96xbf16>, vector<96x384xbf16>, vector<8x384xf32> -> vector<8x384xf32>
    %549 = arith.addf %545, %548 : vector<8x384xf32>
    %550 = math.tanh %549 : vector<8x384xf32>
    %551 = vector.extract_strided_slice %550 {offsets = [0, 0], sizes = [8, 96], strides = [1, 1]} : vector<8x384xf32> to vector<8x96xf32>
    %cst_234 = arith.constant 5.000000e-01 : f32
    %552 = vector.broadcast %cst_234 : f32 to vector<8x96xf32>
    %553 = arith.mulf %552, %551 : vector<8x96xf32>
    %cst_235 = arith.constant 5.000000e-01 : f32
    %554 = vector.broadcast %cst_235 : f32 to vector<8x96xf32>
    %555 = arith.addf %553, %554 : vector<8x96xf32>
    %556 = vector.extract_strided_slice %550 {offsets = [0, 96], sizes = [8, 96], strides = [1, 1]} : vector<8x384xf32> to vector<8x96xf32>
    %cst_236 = arith.constant 5.000000e-01 : f32
    %557 = vector.broadcast %cst_236 : f32 to vector<8x96xf32>
    %558 = arith.mulf %557, %556 : vector<8x96xf32>
    %cst_237 = arith.constant 5.000000e-01 : f32
    %559 = vector.broadcast %cst_237 : f32 to vector<8x96xf32>
    %560 = arith.addf %558, %559 : vector<8x96xf32>
    %561 = vector.extract_strided_slice %550 {offsets = [0, 192], sizes = [8, 96], strides = [1, 1]} : vector<8x384xf32> to vector<8x96xf32>
    %cst_238 = arith.constant 5.000000e-01 : f32
    %562 = vector.broadcast %cst_238 : f32 to vector<8x96xf32>
    %563 = arith.mulf %562, %561 : vector<8x96xf32>
    %cst_239 = arith.constant 5.000000e-01 : f32
    %564 = vector.broadcast %cst_239 : f32 to vector<8x96xf32>
    %565 = arith.addf %563, %564 : vector<8x96xf32>
    %566 = vector.extract_strided_slice %550 {offsets = [0, 288], sizes = [8, 96], strides = [1, 1]} : vector<8x384xf32> to vector<8x96xf32>
    %567 = arith.mulf %560, %535 : vector<8x96xf32>
    %568 = arith.mulf %555, %566 : vector<8x96xf32>
    %569 = arith.addf %567, %568 : vector<8x96xf32>
    %570 = math.tanh %569 : vector<8x96xf32>
    %571 = arith.mulf %565, %570 : vector<8x96xf32>
    %cst_240 = arith.constant 0.000000e+00 : f32
    %572 = vector.broadcast %cst_240 : f32 to vector<8x32xf32>
    %573 = tpu.concatenate %571, %572 in 1 : vector<8x96xf32>, vector<8x32xf32> -> vector<8x128xf32>
    %574 = arith.index_cast %543 : i32 to index
    %c0_241 = arith.constant 0 : index
    %575 = vector.load %arg20[%574, %c0_241] : memref<64x128xf32, #tpu.memory_space<vmem>>, vector<8x128xf32>
    tpu.vector_store %arg20[%574, %c0_241], %573 {strides = array<i32>} : memref<64x128xf32, #tpu.memory_space<vmem>>, vector<8x128xf32>,
    %c8_i32_242 = arith.constant 8 : i32
    %c0_243 = arith.constant 0 : index
    %c0_244 = arith.constant 0 : index
    %576 = vector.load %arg10[%c0_243, %c0_244] : memref<1x512xf32, #tpu.memory_space<vmem>>, vector<1x512xf32>
    %c2_i32_245 = arith.constant 2 : i32
    %577 = tpu.memref_slice %arg21[%c2_i32_245] : memref<4x!tpu.dma_semaphore, #tpu.memory_space<semaphore_mem>> -> memref<1x!tpu.dma_semaphore, #tpu.memory_space<semaphore_mem>>
    %578 = tpu.memref_squeeze %577 : memref<1x!tpu.dma_semaphore, #tpu.memory_space<semaphore_mem>> -> memref<!tpu.dma_semaphore, #tpu.memory_space<semaphore_mem>>
    tpu.wait_dma2 semaphore(%578 : memref<!tpu.dma_semaphore, #tpu.memory_space<semaphore_mem>>) src(%arg8 : memref<128x512xbf16, #tpu.memory_space<any>>) dst(%arg15 : memref<128x512xbf16, #tpu.memory_space<vmem>>)
    %c3_i32_246 = arith.constant 3 : i32
    %579 = tpu.memref_slice %arg21[%c3_i32_246] : memref<4x!tpu.dma_semaphore, #tpu.memory_space<semaphore_mem>> -> memref<1x!tpu.dma_semaphore, #tpu.memory_space<semaphore_mem>>
    %580 = tpu.memref_squeeze %579 : memref<1x!tpu.dma_semaphore, #tpu.memory_space<semaphore_mem>> -> memref<!tpu.dma_semaphore, #tpu.memory_space<semaphore_mem>>
    tpu.wait_dma2 semaphore(%580 : memref<!tpu.dma_semaphore, #tpu.memory_space<semaphore_mem>>) src(%arg9 : memref<128x512xbf16, #tpu.memory_space<any>>) dst(%arg16 : memref<128x512xbf16, #tpu.memory_space<vmem>>)
    %c0_247 = arith.constant 0 : index
    %c0_248 = arith.constant 0 : index
    %581 = vector.load %arg20[%c0_247, %c0_248] : memref<64x128xf32, #tpu.memory_space<vmem>>, vector<64x128xf32>
    %c0_249 = arith.constant 0 : index
    %c0_250 = arith.constant 0 : index
    %582 = vector.load %arg15[%c0_249, %c0_250] : memref<128x512xbf16, #tpu.memory_space<vmem>>, vector<128x512xbf16>
    %583 = arith.truncf %581 : vector<64x128xf32> to vector<64x128xbf16>
    %cst_251 = arith.constant dense<0.000000e+00> : vector<64x512xf32>
    %584 = tpu.matmul %583, %582, %cst_251 {dimension_numbers = #tpu.dot_dimension_numbers<[1], [0], [0], [1], [0, 0, 1, 1], [], []>} : vector<64x128xbf16>, vector<128x512xbf16>, vector<64x512xf32> -> vector<64x512xf32>
    %585 = vector.broadcast %576 : vector<1x512xf32> to vector<64x512xf32>
    %586 = arith.addf %584, %585 : vector<64x512xf32>
    %c0_252 = arith.constant 0 : index
    %c0_253 = arith.constant 0 : index
    %587 = vector.load %arg19[%c0_252, %c0_253] : memref<64x512xf32, #tpu.memory_space<vmem>>, vector<64x512xf32>
    tpu.vector_store %arg19[%c0_252, %c0_253], %586 {strides = array<i32>} : memref<64x512xf32, #tpu.memory_space<vmem>>, vector<64x512xf32>,
    %cst_254 = arith.constant 0.000000e+00 : f32
    %588 = vector.broadcast %cst_254 : f32 to vector<8x128xf32>
    %cst_255 = arith.constant 0.000000e+00 : f32
    %589 = vector.broadcast %cst_255 : f32 to vector<8x128xf32>
    %c0_i32_256 = arith.constant 0 : i32
    %c8_i32_257 = arith.constant 8 : i32
    %590 = arith.muli %c0_i32_256, %c8_i32_257 : i32
    %591 = tpu.assume_multiple %590, 8 : i32
    %592 = arith.index_cast %591 : i32 to index
    %c0_258 = arith.constant 0 : index
    %593 = vector.load %arg19[%592, %c0_258] : memref<64x512xf32, #tpu.memory_space<vmem>>, vector<8x512xf32>
    %594 = arith.truncf %588 : vector<8x128xf32> to vector<8x128xbf16>
    %c0_259 = arith.constant 0 : index
    %c0_260 = arith.constant 0 : index
    %595 = vector.load %arg16[%c0_259, %c0_260] : memref<128x512xbf16, #tpu.memory_space<vmem>>, vector<128x512xbf16>
    %cst_261 = arith.constant dense<0.000000e+00> : vector<8x512xf32>
    %596 = tpu.matmul %594, %595, %cst_261 {dimension_numbers = #tpu.dot_dimension_numbers<[1], [0], [0], [1], [0, 0, 1, 1], [], []>} : vector<8x128xbf16>, vector<128x512xbf16>, vector<8x512xf32> -> vector<8x512xf32>
    %597 = arith.addf %593, %596 : vector<8x512xf32>
    %598 = math.tanh %597 : vector<8x512xf32>
    %599 = vector.extract_strided_slice %598 {offsets = [0, 0], sizes = [8, 128], strides = [1, 1]} : vector<8x512xf32> to vector<8x128xf32>
    %cst_262 = arith.constant 5.000000e-01 : f32
    %600 = vector.broadcast %cst_262 : f32 to vector<8x128xf32>
    %601 = arith.mulf %600, %599 : vector<8x128xf32>
    %cst_263 = arith.constant 5.000000e-01 : f32
    %602 = vector.broadcast %cst_263 : f32 to vector<8x128xf32>
    %603 = arith.addf %601, %602 : vector<8x128xf32>
    %604 = vector.extract_strided_slice %598 {offsets = [0, 128], sizes = [8, 128], strides = [1, 1]} : vector<8x512xf32> to vector<8x128xf32>
    %cst_264 = arith.constant 5.000000e-01 : f32
    %605 = vector.broadcast %cst_264 : f32 to vector<8x128xf32>
    %606 = arith.mulf %605, %604 : vector<8x128xf32>
    %cst_265 = arith.constant 5.000000e-01 : f32
    %607 = vector.broadcast %cst_265 : f32 to vector<8x128xf32>
    %608 = arith.addf %606, %607 : vector<8x128xf32>
    %609 = vector.extract_strided_slice %598 {offsets = [0, 256], sizes = [8, 128], strides = [1, 1]} : vector<8x512xf32> to vector<8x128xf32>
    %cst_266 = arith.constant 5.000000e-01 : f32
    %610 = vector.broadcast %cst_266 : f32 to vector<8x128xf32>
    %611 = arith.mulf %610, %609 : vector<8x128xf32>
    %cst_267 = arith.constant 5.000000e-01 : f32
    %612 = vector.broadcast %cst_267 : f32 to vector<8x128xf32>
    %613 = arith.addf %611, %612 : vector<8x128xf32>
    %614 = vector.extract_strided_slice %598 {offsets = [0, 384], sizes = [8, 128], strides = [1, 1]} : vector<8x512xf32> to vector<8x128xf32>
    %615 = arith.mulf %608, %589 : vector<8x128xf32>
    %616 = arith.mulf %603, %614 : vector<8x128xf32>
    %617 = arith.addf %615, %616 : vector<8x128xf32>
    %618 = math.tanh %617 : vector<8x128xf32>
    %619 = arith.mulf %613, %618 : vector<8x128xf32>
    %620 = arith.index_cast %591 : i32 to index
    %c0_268 = arith.constant 0 : index
    %621 = vector.load %arg11[%620, %c0_268] : memref<64x128xf32, #tpu.memory_space<vmem>>, vector<8x128xf32>
    tpu.vector_store %arg11[%620, %c0_268], %619 {strides = array<i32>} : memref<64x128xf32, #tpu.memory_space<vmem>>, vector<8x128xf32>,
    %c1_i32_269 = arith.constant 1 : i32
    %c8_i32_270 = arith.constant 8 : i32
    %622 = arith.muli %c1_i32_269, %c8_i32_270 : i32
    %623 = tpu.assume_multiple %622, 8 : i32
    %624 = arith.index_cast %623 : i32 to index
    %c0_271 = arith.constant 0 : index
    %625 = vector.load %arg19[%624, %c0_271] : memref<64x512xf32, #tpu.memory_space<vmem>>, vector<8x512xf32>
    %626 = arith.truncf %619 : vector<8x128xf32> to vector<8x128xbf16>
    %c0_272 = arith.constant 0 : index
    %c0_273 = arith.constant 0 : index
    %627 = vector.load %arg16[%c0_272, %c0_273] : memref<128x512xbf16, #tpu.memory_space<vmem>>, vector<128x512xbf16>
    %cst_274 = arith.constant dense<0.000000e+00> : vector<8x512xf32>
    %628 = tpu.matmul %626, %627, %cst_274 {dimension_numbers = #tpu.dot_dimension_numbers<[1], [0], [0], [1], [0, 0, 1, 1], [], []>} : vector<8x128xbf16>, vector<128x512xbf16>, vector<8x512xf32> -> vector<8x512xf32>
    %629 = arith.addf %625, %628 : vector<8x512xf32>
    %630 = math.tanh %629 : vector<8x512xf32>
    %631 = vector.extract_strided_slice %630 {offsets = [0, 0], sizes = [8, 128], strides = [1, 1]} : vector<8x512xf32> to vector<8x128xf32>
    %cst_275 = arith.constant 5.000000e-01 : f32
    %632 = vector.broadcast %cst_275 : f32 to vector<8x128xf32>
    %633 = arith.mulf %632, %631 : vector<8x128xf32>
    %cst_276 = arith.constant 5.000000e-01 : f32
    %634 = vector.broadcast %cst_276 : f32 to vector<8x128xf32>
    %635 = arith.addf %633, %634 : vector<8x128xf32>
    %636 = vector.extract_strided_slice %630 {offsets = [0, 128], sizes = [8, 128], strides = [1, 1]} : vector<8x512xf32> to vector<8x128xf32>
    %cst_277 = arith.constant 5.000000e-01 : f32
    %637 = vector.broadcast %cst_277 : f32 to vector<8x128xf32>
    %638 = arith.mulf %637, %636 : vector<8x128xf32>
    %cst_278 = arith.constant 5.000000e-01 : f32
    %639 = vector.broadcast %cst_278 : f32 to vector<8x128xf32>
    %640 = arith.addf %638, %639 : vector<8x128xf32>
    %641 = vector.extract_strided_slice %630 {offsets = [0, 256], sizes = [8, 128], strides = [1, 1]} : vector<8x512xf32> to vector<8x128xf32>
    %cst_279 = arith.constant 5.000000e-01 : f32
    %642 = vector.broadcast %cst_279 : f32 to vector<8x128xf32>
    %643 = arith.mulf %642, %641 : vector<8x128xf32>
    %cst_280 = arith.constant 5.000000e-01 : f32
    %644 = vector.broadcast %cst_280 : f32 to vector<8x128xf32>
    %645 = arith.addf %643, %644 : vector<8x128xf32>
    %646 = vector.extract_strided_slice %630 {offsets = [0, 384], sizes = [8, 128], strides = [1, 1]} : vector<8x512xf32> to vector<8x128xf32>
    %647 = arith.mulf %640, %617 : vector<8x128xf32>
    %648 = arith.mulf %635, %646 : vector<8x128xf32>
    %649 = arith.addf %647, %648 : vector<8x128xf32>
    %650 = math.tanh %649 : vector<8x128xf32>
    %651 = arith.mulf %645, %650 : vector<8x128xf32>
    %652 = arith.index_cast %623 : i32 to index
    %c0_281 = arith.constant 0 : index
    %653 = vector.load %arg11[%652, %c0_281] : memref<64x128xf32, #tpu.memory_space<vmem>>, vector<8x128xf32>
    tpu.vector_store %arg11[%652, %c0_281], %651 {strides = array<i32>} : memref<64x128xf32, #tpu.memory_space<vmem>>, vector<8x128xf32>,
    %c2_i32_282 = arith.constant 2 : i32
    %c8_i32_283 = arith.constant 8 : i32
    %654 = arith.muli %c2_i32_282, %c8_i32_283 : i32
    %655 = tpu.assume_multiple %654, 8 : i32
    %656 = arith.index_cast %655 : i32 to index
    %c0_284 = arith.constant 0 : index
    %657 = vector.load %arg19[%656, %c0_284] : memref<64x512xf32, #tpu.memory_space<vmem>>, vector<8x512xf32>
    %658 = arith.truncf %651 : vector<8x128xf32> to vector<8x128xbf16>
    %c0_285 = arith.constant 0 : index
    %c0_286 = arith.constant 0 : index
    %659 = vector.load %arg16[%c0_285, %c0_286] : memref<128x512xbf16, #tpu.memory_space<vmem>>, vector<128x512xbf16>
    %cst_287 = arith.constant dense<0.000000e+00> : vector<8x512xf32>
    %660 = tpu.matmul %658, %659, %cst_287 {dimension_numbers = #tpu.dot_dimension_numbers<[1], [0], [0], [1], [0, 0, 1, 1], [], []>} : vector<8x128xbf16>, vector<128x512xbf16>, vector<8x512xf32> -> vector<8x512xf32>
    %661 = arith.addf %657, %660 : vector<8x512xf32>
    %662 = math.tanh %661 : vector<8x512xf32>
    %663 = vector.extract_strided_slice %662 {offsets = [0, 0], sizes = [8, 128], strides = [1, 1]} : vector<8x512xf32> to vector<8x128xf32>
    %cst_288 = arith.constant 5.000000e-01 : f32
    %664 = vector.broadcast %cst_288 : f32 to vector<8x128xf32>
    %665 = arith.mulf %664, %663 : vector<8x128xf32>
    %cst_289 = arith.constant 5.000000e-01 : f32
    %666 = vector.broadcast %cst_289 : f32 to vector<8x128xf32>
    %667 = arith.addf %665, %666 : vector<8x128xf32>
    %668 = vector.extract_strided_slice %662 {offsets = [0, 128], sizes = [8, 128], strides = [1, 1]} : vector<8x512xf32> to vector<8x128xf32>
    %cst_290 = arith.constant 5.000000e-01 : f32
    %669 = vector.broadcast %cst_290 : f32 to vector<8x128xf32>
    %670 = arith.mulf %669, %668 : vector<8x128xf32>
    %cst_291 = arith.constant 5.000000e-01 : f32
    %671 = vector.broadcast %cst_291 : f32 to vector<8x128xf32>
    %672 = arith.addf %670, %671 : vector<8x128xf32>
    %673 = vector.extract_strided_slice %662 {offsets = [0, 256], sizes = [8, 128], strides = [1, 1]} : vector<8x512xf32> to vector<8x128xf32>
    %cst_292 = arith.constant 5.000000e-01 : f32
    %674 = vector.broadcast %cst_292 : f32 to vector<8x128xf32>
    %675 = arith.mulf %674, %673 : vector<8x128xf32>
    %cst_293 = arith.constant 5.000000e-01 : f32
    %676 = vector.broadcast %cst_293 : f32 to vector<8x128xf32>
    %677 = arith.addf %675, %676 : vector<8x128xf32>
    %678 = vector.extract_strided_slice %662 {offsets = [0, 384], sizes = [8, 128], strides = [1, 1]} : vector<8x512xf32> to vector<8x128xf32>
    %679 = arith.mulf %672, %649 : vector<8x128xf32>
    %680 = arith.mulf %667, %678 : vector<8x128xf32>
    %681 = arith.addf %679, %680 : vector<8x128xf32>
    %682 = math.tanh %681 : vector<8x128xf32>
    %683 = arith.mulf %677, %682 : vector<8x128xf32>
    %684 = arith.index_cast %655 : i32 to index
    %c0_294 = arith.constant 0 : index
    %685 = vector.load %arg11[%684, %c0_294] : memref<64x128xf32, #tpu.memory_space<vmem>>, vector<8x128xf32>
    tpu.vector_store %arg11[%684, %c0_294], %683 {strides = array<i32>} : memref<64x128xf32, #tpu.memory_space<vmem>>, vector<8x128xf32>,
    %c3_i32_295 = arith.constant 3 : i32
    %c8_i32_296 = arith.constant 8 : i32
    %686 = arith.muli %c3_i32_295, %c8_i32_296 : i32
    %687 = tpu.assume_multiple %686, 8 : i32
    %688 = arith.index_cast %687 : i32 to index
    %c0_297 = arith.constant 0 : index
    %689 = vector.load %arg19[%688, %c0_297] : memref<64x512xf32, #tpu.memory_space<vmem>>, vector<8x512xf32>
    %690 = arith.truncf %683 : vector<8x128xf32> to vector<8x128xbf16>
    %c0_298 = arith.constant 0 : index
    %c0_299 = arith.constant 0 : index
    %691 = vector.load %arg16[%c0_298, %c0_299] : memref<128x512xbf16, #tpu.memory_space<vmem>>, vector<128x512xbf16>
    %cst_300 = arith.constant dense<0.000000e+00> : vector<8x512xf32>
    %692 = tpu.matmul %690, %691, %cst_300 {dimension_numbers = #tpu.dot_dimension_numbers<[1], [0], [0], [1], [0, 0, 1, 1], [], []>} : vector<8x128xbf16>, vector<128x512xbf16>, vector<8x512xf32> -> vector<8x512xf32>
    %693 = arith.addf %689, %692 : vector<8x512xf32>
    %694 = math.tanh %693 : vector<8x512xf32>
    %695 = vector.extract_strided_slice %694 {offsets = [0, 0], sizes = [8, 128], strides = [1, 1]} : vector<8x512xf32> to vector<8x128xf32>
    %cst_301 = arith.constant 5.000000e-01 : f32
    %696 = vector.broadcast %cst_301 : f32 to vector<8x128xf32>
    %697 = arith.mulf %696, %695 : vector<8x128xf32>
    %cst_302 = arith.constant 5.000000e-01 : f32
    %698 = vector.broadcast %cst_302 : f32 to vector<8x128xf32>
    %699 = arith.addf %697, %698 : vector<8x128xf32>
    %700 = vector.extract_strided_slice %694 {offsets = [0, 128], sizes = [8, 128], strides = [1, 1]} : vector<8x512xf32> to vector<8x128xf32>
    %cst_303 = arith.constant 5.000000e-01 : f32
    %701 = vector.broadcast %cst_303 : f32 to vector<8x128xf32>
    %702 = arith.mulf %701, %700 : vector<8x128xf32>
    %cst_304 = arith.constant 5.000000e-01 : f32
    %703 = vector.broadcast %cst_304 : f32 to vector<8x128xf32>
    %704 = arith.addf %702, %703 : vector<8x128xf32>
    %705 = vector.extract_strided_slice %694 {offsets = [0, 256], sizes = [8, 128], strides = [1, 1]} : vector<8x512xf32> to vector<8x128xf32>
    %cst_305 = arith.constant 5.000000e-01 : f32
    %706 = vector.broadcast %cst_305 : f32 to vector<8x128xf32>
    %707 = arith.mulf %706, %705 : vector<8x128xf32>
    %cst_306 = arith.constant 5.000000e-01 : f32
    %708 = vector.broadcast %cst_306 : f32 to vector<8x128xf32>
    %709 = arith.addf %707, %708 : vector<8x128xf32>
    %710 = vector.extract_strided_slice %694 {offsets = [0, 384], sizes = [8, 128], strides = [1, 1]} : vector<8x512xf32> to vector<8x128xf32>
    %711 = arith.mulf %704, %681 : vector<8x128xf32>
    %712 = arith.mulf %699, %710 : vector<8x128xf32>
    %713 = arith.addf %711, %712 : vector<8x128xf32>
    %714 = math.tanh %713 : vector<8x128xf32>
    %715 = arith.mulf %709, %714 : vector<8x128xf32>
    %716 = arith.index_cast %687 : i32 to index
    %c0_307 = arith.constant 0 : index
    %717 = vector.load %arg11[%716, %c0_307] : memref<64x128xf32, #tpu.memory_space<vmem>>, vector<8x128xf32>
    tpu.vector_store %arg11[%716, %c0_307], %715 {strides = array<i32>} : memref<64x128xf32, #tpu.memory_space<vmem>>, vector<8x128xf32>,
    %c4_i32_308 = arith.constant 4 : i32
    %c8_i32_309 = arith.constant 8 : i32
    %718 = arith.muli %c4_i32_308, %c8_i32_309 : i32
    %719 = tpu.assume_multiple %718, 8 : i32
    %720 = arith.index_cast %719 : i32 to index
    %c0_310 = arith.constant 0 : index
    %721 = vector.load %arg19[%720, %c0_310] : memref<64x512xf32, #tpu.memory_space<vmem>>, vector<8x512xf32>
    %722 = arith.truncf %715 : vector<8x128xf32> to vector<8x128xbf16>
    %c0_311 = arith.constant 0 : index
    %c0_312 = arith.constant 0 : index
    %723 = vector.load %arg16[%c0_311, %c0_312] : memref<128x512xbf16, #tpu.memory_space<vmem>>, vector<128x512xbf16>
    %cst_313 = arith.constant dense<0.000000e+00> : vector<8x512xf32>
    %724 = tpu.matmul %722, %723, %cst_313 {dimension_numbers = #tpu.dot_dimension_numbers<[1], [0], [0], [1], [0, 0, 1, 1], [], []>} : vector<8x128xbf16>, vector<128x512xbf16>, vector<8x512xf32> -> vector<8x512xf32>
    %725 = arith.addf %721, %724 : vector<8x512xf32>
    %726 = math.tanh %725 : vector<8x512xf32>
    %727 = vector.extract_strided_slice %726 {offsets = [0, 0], sizes = [8, 128], strides = [1, 1]} : vector<8x512xf32> to vector<8x128xf32>
    %cst_314 = arith.constant 5.000000e-01 : f32
    %728 = vector.broadcast %cst_314 : f32 to vector<8x128xf32>
    %729 = arith.mulf %728, %727 : vector<8x128xf32>
    %cst_315 = arith.constant 5.000000e-01 : f32
    %730 = vector.broadcast %cst_315 : f32 to vector<8x128xf32>
    %731 = arith.addf %729, %730 : vector<8x128xf32>
    %732 = vector.extract_strided_slice %726 {offsets = [0, 128], sizes = [8, 128], strides = [1, 1]} : vector<8x512xf32> to vector<8x128xf32>
    %cst_316 = arith.constant 5.000000e-01 : f32
    %733 = vector.broadcast %cst_316 : f32 to vector<8x128xf32>
    %734 = arith.mulf %733, %732 : vector<8x128xf32>
    %cst_317 = arith.constant 5.000000e-01 : f32
    %735 = vector.broadcast %cst_317 : f32 to vector<8x128xf32>
    %736 = arith.addf %734, %735 : vector<8x128xf32>
    %737 = vector.extract_strided_slice %726 {offsets = [0, 256], sizes = [8, 128], strides = [1, 1]} : vector<8x512xf32> to vector<8x128xf32>
    %cst_318 = arith.constant 5.000000e-01 : f32
    %738 = vector.broadcast %cst_318 : f32 to vector<8x128xf32>
    %739 = arith.mulf %738, %737 : vector<8x128xf32>
    %cst_319 = arith.constant 5.000000e-01 : f32
    %740 = vector.broadcast %cst_319 : f32 to vector<8x128xf32>
    %741 = arith.addf %739, %740 : vector<8x128xf32>
    %742 = vector.extract_strided_slice %726 {offsets = [0, 384], sizes = [8, 128], strides = [1, 1]} : vector<8x512xf32> to vector<8x128xf32>
    %743 = arith.mulf %736, %713 : vector<8x128xf32>
    %744 = arith.mulf %731, %742 : vector<8x128xf32>
    %745 = arith.addf %743, %744 : vector<8x128xf32>
    %746 = math.tanh %745 : vector<8x128xf32>
    %747 = arith.mulf %741, %746 : vector<8x128xf32>
    %748 = arith.index_cast %719 : i32 to index
    %c0_320 = arith.constant 0 : index
    %749 = vector.load %arg11[%748, %c0_320] : memref<64x128xf32, #tpu.memory_space<vmem>>, vector<8x128xf32>
    tpu.vector_store %arg11[%748, %c0_320], %747 {strides = array<i32>} : memref<64x128xf32, #tpu.memory_space<vmem>>, vector<8x128xf32>,
    %c5_i32_321 = arith.constant 5 : i32
    %c8_i32_322 = arith.constant 8 : i32
    %750 = arith.muli %c5_i32_321, %c8_i32_322 : i32
    %751 = tpu.assume_multiple %750, 8 : i32
    %752 = arith.index_cast %751 : i32 to index
    %c0_323 = arith.constant 0 : index
    %753 = vector.load %arg19[%752, %c0_323] : memref<64x512xf32, #tpu.memory_space<vmem>>, vector<8x512xf32>
    %754 = arith.truncf %747 : vector<8x128xf32> to vector<8x128xbf16>
    %c0_324 = arith.constant 0 : index
    %c0_325 = arith.constant 0 : index
    %755 = vector.load %arg16[%c0_324, %c0_325] : memref<128x512xbf16, #tpu.memory_space<vmem>>, vector<128x512xbf16>
    %cst_326 = arith.constant dense<0.000000e+00> : vector<8x512xf32>
    %756 = tpu.matmul %754, %755, %cst_326 {dimension_numbers = #tpu.dot_dimension_numbers<[1], [0], [0], [1], [0, 0, 1, 1], [], []>} : vector<8x128xbf16>, vector<128x512xbf16>, vector<8x512xf32> -> vector<8x512xf32>
    %757 = arith.addf %753, %756 : vector<8x512xf32>
    %758 = math.tanh %757 : vector<8x512xf32>
    %759 = vector.extract_strided_slice %758 {offsets = [0, 0], sizes = [8, 128], strides = [1, 1]} : vector<8x512xf32> to vector<8x128xf32>
    %cst_327 = arith.constant 5.000000e-01 : f32
    %760 = vector.broadcast %cst_327 : f32 to vector<8x128xf32>
    %761 = arith.mulf %760, %759 : vector<8x128xf32>
    %cst_328 = arith.constant 5.000000e-01 : f32
    %762 = vector.broadcast %cst_328 : f32 to vector<8x128xf32>
    %763 = arith.addf %761, %762 : vector<8x128xf32>
    %764 = vector.extract_strided_slice %758 {offsets = [0, 128], sizes = [8, 128], strides = [1, 1]} : vector<8x512xf32> to vector<8x128xf32>
    %cst_329 = arith.constant 5.000000e-01 : f32
    %765 = vector.broadcast %cst_329 : f32 to vector<8x128xf32>
    %766 = arith.mulf %765, %764 : vector<8x128xf32>
    %cst_330 = arith.constant 5.000000e-01 : f32
    %767 = vector.broadcast %cst_330 : f32 to vector<8x128xf32>
    %768 = arith.addf %766, %767 : vector<8x128xf32>
    %769 = vector.extract_strided_slice %758 {offsets = [0, 256], sizes = [8, 128], strides = [1, 1]} : vector<8x512xf32> to vector<8x128xf32>
    %cst_331 = arith.constant 5.000000e-01 : f32
    %770 = vector.broadcast %cst_331 : f32 to vector<8x128xf32>
    %771 = arith.mulf %770, %769 : vector<8x128xf32>
    %cst_332 = arith.constant 5.000000e-01 : f32
    %772 = vector.broadcast %cst_332 : f32 to vector<8x128xf32>
    %773 = arith.addf %771, %772 : vector<8x128xf32>
    %774 = vector.extract_strided_slice %758 {offsets = [0, 384], sizes = [8, 128], strides = [1, 1]} : vector<8x512xf32> to vector<8x128xf32>
    %775 = arith.mulf %768, %745 : vector<8x128xf32>
    %776 = arith.mulf %763, %774 : vector<8x128xf32>
    %777 = arith.addf %775, %776 : vector<8x128xf32>
    %778 = math.tanh %777 : vector<8x128xf32>
    %779 = arith.mulf %773, %778 : vector<8x128xf32>
    %780 = arith.index_cast %751 : i32 to index
    %c0_333 = arith.constant 0 : index
    %781 = vector.load %arg11[%780, %c0_333] : memref<64x128xf32, #tpu.memory_space<vmem>>, vector<8x128xf32>
    tpu.vector_store %arg11[%780, %c0_333], %779 {strides = array<i32>} : memref<64x128xf32, #tpu.memory_space<vmem>>, vector<8x128xf32>,
    %c6_i32_334 = arith.constant 6 : i32
    %c8_i32_335 = arith.constant 8 : i32
    %782 = arith.muli %c6_i32_334, %c8_i32_335 : i32
    %783 = tpu.assume_multiple %782, 8 : i32
    %784 = arith.index_cast %783 : i32 to index
    %c0_336 = arith.constant 0 : index
    %785 = vector.load %arg19[%784, %c0_336] : memref<64x512xf32, #tpu.memory_space<vmem>>, vector<8x512xf32>
    %786 = arith.truncf %779 : vector<8x128xf32> to vector<8x128xbf16>
    %c0_337 = arith.constant 0 : index
    %c0_338 = arith.constant 0 : index
    %787 = vector.load %arg16[%c0_337, %c0_338] : memref<128x512xbf16, #tpu.memory_space<vmem>>, vector<128x512xbf16>
    %cst_339 = arith.constant dense<0.000000e+00> : vector<8x512xf32>
    %788 = tpu.matmul %786, %787, %cst_339 {dimension_numbers = #tpu.dot_dimension_numbers<[1], [0], [0], [1], [0, 0, 1, 1], [], []>} : vector<8x128xbf16>, vector<128x512xbf16>, vector<8x512xf32> -> vector<8x512xf32>
    %789 = arith.addf %785, %788 : vector<8x512xf32>
    %790 = math.tanh %789 : vector<8x512xf32>
    %791 = vector.extract_strided_slice %790 {offsets = [0, 0], sizes = [8, 128], strides = [1, 1]} : vector<8x512xf32> to vector<8x128xf32>
    %cst_340 = arith.constant 5.000000e-01 : f32
    %792 = vector.broadcast %cst_340 : f32 to vector<8x128xf32>
    %793 = arith.mulf %792, %791 : vector<8x128xf32>
    %cst_341 = arith.constant 5.000000e-01 : f32
    %794 = vector.broadcast %cst_341 : f32 to vector<8x128xf32>
    %795 = arith.addf %793, %794 : vector<8x128xf32>
    %796 = vector.extract_strided_slice %790 {offsets = [0, 128], sizes = [8, 128], strides = [1, 1]} : vector<8x512xf32> to vector<8x128xf32>
    %cst_342 = arith.constant 5.000000e-01 : f32
    %797 = vector.broadcast %cst_342 : f32 to vector<8x128xf32>
    %798 = arith.mulf %797, %796 : vector<8x128xf32>
    %cst_343 = arith.constant 5.000000e-01 : f32
    %799 = vector.broadcast %cst_343 : f32 to vector<8x128xf32>
    %800 = arith.addf %798, %799 : vector<8x128xf32>
    %801 = vector.extract_strided_slice %790 {offsets = [0, 256], sizes = [8, 128], strides = [1, 1]} : vector<8x512xf32> to vector<8x128xf32>
    %cst_344 = arith.constant 5.000000e-01 : f32
    %802 = vector.broadcast %cst_344 : f32 to vector<8x128xf32>
    %803 = arith.mulf %802, %801 : vector<8x128xf32>
    %cst_345 = arith.constant 5.000000e-01 : f32
    %804 = vector.broadcast %cst_345 : f32 to vector<8x128xf32>
    %805 = arith.addf %803, %804 : vector<8x128xf32>
    %806 = vector.extract_strided_slice %790 {offsets = [0, 384], sizes = [8, 128], strides = [1, 1]} : vector<8x512xf32> to vector<8x128xf32>
    %807 = arith.mulf %800, %777 : vector<8x128xf32>
    %808 = arith.mulf %795, %806 : vector<8x128xf32>
    %809 = arith.addf %807, %808 : vector<8x128xf32>
    %810 = math.tanh %809 : vector<8x128xf32>
    %811 = arith.mulf %805, %810 : vector<8x128xf32>
    %812 = arith.index_cast %783 : i32 to index
    %c0_346 = arith.constant 0 : index
    %813 = vector.load %arg11[%812, %c0_346] : memref<64x128xf32, #tpu.memory_space<vmem>>, vector<8x128xf32>
    tpu.vector_store %arg11[%812, %c0_346], %811 {strides = array<i32>} : memref<64x128xf32, #tpu.memory_space<vmem>>, vector<8x128xf32>,
    %c7_i32_347 = arith.constant 7 : i32
    %c8_i32_348 = arith.constant 8 : i32
    %814 = arith.muli %c7_i32_347, %c8_i32_348 : i32
    %815 = tpu.assume_multiple %814, 8 : i32
    %816 = arith.index_cast %815 : i32 to index
    %c0_349 = arith.constant 0 : index
    %817 = vector.load %arg19[%816, %c0_349] : memref<64x512xf32, #tpu.memory_space<vmem>>, vector<8x512xf32>
    %818 = arith.truncf %811 : vector<8x128xf32> to vector<8x128xbf16>
    %c0_350 = arith.constant 0 : index
    %c0_351 = arith.constant 0 : index
    %819 = vector.load %arg16[%c0_350, %c0_351] : memref<128x512xbf16, #tpu.memory_space<vmem>>, vector<128x512xbf16>
    %cst_352 = arith.constant dense<0.000000e+00> : vector<8x512xf32>
    %820 = tpu.matmul %818, %819, %cst_352 {dimension_numbers = #tpu.dot_dimension_numbers<[1], [0], [0], [1], [0, 0, 1, 1], [], []>} : vector<8x128xbf16>, vector<128x512xbf16>, vector<8x512xf32> -> vector<8x512xf32>
    %821 = arith.addf %817, %820 : vector<8x512xf32>
    %822 = math.tanh %821 : vector<8x512xf32>
    %823 = vector.extract_strided_slice %822 {offsets = [0, 0], sizes = [8, 128], strides = [1, 1]} : vector<8x512xf32> to vector<8x128xf32>
    %cst_353 = arith.constant 5.000000e-01 : f32
    %824 = vector.broadcast %cst_353 : f32 to vector<8x128xf32>
    %825 = arith.mulf %824, %823 : vector<8x128xf32>
    %cst_354 = arith.constant 5.000000e-01 : f32
    %826 = vector.broadcast %cst_354 : f32 to vector<8x128xf32>
    %827 = arith.addf %825, %826 : vector<8x128xf32>
    %828 = vector.extract_strided_slice %822 {offsets = [0, 128], sizes = [8, 128], strides = [1, 1]} : vector<8x512xf32> to vector<8x128xf32>
    %cst_355 = arith.constant 5.000000e-01 : f32
    %829 = vector.broadcast %cst_355 : f32 to vector<8x128xf32>
    %830 = arith.mulf %829, %828 : vector<8x128xf32>
    %cst_356 = arith.constant 5.000000e-01 : f32
    %831 = vector.broadcast %cst_356 : f32 to vector<8x128xf32>
    %832 = arith.addf %830, %831 : vector<8x128xf32>
    %833 = vector.extract_strided_slice %822 {offsets = [0, 256], sizes = [8, 128], strides = [1, 1]} : vector<8x512xf32> to vector<8x128xf32>
    %cst_357 = arith.constant 5.000000e-01 : f32
    %834 = vector.broadcast %cst_357 : f32 to vector<8x128xf32>
    %835 = arith.mulf %834, %833 : vector<8x128xf32>
    %cst_358 = arith.constant 5.000000e-01 : f32
    %836 = vector.broadcast %cst_358 : f32 to vector<8x128xf32>
    %837 = arith.addf %835, %836 : vector<8x128xf32>
    %838 = vector.extract_strided_slice %822 {offsets = [0, 384], sizes = [8, 128], strides = [1, 1]} : vector<8x512xf32> to vector<8x128xf32>
    %839 = arith.mulf %832, %809 : vector<8x128xf32>
    %840 = arith.mulf %827, %838 : vector<8x128xf32>
    %841 = arith.addf %839, %840 : vector<8x128xf32>
    %842 = math.tanh %841 : vector<8x128xf32>
    %843 = arith.mulf %837, %842 : vector<8x128xf32>
    %844 = arith.index_cast %815 : i32 to index
    %c0_359 = arith.constant 0 : index
    %845 = vector.load %arg11[%844, %c0_359] : memref<64x128xf32, #tpu.memory_space<vmem>>, vector<8x128xf32>
    tpu.vector_store %arg11[%844, %c0_359], %843 {strides = array<i32>} : memref<64x128xf32, #tpu.memory_space<vmem>>, vector<8x128xf32>,
    %c8_i32_360 = arith.constant 8 : i32
    %c0_361 = arith.constant 0 : index
    %c0_362 = arith.constant 0 : index
    %846 = vector.load %arg12[%c0_361, %c0_362] : memref<8x128xf32, #tpu.memory_space<vmem>>, vector<8x128xf32>
    tpu.vector_store %arg12[%c0_361, %c0_362], %841 {strides = array<i32>} : memref<8x128xf32, #tpu.memory_space<vmem>>, vector<8x128xf32>,
    return
  }
  func.func @transform_0(%arg0: i32) -> (i32, i32) {
    %c0_i32 = arith.constant 0 : i32
    %c0_i32_0 = arith.constant 0 : i32
    %c0_i32_1 = arith.constant 0 : i32
    return %c0_i32, %c0_i32_0 : i32, i32
  }
  func.func @transform_1(%arg0: i32) -> (i32, i32) {
    %c0_i32 = arith.constant 0 : i32
    %c0_i32_0 = arith.constant 0 : i32
    %c0_i32_1 = arith.constant 0 : i32
    return %c0_i32, %c0_i32_0 : i32, i32
  }
  func.func @transform_2(%arg0: i32) -> (i32, i32) {
    %c0_i32 = arith.constant 0 : i32
    %c0_i32_0 = arith.constant 0 : i32
    %c0_i32_1 = arith.constant 0 : i32
    return %c0_i32, %c0_i32_0 : i32, i32
  }
  func.func @transform_3(%arg0: i32) -> (i32, i32) {
    %c0_i32 = arith.constant 0 : i32
    %c0_i32_0 = arith.constant 0 : i32
    %c0_i32_1 = arith.constant 0 : i32
    return %c0_i32, %c0_i32_0 : i32, i32
  }
  func.func @transform_6(%arg0: i32) -> (i32, i32) {
    %c0_i32 = arith.constant 0 : i32
    %c0_i32_0 = arith.constant 0 : i32
    %c0_i32_1 = arith.constant 0 : i32
    return %c0_i32, %c0_i32_0 : i32, i32
  }
  func.func @transform_9(%arg0: i32) -> (i32, i32) {
    %c0_i32 = arith.constant 0 : i32
    %c0_i32_0 = arith.constant 0 : i32
    %c0_i32_1 = arith.constant 0 : i32
    return %c0_i32, %c0_i32_0 : i32, i32
  }
  func.func @transform_10(%arg0: i32) -> (i32, i32) {
    %c0_i32 = arith.constant 0 : i32
    %c0_i32_0 = arith.constant 0 : i32
    %c0_i32_1 = arith.constant 0 : i32
    return %c0_i32, %c0_i32_0 : i32, i32
  }
  func.func @transform_11(%arg0: i32) -> (i32, i32) {
    %c0_i32 = arith.constant 0 : i32
    %c0_i32_0 = arith.constant 0 : i32
    %c0_i32_1 = arith.constant 0 : i32
    return %c0_i32, %c0_i32_0 : i32, i32
  }
}

</mosaic_0001>

<llo_original>
// kernel: mul.44
$region0: #{mul.44}
  #allocation0 [shape = 's32[1]{0}', space=sflag, size = 0x4, scoped, tag = 'scoped memory for mul.44']
  %s0 = inlined_call_operand.vmem [shape: f32[384], index: 0, kind: input, shape index: {}]
  %s1 = inlined_call_operand.vmem [shape: f32[384], index: 1, kind: input, shape index: {}]
  %s2 = inlined_call_operand.vmem [shape: f32[384], index: 2, kind: output, shape index: {}]
  %v3 = vld [vmem:[%s0] sm:$0x7]
  %v4 = vld [vmem:[%s1] sm:$0x7]
  %5 = xla_tuple %v3, %v4
  %6 = xla_tuple %5
  %v7 = vmul.f32 %v3, %v4
  %8 = xla_tuple %v7
  %9 = vst [vmem:[%s2] sm:$0xf] %v7

// kernel: mul.35
$region0: #{mul.35}
  #allocation0 [shape = 's32[1]{0}', space=sflag, size = 0x4, scoped, tag = 'scoped memory for mul.35']
  %s0 = inlined_call_operand.vmem [shape: f32[256], index: 0, kind: input, shape index: {}]
  %s1 = inlined_call_operand.vmem [shape: f32[256], index: 1, kind: input, shape index: {}]
  %s2 = inlined_call_operand.vmem [shape: f32[256], index: 2, kind: output, shape index: {}]
  %v3 = vld [vmem:[%s0] sm:$0x3]
  %v4 = vld [vmem:[%s1] sm:$0x3]
  %5 = xla_tuple %v3, %v4
  %6 = xla_tuple %5
  %v7 = vmul.f32 %v3, %v4
  %8 = xla_tuple %v7
  %9 = vst [vmem:[%s2] sm:$0x3] %v7

// kernel: mul.53
$region0: #{mul.53}
  #allocation0 [shape = 's32[1]{0}', space=sflag, size = 0x4, scoped, tag = 'scoped memory for mul.53']
  %s0 = inlined_call_operand.vmem [shape: f32[512], index: 0, kind: input, shape index: {}]
  %s1 = inlined_call_operand.vmem [shape: f32[512], index: 1, kind: input, shape index: {}]
  %s2 = inlined_call_operand.vmem [shape: f32[512], index: 2, kind: output, shape index: {}]
  %v3 = vld [vmem:[%s0] sm:$0xf]
  %v4 = vld [vmem:[%s1] sm:$0xf]
  %5 = xla_tuple %v3, %v4
  %6 = xla_tuple %5
  %v7 = vmul.f32 %v3, %v4
  %8 = xla_tuple %v7
  %9 = vst [vmem:[%s2] sm:$0xf] %v7

// kernel: convlstm_forward.1
$region0: #{convlstm_forward.1}
  #allocation0 [shape = 'u32[]', space=smem, size = 0x4, offset = 0x4, fixed_abs, tag = 'smem constant byte address 0x4 - core index']
  #allocation1 [shape = 'u32[144,128]{1,0:T(1,128)}', space=vmem, size = 0x12000, scoped, tag = 'internal scratch']
  #allocation2 [shape = 'bf16[128,384]{1,0:T(16,128)(2,1)}', space=vmem, size = 0x18000, scoped, tag = 'scratch operand']
  #allocation3 [shape = 'bf16[96,384]{1,0:T(16,128)(2,1)}', space=vmem, size = 0x12000, scoped, tag = 'scratch operand']
  #allocation4 [shape = 'bf16[128,512]{1,0:T(16,128)(2,1)}', space=vmem, size = 0x20000, scoped, tag = 'scratch operand']
  #allocation5 [shape = 'bf16[128,512]{1,0:T(16,128)(2,1)}', space=vmem, size = 0x20000, scoped, tag = 'scratch operand']
  #allocation6 [shape = 'f32[64,256]{1,0:T(8,128)}', space=vmem, size = 0x10000, scoped, tag = 'scratch operand']
  #allocation7 [shape = 'f32[64,384]{1,0:T(8,128)}', space=vmem, size = 0x18000, scoped, tag = 'scratch operand']
  #allocation8 [shape = 'f32[64,512]{1,0:T(8,128)}', space=vmem, size = 0x20000, scoped, tag = 'scratch operand']
  #allocation9 [shape = 'f32[64,128]{1,0:T(8,128)}', space=vmem, size = 0x8000, scoped, tag = 'scratch operand']
  #allocation10 [shape = 's32[4]{0}', space=sflag, size = 0x10, scoped, tag = 'scratch operand']
  #allocation11 [shape = 's32[]', space=sflag, size = 0x4, offset = 0, fixed_abs, tag = 'sflag constant byte address 0x0 - dummy sync flag']
  #allocation12 [shape = 's32[]', space=sflag, size = 0x4, offset = 0, fixed_abs, tag = 'sflag constant byte address 0x0 - dummy sync flag']
  #allocation13 [shape = 's32[]', space=sflag, size = 0x4, offset = 0, fixed_abs, tag = 'sflag constant byte address 0x0 - dummy sync flag']
  #allocation14 [shape = 's32[]', space=sflag, size = 0x4, offset = 0, fixed_abs, tag = 'sflag constant byte address 0x0 - dummy sync flag']
  %s0 = inlined_call_operand.vmem [shape: f32[64,220], index: 0, kind: input, shape index: {}]
  %s1 = inlined_call_operand.vmem [shape: bf16[220,256], index: 1, kind: input, shape index: {}]
  %s2 = inlined_call_operand.vmem [shape: bf16[64,256], index: 2, kind: input, shape index: {}]
  %s3 = inlined_call_operand.vmem [shape: f32[1,256], index: 3, kind: input, shape index: {}]
  %s4 = inlined_call_operand.vmem [shape: bf16[128,384], index: 4, kind: input, shape index: {}]
  %s5 = inlined_call_operand.vmem [shape: bf16[96,384], index: 5, kind: input, shape index: {}]
  %s6 = inlined_call_operand.vmem [shape: f32[1,384], index: 6, kind: input, shape index: {}]
  %s7 = inlined_call_operand.vmem [shape: bf16[128,512], index: 7, kind: input, shape index: {}]
  %s8 = inlined_call_operand.vmem [shape: bf16[128,512], index: 8, kind: input, shape index: {}]
  %s9 = inlined_call_operand.vmem [shape: f32[1,512], index: 9, kind: input, shape index: {}]
  %s10 = inlined_call_operand.vmem [shape: f32[64,128], index: 10, kind: output, shape index: {0}]
  %s11 = inlined_call_operand.vmem [shape: f32[8,128], index: 11, kind: output, shape index: {1}]
  %12 = xla_tuple %s10, %s11
  %s13 = sld [smem:[#allocation0]]
  $region190: #{convlstm_forward.1} parent=0
    _
  %s15 = ssub.s32 1, %s13
  %s16 = scalar_select 0, %s15, %s13
  // Predicated region
  $region2: #{convlstm_forward.1} parent=0 // pred_check
    _
  $region3: #{convlstm_forward.1} parent=0 // pred_check_branch
    %18 = sbr.rel (0) target = $region5
  $region4: #{convlstm_forward.1} parent=0 // pred_region
    _
  $region5: #{convlstm_forward.1} parent=0 // pred_fallthru
    _
  // Predicated region
  $region6: #{convlstm_forward.1} parent=0 // pred_check
    _
  $region7: #{convlstm_forward.1} parent=0 // pred_check_branch
    %20 = sbr.rel (0) target = $region9
  $region8: #{convlstm_forward.1} parent=0 // pred_region
    _
  $region9: #{convlstm_forward.1} parent=0 // pred_fallthru
    _
  // Predicated region
  $region10: #{convlstm_forward.1} parent=0 // pred_check
    _
  $region11: #{convlstm_forward.1} parent=0 // pred_check_branch
    %22 = sbr.rel (0) target = $region13
  $region12: #{convlstm_forward.1} parent=0 // pred_region
    _
  $region13: #{convlstm_forward.1} parent=0 // pred_fallthru
    _
  // Predicated region
  $region14: #{convlstm_forward.1} parent=0 // pred_check
    _
  $region15: #{convlstm_forward.1} parent=0 // pred_check_branch
    %24 = sbr.rel (0) target = $region17
  $region16: #{convlstm_forward.1} parent=0 // pred_region
    _
  $region17: #{convlstm_forward.1} parent=0 // pred_fallthru
    _
  // Predicated region
  $region18: #{convlstm_forward.1} parent=0 // pred_check
    _
  $region19: #{convlstm_forward.1} parent=0 // pred_check_branch
    %26 = sbr.rel (0) target = $region21
  $region20: #{convlstm_forward.1} parent=0 // pred_region
    _
  $region21: #{convlstm_forward.1} parent=0 // pred_fallthru
    _
  // Predicated region
  $region22: #{convlstm_forward.1} parent=0 // pred_check
    _
  $region23: #{convlstm_forward.1} parent=0 // pred_check_branch
    %28 = sbr.rel (0) target = $region25
  $region24: #{convlstm_forward.1} parent=0 // pred_region
    _
  $region25: #{convlstm_forward.1} parent=0 // pred_fallthru
    _
  %p31 = scmp.lt.u32.totalorder 4, 8
  %p32 = pneg %p31
  // Predicated region
  $region26: #{convlstm_forward.1} parent=0 // pred_check
    _
  $region27: #{convlstm_forward.1} parent=0 // pred_check_branch
    %34 = sbr.rel (%p31) target = $region29
  $region28: #{convlstm_forward.1} parent=0 // pred_region
    %s143 = sand.u32 4, 7
    %p144 = scmp.eq.s32.totalorder %s143, 0
    %p145 = pneg %p144
    // Predicated region
    $region41: #{convlstm_forward.1} parent=28 // pred_check
      _
    $region42: #{convlstm_forward.1} parent=28 // pred_check_branch
      %147 = sbr.rel (%p144) target = $region44
    $region43: #{convlstm_forward.1} parent=28 // pred_region
      %s148 = sand.u32 4, 7
      %s149 = ssub.s32 4, %s148
      %s150 = scalar_lea.vmem %s4, %s149
      %s151 = ssub.s32 4, %s148
      %s152 = scalar_lea.vmem [#allocation2], %s151
      loop: start=0, step=1, limit=1
      $region45: #{convlstm_forward.1} parent=43 // loop_pre_header
        _
      $region46: #{convlstm_forward.1} parent=43 // loop_header
        %s154 = sphi 0, %s158
        %p155 = scmp.ge.s32.totalorder %s154, 1
        %s159 = sphi %s4, %s4
        %s160 = sphi [#allocation2], [#allocation2]
      $region47: #{convlstm_forward.1} parent=43 // loop_header_branch
        %157 = sbr.rel (%p155) target = $region51
      $region48: #{convlstm_forward.1} parent=43 // loop_body
        _
      $region49: #{convlstm_forward.1} parent=43 // loop_footer
        %s158 = sadd.s32 1, %s154
      $region50: #{convlstm_forward.1} parent=43 // loop_footer_branch
        %153 = sbr.rel target = $region46
      $region51: #{convlstm_forward.1} parent=43 // loop_exit
        _
      %s161 = sshllo.u32 0, %s148
      loop: start=0, step=1, limit=1
      $region52: #{convlstm_forward.1} parent=43 // loop_pre_header
        _
      $region53: #{convlstm_forward.1} parent=43 // loop_header
        %s163 = sphi 0, %s167
        %p164 = scmp.ge.s32.totalorder %s163, 1
        %s168 = sphi %s150, %s150
        %s169 = sphi %s152, %s152
      $region54: #{convlstm_forward.1} parent=43 // loop_header_branch
        %166 = sbr.rel (%p164) target = $region58
      $region55: #{convlstm_forward.1} parent=43 // loop_body
        %v170 = vld [vmem:[%s168] sm:%s161]
        %171 = vst [vmem:[%s169] sm:%s161] %v170
        %v172 = vld [vmem:[%s168 + $0xc] sm:%s161]
        %173 = vst [vmem:[%s169 + $0x4] sm:%s161] %v172
        %v174 = vld [vmem:[%s168 + $0x4] sm:%s161]
        %175 = vst [vmem:[%s169 + $0x8] sm:%s161] %v174
        %v176 = vld [vmem:[%s168 + $0x10] sm:%s161]
        %177 = vst [vmem:[%s169 + $0xc] sm:%s161] %v176
        %v178 = vld [vmem:[%s168 + $0x8] sm:%s161]
        %179 = vst [vmem:[%s169 + $0x10] sm:%s161] %v178
        %v180 = vld [vmem:[%s168 + $0x14] sm:%s161]
        %181 = vst [vmem:[%s169 + $0x14] sm:%s161] %v180
        %v182 = vld [vmem:[%s168 + $0x18] sm:%s161]
        %183 = vst [vmem:[%s169 + $0x18] sm:%s161] %v182
        %v184 = vld [vmem:[%s168 + $0x24] sm:%s161]
        %185 = vst [vmem:[%s169 + $0x1c] sm:%s161] %v184
        %v186 = vld [vmem:[%s168 + $0x1c] sm:%s161]
        %187 = vst [vmem:[%s169 + $0x20] sm:%s161] %v186
        %v188 = vld [vmem:[%s168 + $0x28] sm:%s161]
        %189 = vst [vmem:[%s169 + $0x24] sm:%s161] %v188
        %v190 = vld [vmem:[%s168 + $0x20] sm:%s161]
        %191 = vst [vmem:[%s169 + $0x28] sm:%s161] %v190
        %v192 = vld [vmem:[%s168 + $0x2c] sm:%s161]
        %193 = vst [vmem:[%s169 + $0x2c] sm:%s161] %v192
        %v194 = vld [vmem:[%s168 + $0x30] sm:%s161]
        %195 = vst [vmem:[%s169 + $0x30] sm:%s161] %v194
        %v196 = vld [vmem:[%s168 + $0x3c] sm:%s161]
        %197 = vst [vmem:[%s169 + $0x34] sm:%s161] %v196
        %v198 = vld [vmem:[%s168 + $0x34] sm:%s161]
        %199 = vst [vmem:[%s169 + $0x38] sm:%s161] %v198
        %v200 = vld [vmem:[%s168 + $0x40] sm:%s161]
        %201 = vst [vmem:[%s169 + $0x3c] sm:%s161] %v200
        %v202 = vld [vmem:[%s168 + $0x38] sm:%s161]
        %203 = vst [vmem:[%s169 + $0x40] sm:%s161] %v202
        %v204 = vld [vmem:[%s168 + $0x44] sm:%s161]
        %205 = vst [vmem:[%s169 + $0x44] sm:%s161] %v204
        %v206 = vld [vmem:[%s168 + $0x48] sm:%s161]
        %207 = vst [vmem:[%s169 + $0x48] sm:%s161] %v206
        %v208 = vld [vmem:[%s168 + $0x54] sm:%s161]
        %209 = vst [vmem:[%s169 + $0x4c] sm:%s161] %v208
        %v210 = vld [vmem:[%s168 + $0x4c] sm:%s161]
        %211 = vst [vmem:[%s169 + $0x50] sm:%s161] %v210
        %v212 = vld [vmem:[%s168 + $0x58] sm:%s161]
        %213 = vst [vmem:[%s169 + $0x54] sm:%s161] %v212
        %v214 = vld [vmem:[%s168 + $0x50] sm:%s161]
        %215 = vst [vmem:[%s169 + $0x58] sm:%s161] %v214
        %v216 = vld [vmem:[%s168 + $0x5c] sm:%s161]
        %217 = vst [vmem:[%s169 + $0x5c] sm:%s161] %v216
        %v218 = vld [vmem:[%s168 + $0x60] sm:%s161]
        %219 = vst [vmem:[%s169 + $0x60] sm:%s161] %v218
        %v220 = vld [vmem:[%s168 + $0x6c] sm:%s161]
        %221 = vst [vmem:[%s169 + $0x64] sm:%s161] %v220
        %v222 = vld [vmem:[%s168 + $0x64] sm:%s161]
        %223 = vst [vmem:[%s169 + $0x68] sm:%s161] %v222
        %v224 = vld [vmem:[%s168 + $0x70] sm:%s161]
        %225 = vst [vmem:[%s169 + $0x6c] sm:%s161] %v224
        %v226 = vld [vmem:[%s168 + $0x68] sm:%s161]
        %227 = vst [vmem:[%s169 + $0x70] sm:%s161] %v226
        %v228 = vld [vmem:[%s168 + $0x74] sm:%s161]
        %229 = vst [vmem:[%s169 + $0x74] sm:%s161] %v228
        %v230 = vld [vmem:[%s168 + $0x78] sm:%s161]
        %231 = vst [vmem:[%s169 + $0x78] sm:%s161] %v230
        %v232 = vld [vmem:[%s168 + $0x84] sm:%s161]
        %233 = vst [vmem:[%s169 + $0x7c] sm:%s161] %v232
        %v234 = vld [vmem:[%s168 + $0x7c] sm:%s161]
        %235 = vst [vmem:[%s169 + $0x80] sm:%s161] %v234
        %v236 = vld [vmem:[%s168 + $0x88] sm:%s161]
        %237 = vst [vmem:[%s169 + $0x84] sm:%s161] %v236
        %v238 = vld [vmem:[%s168 + $0x80] sm:%s161]
        %239 = vst [vmem:[%s169 + $0x88] sm:%s161] %v238
        %v240 = vld [vmem:[%s168 + $0x8c] sm:%s161]
        %241 = vst [vmem:[%s169 + $0x8c] sm:%s161] %v240
        %v242 = vld [vmem:[%s168 + $0x90] sm:%s161]
        %243 = vst [vmem:[%s169 + $0x90] sm:%s161] %v242
        %v244 = vld [vmem:[%s168 + $0x9c] sm:%s161]
        %245 = vst [vmem:[%s169 + $0x94] sm:%s161] %v244
        %v246 = vld [vmem:[%s168 + $0x94] sm:%s161]
        %247 = vst [vmem:[%s169 + $0x98] sm:%s161] %v246
        %v248 = vld [vmem:[%s168 + $0xa0] sm:%s161]
        %249 = vst [vmem:[%s169 + $0x9c] sm:%s161] %v248
        %v250 = vld [vmem:[%s168 + $0x98] sm:%s161]
        %251 = vst [vmem:[%s169 + $0xa0] sm:%s161] %v250
        %v252 = vld [vmem:[%s168 + $0xa4] sm:%s161]
        %253 = vst [vmem:[%s169 + $0xa4] sm:%s161] %v252
        %v254 = vld [vmem:[%s168 + $0xa8] sm:%s161]
        %255 = vst [vmem:[%s169 + $0xa8] sm:%s161] %v254
        %v256 = vld [vmem:[%s168 + $0xb4] sm:%s161]
        %257 = vst [vmem:[%s169 + $0xac] sm:%s161] %v256
        %v258 = vld [vmem:[%s168 + $0xac] sm:%s161]
        %259 = vst [vmem:[%s169 + $0xb0] sm:%s161] %v258
        %v260 = vld [vmem:[%s168 + $0xb8] sm:%s161]
        %261 = vst [vmem:[%s169 + $0xb4] sm:%s161] %v260
        %v262 = vld [vmem:[%s168 + $0xb0] sm:%s161]
        %263 = vst [vmem:[%s169 + $0xb8] sm:%s161] %v262
        %v264 = vld [vmem:[%s168 + $0xbc] sm:%s161]
        %265 = vst [vmem:[%s169 + $0xbc] sm:%s161] %v264
      $region56: #{convlstm_forward.1} parent=43 // loop_footer
        %s167 = sadd.s32 1, %s163
      $region57: #{convlstm_forward.1} parent=43 // loop_footer_branch
        %162 = sbr.rel target = $region53
      $region58: #{convlstm_forward.1} parent=43 // loop_exit
        _
    $region44: #{convlstm_forward.1} parent=28 // pred_fallthru
      _
  $region29: #{convlstm_forward.1} parent=0 // pred_fallthru
    _
  // Predicated region
  $region30: #{convlstm_forward.1} parent=0 // pred_check
    %p35 = pneg %p31
  $region31: #{convlstm_forward.1} parent=0 // pred_check_branch
    %37 = sbr.rel (%p35) target = $region33
  $region32: #{convlstm_forward.1} parent=0 // pred_region
    %s38 = sshllo.u32 0, 4
    loop: start=0, step=1, limit=1
    $region34: #{convlstm_forward.1} parent=32 // loop_pre_header
      _
    $region35: #{convlstm_forward.1} parent=32 // loop_header
      %s40 = sphi 0, %s44
      %p41 = scmp.ge.s32.totalorder %s40, 1
      %s45 = sphi %s4, %s4
      %s46 = sphi [#allocation2], [#allocation2]
    $region36: #{convlstm_forward.1} parent=32 // loop_header_branch
      %43 = sbr.rel (%p41) target = $region40
    $region37: #{convlstm_forward.1} parent=32 // loop_body
      %v47 = vld [vmem:[%s45] sm:%s38]
      %48 = vst [vmem:[%s46] sm:%s38] %v47
      %v49 = vld [vmem:[%s45 + $0xc] sm:%s38]
      %50 = vst [vmem:[%s46 + $0x4] sm:%s38] %v49
      %v51 = vld [vmem:[%s45 + $0x4] sm:%s38]
      %52 = vst [vmem:[%s46 + $0x8] sm:%s38] %v51
      %v53 = vld [vmem:[%s45 + $0x10] sm:%s38]
      %54 = vst [vmem:[%s46 + $0xc] sm:%s38] %v53
      %v55 = vld [vmem:[%s45 + $0x8] sm:%s38]
      %56 = vst [vmem:[%s46 + $0x10] sm:%s38] %v55
      %v57 = vld [vmem:[%s45 + $0x14] sm:%s38]
      %58 = vst [vmem:[%s46 + $0x14] sm:%s38] %v57
      %v59 = vld [vmem:[%s45 + $0x18] sm:%s38]
      %60 = vst [vmem:[%s46 + $0x18] sm:%s38] %v59
      %v61 = vld [vmem:[%s45 + $0x24] sm:%s38]
      %62 = vst [vmem:[%s46 + $0x1c] sm:%s38] %v61
      %v63 = vld [vmem:[%s45 + $0x1c] sm:%s38]
      %64 = vst [vmem:[%s46 + $0x20] sm:%s38] %v63
      %v65 = vld [vmem:[%s45 + $0x28] sm:%s38]
      %66 = vst [vmem:[%s46 + $0x24] sm:%s38] %v65
      %v67 = vld [vmem:[%s45 + $0x20] sm:%s38]
      %68 = vst [vmem:[%s46 + $0x28] sm:%s38] %v67
      %v69 = vld [vmem:[%s45 + $0x2c] sm:%s38]
      %70 = vst [vmem:[%s46 + $0x2c] sm:%s38] %v69
      %v71 = vld [vmem:[%s45 + $0x30] sm:%s38]
      %72 = vst [vmem:[%s46 + $0x30] sm:%s38] %v71
      %v73 = vld [vmem:[%s45 + $0x3c] sm:%s38]
      %74 = vst [vmem:[%s46 + $0x34] sm:%s38] %v73
      %v75 = vld [vmem:[%s45 + $0x34] sm:%s38]
      %76 = vst [vmem:[%s46 + $0x38] sm:%s38] %v75
      %v77 = vld [vmem:[%s45 + $0x40] sm:%s38]
      %78 = vst [vmem:[%s46 + $0x3c] sm:%s38] %v77
      %v79 = vld [vmem:[%s45 + $0x38] sm:%s38]
      %80 = vst [vmem:[%s46 + $0x40] sm:%s38] %v79
      %v81 = vld [vmem:[%s45 + $0x44] sm:%s38]
      %82 = vst [vmem:[%s46 + $0x44] sm:%s38] %v81
      %v83 = vld [vmem:[%s45 + $0x48] sm:%s38]
      %84 = vst [vmem:[%s46 + $0x48] sm:%s38] %v83
      %v85 = vld [vmem:[%s45 + $0x54] sm:%s38]
      %86 = vst [vmem:[%s46 + $0x4c] sm:%s38] %v85
      %v87 = vld [vmem:[%s45 + $0x4c] sm:%s38]
      %88 = vst [vmem:[%s46 + $0x50] sm:%s38] %v87
      %v89 = vld [vmem:[%s45 + $0x58] sm:%s38]
      %90 = vst [vmem:[%s46 + $0x54] sm:%s38] %v89
      %v91 = vld [vmem:[%s45 + $0x50] sm:%s38]
      %92 = vst [vmem:[%s46 + $0x58] sm:%s38] %v91
      %v93 = vld [vmem:[%s45 + $0x5c] sm:%s38]
      %94 = vst [vmem:[%s46 + $0x5c] sm:%s38] %v93
      %v95 = vld [vmem:[%s45 + $0x60] sm:%s38]
      %96 = vst [vmem:[%s46 + $0x60] sm:%s38] %v95
      %v97 = vld [vmem:[%s45 + $0x6c] sm:%s38]
      %98 = vst [vmem:[%s46 + $0x64] sm:%s38] %v97
      %v99 = vld [vmem:[%s45 + $0x64] sm:%s38]
      %100 = vst [vmem:[%s46 + $0x68] sm:%s38] %v99
      %v101 = vld [vmem:[%s45 + $0x70] sm:%s38]
      %102 = vst [vmem:[%s46 + $0x6c] sm:%s38] %v101
      %v103 = vld [vmem:[%s45 + $0x68] sm:%s38]
      %104 = vst [vmem:[%s46 + $0x70] sm:%s38] %v103
      %v105 = vld [vmem:[%s45 + $0x74] sm:%s38]
      %106 = vst [vmem:[%s46 + $0x74] sm:%s38] %v105
      %v107 = vld [vmem:[%s45 + $0x78] sm:%s38]
      %108 = vst [vmem:[%s46 + $0x78] sm:%s38] %v107
      %v109 = vld [vmem:[%s45 + $0x84] sm:%s38]
      %110 = vst [vmem:[%s46 + $0x7c] sm:%s38] %v109
      %v111 = vld [vmem:[%s45 + $0x7c] sm:%s38]
      %112 = vst [vmem:[%s46 + $0x80] sm:%s38] %v111
      %v113 = vld [vmem:[%s45 + $0x88] sm:%s38]
      %114 = vst [vmem:[%s46 + $0x84] sm:%s38] %v113
      %v115 = vld [vmem:[%s45 + $0x80] sm:%s38]
      %116 = vst [vmem:[%s46 + $0x88] sm:%s38] %v115
      %v117 = vld [vmem:[%s45 + $0x8c] sm:%s38]
      %118 = vst [vmem:[%s46 + $0x8c] sm:%s38] %v117
      %v119 = vld [vmem:[%s45 + $0x90] sm:%s38]
      %120 = vst [vmem:[%s46 + $0x90] sm:%s38] %v119
      %v121 = vld [vmem:[%s45 + $0x9c] sm:%s38]
      %122 = vst [vmem:[%s46 + $0x94] sm:%s38] %v121
      %v123 = vld [vmem:[%s45 + $0x94] sm:%s38]
      %124 = vst [vmem:[%s46 + $0x98] sm:%s38] %v123
      %v125 = vld [vmem:[%s45 + $0xa0] sm:%s38]
      %126 = vst [vmem:[%s46 + $0x9c] sm:%s38] %v125
      %v127 = vld [vmem:[%s45 + $0x98] sm:%s38]
      %128 = vst [vmem:[%s46 + $0xa0] sm:%s38] %v127
      %v129 = vld [vmem:[%s45 + $0xa4] sm:%s38]
      %130 = vst [vmem:[%s46 + $0xa4] sm:%s38] %v129
      %v131 = vld [vmem:[%s45 + $0xa8] sm:%s38]
      %132 = vst [vmem:[%s46 + $0xa8] sm:%s38] %v131
      %v133 = vld [vmem:[%s45 + $0xb4] sm:%s38]
      %134 = vst [vmem:[%s46 + $0xac] sm:%s38] %v133
      %v135 = vld [vmem:[%s45 + $0xac] sm:%s38]
      %136 = vst [vmem:[%s46 + $0xb0] sm:%s38] %v135
      %v137 = vld [vmem:[%s45 + $0xb8] sm:%s38]
      %138 = vst [vmem:[%s46 + $0xb4] sm:%s38] %v137
      %v139 = vld [vmem:[%s45 + $0xb0] sm:%s38]
      %140 = vst [vmem:[%s46 + $0xb8] sm:%s38] %v139
      %v141 = vld [vmem:[%s45 + $0xbc] sm:%s38]
      %142 = vst [vmem:[%s46 + $0xbc] sm:%s38] %v141
    $region38: #{convlstm_forward.1} parent=32 // loop_footer
      %s44 = sadd.s32 1, %s40
    $region39: #{convlstm_forward.1} parent=32 // loop_footer_branch
      %39 = sbr.rel target = $region35
    $region40: #{convlstm_forward.1} parent=32 // loop_exit
      _
  $region33: #{convlstm_forward.1} parent=0 // pred_fallthru
    _
  // Predicated region
  $region59: #{convlstm_forward.1} parent=0 // pred_check
    _
  $region60: #{convlstm_forward.1} parent=0 // pred_check_branch
    %268 = sbr.rel (0) target = $region62
  $region61: #{convlstm_forward.1} parent=0 // pred_region
    %269 = vsyncadd [#allocation10], 3072
  $region62: #{convlstm_forward.1} parent=0 // pred_fallthru
    _
  %s270 = scalar_lea.sflag [#allocation10], 1
  %p272 = scmp.lt.u32.totalorder 4, 8
  %p273 = pneg %p272
  // Predicated region
  $region63: #{convlstm_forward.1} parent=0 // pred_check
    _
  $region64: #{convlstm_forward.1} parent=0 // pred_check_branch
    %275 = sbr.rel (%p272) target = $region66
  $region65: #{convlstm_forward.1} parent=0 // pred_region
    %s360 = sand.u32 4, 7
    %p361 = scmp.eq.s32.totalorder %s360, 0
    %p362 = pneg %p361
    // Predicated region
    $region78: #{convlstm_forward.1} parent=65 // pred_check
      _
    $region79: #{convlstm_forward.1} parent=65 // pred_check_branch
      %364 = sbr.rel (%p361) target = $region81
    $region80: #{convlstm_forward.1} parent=65 // pred_region
      %s365 = sand.u32 4, 7
      %s366 = ssub.s32 4, %s365
      %s367 = scalar_lea.vmem %s5, %s366
      %s368 = ssub.s32 4, %s365
      %s369 = scalar_lea.vmem [#allocation3], %s368
      loop: start=0, step=1, limit=1
      $region82: #{convlstm_forward.1} parent=80 // loop_pre_header
        _
      $region83: #{convlstm_forward.1} parent=80 // loop_header
        %s371 = sphi 0, %s375
        %p372 = scmp.ge.s32.totalorder %s371, 1
        %s376 = sphi %s5, %s5
        %s377 = sphi [#allocation3], [#allocation3]
      $region84: #{convlstm_forward.1} parent=80 // loop_header_branch
        %374 = sbr.rel (%p372) target = $region88
      $region85: #{convlstm_forward.1} parent=80 // loop_body
        _
      $region86: #{convlstm_forward.1} parent=80 // loop_footer
        %s375 = sadd.s32 1, %s371
      $region87: #{convlstm_forward.1} parent=80 // loop_footer_branch
        %370 = sbr.rel target = $region83
      $region88: #{convlstm_forward.1} parent=80 // loop_exit
        _
      %s378 = sshllo.u32 0, %s365
      loop: start=0, step=1, limit=1
      $region89: #{convlstm_forward.1} parent=80 // loop_pre_header
        _
      $region90: #{convlstm_forward.1} parent=80 // loop_header
        %s380 = sphi 0, %s384
        %p381 = scmp.ge.s32.totalorder %s380, 1
        %s385 = sphi %s367, %s367
        %s386 = sphi %s369, %s369
      $region91: #{convlstm_forward.1} parent=80 // loop_header_branch
        %383 = sbr.rel (%p381) target = $region95
      $region92: #{convlstm_forward.1} parent=80 // loop_body
        %v387 = vld [vmem:[%s385] sm:%s378]
        %388 = vst [vmem:[%s386] sm:%s378] %v387
        %v389 = vld [vmem:[%s385 + $0xc] sm:%s378]
        %390 = vst [vmem:[%s386 + $0x4] sm:%s378] %v389
        %v391 = vld [vmem:[%s385 + $0x4] sm:%s378]
        %392 = vst [vmem:[%s386 + $0x8] sm:%s378] %v391
        %v393 = vld [vmem:[%s385 + $0x10] sm:%s378]
        %394 = vst [vmem:[%s386 + $0xc] sm:%s378] %v393
        %v395 = vld [vmem:[%s385 + $0x8] sm:%s378]
        %396 = vst [vmem:[%s386 + $0x10] sm:%s378] %v395
        %v397 = vld [vmem:[%s385 + $0x14] sm:%s378]
        %398 = vst [vmem:[%s386 + $0x14] sm:%s378] %v397
        %v399 = vld [vmem:[%s385 + $0x18] sm:%s378]
        %400 = vst [vmem:[%s386 + $0x18] sm:%s378] %v399
        %v401 = vld [vmem:[%s385 + $0x24] sm:%s378]
        %402 = vst [vmem:[%s386 + $0x1c] sm:%s378] %v401
        %v403 = vld [vmem:[%s385 + $0x1c] sm:%s378]
        %404 = vst [vmem:[%s386 + $0x20] sm:%s378] %v403
        %v405 = vld [vmem:[%s385 + $0x28] sm:%s378]
        %406 = vst [vmem:[%s386 + $0x24] sm:%s378] %v405
        %v407 = vld [vmem:[%s385 + $0x20] sm:%s378]
        %408 = vst [vmem:[%s386 + $0x28] sm:%s378] %v407
        %v409 = vld [vmem:[%s385 + $0x2c] sm:%s378]
        %410 = vst [vmem:[%s386 + $0x2c] sm:%s378] %v409
        %v411 = vld [vmem:[%s385 + $0x30] sm:%s378]
        %412 = vst [vmem:[%s386 + $0x30] sm:%s378] %v411
        %v413 = vld [vmem:[%s385 + $0x3c] sm:%s378]
        %414 = vst [vmem:[%s386 + $0x34] sm:%s378] %v413
        %v415 = vld [vmem:[%s385 + $0x34] sm:%s378]
        %416 = vst [vmem:[%s386 + $0x38] sm:%s378] %v415
        %v417 = vld [vmem:[%s385 + $0x40] sm:%s378]
        %418 = vst [vmem:[%s386 + $0x3c] sm:%s378] %v417
        %v419 = vld [vmem:[%s385 + $0x38] sm:%s378]
        %420 = vst [vmem:[%s386 + $0x40] sm:%s378] %v419
        %v421 = vld [vmem:[%s385 + $0x44] sm:%s378]
        %422 = vst [vmem:[%s386 + $0x44] sm:%s378] %v421
        %v423 = vld [vmem:[%s385 + $0x48] sm:%s378]
        %424 = vst [vmem:[%s386 + $0x48] sm:%s378] %v423
        %v425 = vld [vmem:[%s385 + $0x54] sm:%s378]
        %426 = vst [vmem:[%s386 + $0x4c] sm:%s378] %v425
        %v427 = vld [vmem:[%s385 + $0x4c] sm:%s378]
        %428 = vst [vmem:[%s386 + $0x50] sm:%s378] %v427
        %v429 = vld [vmem:[%s385 + $0x58] sm:%s378]
        %430 = vst [vmem:[%s386 + $0x54] sm:%s378] %v429
        %v431 = vld [vmem:[%s385 + $0x50] sm:%s378]
        %432 = vst [vmem:[%s386 + $0x58] sm:%s378] %v431
        %v433 = vld [vmem:[%s385 + $0x5c] sm:%s378]
        %434 = vst [vmem:[%s386 + $0x5c] sm:%s378] %v433
        %v435 = vld [vmem:[%s385 + $0x60] sm:%s378]
        %436 = vst [vmem:[%s386 + $0x60] sm:%s378] %v435
        %v437 = vld [vmem:[%s385 + $0x6c] sm:%s378]
        %438 = vst [vmem:[%s386 + $0x64] sm:%s378] %v437
        %v439 = vld [vmem:[%s385 + $0x64] sm:%s378]
        %440 = vst [vmem:[%s386 + $0x68] sm:%s378] %v439
        %v441 = vld [vmem:[%s385 + $0x70] sm:%s378]
        %442 = vst [vmem:[%s386 + $0x6c] sm:%s378] %v441
        %v443 = vld [vmem:[%s385 + $0x68] sm:%s378]
        %444 = vst [vmem:[%s386 + $0x70] sm:%s378] %v443
        %v445 = vld [vmem:[%s385 + $0x74] sm:%s378]
        %446 = vst [vmem:[%s386 + $0x74] sm:%s378] %v445
        %v447 = vld [vmem:[%s385 + $0x78] sm:%s378]
        %448 = vst [vmem:[%s386 + $0x78] sm:%s378] %v447
        %v449 = vld [vmem:[%s385 + $0x84] sm:%s378]
        %450 = vst [vmem:[%s386 + $0x7c] sm:%s378] %v449
        %v451 = vld [vmem:[%s385 + $0x7c] sm:%s378]
        %452 = vst [vmem:[%s386 + $0x80] sm:%s378] %v451
        %v453 = vld [vmem:[%s385 + $0x88] sm:%s378]
        %454 = vst [vmem:[%s386 + $0x84] sm:%s378] %v453
        %v455 = vld [vmem:[%s385 + $0x80] sm:%s378]
        %456 = vst [vmem:[%s386 + $0x88] sm:%s378] %v455
        %v457 = vld [vmem:[%s385 + $0x8c] sm:%s378]
        %458 = vst [vmem:[%s386 + $0x8c] sm:%s378] %v457
      $region93: #{convlstm_forward.1} parent=80 // loop_footer
        %s384 = sadd.s32 1, %s380
      $region94: #{convlstm_forward.1} parent=80 // loop_footer_branch
        %379 = sbr.rel target = $region90
      $region95: #{convlstm_forward.1} parent=80 // loop_exit
        _
    $region81: #{convlstm_forward.1} parent=65 // pred_fallthru
      _
  $region66: #{convlstm_forward.1} parent=0 // pred_fallthru
    _
  // Predicated region
  $region67: #{convlstm_forward.1} parent=0 // pred_check
    %p276 = pneg %p272
  $region68: #{convlstm_forward.1} parent=0 // pred_check_branch
    %278 = sbr.rel (%p276) target = $region70
  $region69: #{convlstm_forward.1} parent=0 // pred_region
    %s279 = sshllo.u32 0, 4
    loop: start=0, step=1, limit=1
    $region71: #{convlstm_forward.1} parent=69 // loop_pre_header
      _
    $region72: #{convlstm_forward.1} parent=69 // loop_header
      %s281 = sphi 0, %s285
      %p282 = scmp.ge.s32.totalorder %s281, 1
      %s286 = sphi %s5, %s5
      %s287 = sphi [#allocation3], [#allocation3]
    $region73: #{convlstm_forward.1} parent=69 // loop_header_branch
      %284 = sbr.rel (%p282) target = $region77
    $region74: #{convlstm_forward.1} parent=69 // loop_body
      %v288 = vld [vmem:[%s286] sm:%s279]
      %289 = vst [vmem:[%s287] sm:%s279] %v288
      %v290 = vld [vmem:[%s286 + $0xc] sm:%s279]
      %291 = vst [vmem:[%s287 + $0x4] sm:%s279] %v290
      %v292 = vld [vmem:[%s286 + $0x4] sm:%s279]
      %293 = vst [vmem:[%s287 + $0x8] sm:%s279] %v292
      %v294 = vld [vmem:[%s286 + $0x10] sm:%s279]
      %295 = vst [vmem:[%s287 + $0xc] sm:%s279] %v294
      %v296 = vld [vmem:[%s286 + $0x8] sm:%s279]
      %297 = vst [vmem:[%s287 + $0x10] sm:%s279] %v296
      %v298 = vld [vmem:[%s286 + $0x14] sm:%s279]
      %299 = vst [vmem:[%s287 + $0x14] sm:%s279] %v298
      %v300 = vld [vmem:[%s286 + $0x18] sm:%s279]
      %301 = vst [vmem:[%s287 + $0x18] sm:%s279] %v300
      %v302 = vld [vmem:[%s286 + $0x24] sm:%s279]
      %303 = vst [vmem:[%s287 + $0x1c] sm:%s279] %v302
      %v304 = vld [vmem:[%s286 + $0x1c] sm:%s279]
      %305 = vst [vmem:[%s287 + $0x20] sm:%s279] %v304
      %v306 = vld [vmem:[%s286 + $0x28] sm:%s279]
      %307 = vst [vmem:[%s287 + $0x24] sm:%s279] %v306
      %v308 = vld [vmem:[%s286 + $0x20] sm:%s279]
      %309 = vst [vmem:[%s287 + $0x28] sm:%s279] %v308
      %v310 = vld [vmem:[%s286 + $0x2c] sm:%s279]
      %311 = vst [vmem:[%s287 + $0x2c] sm:%s279] %v310
      %v312 = vld [vmem:[%s286 + $0x30] sm:%s279]
      %313 = vst [vmem:[%s287 + $0x30] sm:%s279] %v312
      %v314 = vld [vmem:[%s286 + $0x3c] sm:%s279]
      %315 = vst [vmem:[%s287 + $0x34] sm:%s279] %v314
      %v316 = vld [vmem:[%s286 + $0x34] sm:%s279]
      %317 = vst [vmem:[%s287 + $0x38] sm:%s279] %v316
      %v318 = vld [vmem:[%s286 + $0x40] sm:%s279]
      %319 = vst [vmem:[%s287 + $0x3c] sm:%s279] %v318
      %v320 = vld [vmem:[%s286 + $0x38] sm:%s279]
      %321 = vst [vmem:[%s287 + $0x40] sm:%s279] %v320
      %v322 = vld [vmem:[%s286 + $0x44] sm:%s279]
      %323 = vst [vmem:[%s287 + $0x44] sm:%s279] %v322
      %v324 = vld [vmem:[%s286 + $0x48] sm:%s279]
      %325 = vst [vmem:[%s287 + $0x48] sm:%s279] %v324
      %v326 = vld [vmem:[%s286 + $0x54] sm:%s279]
      %327 = vst [vmem:[%s287 + $0x4c] sm:%s279] %v326
      %v328 = vld [vmem:[%s286 + $0x4c] sm:%s279]
      %329 = vst [vmem:[%s287 + $0x50] sm:%s279] %v328
      %v330 = vld [vmem:[%s286 + $0x58] sm:%s279]
      %331 = vst [vmem:[%s287 + $0x54] sm:%s279] %v330
      %v332 = vld [vmem:[%s286 + $0x50] sm:%s279]
      %333 = vst [vmem:[%s287 + $0x58] sm:%s279] %v332
      %v334 = vld [vmem:[%s286 + $0x5c] sm:%s279]
      %335 = vst [vmem:[%s287 + $0x5c] sm:%s279] %v334
      %v336 = vld [vmem:[%s286 + $0x60] sm:%s279]
      %337 = vst [vmem:[%s287 + $0x60] sm:%s279] %v336
      %v338 = vld [vmem:[%s286 + $0x6c] sm:%s279]
      %339 = vst [vmem:[%s287 + $0x64] sm:%s279] %v338
      %v340 = vld [vmem:[%s286 + $0x64] sm:%s279]
      %341 = vst [vmem:[%s287 + $0x68] sm:%s279] %v340
      %v342 = vld [vmem:[%s286 + $0x70] sm:%s279]
      %343 = vst [vmem:[%s287 + $0x6c] sm:%s279] %v342
      %v344 = vld [vmem:[%s286 + $0x68] sm:%s279]
      %345 = vst [vmem:[%s287 + $0x70] sm:%s279] %v344
      %v346 = vld [vmem:[%s286 + $0x74] sm:%s279]
      %347 = vst [vmem:[%s287 + $0x74] sm:%s279] %v346
      %v348 = vld [vmem:[%s286 + $0x78] sm:%s279]
      %349 = vst [vmem:[%s287 + $0x78] sm:%s279] %v348
      %v350 = vld [vmem:[%s286 + $0x84] sm:%s279]
      %351 = vst [vmem:[%s287 + $0x7c] sm:%s279] %v350
      %v352 = vld [vmem:[%s286 + $0x7c] sm:%s279]
      %353 = vst [vmem:[%s287 + $0x80] sm:%s279] %v352
      %v354 = vld [vmem:[%s286 + $0x88] sm:%s279]
      %355 = vst [vmem:[%s287 + $0x84] sm:%s279] %v354
      %v356 = vld [vmem:[%s286 + $0x80] sm:%s279]
      %357 = vst [vmem:[%s287 + $0x88] sm:%s279] %v356
      %v358 = vld [vmem:[%s286 + $0x8c] sm:%s279]
      %359 = vst [vmem:[%s287 + $0x8c] sm:%s279] %v358
    $region75: #{convlstm_forward.1} parent=69 // loop_footer
      %s285 = sadd.s32 1, %s281
    $region76: #{convlstm_forward.1} parent=69 // loop_footer_branch
      %280 = sbr.rel target = $region72
    $region77: #{convlstm_forward.1} parent=69 // loop_exit
      _
  $region70: #{convlstm_forward.1} parent=0 // pred_fallthru
    _
  // Predicated region
  $region96: #{convlstm_forward.1} parent=0 // pred_check
    _
  $region97: #{convlstm_forward.1} parent=0 // pred_check_branch
    %461 = sbr.rel (0) target = $region99
  $region98: #{convlstm_forward.1} parent=0 // pred_region
    %462 = vsyncadd %s270, 2304
  $region99: #{convlstm_forward.1} parent=0 // pred_fallthru
    _
  %s463 = scalar_lea.sflag [#allocation10], 2
  %p465 = scmp.lt.u32.totalorder 4, 8
  %p466 = pneg %p465
  // Predicated region
  $region100: #{convlstm_forward.1} parent=0 // pred_check
    _
  $region101: #{convlstm_forward.1} parent=0 // pred_check_branch
    %468 = sbr.rel (%p465) target = $region103
  $region102: #{convlstm_forward.1} parent=0 // pred_region
    %s609 = sand.u32 4, 7
    %p610 = scmp.eq.s32.totalorder %s609, 0
    %p611 = pneg %p610
    // Predicated region
    $region115: #{convlstm_forward.1} parent=102 // pred_check
      _
    $region116: #{convlstm_forward.1} parent=102 // pred_check_branch
      %613 = sbr.rel (%p610) target = $region118
    $region117: #{convlstm_forward.1} parent=102 // pred_region
      %s614 = sand.u32 4, 7
      %s615 = ssub.s32 4, %s614
      %s616 = scalar_lea.vmem %s7, %s615
      %s617 = ssub.s32 4, %s614
      %s618 = scalar_lea.vmem [#allocation4], %s617
      loop: start=0, step=1, limit=1
      $region119: #{convlstm_forward.1} parent=117 // loop_pre_header
        _
      $region120: #{convlstm_forward.1} parent=117 // loop_header
        %s620 = sphi 0, %s624
        %p621 = scmp.ge.s32.totalorder %s620, 1
        %s625 = sphi %s7, %s7
        %s626 = sphi [#allocation4], [#allocation4]
      $region121: #{convlstm_forward.1} parent=117 // loop_header_branch
        %623 = sbr.rel (%p621) target = $region125
      $region122: #{convlstm_forward.1} parent=117 // loop_body
        _
      $region123: #{convlstm_forward.1} parent=117 // loop_footer
        %s624 = sadd.s32 1, %s620
      $region124: #{convlstm_forward.1} parent=117 // loop_footer_branch
        %619 = sbr.rel target = $region120
      $region125: #{convlstm_forward.1} parent=117 // loop_exit
        _
      %s627 = sshllo.u32 0, %s614
      loop: start=0, step=1, limit=1
      $region126: #{convlstm_forward.1} parent=117 // loop_pre_header
        _
      $region127: #{convlstm_forward.1} parent=117 // loop_header
        %s629 = sphi 0, %s633
        %p630 = scmp.ge.s32.totalorder %s629, 1
        %s634 = sphi %s616, %s616
        %s635 = sphi %s618, %s618
      $region128: #{convlstm_forward.1} parent=117 // loop_header_branch
        %632 = sbr.rel (%p630) target = $region132
      $region129: #{convlstm_forward.1} parent=117 // loop_body
        %v636 = vld [vmem:[%s634] sm:%s627]
        %637 = vst [vmem:[%s635] sm:%s627] %v636
        %v638 = vld [vmem:[%s634 + $0x10] sm:%s627]
        %639 = vst [vmem:[%s635 + $0x4] sm:%s627] %v638
        %v640 = vld [vmem:[%s634 + $0x4] sm:%s627]
        %641 = vst [vmem:[%s635 + $0x8] sm:%s627] %v640
        %v642 = vld [vmem:[%s634 + $0x14] sm:%s627]
        %643 = vst [vmem:[%s635 + $0xc] sm:%s627] %v642
        %v644 = vld [vmem:[%s634 + $0x8] sm:%s627]
        %645 = vst [vmem:[%s635 + $0x10] sm:%s627] %v644
        %v646 = vld [vmem:[%s634 + $0x18] sm:%s627]
        %647 = vst [vmem:[%s635 + $0x14] sm:%s627] %v646
        %v648 = vld [vmem:[%s634 + $0xc] sm:%s627]
        %649 = vst [vmem:[%s635 + $0x18] sm:%s627] %v648
        %v650 = vld [vmem:[%s634 + $0x1c] sm:%s627]
        %651 = vst [vmem:[%s635 + $0x1c] sm:%s627] %v650
        %v652 = vld [vmem:[%s634 + $0x20] sm:%s627]
        %653 = vst [vmem:[%s635 + $0x20] sm:%s627] %v652
        %v654 = vld [vmem:[%s634 + $0x30] sm:%s627]
        %655 = vst [vmem:[%s635 + $0x24] sm:%s627] %v654
        %v656 = vld [vmem:[%s634 + $0x24] sm:%s627]
        %657 = vst [vmem:[%s635 + $0x28] sm:%s627] %v656
        %v658 = vld [vmem:[%s634 + $0x34] sm:%s627]
        %659 = vst [vmem:[%s635 + $0x2c] sm:%s627] %v658
        %v660 = vld [vmem:[%s634 + $0x28] sm:%s627]
        %661 = vst [vmem:[%s635 + $0x30] sm:%s627] %v660
        %v662 = vld [vmem:[%s634 + $0x38] sm:%s627]
        %663 = vst [vmem:[%s635 + $0x34] sm:%s627] %v662
        %v664 = vld [vmem:[%s634 + $0x2c] sm:%s627]
        %665 = vst [vmem:[%s635 + $0x38] sm:%s627] %v664
        %v666 = vld [vmem:[%s634 + $0x3c] sm:%s627]
        %667 = vst [vmem:[%s635 + $0x3c] sm:%s627] %v666
        %v668 = vld [vmem:[%s634 + $0x40] sm:%s627]
        %669 = vst [vmem:[%s635 + $0x40] sm:%s627] %v668
        %v670 = vld [vmem:[%s634 + $0x50] sm:%s627]
        %671 = vst [vmem:[%s635 + $0x44] sm:%s627] %v670
        %v672 = vld [vmem:[%s634 + $0x44] sm:%s627]
        %673 = vst [vmem:[%s635 + $0x48] sm:%s627] %v672
        %v674 = vld [vmem:[%s634 + $0x54] sm:%s627]
        %675 = vst [vmem:[%s635 + $0x4c] sm:%s627] %v674
        %v676 = vld [vmem:[%s634 + $0x48] sm:%s627]
        %677 = vst [vmem:[%s635 + $0x50] sm:%s627] %v676
        %v678 = vld [vmem:[%s634 + $0x58] sm:%s627]
        %679 = vst [vmem:[%s635 + $0x54] sm:%s627] %v678
        %v680 = vld [vmem:[%s634 + $0x4c] sm:%s627]
        %681 = vst [vmem:[%s635 + $0x58] sm:%s627] %v680
        %v682 = vld [vmem:[%s634 + $0x5c] sm:%s627]
        %683 = vst [vmem:[%s635 + $0x5c] sm:%s627] %v682
        %v684 = vld [vmem:[%s634 + $0x60] sm:%s627]
        %685 = vst [vmem:[%s635 + $0x60] sm:%s627] %v684
        %v686 = vld [vmem:[%s634 + $0x70] sm:%s627]
        %687 = vst [vmem:[%s635 + $0x64] sm:%s627] %v686
        %v688 = vld [vmem:[%s634 + $0x64] sm:%s627]
        %689 = vst [vmem:[%s635 + $0x68] sm:%s627] %v688
        %v690 = vld [vmem:[%s634 + $0x74] sm:%s627]
        %691 = vst [vmem:[%s635 + $0x6c] sm:%s627] %v690
        %v692 = vld [vmem:[%s634 + $0x68] sm:%s627]
        %693 = vst [vmem:[%s635 + $0x70] sm:%s627] %v692
        %v694 = vld [vmem:[%s634 + $0x78] sm:%s627]
        %695 = vst [vmem:[%s635 + $0x74] sm:%s627] %v694
        %v696 = vld [vmem:[%s634 + $0x6c] sm:%s627]
        %697 = vst [vmem:[%s635 + $0x78] sm:%s627] %v696
        %v698 = vld [vmem:[%s634 + $0x7c] sm:%s627]
        %699 = vst [vmem:[%s635 + $0x7c] sm:%s627] %v698
        %v700 = vld [vmem:[%s634 + $0x80] sm:%s627]
        %701 = vst [vmem:[%s635 + $0x80] sm:%s627] %v700
        %v702 = vld [vmem:[%s634 + $0x90] sm:%s627]
        %703 = vst [vmem:[%s635 + $0x84] sm:%s627] %v702
        %v704 = vld [vmem:[%s634 + $0x84] sm:%s627]
        %705 = vst [vmem:[%s635 + $0x88] sm:%s627] %v704
        %v706 = vld [vmem:[%s634 + $0x94] sm:%s627]
        %707 = vst [vmem:[%s635 + $0x8c] sm:%s627] %v706
        %v708 = vld [vmem:[%s634 + $0x88] sm:%s627]
        %709 = vst [vmem:[%s635 + $0x90] sm:%s627] %v708
        %v710 = vld [vmem:[%s634 + $0x98] sm:%s627]
        %711 = vst [vmem:[%s635 + $0x94] sm:%s627] %v710
        %v712 = vld [vmem:[%s634 + $0x8c] sm:%s627]
        %713 = vst [vmem:[%s635 + $0x98] sm:%s627] %v712
        %v714 = vld [vmem:[%s634 + $0x9c] sm:%s627]
        %715 = vst [vmem:[%s635 + $0x9c] sm:%s627] %v714
        %v716 = vld [vmem:[%s634 + $0xa0] sm:%s627]
        %717 = vst [vmem:[%s635 + $0xa0] sm:%s627] %v716
        %v718 = vld [vmem:[%s634 + $0xb0] sm:%s627]
        %719 = vst [vmem:[%s635 + $0xa4] sm:%s627] %v718
        %v720 = vld [vmem:[%s634 + $0xa4] sm:%s627]
        %721 = vst [vmem:[%s635 + $0xa8] sm:%s627] %v720
        %v722 = vld [vmem:[%s634 + $0xb4] sm:%s627]
        %723 = vst [vmem:[%s635 + $0xac] sm:%s627] %v722
        %v724 = vld [vmem:[%s634 + $0xa8] sm:%s627]
        %725 = vst [vmem:[%s635 + $0xb0] sm:%s627] %v724
        %v726 = vld [vmem:[%s634 + $0xb8] sm:%s627]
        %727 = vst [vmem:[%s635 + $0xb4] sm:%s627] %v726
        %v728 = vld [vmem:[%s634 + $0xac] sm:%s627]
        %729 = vst [vmem:[%s635 + $0xb8] sm:%s627] %v728
        %v730 = vld [vmem:[%s634 + $0xbc] sm:%s627]
        %731 = vst [vmem:[%s635 + $0xbc] sm:%s627] %v730
        %v732 = vld [vmem:[%s634 + $0xc0] sm:%s627]
        %733 = vst [vmem:[%s635 + $0xc0] sm:%s627] %v732
        %v734 = vld [vmem:[%s634 + $0xd0] sm:%s627]
        %735 = vst [vmem:[%s635 + $0xc4] sm:%s627] %v734
        %v736 = vld [vmem:[%s634 + $0xc4] sm:%s627]
        %737 = vst [vmem:[%s635 + $0xc8] sm:%s627] %v736
        %v738 = vld [vmem:[%s634 + $0xd4] sm:%s627]
        %739 = vst [vmem:[%s635 + $0xcc] sm:%s627] %v738
        %v740 = vld [vmem:[%s634 + $0xc8] sm:%s627]
        %741 = vst [vmem:[%s635 + $0xd0] sm:%s627] %v740
        %v742 = vld [vmem:[%s634 + $0xd8] sm:%s627]
        %743 = vst [vmem:[%s635 + $0xd4] sm:%s627] %v742
        %v744 = vld [vmem:[%s634 + $0xcc] sm:%s627]
        %745 = vst [vmem:[%s635 + $0xd8] sm:%s627] %v744
        %v746 = vld [vmem:[%s634 + $0xdc] sm:%s627]
        %747 = vst [vmem:[%s635 + $0xdc] sm:%s627] %v746
        %v748 = vld [vmem:[%s634 + $0xe0] sm:%s627]
        %749 = vst [vmem:[%s635 + $0xe0] sm:%s627] %v748
        %v750 = vld [vmem:[%s634 + $0xf0] sm:%s627]
        %751 = vst [vmem:[%s635 + $0xe4] sm:%s627] %v750
        %v752 = vld [vmem:[%s634 + $0xe4] sm:%s627]
        %753 = vst [vmem:[%s635 + $0xe8] sm:%s627] %v752
        %v754 = vld [vmem:[%s634 + $0xf4] sm:%s627]
        %755 = vst [vmem:[%s635 + $0xec] sm:%s627] %v754
        %v756 = vld [vmem:[%s634 + $0xe8] sm:%s627]
        %757 = vst [vmem:[%s635 + $0xf0] sm:%s627] %v756
        %v758 = vld [vmem:[%s634 + $0xf8] sm:%s627]
        %759 = vst [vmem:[%s635 + $0xf4] sm:%s627] %v758
        %v760 = vld [vmem:[%s634 + $0xec] sm:%s627]
        %761 = vst [vmem:[%s635 + $0xf8] sm:%s627] %v760
        %v762 = vld [vmem:[%s634 + $0xfc] sm:%s627]
        %763 = vst [vmem:[%s635 + $0xfc] sm:%s627] %v762
      $region130: #{convlstm_forward.1} parent=117 // loop_footer
        %s633 = sadd.s32 1, %s629
      $region131: #{convlstm_forward.1} parent=117 // loop_footer_branch
        %628 = sbr.rel target = $region127
      $region132: #{convlstm_forward.1} parent=117 // loop_exit
        _
    $region118: #{convlstm_forward.1} parent=102 // pred_fallthru
      _
  $region103: #{convlstm_forward.1} parent=0 // pred_fallthru
    _
  // Predicated region
  $region104: #{convlstm_forward.1} parent=0 // pred_check
    %p469 = pneg %p465
  $region105: #{convlstm_forward.1} parent=0 // pred_check_branch
    %471 = sbr.rel (%p469) target = $region107
  $region106: #{convlstm_forward.1} parent=0 // pred_region
    %s472 = sshllo.u32 0, 4
    loop: start=0, step=1, limit=1
    $region108: #{convlstm_forward.1} parent=106 // loop_pre_header
      _
    $region109: #{convlstm_forward.1} parent=106 // loop_header
      %s474 = sphi 0, %s478
      %p475 = scmp.ge.s32.totalorder %s474, 1
      %s479 = sphi %s7, %s7
      %s480 = sphi [#allocation4], [#allocation4]
    $region110: #{convlstm_forward.1} parent=106 // loop_header_branch
      %477 = sbr.rel (%p475) target = $region114
    $region111: #{convlstm_forward.1} parent=106 // loop_body
      %v481 = vld [vmem:[%s479] sm:%s472]
      %482 = vst [vmem:[%s480] sm:%s472] %v481
      %v483 = vld [vmem:[%s479 + $0x10] sm:%s472]
      %484 = vst [vmem:[%s480 + $0x4] sm:%s472] %v483
      %v485 = vld [vmem:[%s479 + $0x4] sm:%s472]
      %486 = vst [vmem:[%s480 + $0x8] sm:%s472] %v485
      %v487 = vld [vmem:[%s479 + $0x14] sm:%s472]
      %488 = vst [vmem:[%s480 + $0xc] sm:%s472] %v487
      %v489 = vld [vmem:[%s479 + $0x8] sm:%s472]
      %490 = vst [vmem:[%s480 + $0x10] sm:%s472] %v489
      %v491 = vld [vmem:[%s479 + $0x18] sm:%s472]
      %492 = vst [vmem:[%s480 + $0x14] sm:%s472] %v491
      %v493 = vld [vmem:[%s479 + $0xc] sm:%s472]
      %494 = vst [vmem:[%s480 + $0x18] sm:%s472] %v493
      %v495 = vld [vmem:[%s479 + $0x1c] sm:%s472]
      %496 = vst [vmem:[%s480 + $0x1c] sm:%s472] %v495
      %v497 = vld [vmem:[%s479 + $0x20] sm:%s472]
      %498 = vst [vmem:[%s480 + $0x20] sm:%s472] %v497
      %v499 = vld [vmem:[%s479 + $0x30] sm:%s472]
      %500 = vst [vmem:[%s480 + $0x24] sm:%s472] %v499
      %v501 = vld [vmem:[%s479 + $0x24] sm:%s472]
      %502 = vst [vmem:[%s480 + $0x28] sm:%s472] %v501
      %v503 = vld [vmem:[%s479 + $0x34] sm:%s472]
      %504 = vst [vmem:[%s480 + $0x2c] sm:%s472] %v503
      %v505 = vld [vmem:[%s479 + $0x28] sm:%s472]
      %506 = vst [vmem:[%s480 + $0x30] sm:%s472] %v505
      %v507 = vld [vmem:[%s479 + $0x38] sm:%s472]
      %508 = vst [vmem:[%s480 + $0x34] sm:%s472] %v507
      %v509 = vld [vmem:[%s479 + $0x2c] sm:%s472]
      %510 = vst [vmem:[%s480 + $0x38] sm:%s472] %v509
      %v511 = vld [vmem:[%s479 + $0x3c] sm:%s472]
      %512 = vst [vmem:[%s480 + $0x3c] sm:%s472] %v511
      %v513 = vld [vmem:[%s479 + $0x40] sm:%s472]
      %514 = vst [vmem:[%s480 + $0x40] sm:%s472] %v513
      %v515 = vld [vmem:[%s479 + $0x50] sm:%s472]
      %516 = vst [vmem:[%s480 + $0x44] sm:%s472] %v515
      %v517 = vld [vmem:[%s479 + $0x44] sm:%s472]
      %518 = vst [vmem:[%s480 + $0x48] sm:%s472] %v517
      %v519 = vld [vmem:[%s479 + $0x54] sm:%s472]
      %520 = vst [vmem:[%s480 + $0x4c] sm:%s472] %v519
      %v521 = vld [vmem:[%s479 + $0x48] sm:%s472]
      %522 = vst [vmem:[%s480 + $0x50] sm:%s472] %v521
      %v523 = vld [vmem:[%s479 + $0x58] sm:%s472]
      %524 = vst [vmem:[%s480 + $0x54] sm:%s472] %v523
      %v525 = vld [vmem:[%s479 + $0x4c] sm:%s472]
      %526 = vst [vmem:[%s480 + $0x58] sm:%s472] %v525
      %v527 = vld [vmem:[%s479 + $0x5c] sm:%s472]
      %528 = vst [vmem:[%s480 + $0x5c] sm:%s472] %v527
      %v529 = vld [vmem:[%s479 + $0x60] sm:%s472]
      %530 = vst [vmem:[%s480 + $0x60] sm:%s472] %v529
      %v531 = vld [vmem:[%s479 + $0x70] sm:%s472]
      %532 = vst [vmem:[%s480 + $0x64] sm:%s472] %v531
      %v533 = vld [vmem:[%s479 + $0x64] sm:%s472]
      %534 = vst [vmem:[%s480 + $0x68] sm:%s472] %v533
      %v535 = vld [vmem:[%s479 + $0x74] sm:%s472]
      %536 = vst [vmem:[%s480 + $0x6c] sm:%s472] %v535
      %v537 = vld [vmem:[%s479 + $0x68] sm:%s472]
      %538 = vst [vmem:[%s480 + $0x70] sm:%s472] %v537
      %v539 = vld [vmem:[%s479 + $0x78] sm:%s472]
      %540 = vst [vmem:[%s480 + $0x74] sm:%s472] %v539
      %v541 = vld [vmem:[%s479 + $0x6c] sm:%s472]
      %542 = vst [vmem:[%s480 + $0x78] sm:%s472] %v541
      %v543 = vld [vmem:[%s479 + $0x7c] sm:%s472]
      %544 = vst [vmem:[%s480 + $0x7c] sm:%s472] %v543
      %v545 = vld [vmem:[%s479 + $0x80] sm:%s472]
      %546 = vst [vmem:[%s480 + $0x80] sm:%s472] %v545
      %v547 = vld [vmem:[%s479 + $0x90] sm:%s472]
      %548 = vst [vmem:[%s480 + $0x84] sm:%s472] %v547
      %v549 = vld [vmem:[%s479 + $0x84] sm:%s472]
      %550 = vst [vmem:[%s480 + $0x88] sm:%s472] %v549
      %v551 = vld [vmem:[%s479 + $0x94] sm:%s472]
      %552 = vst [vmem:[%s480 + $0x8c] sm:%s472] %v551
      %v553 = vld [vmem:[%s479 + $0x88] sm:%s472]
      %554 = vst [vmem:[%s480 + $0x90] sm:%s472] %v553
      %v555 = vld [vmem:[%s479 + $0x98] sm:%s472]
      %556 = vst [vmem:[%s480 + $0x94] sm:%s472] %v555
      %v557 = vld [vmem:[%s479 + $0x8c] sm:%s472]
      %558 = vst [vmem:[%s480 + $0x98] sm:%s472] %v557
      %v559 = vld [vmem:[%s479 + $0x9c] sm:%s472]
      %560 = vst [vmem:[%s480 + $0x9c] sm:%s472] %v559
      %v561 = vld [vmem:[%s479 + $0xa0] sm:%s472]
      %562 = vst [vmem:[%s480 + $0xa0] sm:%s472] %v561
      %v563 = vld [vmem:[%s479 + $0xb0] sm:%s472]
      %564 = vst [vmem:[%s480 + $0xa4] sm:%s472] %v563
      %v565 = vld [vmem:[%s479 + $0xa4] sm:%s472]
      %566 = vst [vmem:[%s480 + $0xa8] sm:%s472] %v565
      %v567 = vld [vmem:[%s479 + $0xb4] sm:%s472]
      %568 = vst [vmem:[%s480 + $0xac] sm:%s472] %v567
      %v569 = vld [vmem:[%s479 + $0xa8] sm:%s472]
      %570 = vst [vmem:[%s480 + $0xb0] sm:%s472] %v569
      %v571 = vld [vmem:[%s479 + $0xb8] sm:%s472]
      %572 = vst [vmem:[%s480 + $0xb4] sm:%s472] %v571
      %v573 = vld [vmem:[%s479 + $0xac] sm:%s472]
      %574 = vst [vmem:[%s480 + $0xb8] sm:%s472] %v573
      %v575 = vld [vmem:[%s479 + $0xbc] sm:%s472]
      %576 = vst [vmem:[%s480 + $0xbc] sm:%s472] %v575
      %v577 = vld [vmem:[%s479 + $0xc0] sm:%s472]
      %578 = vst [vmem:[%s480 + $0xc0] sm:%s472] %v577
      %v579 = vld [vmem:[%s479 + $0xd0] sm:%s472]
      %580 = vst [vmem:[%s480 + $0xc4] sm:%s472] %v579
      %v581 = vld [vmem:[%s479 + $0xc4] sm:%s472]
      %582 = vst [vmem:[%s480 + $0xc8] sm:%s472] %v581
      %v583 = vld [vmem:[%s479 + $0xd4] sm:%s472]
      %584 = vst [vmem:[%s480 + $0xcc] sm:%s472] %v583
      %v585 = vld [vmem:[%s479 + $0xc8] sm:%s472]
      %586 = vst [vmem:[%s480 + $0xd0] sm:%s472] %v585
      %v587 = vld [vmem:[%s479 + $0xd8] sm:%s472]
      %588 = vst [vmem:[%s480 + $0xd4] sm:%s472] %v587
      %v589 = vld [vmem:[%s479 + $0xcc] sm:%s472]
      %590 = vst [vmem:[%s480 + $0xd8] sm:%s472] %v589
      %v591 = vld [vmem:[%s479 + $0xdc] sm:%s472]
      %592 = vst [vmem:[%s480 + $0xdc] sm:%s472] %v591
      %v593 = vld [vmem:[%s479 + $0xe0] sm:%s472]
      %594 = vst [vmem:[%s480 + $0xe0] sm:%s472] %v593
      %v595 = vld [vmem:[%s479 + $0xf0] sm:%s472]
      %596 = vst [vmem:[%s480 + $0xe4] sm:%s472] %v595
      %v597 = vld [vmem:[%s479 + $0xe4] sm:%s472]
      %598 = vst [vmem:[%s480 + $0xe8] sm:%s472] %v597
      %v599 = vld [vmem:[%s479 + $0xf4] sm:%s472]
      %600 = vst [vmem:[%s480 + $0xec] sm:%s472] %v599
      %v601 = vld [vmem:[%s479 + $0xe8] sm:%s472]
      %602 = vst [vmem:[%s480 + $0xf0] sm:%s472] %v601
      %v603 = vld [vmem:[%s479 + $0xf8] sm:%s472]
      %604 = vst [vmem:[%s480 + $0xf4] sm:%s472] %v603
      %v605 = vld [vmem:[%s479 + $0xec] sm:%s472]
      %606 = vst [vmem:[%s480 + $0xf8] sm:%s472] %v605
      %v607 = vld [vmem:[%s479 + $0xfc] sm:%s472]
      %608 = vst [vmem:[%s480 + $0xfc] sm:%s472] %v607
    $region112: #{convlstm_forward.1} parent=106 // loop_footer
      %s478 = sadd.s32 1, %s474
    $region113: #{convlstm_forward.1} parent=106 // loop_footer_branch
      %473 = sbr.rel target = $region109
    $region114: #{convlstm_forward.1} parent=106 // loop_exit
      _
  $region107: #{convlstm_forward.1} parent=0 // pred_fallthru
    _
  // Predicated region
  $region133: #{convlstm_forward.1} parent=0 // pred_check
    _
  $region134: #{convlstm_forward.1} parent=0 // pred_check_branch
    %766 = sbr.rel (0) target = $region136
  $region135: #{convlstm_forward.1} parent=0 // pred_region
    %767 = vsyncadd %s463, 4096
  $region136: #{convlstm_forward.1} parent=0 // pred_fallthru
    _
  %s768 = scalar_lea.sflag [#allocation10], 3
  %p770 = scmp.lt.u32.totalorder 4, 8
  %p771 = pneg %p770
  // Predicated region
  $region137: #{convlstm_forward.1} parent=0 // pred_check
    _
  $region138: #{convlstm_forward.1} parent=0 // pred_check_branch
    %773 = sbr.rel (%p770) target = $region140
  $region139: #{convlstm_forward.1} parent=0 // pred_region
    %s914 = sand.u32 4, 7
    %p915 = scmp.eq.s32.totalorder %s914, 0
    %p916 = pneg %p915
    // Predicated region
    $region152: #{convlstm_forward.1} parent=139 // pred_check
      _
    $region153: #{convlstm_forward.1} parent=139 // pred_check_branch
      %918 = sbr.rel (%p915) target = $region155
    $region154: #{convlstm_forward.1} parent=139 // pred_region
      %s919 = sand.u32 4, 7
      %s920 = ssub.s32 4, %s919
      %s921 = scalar_lea.vmem %s8, %s920
      %s922 = ssub.s32 4, %s919
      %s923 = scalar_lea.vmem [#allocation5], %s922
      loop: start=0, step=1, limit=1
      $region156: #{convlstm_forward.1} parent=154 // loop_pre_header
        _
      $region157: #{convlstm_forward.1} parent=154 // loop_header
        %s925 = sphi 0, %s929
        %p926 = scmp.ge.s32.totalorder %s925, 1
        %s930 = sphi %s8, %s8
        %s931 = sphi [#allocation5], [#allocation5]
      $region158: #{convlstm_forward.1} parent=154 // loop_header_branch
        %928 = sbr.rel (%p926) target = $region162
      $region159: #{convlstm_forward.1} parent=154 // loop_body
        _
      $region160: #{convlstm_forward.1} parent=154 // loop_footer
        %s929 = sadd.s32 1, %s925
      $region161: #{convlstm_forward.1} parent=154 // loop_footer_branch
        %924 = sbr.rel target = $region157
      $region162: #{convlstm_forward.1} parent=154 // loop_exit
        _
      %s932 = sshllo.u32 0, %s919
      loop: start=0, step=1, limit=1
      $region163: #{convlstm_forward.1} parent=154 // loop_pre_header
        _
      $region164: #{convlstm_forward.1} parent=154 // loop_header
        %s934 = sphi 0, %s938
        %p935 = scmp.ge.s32.totalorder %s934, 1
        %s939 = sphi %s921, %s921
        %s940 = sphi %s923, %s923
      $region165: #{convlstm_forward.1} parent=154 // loop_header_branch
        %937 = sbr.rel (%p935) target = $region169
      $region166: #{convlstm_forward.1} parent=154 // loop_body
        %v941 = vld [vmem:[%s939] sm:%s932]
        %942 = vst [vmem:[%s940] sm:%s932] %v941
        %v943 = vld [vmem:[%s939 + $0x10] sm:%s932]
        %944 = vst [vmem:[%s940 + $0x4] sm:%s932] %v943
        %v945 = vld [vmem:[%s939 + $0x4] sm:%s932]
        %946 = vst [vmem:[%s940 + $0x8] sm:%s932] %v945
        %v947 = vld [vmem:[%s939 + $0x14] sm:%s932]
        %948 = vst [vmem:[%s940 + $0xc] sm:%s932] %v947
        %v949 = vld [vmem:[%s939 + $0x8] sm:%s932]
        %950 = vst [vmem:[%s940 + $0x10] sm:%s932] %v949
        %v951 = vld [vmem:[%s939 + $0x18] sm:%s932]
        %952 = vst [vmem:[%s940 + $0x14] sm:%s932] %v951
        %v953 = vld [vmem:[%s939 + $0xc] sm:%s932]
        %954 = vst [vmem:[%s940 + $0x18] sm:%s932] %v953
        %v955 = vld [vmem:[%s939 + $0x1c] sm:%s932]
        %956 = vst [vmem:[%s940 + $0x1c] sm:%s932] %v955
        %v957 = vld [vmem:[%s939 + $0x20] sm:%s932]
        %958 = vst [vmem:[%s940 + $0x20] sm:%s932] %v957
        %v959 = vld [vmem:[%s939 + $0x30] sm:%s932]
        %960 = vst [vmem:[%s940 + $0x24] sm:%s932] %v959
        %v961 = vld [vmem:[%s939 + $0x24] sm:%s932]
        %962 = vst [vmem:[%s940 + $0x28] sm:%s932] %v961
        %v963 = vld [vmem:[%s939 + $0x34] sm:%s932]
        %964 = vst [vmem:[%s940 + $0x2c] sm:%s932] %v963
        %v965 = vld [vmem:[%s939 + $0x28] sm:%s932]
        %966 = vst [vmem:[%s940 + $0x30] sm:%s932] %v965
        %v967 = vld [vmem:[%s939 + $0x38] sm:%s932]
        %968 = vst [vmem:[%s940 + $0x34] sm:%s932] %v967
        %v969 = vld [vmem:[%s939 + $0x2c] sm:%s932]
        %970 = vst [vmem:[%s940 + $0x38] sm:%s932] %v969
        %v971 = vld [vmem:[%s939 + $0x3c] sm:%s932]
        %972 = vst [vmem:[%s940 + $0x3c] sm:%s932] %v971
        %v973 = vld [vmem:[%s939 + $0x40] sm:%s932]
        %974 = vst [vmem:[%s940 + $0x40] sm:%s932] %v973
        %v975 = vld [vmem:[%s939 + $0x50] sm:%s932]
        %976 = vst [vmem:[%s940 + $0x44] sm:%s932] %v975
        %v977 = vld [vmem:[%s939 + $0x44] sm:%s932]
        %978 = vst [vmem:[%s940 + $0x48] sm:%s932] %v977
        %v979 = vld [vmem:[%s939 + $0x54] sm:%s932]
        %980 = vst [vmem:[%s940 + $0x4c] sm:%s932] %v979
        %v981 = vld [vmem:[%s939 + $0x48] sm:%s932]
        %982 = vst [vmem:[%s940 + $0x50] sm:%s932] %v981
        %v983 = vld [vmem:[%s939 + $0x58] sm:%s932]
        %984 = vst [vmem:[%s940 + $0x54] sm:%s932] %v983
        %v985 = vld [vmem:[%s939 + $0x4c] sm:%s932]
        %986 = vst [vmem:[%s940 + $0x58] sm:%s932] %v985
        %v987 = vld [vmem:[%s939 + $0x5c] sm:%s932]
        %988 = vst [vmem:[%s940 + $0x5c] sm:%s932] %v987
        %v989 = vld [vmem:[%s939 + $0x60] sm:%s932]
        %990 = vst [vmem:[%s940 + $0x60] sm:%s932] %v989
        %v991 = vld [vmem:[%s939 + $0x70] sm:%s932]
        %992 = vst [vmem:[%s940 + $0x64] sm:%s932] %v991
        %v993 = vld [vmem:[%s939 + $0x64] sm:%s932]
        %994 = vst [vmem:[%s940 + $0x68] sm:%s932] %v993
        %v995 = vld [vmem:[%s939 + $0x74] sm:%s932]
        %996 = vst [vmem:[%s940 + $0x6c] sm:%s932] %v995
        %v997 = vld [vmem:[%s939 + $0x68] sm:%s932]
        %998 = vst [vmem:[%s940 + $0x70] sm:%s932] %v997
        %v999 = vld [vmem:[%s939 + $0x78] sm:%s932]
        %1000 = vst [vmem:[%s940 + $0x74] sm:%s932] %v999
        %v1001 = vld [vmem:[%s939 + $0x6c] sm:%s932]
        %1002 = vst [vmem:[%s940 + $0x78] sm:%s932] %v1001
        %v1003 = vld [vmem:[%s939 + $0x7c] sm:%s932]
        %1004 = vst [vmem:[%s940 + $0x7c] sm:%s932] %v1003
        %v1005 = vld [vmem:[%s939 + $0x80] sm:%s932]
        %1006 = vst [vmem:[%s940 + $0x80] sm:%s932] %v1005
        %v1007 = vld [vmem:[%s939 + $0x90] sm:%s932]
        %1008 = vst [vmem:[%s940 + $0x84] sm:%s932] %v1007
        %v1009 = vld [vmem:[%s939 + $0x84] sm:%s932]
        %1010 = vst [vmem:[%s940 + $0x88] sm:%s932] %v1009
        %v1011 = vld [vmem:[%s939 + $0x94] sm:%s932]
        %1012 = vst [vmem:[%s940 + $0x8c] sm:%s932] %v1011
        %v1013 = vld [vmem:[%s939 + $0x88] sm:%s932]
        %1014 = vst [vmem:[%s940 + $0x90] sm:%s932] %v1013
        %v1015 = vld [vmem:[%s939 + $0x98] sm:%s932]
        %1016 = vst [vmem:[%s940 + $0x94] sm:%s932] %v1015
        %v1017 = vld [vmem:[%s939 + $0x8c] sm:%s932]
        %1018 = vst [vmem:[%s940 + $0x98] sm:%s932] %v1017
        %v1019 = vld [vmem:[%s939 + $0x9c] sm:%s932]
        %1020 = vst [vmem:[%s940 + $0x9c] sm:%s932] %v1019
        %v1021 = vld [vmem:[%s939 + $0xa0] sm:%s932]
        %1022 = vst [vmem:[%s940 + $0xa0] sm:%s932] %v1021
        %v1023 = vld [vmem:[%s939 + $0xb0] sm:%s932]
        %1024 = vst [vmem:[%s940 + $0xa4] sm:%s932] %v1023
        %v1025 = vld [vmem:[%s939 + $0xa4] sm:%s932]
        %1026 = vst [vmem:[%s940 + $0xa8] sm:%s932] %v1025
        %v1027 = vld [vmem:[%s939 + $0xb4] sm:%s932]
        %1028 = vst [vmem:[%s940 + $0xac] sm:%s932] %v1027
        %v1029 = vld [vmem:[%s939 + $0xa8] sm:%s932]
        %1030 = vst [vmem:[%s940 + $0xb0] sm:%s932] %v1029
        %v1031 = vld [vmem:[%s939 + $0xb8] sm:%s932]
        %1032 = vst [vmem:[%s940 + $0xb4] sm:%s932] %v1031
        %v1033 = vld [vmem:[%s939 + $0xac] sm:%s932]
        %1034 = vst [vmem:[%s940 + $0xb8] sm:%s932] %v1033
        %v1035 = vld [vmem:[%s939 + $0xbc] sm:%s932]
        %1036 = vst [vmem:[%s940 + $0xbc] sm:%s932] %v1035
        %v1037 = vld [vmem:[%s939 + $0xc0] sm:%s932]
        %1038 = vst [vmem:[%s940 + $0xc0] sm:%s932] %v1037
        %v1039 = vld [vmem:[%s939 + $0xd0] sm:%s932]
        %1040 = vst [vmem:[%s940 + $0xc4] sm:%s932] %v1039
        %v1041 = vld [vmem:[%s939 + $0xc4] sm:%s932]
        %1042 = vst [vmem:[%s940 + $0xc8] sm:%s932] %v1041
        %v1043 = vld [vmem:[%s939 + $0xd4] sm:%s932]
        %1044 = vst [vmem:[%s940 + $0xcc] sm:%s932] %v1043
        %v1045 = vld [vmem:[%s939 + $0xc8] sm:%s932]
        %1046 = vst [vmem:[%s940 + $0xd0] sm:%s932] %v1045
        %v1047 = vld [vmem:[%s939 + $0xd8] sm:%s932]
        %1048 = vst [vmem:[%s940 + $0xd4] sm:%s932] %v1047
        %v1049 = vld [vmem:[%s939 + $0xcc] sm:%s932]
        %1050 = vst [vmem:[%s940 + $0xd8] sm:%s932] %v1049
        %v1051 = vld [vmem:[%s939 + $0xdc] sm:%s932]
        %1052 = vst [vmem:[%s940 + $0xdc] sm:%s932] %v1051
        %v1053 = vld [vmem:[%s939 + $0xe0] sm:%s932]
        %1054 = vst [vmem:[%s940 + $0xe0] sm:%s932] %v1053
        %v1055 = vld [vmem:[%s939 + $0xf0] sm:%s932]
        %1056 = vst [vmem:[%s940 + $0xe4] sm:%s932] %v1055
        %v1057 = vld [vmem:[%s939 + $0xe4] sm:%s932]
        %1058 = vst [vmem:[%s940 + $0xe8] sm:%s932] %v1057
        %v1059 = vld [vmem:[%s939 + $0xf4] sm:%s932]
        %1060 = vst [vmem:[%s940 + $0xec] sm:%s932] %v1059
        %v1061 = vld [vmem:[%s939 + $0xe8] sm:%s932]
        %1062 = vst [vmem:[%s940 + $0xf0] sm:%s932] %v1061
        %v1063 = vld [vmem:[%s939 + $0xf8] sm:%s932]
        %1064 = vst [vmem:[%s940 + $0xf4] sm:%s932] %v1063
        %v1065 = vld [vmem:[%s939 + $0xec] sm:%s932]
        %1066 = vst [vmem:[%s940 + $0xf8] sm:%s932] %v1065
        %v1067 = vld [vmem:[%s939 + $0xfc] sm:%s932]
        %1068 = vst [vmem:[%s940 + $0xfc] sm:%s932] %v1067
      $region167: #{convlstm_forward.1} parent=154 // loop_footer
        %s938 = sadd.s32 1, %s934
      $region168: #{convlstm_forward.1} parent=154 // loop_footer_branch
        %933 = sbr.rel target = $region164
      $region169: #{convlstm_forward.1} parent=154 // loop_exit
        _
    $region155: #{convlstm_forward.1} parent=139 // pred_fallthru
      _
  $region140: #{convlstm_forward.1} parent=0 // pred_fallthru
    _
  // Predicated region
  $region141: #{convlstm_forward.1} parent=0 // pred_check
    %p774 = pneg %p770
  $region142: #{convlstm_forward.1} parent=0 // pred_check_branch
    %776 = sbr.rel (%p774) target = $region144
  $region143: #{convlstm_forward.1} parent=0 // pred_region
    %s777 = sshllo.u32 0, 4
    loop: start=0, step=1, limit=1
    $region145: #{convlstm_forward.1} parent=143 // loop_pre_header
      _
    $region146: #{convlstm_forward.1} parent=143 // loop_header
      %s779 = sphi 0, %s783
      %p780 = scmp.ge.s32.totalorder %s779, 1
      %s784 = sphi %s8, %s8
      %s785 = sphi [#allocation5], [#allocation5]
    $region147: #{convlstm_forward.1} parent=143 // loop_header_branch
      %782 = sbr.rel (%p780) target = $region151
    $region148: #{convlstm_forward.1} parent=143 // loop_body
      %v786 = vld [vmem:[%s784] sm:%s777]
      %787 = vst [vmem:[%s785] sm:%s777] %v786
      %v788 = vld [vmem:[%s784 + $0x10] sm:%s777]
      %789 = vst [vmem:[%s785 + $0x4] sm:%s777] %v788
      %v790 = vld [vmem:[%s784 + $0x4] sm:%s777]
      %791 = vst [vmem:[%s785 + $0x8] sm:%s777] %v790
      %v792 = vld [vmem:[%s784 + $0x14] sm:%s777]
      %793 = vst [vmem:[%s785 + $0xc] sm:%s777] %v792
      %v794 = vld [vmem:[%s784 + $0x8] sm:%s777]
      %795 = vst [vmem:[%s785 + $0x10] sm:%s777] %v794
      %v796 = vld [vmem:[%s784 + $0x18] sm:%s777]
      %797 = vst [vmem:[%s785 + $0x14] sm:%s777] %v796
      %v798 = vld [vmem:[%s784 + $0xc] sm:%s777]
      %799 = vst [vmem:[%s785 + $0x18] sm:%s777] %v798
      %v800 = vld [vmem:[%s784 + $0x1c] sm:%s777]
      %801 = vst [vmem:[%s785 + $0x1c] sm:%s777] %v800
      %v802 = vld [vmem:[%s784 + $0x20] sm:%s777]
      %803 = vst [vmem:[%s785 + $0x20] sm:%s777] %v802
      %v804 = vld [vmem:[%s784 + $0x30] sm:%s777]
      %805 = vst [vmem:[%s785 + $0x24] sm:%s777] %v804
      %v806 = vld [vmem:[%s784 + $0x24] sm:%s777]
      %807 = vst [vmem:[%s785 + $0x28] sm:%s777] %v806
      %v808 = vld [vmem:[%s784 + $0x34] sm:%s777]
      %809 = vst [vmem:[%s785 + $0x2c] sm:%s777] %v808
      %v810 = vld [vmem:[%s784 + $0x28] sm:%s777]
      %811 = vst [vmem:[%s785 + $0x30] sm:%s777] %v810
      %v812 = vld [vmem:[%s784 + $0x38] sm:%s777]
      %813 = vst [vmem:[%s785 + $0x34] sm:%s777] %v812
      %v814 = vld [vmem:[%s784 + $0x2c] sm:%s777]
      %815 = vst [vmem:[%s785 + $0x38] sm:%s777] %v814
      %v816 = vld [vmem:[%s784 + $0x3c] sm:%s777]
      %817 = vst [vmem:[%s785 + $0x3c] sm:%s777] %v816
      %v818 = vld [vmem:[%s784 + $0x40] sm:%s777]
      %819 = vst [vmem:[%s785 + $0x40] sm:%s777] %v818
      %v820 = vld [vmem:[%s784 + $0x50] sm:%s777]
      %821 = vst [vmem:[%s785 + $0x44] sm:%s777] %v820
      %v822 = vld [vmem:[%s784 + $0x44] sm:%s777]
      %823 = vst [vmem:[%s785 + $0x48] sm:%s777] %v822
      %v824 = vld [vmem:[%s784 + $0x54] sm:%s777]
      %825 = vst [vmem:[%s785 + $0x4c] sm:%s777] %v824
      %v826 = vld [vmem:[%s784 + $0x48] sm:%s777]
      %827 = vst [vmem:[%s785 + $0x50] sm:%s777] %v826
      %v828 = vld [vmem:[%s784 + $0x58] sm:%s777]
      %829 = vst [vmem:[%s785 + $0x54] sm:%s777] %v828
      %v830 = vld [vmem:[%s784 + $0x4c] sm:%s777]
      %831 = vst [vmem:[%s785 + $0x58] sm:%s777] %v830
      %v832 = vld [vmem:[%s784 + $0x5c] sm:%s777]
      %833 = vst [vmem:[%s785 + $0x5c] sm:%s777] %v832
      %v834 = vld [vmem:[%s784 + $0x60] sm:%s777]
      %835 = vst [vmem:[%s785 + $0x60] sm:%s777] %v834
      %v836 = vld [vmem:[%s784 + $0x70] sm:%s777]
      %837 = vst [vmem:[%s785 + $0x64] sm:%s777] %v836
      %v838 = vld [vmem:[%s784 + $0x64] sm:%s777]
      %839 = vst [vmem:[%s785 + $0x68] sm:%s777] %v838
      %v840 = vld [vmem:[%s784 + $0x74] sm:%s777]
      %841 = vst [vmem:[%s785 + $0x6c] sm:%s777] %v840
      %v842 = vld [vmem:[%s784 + $0x68] sm:%s777]
      %843 = vst [vmem:[%s785 + $0x70] sm:%s777] %v842
      %v844 = vld [vmem:[%s784 + $0x78] sm:%s777]
      %845 = vst [vmem:[%s785 + $0x74] sm:%s777] %v844
      %v846 = vld [vmem:[%s784 + $0x6c] sm:%s777]
      %847 = vst [vmem:[%s785 + $0x78] sm:%s777] %v846
      %v848 = vld [vmem:[%s784 + $0x7c] sm:%s777]
      %849 = vst [vmem:[%s785 + $0x7c] sm:%s777] %v848
      %v850 = vld [vmem:[%s784 + $0x80] sm:%s777]
      %851 = vst [vmem:[%s785 + $0x80] sm:%s777] %v850
      %v852 = vld [vmem:[%s784 + $0x90] sm:%s777]
      %853 = vst [vmem:[%s785 + $0x84] sm:%s777] %v852
      %v854 = vld [vmem:[%s784 + $0x84] sm:%s777]
      %855 = vst [vmem:[%s785 + $0x88] sm:%s777] %v854
      %v856 = vld [vmem:[%s784 + $0x94] sm:%s777]
      %857 = vst [vmem:[%s785 + $0x8c] sm:%s777] %v856
      %v858 = vld [vmem:[%s784 + $0x88] sm:%s777]
      %859 = vst [vmem:[%s785 + $0x90] sm:%s777] %v858
      %v860 = vld [vmem:[%s784 + $0x98] sm:%s777]
      %861 = vst [vmem:[%s785 + $0x94] sm:%s777] %v860
      %v862 = vld [vmem:[%s784 + $0x8c] sm:%s777]
      %863 = vst [vmem:[%s785 + $0x98] sm:%s777] %v862
      %v864 = vld [vmem:[%s784 + $0x9c] sm:%s777]
      %865 = vst [vmem:[%s785 + $0x9c] sm:%s777] %v864
      %v866 = vld [vmem:[%s784 + $0xa0] sm:%s777]
      %867 = vst [vmem:[%s785 + $0xa0] sm:%s777] %v866
      %v868 = vld [vmem:[%s784 + $0xb0] sm:%s777]
      %869 = vst [vmem:[%s785 + $0xa4] sm:%s777] %v868
      %v870 = vld [vmem:[%s784 + $0xa4] sm:%s777]
      %871 = vst [vmem:[%s785 + $0xa8] sm:%s777] %v870
      %v872 = vld [vmem:[%s784 + $0xb4] sm:%s777]
      %873 = vst [vmem:[%s785 + $0xac] sm:%s777] %v872
      %v874 = vld [vmem:[%s784 + $0xa8] sm:%s777]
      %875 = vst [vmem:[%s785 + $0xb0] sm:%s777] %v874
      %v876 = vld [vmem:[%s784 + $0xb8] sm:%s777]
      %877 = vst [vmem:[%s785 + $0xb4] sm:%s777] %v876
      %v878 = vld [vmem:[%s784 + $0xac] sm:%s777]
      %879 = vst [vmem:[%s785 + $0xb8] sm:%s777] %v878
      %v880 = vld [vmem:[%s784 + $0xbc] sm:%s777]
      %881 = vst [vmem:[%s785 + $0xbc] sm:%s777] %v880
      %v882 = vld [vmem:[%s784 + $0xc0] sm:%s777]
      %883 = vst [vmem:[%s785 + $0xc0] sm:%s777] %v882
      %v884 = vld [vmem:[%s784 + $0xd0] sm:%s777]
      %885 = vst [vmem:[%s785 + $0xc4] sm:%s777] %v884
      %v886 = vld [vmem:[%s784 + $0xc4] sm:%s777]
      %887 = vst [vmem:[%s785 + $0xc8] sm:%s777] %v886
      %v888 = vld [vmem:[%s784 + $0xd4] sm:%s777]
      %889 = vst [vmem:[%s785 + $0xcc] sm:%s777] %v888
      %v890 = vld [vmem:[%s784 + $0xc8] sm:%s777]
      %891 = vst [vmem:[%s785 + $0xd0] sm:%s777] %v890
      %v892 = vld [vmem:[%s784 + $0xd8] sm:%s777]
      %893 = vst [vmem:[%s785 + $0xd4] sm:%s777] %v892
      %v894 = vld [vmem:[%s784 + $0xcc] sm:%s777]
      %895 = vst [vmem:[%s785 + $0xd8] sm:%s777] %v894
      %v896 = vld [vmem:[%s784 + $0xdc] sm:%s777]
      %897 = vst [vmem:[%s785 + $0xdc] sm:%s777] %v896
      %v898 = vld [vmem:[%s784 + $0xe0] sm:%s777]
      %899 = vst [vmem:[%s785 + $0xe0] sm:%s777] %v898
      %v900 = vld [vmem:[%s784 + $0xf0] sm:%s777]
      %901 = vst [vmem:[%s785 + $0xe4] sm:%s777] %v900
      %v902 = vld [vmem:[%s784 + $0xe4] sm:%s777]
      %903 = vst [vmem:[%s785 + $0xe8] sm:%s777] %v902
      %v904 = vld [vmem:[%s784 + $0xf4] sm:%s777]
      %905 = vst [vmem:[%s785 + $0xec] sm:%s777] %v904
      %v906 = vld [vmem:[%s784 + $0xe8] sm:%s777]
      %907 = vst [vmem:[%s785 + $0xf0] sm:%s777] %v906
      %v908 = vld [vmem:[%s784 + $0xf8] sm:%s777]
      %909 = vst [vmem:[%s785 + $0xf4] sm:%s777] %v908
      %v910 = vld [vmem:[%s784 + $0xec] sm:%s777]
      %911 = vst [vmem:[%s785 + $0xf8] sm:%s777] %v910
      %v912 = vld [vmem:[%s784 + $0xfc] sm:%s777]
      %913 = vst [vmem:[%s785 + $0xfc] sm:%s777] %v912
    $region149: #{convlstm_forward.1} parent=143 // loop_footer
      %s783 = sadd.s32 1, %s779
    $region150: #{convlstm_forward.1} parent=143 // loop_footer_branch
      %778 = sbr.rel target = $region146
    $region151: #{convlstm_forward.1} parent=143 // loop_exit
      _
  $region144: #{convlstm_forward.1} parent=0 // pred_fallthru
    _
  // Predicated region
  $region170: #{convlstm_forward.1} parent=0 // pred_check
    _
  $region171: #{convlstm_forward.1} parent=0 // pred_check_branch
    %1071 = sbr.rel (0) target = $region173
  $region172: #{convlstm_forward.1} parent=0 // pred_region
    %1072 = vsyncadd %s768, 4096
  $region173: #{convlstm_forward.1} parent=0 // pred_fallthru
    _
  %v1073 = vld [vmem:[%s3] sm:$0x3]
  %v1074 = vld [vmem:[%s0] sm:$0xff]
  %v1075 = vld [vmem:[%s0 + $0x8] sm:$0xff]
  %v1076 = vld [vmem:[%s0 + $0x10] sm:$0xff]
  %v1077 = vld [vmem:[%s0 + $0x18] sm:$0xff]
  %v1078 = vld [vmem:[%s0 + $0x20] sm:$0xff]
  %v1079 = vld [vmem:[%s0 + $0x28] sm:$0xff]
  %v1080 = vld [vmem:[%s0 + $0x30] sm:$0xff]
  %v1081 = vld [vmem:[%s0 + $0x38] sm:$0xff]
  %v1082 = vld [vmem:[%s0 + $0x40] sm:$0xff]
  %v1083 = vld [vmem:[%s0 + $0x48] sm:$0xff]
  %v1084 = vld [vmem:[%s0 + $0x50] sm:$0xff]
  %v1085 = vld [vmem:[%s0 + $0x58] sm:$0xff]
  %v1086 = vld [vmem:[%s0 + $0x60] sm:$0xff]
  %v1087 = vld [vmem:[%s0 + $0x68] sm:$0xff]
  %v1088 = vld [vmem:[%s0 + $0x70] sm:$0xff]
  %v1089 = vld [vmem:[%s0 + $0x78] sm:$0xff]
  %v1090 = vld [vmem:[%s1] sm:$0xff]
  %v1091 = vld [vmem:[%s1 + $0x8] sm:$0xff]
  %v1092 = vld [vmem:[%s1 + $0x10] sm:$0xff]
  %v1093 = vld [vmem:[%s1 + $0x18] sm:$0xff]
  %v1094 = vld [vmem:[%s1 + $0x20] sm:$0xff]
  %v1095 = vld [vmem:[%s1 + $0x28] sm:$0xff]
  %v1096 = vld [vmem:[%s1 + $0x30] sm:$0xff]
  %v1097 = vld [vmem:[%s1 + $0x38] sm:$0xff]
  %v1098 = vld [vmem:[%s1 + $0x40] sm:$0xff]
  %v1099 = vld [vmem:[%s1 + $0x48] sm:$0xff]
  %v1100 = vld [vmem:[%s1 + $0x50] sm:$0xff]
  %v1101 = vld [vmem:[%s1 + $0x58] sm:$0xff]
  %v1102 = vld [vmem:[%s1 + $0x60] sm:$0xff]
  %v1103 = vld [vmem:[%s1 + $0x68] sm:$0xff]
  %v1104 = vld [vmem:[%s1 + $0x70] sm:$0xff]
  %v1105 = vld [vmem:[%s1 + $0x78] sm:$0xff]
  %v1106 = vld [vmem:[%s1 + $0x80] sm:$0xff]
  %v1107 = vld [vmem:[%s1 + $0x88] sm:$0xff]
  %v1108 = vld [vmem:[%s1 + $0x90] sm:$0xff]
  %v1109 = vld [vmem:[%s1 + $0x98] sm:$0xff]
  %v1110 = vld [vmem:[%s1 + $0xa0] sm:$0xff]
  %v1111 = vld [vmem:[%s1 + $0xa8] sm:$0xff]
  %v1112 = vld [vmem:[%s1 + $0xb0] sm:$0xff]
  %v1113 = vld [vmem:[%s1 + $0xb8] sm:$0xff]
  %v1114 = vld [vmem:[%s1 + $0xc0] sm:$0xff]
  %v1115 = vld [vmem:[%s1 + $0xc8] sm:$0xff]
  %v1116 = vld [vmem:[%s1 + $0xd0] sm:$0xff]
  %v1117 = vld [vmem:[%s1 + $0xd8] sm:$0x33]
  %v1118 = vpack.c.bf16 %v1076, %v1074
  %v1119 = vpack.c.bf16 %v1077, %v1075
  %v1120 = vpack.c.bf16 %v1080, %v1078
  %v1121 = vpack.c.bf16 %v1081, %v1079
  %v1122 = vpack.c.bf16 %v1084, %v1082
  %v1123 = vpack.c.bf16 %v1085, %v1083
  %v1124 = vpack.c.bf16 %v1088, %v1086
  %v1125 = vpack.c.bf16 %v1089, %v1087
  %v1127 = vlaneseq
  %v1128 = vshrl.u32 %v1127, 7
  %v1129 = vsub.s32 0, %v1128
  %v1130 = vrot.slane %v1073, %v1129
  %v1131 = vlaneseq
  %v1132 = vshrl.u32 %v1131, 7
  %v1133 = vsub.s32 1, %v1132
  %v1134 = vrot.slane %v1073, %v1133
  %v1165 = vunpack.c.l.b16 %v1090
  %v1166 = vunpack.c.h.b16 %v1090
  %v1167 = vunpack.c.l.b16 %v1091
  %v1168 = vunpack.c.h.b16 %v1091
  %v1169 = vunpack.c.l.b16 %v1092
  %v1170 = vunpack.c.h.b16 %v1092
  %v1171 = vunpack.c.l.b16 %v1093
  %v1172 = vunpack.c.h.b16 %v1093
  %v1173 = vunpack.c.l.b16 %v1094
  %v1174 = vunpack.c.h.b16 %v1094
  %v1175 = vunpack.c.l.b16 %v1095
  %v1176 = vunpack.c.h.b16 %v1095
  %v1177 = vunpack.c.l.b16 %v1096
  %v1178 = vunpack.c.h.b16 %v1096
  %v1179 = vunpack.c.l.b16 %v1097
  %v1180 = vunpack.c.h.b16 %v1097
  %v1181 = vunpack.c.l.b16 %v1098
  %v1182 = vunpack.c.h.b16 %v1098
  %v1183 = vunpack.c.l.b16 %v1099
  %v1184 = vunpack.c.h.b16 %v1099
  %v1185 = vunpack.c.l.b16 %v1100
  %v1186 = vunpack.c.h.b16 %v1100
  %v1187 = vunpack.c.l.b16 %v1101
  %v1188 = vunpack.c.h.b16 %v1101
  %v1189 = vunpack.c.l.b16 %v1102
  %v1190 = vunpack.c.h.b16 %v1102
  %v1191 = vunpack.c.l.b16 %v1103
  %v1192 = vunpack.c.h.b16 %v1103
  %v1193 = vunpack.c.l.b16 %v1104
  %v1194 = vunpack.c.h.b16 %v1104
  %v1195 = vunpack.c.l.b16 %v1105
  %v1196 = vunpack.c.h.b16 %v1105
  %v1197 = vunpack.c.l.b16 %v1106
  %v1198 = vunpack.c.h.b16 %v1106
  %v1199 = vunpack.c.l.b16 %v1107
  %v1200 = vunpack.c.h.b16 %v1107
  %v1201 = vunpack.c.l.b16 %v1108
  %v1202 = vunpack.c.h.b16 %v1108
  %v1203 = vunpack.c.l.b16 %v1109
  %v1204 = vunpack.c.h.b16 %v1109
  %v1205 = vunpack.c.l.b16 %v1110
  %v1206 = vunpack.c.h.b16 %v1110
  %v1207 = vunpack.c.l.b16 %v1111
  %v1208 = vunpack.c.h.b16 %v1111
  %v1209 = vunpack.c.l.b16 %v1112
  %v1210 = vunpack.c.h.b16 %v1112
  %v1211 = vunpack.c.l.b16 %v1113
  %v1212 = vunpack.c.h.b16 %v1113
  %v1213 = vunpack.c.l.b16 %v1114
  %v1214 = vunpack.c.h.b16 %v1114
  %v1215 = vunpack.c.l.b16 %v1115
  %v1216 = vunpack.c.h.b16 %v1115
  %v1217 = vunpack.c.l.b16 %v1116
  %v1218 = vunpack.c.h.b16 %v1116
  %v1219 = vunpack.c.l.b16 %v1117
  %v1220 = vunpack.c.h.b16 %v1117
  %v1221 = vpack.c.b16 %v1167, %v1165
  %v1222 = vpack.c.b16 %v1168, %v1166
  %v1223 = vpack.c.b16 %v1171, %v1169
  %v1224 = vpack.c.b16 %v1172, %v1170
  %v1225 = vpack.c.b16 %v1175, %v1173
  %v1226 = vpack.c.b16 %v1176, %v1174
  %v1227 = vpack.c.b16 %v1179, %v1177
  %v1228 = vpack.c.b16 %v1180, %v1178
  %v1229 = vpack.c.b16 %v1183, %v1181
  %v1230 = vpack.c.b16 %v1184, %v1182
  %v1231 = vpack.c.b16 %v1187, %v1185
  %v1232 = vpack.c.b16 %v1188, %v1186
  %v1233 = vpack.c.b16 %v1191, %v1189
  %v1234 = vpack.c.b16 %v1192, %v1190
  %v1235 = vpack.c.b16 %v1195, %v1193
  %v1236 = vpack.c.b16 %v1196, %v1194
  %v1237 = vpack.c.b16 %v1199, %v1197
  %v1238 = vpack.c.b16 %v1200, %v1198
  %v1239 = vpack.c.b16 %v1203, %v1201
  %v1240 = vpack.c.b16 %v1204, %v1202
  %v1241 = vpack.c.b16 %v1207, %v1205
  %v1242 = vpack.c.b16 %v1208, %v1206
  %v1243 = vpack.c.b16 %v1211, %v1209
  %v1244 = vpack.c.b16 %v1212, %v1210
  %v1245 = vpack.c.b16 %v1215, %v1213
  %v1246 = vpack.c.b16 %v1216, %v1214
  %v1247 = vpack.c.b16 %v1219, %v1217
  %v1248 = vpack.c.b16 %v1220, %v1218
  %vm1275 = vcmask 752640
  %v1277 = vsel %vm1275, %v1119, 0
  %v1280 = vsel %vm1275, %v1121, 0
  %v1283 = vsel %vm1275, %v1123, 0
  %v1286 = vsel %vm1275, %v1125, 0
  %vm1288 = vcmask 1045504
  %v1290 = vsel %vm1288, %v1247, 0
  %v1293 = vsel %vm1288, %v1248, 0
  %1295 = vmatprep.subr.bf16.mxu0 %v1222
  %1296 = vmatpush1.bf16.msra.mxu0 %v1221
  %1297 = vmatprep.subr.bf16.mxu0 %v1224
  %1298 = vmatpush1.bf16.msra.mxu0 %v1223
  %1299 = vmatprep.subr.bf16.mxu0 %v1226
  %1300 = vmatpush1.bf16.msra.mxu0 %v1225
  %1301 = vmatprep.subr.bf16.mxu0 %v1228
  %1302 = vmatpush1.bf16.msra.mxu0 %v1227
  %1303 = vmatprep.subr.bf16.mxu0 %v1230
  %1304 = vmatpush1.bf16.msra.mxu0 %v1229
  %1305 = vmatprep.subr.bf16.mxu0 %v1232
  %1306 = vmatpush1.bf16.msra.mxu0 %v1231
  %1307 = vmatprep.subr.bf16.mxu0 %v1234
  %1308 = vmatpush1.bf16.msra.mxu0 %v1233
  %1309 = vmatprep.subr.bf16.mxu0 %v1236
  %1310 = vmatpush1.bf16.msra.mxu0 %v1235
  %1311 = vmatprep.subr.bf16.mxu0 %v1238
  %1312 = vmatpush1.bf16.msra.mxu0 %v1237
  %1313 = vmatprep.subr.bf16.mxu0 %v1240
  %1314 = vmatpush1.bf16.msra.mxu0 %v1239
  %1315 = vmatprep.subr.bf16.mxu0 %v1242
  %1316 = vmatpush1.bf16.msra.mxu0 %v1241
  %1317 = vmatprep.subr.bf16.mxu0 %v1244
  %1318 = vmatpush1.bf16.msra.mxu0 %v1243
  %1319 = vmatprep.subr.bf16.mxu0 %v1246
  %1320 = vmatpush1.bf16.msra.mxu0 %v1245
  %1321 = vmatprep.subr.bf16.mxu0 %v1293
  %1322 = vmatpush1.bf16.msra.mxu0 %v1290
  %1323 = vmatprep.subr.bf16.mxu0 0
  %1324 = vmatpush1.bf16.msra.mxu0 0
  %1325 = vmatprep.subr.bf16.mxu0 0
  %1326 = vmatpush1.bf16.msra.mxu0 0
  %1327 = vmatprep.mubr.bf16.mxu0 %v1277
  %1328 = vmatmul.mubr.bf16.gmra.mrb[0].mxu0 %v1118
  %v1329 = vpop.f32.mrb[0].mxu0
  %v1330 = vadd.f32 %v1130, %v1329
  %v1331 = vpop.f32.mrb[0].mxu0
  %v1332 = vadd.f32 %v1134, %v1331
  %v1333 = vpop.f32.mrb[0].mxu0
  %v1334 = vadd.f32 %v1130, %v1333
  %v1335 = vpop.f32.mrb[0].mxu0
  %v1336 = vadd.f32 %v1134, %v1335
  %1337 = vmatprep.mubr.bf16.mxu0 %v1280
  %1338 = vmatmul.mubr.bf16.gmra.mrb[0].mxu0 %v1120
  %v1339 = vpop.f32.mrb[0].mxu0
  %v1340 = vadd.f32 %v1130, %v1339
  %v1341 = vpop.f32.mrb[0].mxu0
  %v1342 = vadd.f32 %v1134, %v1341
  %v1343 = vpop.f32.mrb[0].mxu0
  %v1344 = vadd.f32 %v1130, %v1343
  %v1345 = vpop.f32.mrb[0].mxu0
  %v1346 = vadd.f32 %v1134, %v1345
  %1347 = vmatprep.mubr.bf16.mxu0 %v1283
  %1348 = vmatmul.mubr.bf16.gmra.mrb[0].mxu0 %v1122
  %v1349 = vpop.f32.mrb[0].mxu0
  %v1350 = vadd.f32 %v1130, %v1349
  %v1351 = vpop.f32.mrb[0].mxu0
  %v1352 = vadd.f32 %v1134, %v1351
  %v1353 = vpop.f32.mrb[0].mxu0
  %v1354 = vadd.f32 %v1130, %v1353
  %v1355 = vpop.f32.mrb[0].mxu0
  %v1356 = vadd.f32 %v1134, %v1355
  %1357 = vmatprep.mubr.bf16.mxu0 %v1286
  %1358 = vmatmul.mubr.bf16.gmra.mrb[0].mxu0 %v1124
  %v1359 = vpop.f32.mrb[0].mxu0
  %v1360 = vadd.f32 %v1130, %v1359
  %v1361 = vpop.f32.mrb[0].mxu0
  %v1362 = vadd.f32 %v1134, %v1361
  %v1363 = vpop.f32.mrb[0].mxu0
  %v1364 = vadd.f32 %v1130, %v1363
  %v1365 = vpop.f32.mrb[0].mxu0
  %v1366 = vadd.f32 %v1134, %v1365
  %1367 = vdwg.mxu0
  %1368 = vst [vmem:[#allocation6] sm:$0xff] %v1330
  %1369 = vst [vmem:[#allocation6 + $0x8] sm:$0xff] %v1332
  %1370 = vst [vmem:[#allocation6 + $0x10] sm:$0xff] %v1334
  %1371 = vst [vmem:[#allocation6 + $0x18] sm:$0xff] %v1336
  %1372 = vst [vmem:[#allocation6 + $0x20] sm:$0xff] %v1340
  %1373 = vst [vmem:[#allocation6 + $0x28] sm:$0xff] %v1342
  %1374 = vst [vmem:[#allocation6 + $0x30] sm:$0xff] %v1344
  %1375 = vst [vmem:[#allocation6 + $0x38] sm:$0xff] %v1346
  %1376 = vst [vmem:[#allocation6 + $0x40] sm:$0xff] %v1350
  %1377 = vst [vmem:[#allocation6 + $0x48] sm:$0xff] %v1352
  %1378 = vst [vmem:[#allocation6 + $0x50] sm:$0xff] %v1354
  %1379 = vst [vmem:[#allocation6 + $0x58] sm:$0xff] %v1356
  %1380 = vst [vmem:[#allocation6 + $0x60] sm:$0xff] %v1360
  %1381 = vst [vmem:[#allocation6 + $0x68] sm:$0xff] %v1362
  %1382 = vst [vmem:[#allocation6 + $0x70] sm:$0xff] %v1364
  %1383 = vst [vmem:[#allocation6 + $0x78] sm:$0xff] %v1366
  %s1384 = smul.u32 0, 2
  %s1385 = smul.addr %s1384, 8
  %s1386 = scalar_lea.vmem [#allocation6], %s1385
  %v1387 = vld [vmem:[%s1386] sm:$0xff]
  %v1388 = vld [vmem:[%s1386 + $0x8] sm:$0xff]
  %v1389 = vld [vmem:[%s2] sm:$0xff]
  %v1390 = vld [vmem:[%s2 + $0x8] sm:$0xff]
  %v1391 = vld [vmem:[%s2 + $0x10] sm:$0xff]
  %v1392 = vld [vmem:[%s2 + $0x18] sm:$0xff]
  %v1393 = vld [vmem:[%s2 + $0x20] sm:$0xff]
  %v1394 = vld [vmem:[%s2 + $0x28] sm:$0xff]
  %v1395 = vld [vmem:[%s2 + $0x30] sm:$0xff]
  %v1396 = vld [vmem:[%s2 + $0x38] sm:$0xff]
  %v1405 = vunpack.c.l.b16 %v1389
  %v1406 = vunpack.c.h.b16 %v1389
  %v1407 = vunpack.c.l.b16 %v1390
  %v1408 = vunpack.c.h.b16 %v1390
  %v1409 = vunpack.c.l.b16 %v1391
  %v1410 = vunpack.c.h.b16 %v1391
  %v1411 = vunpack.c.l.b16 %v1392
  %v1412 = vunpack.c.h.b16 %v1392
  %v1413 = vunpack.c.l.b16 %v1393
  %v1414 = vunpack.c.h.b16 %v1393
  %v1415 = vunpack.c.l.b16 %v1394
  %v1416 = vunpack.c.h.b16 %v1394
  %v1417 = vunpack.c.l.b16 %v1395
  %v1418 = vunpack.c.h.b16 %v1395
  %v1419 = vunpack.c.l.b16 %v1396
  %v1420 = vunpack.c.h.b16 %v1396
  %v1421 = vpack.c.b16 %v1407, %v1405
  %v1422 = vpack.c.b16 %v1408, %v1406
  %v1423 = vpack.c.b16 %v1411, %v1409
  %v1424 = vpack.c.b16 %v1412, %v1410
  %v1425 = vpack.c.b16 %v1415, %v1413
  %v1426 = vpack.c.b16 %v1416, %v1414
  %v1427 = vpack.c.b16 %v1419, %v1417
  %v1428 = vpack.c.b16 %v1420, %v1418
  %vm1437 = vcmask 523264
  %v1439 = vsel %vm1437, 0, 0
  %1441 = vmatprep.subr.bf16.mxu0 %v1422
  %1442 = vmatpush1.bf16.msra.mxu0 %v1421
  %1443 = vmatprep.subr.bf16.mxu0 %v1424
  %1444 = vmatpush1.bf16.msra.mxu0 %v1423
  %1445 = vmatprep.subr.bf16.mxu0 %v1426
  %1446 = vmatpush1.bf16.msra.mxu0 %v1425
  %1447 = vmatprep.subr.bf16.mxu0 %v1428
  %1448 = vmatpush1.bf16.msra.mxu0 %v1427
  %1449 = vmatprep.subr.bf16.mxu0 0
  %1450 = vmatpush1.bf16.msra.mxu0 0
  %1451 = vmatprep.subr.bf16.mxu0 0
  %1452 = vmatpush1.bf16.msra.mxu0 0
  %1453 = vmatprep.subr.bf16.mxu0 0
  %1454 = vmatpush1.bf16.msra.mxu0 0
  %1455 = vmatprep.subr.bf16.mxu0 0
  %1456 = vmatpush1.bf16.msra.mxu0 0
  %1457 = vmatprep.subr.bf16.mxu0 0
  %1458 = vmatpush1.bf16.msra.mxu0 0
  %1459 = vmatprep.subr.bf16.mxu0 0
  %1460 = vmatpush1.bf16.msra.mxu0 0
  %1461 = vmatprep.subr.bf16.mxu0 0
  %1462 = vmatpush1.bf16.msra.mxu0 0
  %1463 = vmatprep.subr.bf16.mxu0 0
  %1464 = vmatpush1.bf16.msra.mxu0 0
  %1465 = vmatprep.subr.bf16.mxu0 0
  %1466 = vmatpush1.bf16.msra.mxu0 0
  %1467 = vmatprep.subr.bf16.mxu0 0
  %1468 = vmatpush1.bf16.msra.mxu0 0
  %1469 = vmatprep.subr.bf16.mxu0 0
  %1470 = vmatpush1.bf16.msra.mxu0 0
  %1471 = vmatprep.subr.bf16.mxu0 0
  %1472 = vmatpush1.bf16.msra.mxu0 0
  %1473 = vmatprep.mubr.bf16.mxu0 0
  %1474 = vmatmul.mubr.bf16.gmra.mrb[0].mxu0 %v1439
  %v1475 = vpop.f32.mrb[0].mxu0
  %v1476 = vadd.f32 0.0, %v1475
  %v1477 = vpop.f32.mrb[0].mxu0
  %v1478 = vadd.f32 0.0, %v1477
  %v1479 = vpop.f32.mrb[0].mxu0
  %v1480 = vpop.f32.mrb[0].mxu0
  %1481 = vdwg.mxu0
  %v1482 = vadd.f32 %v1387, %v1476
  %v1483 = vadd.f32 %v1388, %v1478
  %v1484 = vtanh.pop %v1482
  %v1485 = vtanh.pop %v1483
  %v1486 = vmul.f32 %v1484, 0.5
  %v1487 = vadd.f32 %v1486, 0.5
  %v1488 = vmul.f32 %v1485, 0.5
  %v1489 = vadd.f32 %v1488, 0.5
  %v1490 = vmul.f32 %v1487, 0.0
  %1492 = vrot.lane.b32.xlu0 %v1485, 64
  %v1493 = vpop.permute.xlu0 %1492
  %v1495 = vmul.f32 %v1487, %v1493
  %1497 = vrot.lane.b32.xlu0 %v1495, 64
  %v1498 = vpop.permute.xlu0 %1497
  %v1500 = vadd.f32 %v1490, %v1498
  %v1501 = vtanh.pop %v1500
  %1503 = vrot.lane.b32.xlu0 %v1501, 64
  %v1504 = vpop.permute.xlu0 %1503
  %v1506 = vmul.f32 %v1489, %v1504
  %v1507 = vsel %vm1437, %v1506, 0.0
  %1508 = vst [vmem:[#allocation9] sm:$0xff] %v1507
  %s1509 = smul.u32 1, 2
  %s1510 = smul.addr %s1509, 8
  %s1511 = scalar_lea.vmem [#allocation6], %s1510
  %v1512 = vld [vmem:[%s1511] sm:$0xff]
  %v1513 = vld [vmem:[%s1511 + $0x8] sm:$0xff]
  %v1514 = vpack.c.bf16 %v1506, %v1506
  %v1515 = vld [vmem:[%s2] sm:$0xff]
  %v1516 = vld [vmem:[%s2 + $0x8] sm:$0xff]
  %v1517 = vld [vmem:[%s2 + $0x10] sm:$0xff]
  %v1518 = vld [vmem:[%s2 + $0x18] sm:$0xff]
  %v1519 = vld [vmem:[%s2 + $0x20] sm:$0xff]
  %v1520 = vld [vmem:[%s2 + $0x28] sm:$0xff]
  %v1521 = vld [vmem:[%s2 + $0x30] sm:$0xff]
  %v1522 = vld [vmem:[%s2 + $0x38] sm:$0xff]
  %v1531 = vunpack.c.l.b16 %v1515
  %v1532 = vunpack.c.h.b16 %v1515
  %v1533 = vunpack.c.l.b16 %v1516
  %v1534 = vunpack.c.h.b16 %v1516
  %v1535 = vunpack.c.l.b16 %v1517
  %v1536 = vunpack.c.h.b16 %v1517
  %v1537 = vunpack.c.l.b16 %v1518
  %v1538 = vunpack.c.h.b16 %v1518
  %v1539 = vunpack.c.l.b16 %v1519
  %v1540 = vunpack.c.h.b16 %v1519
  %v1541 = vunpack.c.l.b16 %v1520
  %v1542 = vunpack.c.h.b16 %v1520
  %v1543 = vunpack.c.l.b16 %v1521
  %v1544 = vunpack.c.h.b16 %v1521
  %v1545 = vunpack.c.l.b16 %v1522
  %v1546 = vunpack.c.h.b16 %v1522
  %v1547 = vpack.c.b16 %v1533, %v1531
  %v1548 = vpack.c.b16 %v1534, %v1532
  %v1549 = vpack.c.b16 %v1537, %v1535
  %v1550 = vpack.c.b16 %v1538, %v1536
  %v1551 = vpack.c.b16 %v1541, %v1539
  %v1552 = vpack.c.b16 %v1542, %v1540
  %v1553 = vpack.c.b16 %v1545, %v1543
  %v1554 = vpack.c.b16 %v1546, %v1544
  %v1564 = vsel %vm1437, %v1514, 0
  %1566 = vmatprep.subr.bf16.mxu0 %v1548
  %1567 = vmatpush1.bf16.msra.mxu0 %v1547
  %1568 = vmatprep.subr.bf16.mxu0 %v1550
  %1569 = vmatpush1.bf16.msra.mxu0 %v1549
  %1570 = vmatprep.subr.bf16.mxu0 %v1552
  %1571 = vmatpush1.bf16.msra.mxu0 %v1551
  %1572 = vmatprep.subr.bf16.mxu0 %v1554
  %1573 = vmatpush1.bf16.msra.mxu0 %v1553
  %1574 = vmatprep.subr.bf16.mxu0 0
  %1575 = vmatpush1.bf16.msra.mxu0 0
  %1576 = vmatprep.subr.bf16.mxu0 0
  %1577 = vmatpush1.bf16.msra.mxu0 0
  %1578 = vmatprep.subr.bf16.mxu0 0
  %1579 = vmatpush1.bf16.msra.mxu0 0
  %1580 = vmatprep.subr.bf16.mxu0 0
  %1581 = vmatpush1.bf16.msra.mxu0 0
  %1582 = vmatprep.subr.bf16.mxu0 0
  %1583 = vmatpush1.bf16.msra.mxu0 0
  %1584 = vmatprep.subr.bf16.mxu0 0
  %1585 = vmatpush1.bf16.msra.mxu0 0
  %1586 = vmatprep.subr.bf16.mxu0 0
  %1587 = vmatpush1.bf16.msra.mxu0 0
  %1588 = vmatprep.subr.bf16.mxu0 0
  %1589 = vmatpush1.bf16.msra.mxu0 0
  %1590 = vmatprep.subr.bf16.mxu0 0
  %1591 = vmatpush1.bf16.msra.mxu0 0
  %1592 = vmatprep.subr.bf16.mxu0 0
  %1593 = vmatpush1.bf16.msra.mxu0 0
  %1594 = vmatprep.subr.bf16.mxu0 0
  %1595 = vmatpush1.bf16.msra.mxu0 0
  %1596 = vmatprep.subr.bf16.mxu0 0
  %1597 = vmatpush1.bf16.msra.mxu0 0
  %1598 = vmatprep.mubr.bf16.mxu0 0
  %1599 = vmatmul.mubr.bf16.gmra.mrb[0].mxu0 %v1564
  %v1600 = vpop.f32.mrb[0].mxu0
  %v1601 = vadd.f32 0.0, %v1600
  %v1602 = vpop.f32.mrb[0].mxu0
  %v1603 = vadd.f32 0.0, %v1602
  %v1604 = vpop.f32.mrb[0].mxu0
  %v1605 = vpop.f32.mrb[0].mxu0
  %1606 = vdwg.mxu0
  %v1607 = vadd.f32 %v1512, %v1601
  %v1608 = vadd.f32 %v1513, %v1603
  %v1609 = vtanh.pop %v1607
  %v1610 = vtanh.pop %v1608
  %v1611 = vmul.f32 %v1609, 0.5
  %v1612 = vadd.f32 %v1611, 0.5
  %v1613 = vmul.f32 %v1610, 0.5
  %v1614 = vadd.f32 %v1613, 0.5
  %v1615 = vmul.f32 %v1612, %v1500
  %1617 = vrot.lane.b32.xlu0 %v1610, 64
  %v1618 = vpop.permute.xlu0 %1617
  %v1620 = vmul.f32 %v1612, %v1618
  %1622 = vrot.lane.b32.xlu0 %v1620, 64
  %v1623 = vpop.permute.xlu0 %1622
  %v1625 = vadd.f32 %v1615, %v1623
  %v1626 = vtanh.pop %v1625
  %1628 = vrot.lane.b32.xlu0 %v1626, 64
  %v1629 = vpop.permute.xlu0 %1628
  %v1631 = vmul.f32 %v1614, %v1629
  %v1632 = vsel %vm1437, %v1631, 0.0
  %s1633 = scalar_lea.vmem [#allocation9], 8
  %1634 = vst [vmem:[%s1633] sm:$0xff] %v1632
  %s1635 = smul.u32 2, 2
  %s1636 = smul.addr %s1635, 8
  %s1637 = scalar_lea.vmem [#allocation6], %s1636
  %v1638 = vld [vmem:[%s1637] sm:$0xff]
  %v1639 = vld [vmem:[%s1637 + $0x8] sm:$0xff]
  %v1640 = vpack.c.bf16 %v1631, %v1631
  %v1641 = vld [vmem:[%s2] sm:$0xff]
  %v1642 = vld [vmem:[%s2 + $0x8] sm:$0xff]
  %v1643 = vld [vmem:[%s2 + $0x10] sm:$0xff]
  %v1644 = vld [vmem:[%s2 + $0x18] sm:$0xff]
  %v1645 = vld [vmem:[%s2 + $0x20] sm:$0xff]
  %v1646 = vld [vmem:[%s2 + $0x28] sm:$0xff]
  %v1647 = vld [vmem:[%s2 + $0x30] sm:$0xff]
  %v1648 = vld [vmem:[%s2 + $0x38] sm:$0xff]
  %v1657 = vunpack.c.l.b16 %v1641
  %v1658 = vunpack.c.h.b16 %v1641
  %v1659 = vunpack.c.l.b16 %v1642
  %v1660 = vunpack.c.h.b16 %v1642
  %v1661 = vunpack.c.l.b16 %v1643
  %v1662 = vunpack.c.h.b16 %v1643
  %v1663 = vunpack.c.l.b16 %v1644
  %v1664 = vunpack.c.h.b16 %v1644
  %v1665 = vunpack.c.l.b16 %v1645
  %v1666 = vunpack.c.h.b16 %v1645
  %v1667 = vunpack.c.l.b16 %v1646
  %v1668 = vunpack.c.h.b16 %v1646
  %v1669 = vunpack.c.l.b16 %v1647
  %v1670 = vunpack.c.h.b16 %v1647
  %v1671 = vunpack.c.l.b16 %v1648
  %v1672 = vunpack.c.h.b16 %v1648
  %v1673 = vpack.c.b16 %v1659, %v1657
  %v1674 = vpack.c.b16 %v1660, %v1658
  %v1675 = vpack.c.b16 %v1663, %v1661
  %v1676 = vpack.c.b16 %v1664, %v1662
  %v1677 = vpack.c.b16 %v1667, %v1665
  %v1678 = vpack.c.b16 %v1668, %v1666
  %v1679 = vpack.c.b16 %v1671, %v1669
  %v1680 = vpack.c.b16 %v1672, %v1670
  %v1690 = vsel %vm1437, %v1640, 0
  %1692 = vmatprep.subr.bf16.mxu0 %v1674
  %1693 = vmatpush1.bf16.msra.mxu0 %v1673
  %1694 = vmatprep.subr.bf16.mxu0 %v1676
  %1695 = vmatpush1.bf16.msra.mxu0 %v1675
  %1696 = vmatprep.subr.bf16.mxu0 %v1678
  %1697 = vmatpush1.bf16.msra.mxu0 %v1677
  %1698 = vmatprep.subr.bf16.mxu0 %v1680
  %1699 = vmatpush1.bf16.msra.mxu0 %v1679
  %1700 = vmatprep.subr.bf16.mxu0 0
  %1701 = vmatpush1.bf16.msra.mxu0 0
  %1702 = vmatprep.subr.bf16.mxu0 0
  %1703 = vmatpush1.bf16.msra.mxu0 0
  %1704 = vmatprep.subr.bf16.mxu0 0
  %1705 = vmatpush1.bf16.msra.mxu0 0
  %1706 = vmatprep.subr.bf16.mxu0 0
  %1707 = vmatpush1.bf16.msra.mxu0 0
  %1708 = vmatprep.subr.bf16.mxu0 0
  %1709 = vmatpush1.bf16.msra.mxu0 0
  %1710 = vmatprep.subr.bf16.mxu0 0
  %1711 = vmatpush1.bf16.msra.mxu0 0
  %1712 = vmatprep.subr.bf16.mxu0 0
  %1713 = vmatpush1.bf16.msra.mxu0 0
  %1714 = vmatprep.subr.bf16.mxu0 0
  %1715 = vmatpush1.bf16.msra.mxu0 0
  %1716 = vmatprep.subr.bf16.mxu0 0
  %1717 = vmatpush1.bf16.msra.mxu0 0
  %1718 = vmatprep.subr.bf16.mxu0 0
  %1719 = vmatpush1.bf16.msra.mxu0 0
  %1720 = vmatprep.subr.bf16.mxu0 0
  %1721 = vmatpush1.bf16.msra.mxu0 0
  %1722 = vmatprep.subr.bf16.mxu0 0
  %1723 = vmatpush1.bf16.msra.mxu0 0
  %1724 = vmatprep.mubr.bf16.mxu0 0
  %1725 = vmatmul.mubr.bf16.gmra.mrb[0].mxu0 %v1690
  %v1726 = vpop.f32.mrb[0].mxu0
  %v1727 = vadd.f32 0.0, %v1726
  %v1728 = vpop.f32.mrb[0].mxu0
  %v1729 = vadd.f32 0.0, %v1728
  %v1730 = vpop.f32.mrb[0].mxu0
  %v1731 = vpop.f32.mrb[0].mxu0
  %1732 = vdwg.mxu0
  %v1733 = vadd.f32 %v1638, %v1727
  %v1734 = vadd.f32 %v1639, %v1729
  %v1735 = vtanh.pop %v1733
  %v1736 = vtanh.pop %v1734
  %v1737 = vmul.f32 %v1735, 0.5
  %v1738 = vadd.f32 %v1737, 0.5
  %v1739 = vmul.f32 %v1736, 0.5
  %v1740 = vadd.f32 %v1739, 0.5
  %v1741 = vmul.f32 %v1738, %v1625
  %1743 = vrot.lane.b32.xlu0 %v1736, 64
  %v1744 = vpop.permute.xlu0 %1743
  %v1746 = vmul.f32 %v1738, %v1744
  %1748 = vrot.lane.b32.xlu0 %v1746, 64
  %v1749 = vpop.permute.xlu0 %1748
  %v1751 = vadd.f32 %v1741, %v1749
  %v1752 = vtanh.pop %v1751
  %1754 = vrot.lane.b32.xlu0 %v1752, 64
  %v1755 = vpop.permute.xlu0 %1754
  %v1757 = vmul.f32 %v1740, %v1755
  %v1758 = vsel %vm1437, %v1757, 0.0
  %s1759 = scalar_lea.vmem [#allocation9], 16
  %1760 = vst [vmem:[%s1759] sm:$0xff] %v1758
  %s1761 = smul.u32 3, 2
  %s1762 = smul.addr %s1761, 8
  %s1763 = scalar_lea.vmem [#allocation6], %s1762
  %v1764 = vld [vmem:[%s1763] sm:$0xff]
  %v1765 = vld [vmem:[%s1763 + $0x8] sm:$0xff]
  %v1766 = vpack.c.bf16 %v1757, %v1757
  %v1767 = vld [vmem:[%s2] sm:$0xff]
  %v1768 = vld [vmem:[%s2 + $0x8] sm:$0xff]
  %v1769 = vld [vmem:[%s2 + $0x10] sm:$0xff]
  %v1770 = vld [vmem:[%s2 + $0x18] sm:$0xff]
  %v1771 = vld [vmem:[%s2 + $0x20] sm:$0xff]
  %v1772 = vld [vmem:[%s2 + $0x28] sm:$0xff]
  %v1773 = vld [vmem:[%s2 + $0x30] sm:$0xff]
  %v1774 = vld [vmem:[%s2 + $0x38] sm:$0xff]
  %v1783 = vunpack.c.l.b16 %v1767
  %v1784 = vunpack.c.h.b16 %v1767
  %v1785 = vunpack.c.l.b16 %v1768
  %v1786 = vunpack.c.h.b16 %v1768
  %v1787 = vunpack.c.l.b16 %v1769
  %v1788 = vunpack.c.h.b16 %v1769
  %v1789 = vunpack.c.l.b16 %v1770
  %v1790 = vunpack.c.h.b16 %v1770
  %v1791 = vunpack.c.l.b16 %v1771
  %v1792 = vunpack.c.h.b16 %v1771
  %v1793 = vunpack.c.l.b16 %v1772
  %v1794 = vunpack.c.h.b16 %v1772
  %v1795 = vunpack.c.l.b16 %v1773
  %v1796 = vunpack.c.h.b16 %v1773
  %v1797 = vunpack.c.l.b16 %v1774
  %v1798 = vunpack.c.h.b16 %v1774
  %v1799 = vpack.c.b16 %v1785, %v1783
  %v1800 = vpack.c.b16 %v1786, %v1784
  %v1801 = vpack.c.b16 %v1789, %v1787
  %v1802 = vpack.c.b16 %v1790, %v1788
  %v1803 = vpack.c.b16 %v1793, %v1791
  %v1804 = vpack.c.b16 %v1794, %v1792
  %v1805 = vpack.c.b16 %v1797, %v1795
  %v1806 = vpack.c.b16 %v1798, %v1796
  %v1816 = vsel %vm1437, %v1766, 0
  %1818 = vmatprep.subr.bf16.mxu0 %v1800
  %1819 = vmatpush1.bf16.msra.mxu0 %v1799
  %1820 = vmatprep.subr.bf16.mxu0 %v1802
  %1821 = vmatpush1.bf16.msra.mxu0 %v1801
  %1822 = vmatprep.subr.bf16.mxu0 %v1804
  %1823 = vmatpush1.bf16.msra.mxu0 %v1803
  %1824 = vmatprep.subr.bf16.mxu0 %v1806
  %1825 = vmatpush1.bf16.msra.mxu0 %v1805
  %1826 = vmatprep.subr.bf16.mxu0 0
  %1827 = vmatpush1.bf16.msra.mxu0 0
  %1828 = vmatprep.subr.bf16.mxu0 0
  %1829 = vmatpush1.bf16.msra.mxu0 0
  %1830 = vmatprep.subr.bf16.mxu0 0
  %1831 = vmatpush1.bf16.msra.mxu0 0
  %1832 = vmatprep.subr.bf16.mxu0 0
  %1833 = vmatpush1.bf16.msra.mxu0 0
  %1834 = vmatprep.subr.bf16.mxu0 0
  %1835 = vmatpush1.bf16.msra.mxu0 0
  %1836 = vmatprep.subr.bf16.mxu0 0
  %1837 = vmatpush1.bf16.msra.mxu0 0
  %1838 = vmatprep.subr.bf16.mxu0 0
  %1839 = vmatpush1.bf16.msra.mxu0 0
  %1840 = vmatprep.subr.bf16.mxu0 0
  %1841 = vmatpush1.bf16.msra.mxu0 0
  %1842 = vmatprep.subr.bf16.mxu0 0
  %1843 = vmatpush1.bf16.msra.mxu0 0
  %1844 = vmatprep.subr.bf16.mxu0 0
  %1845 = vmatpush1.bf16.msra.mxu0 0
  %1846 = vmatprep.subr.bf16.mxu0 0
  %1847 = vmatpush1.bf16.msra.mxu0 0
  %1848 = vmatprep.subr.bf16.mxu0 0
  %1849 = vmatpush1.bf16.msra.mxu0 0
  %1850 = vmatprep.mubr.bf16.mxu0 0
  %1851 = vmatmul.mubr.bf16.gmra.mrb[0].mxu0 %v1816
  %v1852 = vpop.f32.mrb[0].mxu0
  %v1853 = vadd.f32 0.0, %v1852
  %v1854 = vpop.f32.mrb[0].mxu0
  %v1855 = vadd.f32 0.0, %v1854
  %v1856 = vpop.f32.mrb[0].mxu0
  %v1857 = vpop.f32.mrb[0].mxu0
  %1858 = vdwg.mxu0
  %v1859 = vadd.f32 %v1764, %v1853
  %v1860 = vadd.f32 %v1765, %v1855
  %v1861 = vtanh.pop %v1859
  %v1862 = vtanh.pop %v1860
  %v1863 = vmul.f32 %v1861, 0.5
  %v1864 = vadd.f32 %v1863, 0.5
  %v1865 = vmul.f32 %v1862, 0.5
  %v1866 = vadd.f32 %v1865, 0.5
  %v1867 = vmul.f32 %v1864, %v1751
  %1869 = vrot.lane.b32.xlu0 %v1862, 64
  %v1870 = vpop.permute.xlu0 %1869
  %v1872 = vmul.f32 %v1864, %v1870
  %1874 = vrot.lane.b32.xlu0 %v1872, 64
  %v1875 = vpop.permute.xlu0 %1874
  %v1877 = vadd.f32 %v1867, %v1875
  %v1878 = vtanh.pop %v1877
  %1880 = vrot.lane.b32.xlu0 %v1878, 64
  %v1881 = vpop.permute.xlu0 %1880
  %v1883 = vmul.f32 %v1866, %v1881
  %v1884 = vsel %vm1437, %v1883, 0.0
  %s1885 = scalar_lea.vmem [#allocation9], 24
  %1886 = vst [vmem:[%s1885] sm:$0xff] %v1884
  %s1887 = smul.u32 4, 2
  %s1888 = smul.addr %s1887, 8
  %s1889 = scalar_lea.vmem [#allocation6], %s1888
  %v1890 = vld [vmem:[%s1889] sm:$0xff]
  %v1891 = vld [vmem:[%s1889 + $0x8] sm:$0xff]
  %v1892 = vpack.c.bf16 %v1883, %v1883
  %v1893 = vld [vmem:[%s2] sm:$0xff]
  %v1894 = vld [vmem:[%s2 + $0x8] sm:$0xff]
  %v1895 = vld [vmem:[%s2 + $0x10] sm:$0xff]
  %v1896 = vld [vmem:[%s2 + $0x18] sm:$0xff]
  %v1897 = vld [vmem:[%s2 + $0x20] sm:$0xff]
  %v1898 = vld [vmem:[%s2 + $0x28] sm:$0xff]
  %v1899 = vld [vmem:[%s2 + $0x30] sm:$0xff]
  %v1900 = vld [vmem:[%s2 + $0x38] sm:$0xff]
  %v1909 = vunpack.c.l.b16 %v1893
  %v1910 = vunpack.c.h.b16 %v1893
  %v1911 = vunpack.c.l.b16 %v1894
  %v1912 = vunpack.c.h.b16 %v1894
  %v1913 = vunpack.c.l.b16 %v1895
  %v1914 = vunpack.c.h.b16 %v1895
  %v1915 = vunpack.c.l.b16 %v1896
  %v1916 = vunpack.c.h.b16 %v1896
  %v1917 = vunpack.c.l.b16 %v1897
  %v1918 = vunpack.c.h.b16 %v1897
  %v1919 = vunpack.c.l.b16 %v1898
  %v1920 = vunpack.c.h.b16 %v1898
  %v1921 = vunpack.c.l.b16 %v1899
  %v1922 = vunpack.c.h.b16 %v1899
  %v1923 = vunpack.c.l.b16 %v1900
  %v1924 = vunpack.c.h.b16 %v1900
  %v1925 = vpack.c.b16 %v1911, %v1909
  %v1926 = vpack.c.b16 %v1912, %v1910
  %v1927 = vpack.c.b16 %v1915, %v1913
  %v1928 = vpack.c.b16 %v1916, %v1914
  %v1929 = vpack.c.b16 %v1919, %v1917
  %v1930 = vpack.c.b16 %v1920, %v1918
  %v1931 = vpack.c.b16 %v1923, %v1921
  %v1932 = vpack.c.b16 %v1924, %v1922
  %v1942 = vsel %vm1437, %v1892, 0
  %1944 = vmatprep.subr.bf16.mxu0 %v1926
  %1945 = vmatpush1.bf16.msra.mxu0 %v1925
  %1946 = vmatprep.subr.bf16.mxu0 %v1928
  %1947 = vmatpush1.bf16.msra.mxu0 %v1927
  %1948 = vmatprep.subr.bf16.mxu0 %v1930
  %1949 = vmatpush1.bf16.msra.mxu0 %v1929
  %1950 = vmatprep.subr.bf16.mxu0 %v1932
  %1951 = vmatpush1.bf16.msra.mxu0 %v1931
  %1952 = vmatprep.subr.bf16.mxu0 0
  %1953 = vmatpush1.bf16.msra.mxu0 0
  %1954 = vmatprep.subr.bf16.mxu0 0
  %1955 = vmatpush1.bf16.msra.mxu0 0
  %1956 = vmatprep.subr.bf16.mxu0 0
  %1957 = vmatpush1.bf16.msra.mxu0 0
  %1958 = vmatprep.subr.bf16.mxu0 0
  %1959 = vmatpush1.bf16.msra.mxu0 0
  %1960 = vmatprep.subr.bf16.mxu0 0
  %1961 = vmatpush1.bf16.msra.mxu0 0
  %1962 = vmatprep.subr.bf16.mxu0 0
  %1963 = vmatpush1.bf16.msra.mxu0 0
  %1964 = vmatprep.subr.bf16.mxu0 0
  %1965 = vmatpush1.bf16.msra.mxu0 0
  %1966 = vmatprep.subr.bf16.mxu0 0
  %1967 = vmatpush1.bf16.msra.mxu0 0
  %1968 = vmatprep.subr.bf16.mxu0 0
  %1969 = vmatpush1.bf16.msra.mxu0 0
  %1970 = vmatprep.subr.bf16.mxu0 0
  %1971 = vmatpush1.bf16.msra.mxu0 0
  %1972 = vmatprep.subr.bf16.mxu0 0
  %1973 = vmatpush1.bf16.msra.mxu0 0
  %1974 = vmatprep.subr.bf16.mxu0 0
  %1975 = vmatpush1.bf16.msra.mxu0 0
  %1976 = vmatprep.mubr.bf16.mxu0 0
  %1977 = vmatmul.mubr.bf16.gmra.mrb[0].mxu0 %v1942
  %v1978 = vpop.f32.mrb[0].mxu0
  %v1979 = vadd.f32 0.0, %v1978
  %v1980 = vpop.f32.mrb[0].mxu0
  %v1981 = vadd.f32 0.0, %v1980
  %v1982 = vpop.f32.mrb[0].mxu0
  %v1983 = vpop.f32.mrb[0].mxu0
  %1984 = vdwg.mxu0
  %v1985 = vadd.f32 %v1890, %v1979
  %v1986 = vadd.f32 %v1891, %v1981
  %v1987 = vtanh.pop %v1985
  %v1988 = vtanh.pop %v1986
  %v1989 = vmul.f32 %v1987, 0.5
  %v1990 = vadd.f32 %v1989, 0.5
  %v1991 = vmul.f32 %v1988, 0.5
  %v1992 = vadd.f32 %v1991, 0.5
  %v1993 = vmul.f32 %v1990, %v1877
  %1995 = vrot.lane.b32.xlu0 %v1988, 64
  %v1996 = vpop.permute.xlu0 %1995
  %v1998 = vmul.f32 %v1990, %v1996
  %2000 = vrot.lane.b32.xlu0 %v1998, 64
  %v2001 = vpop.permute.xlu0 %2000
  %v2003 = vadd.f32 %v1993, %v2001
  %v2004 = vtanh.pop %v2003
  %2006 = vrot.lane.b32.xlu0 %v2004, 64
  %v2007 = vpop.permute.xlu0 %2006
  %v2009 = vmul.f32 %v1992, %v2007
  %v2010 = vsel %vm1437, %v2009, 0.0
  %s2011 = scalar_lea.vmem [#allocation9], 32
  %2012 = vst [vmem:[%s2011] sm:$0xff] %v2010
  %s2013 = smul.u32 5, 2
  %s2014 = smul.addr %s2013, 8
  %s2015 = scalar_lea.vmem [#allocation6], %s2014
  %v2016 = vld [vmem:[%s2015] sm:$0xff]
  %v2017 = vld [vmem:[%s2015 + $0x8] sm:$0xff]
  %v2018 = vpack.c.bf16 %v2009, %v2009
  %v2019 = vld [vmem:[%s2] sm:$0xff]
  %v2020 = vld [vmem:[%s2 + $0x8] sm:$0xff]
  %v2021 = vld [vmem:[%s2 + $0x10] sm:$0xff]
  %v2022 = vld [vmem:[%s2 + $0x18] sm:$0xff]
  %v2023 = vld [vmem:[%s2 + $0x20] sm:$0xff]
  %v2024 = vld [vmem:[%s2 + $0x28] sm:$0xff]
  %v2025 = vld [vmem:[%s2 + $0x30] sm:$0xff]
  %v2026 = vld [vmem:[%s2 + $0x38] sm:$0xff]
  %v2035 = vunpack.c.l.b16 %v2019
  %v2036 = vunpack.c.h.b16 %v2019
  %v2037 = vunpack.c.l.b16 %v2020
  %v2038 = vunpack.c.h.b16 %v2020
  %v2039 = vunpack.c.l.b16 %v2021
  %v2040 = vunpack.c.h.b16 %v2021
  %v2041 = vunpack.c.l.b16 %v2022
  %v2042 = vunpack.c.h.b16 %v2022
  %v2043 = vunpack.c.l.b16 %v2023
  %v2044 = vunpack.c.h.b16 %v2023
  %v2045 = vunpack.c.l.b16 %v2024
  %v2046 = vunpack.c.h.b16 %v2024
  %v2047 = vunpack.c.l.b16 %v2025
  %v2048 = vunpack.c.h.b16 %v2025
  %v2049 = vunpack.c.l.b16 %v2026
  %v2050 = vunpack.c.h.b16 %v2026
  %v2051 = vpack.c.b16 %v2037, %v2035
  %v2052 = vpack.c.b16 %v2038, %v2036
  %v2053 = vpack.c.b16 %v2041, %v2039
  %v2054 = vpack.c.b16 %v2042, %v2040
  %v2055 = vpack.c.b16 %v2045, %v2043
  %v2056 = vpack.c.b16 %v2046, %v2044
  %v2057 = vpack.c.b16 %v2049, %v2047
  %v2058 = vpack.c.b16 %v2050, %v2048
  %v2068 = vsel %vm1437, %v2018, 0
  %2070 = vmatprep.subr.bf16.mxu0 %v2052
  %2071 = vmatpush1.bf16.msra.mxu0 %v2051
  %2072 = vmatprep.subr.bf16.mxu0 %v2054
  %2073 = vmatpush1.bf16.msra.mxu0 %v2053
  %2074 = vmatprep.subr.bf16.mxu0 %v2056
  %2075 = vmatpush1.bf16.msra.mxu0 %v2055
  %2076 = vmatprep.subr.bf16.mxu0 %v2058
  %2077 = vmatpush1.bf16.msra.mxu0 %v2057
  %2078 = vmatprep.subr.bf16.mxu0 0
  %2079 = vmatpush1.bf16.msra.mxu0 0
  %2080 = vmatprep.subr.bf16.mxu0 0
  %2081 = vmatpush1.bf16.msra.mxu0 0
  %2082 = vmatprep.subr.bf16.mxu0 0
  %2083 = vmatpush1.bf16.msra.mxu0 0
  %2084 = vmatprep.subr.bf16.mxu0 0
  %2085 = vmatpush1.bf16.msra.mxu0 0
  %2086 = vmatprep.subr.bf16.mxu0 0
  %2087 = vmatpush1.bf16.msra.mxu0 0
  %2088 = vmatprep.subr.bf16.mxu0 0
  %2089 = vmatpush1.bf16.msra.mxu0 0
  %2090 = vmatprep.subr.bf16.mxu0 0
  %2091 = vmatpush1.bf16.msra.mxu0 0
  %2092 = vmatprep.subr.bf16.mxu0 0
  %2093 = vmatpush1.bf16.msra.mxu0 0
  %2094 = vmatprep.subr.bf16.mxu0 0
  %2095 = vmatpush1.bf16.msra.mxu0 0
  %2096 = vmatprep.subr.bf16.mxu0 0
  %2097 = vmatpush1.bf16.msra.mxu0 0
  %2098 = vmatprep.subr.bf16.mxu0 0
  %2099 = vmatpush1.bf16.msra.mxu0 0
  %2100 = vmatprep.subr.bf16.mxu0 0
  %2101 = vmatpush1.bf16.msra.mxu0 0
  %2102 = vmatprep.mubr.bf16.mxu0 0
  %2103 = vmatmul.mubr.bf16.gmra.mrb[0].mxu0 %v2068
  %v2104 = vpop.f32.mrb[0].mxu0
  %v2105 = vadd.f32 0.0, %v2104
  %v2106 = vpop.f32.mrb[0].mxu0
  %v2107 = vadd.f32 0.0, %v2106
  %v2108 = vpop.f32.mrb[0].mxu0
  %v2109 = vpop.f32.mrb[0].mxu0
  %2110 = vdwg.mxu0
  %v2111 = vadd.f32 %v2016, %v2105
  %v2112 = vadd.f32 %v2017, %v2107
  %v2113 = vtanh.pop %v2111
  %v2114 = vtanh.pop %v2112
  %v2115 = vmul.f32 %v2113, 0.5
  %v2116 = vadd.f32 %v2115, 0.5
  %v2117 = vmul.f32 %v2114, 0.5
  %v2118 = vadd.f32 %v2117, 0.5
  %v2119 = vmul.f32 %v2116, %v2003
  %2121 = vrot.lane.b32.xlu0 %v2114, 64
  %v2122 = vpop.permute.xlu0 %2121
  %v2124 = vmul.f32 %v2116, %v2122
  %2126 = vrot.lane.b32.xlu0 %v2124, 64
  %v2127 = vpop.permute.xlu0 %2126
  %v2129 = vadd.f32 %v2119, %v2127
  %v2130 = vtanh.pop %v2129
  %2132 = vrot.lane.b32.xlu0 %v2130, 64
  %v2133 = vpop.permute.xlu0 %2132
  %v2135 = vmul.f32 %v2118, %v2133
  %v2136 = vsel %vm1437, %v2135, 0.0
  %s2137 = scalar_lea.vmem [#allocation9], 40
  %2138 = vst [vmem:[%s2137] sm:$0xff] %v2136
  %s2139 = smul.u32 6, 2
  %s2140 = smul.addr %s2139, 8
  %s2141 = scalar_lea.vmem [#allocation6], %s2140
  %v2142 = vld [vmem:[%s2141] sm:$0xff]
  %v2143 = vld [vmem:[%s2141 + $0x8] sm:$0xff]
  %v2144 = vpack.c.bf16 %v2135, %v2135
  %v2145 = vld [vmem:[%s2] sm:$0xff]
  %v2146 = vld [vmem:[%s2 + $0x8] sm:$0xff]
  %v2147 = vld [vmem:[%s2 + $0x10] sm:$0xff]
  %v2148 = vld [vmem:[%s2 + $0x18] sm:$0xff]
  %v2149 = vld [vmem:[%s2 + $0x20] sm:$0xff]
  %v2150 = vld [vmem:[%s2 + $0x28] sm:$0xff]
  %v2151 = vld [vmem:[%s2 + $0x30] sm:$0xff]
  %v2152 = vld [vmem:[%s2 + $0x38] sm:$0xff]
  %v2161 = vunpack.c.l.b16 %v2145
  %v2162 = vunpack.c.h.b16 %v2145
  %v2163 = vunpack.c.l.b16 %v2146
  %v2164 = vunpack.c.h.b16 %v2146
  %v2165 = vunpack.c.l.b16 %v2147
  %v2166 = vunpack.c.h.b16 %v2147
  %v2167 = vunpack.c.l.b16 %v2148
  %v2168 = vunpack.c.h.b16 %v2148
  %v2169 = vunpack.c.l.b16 %v2149
  %v2170 = vunpack.c.h.b16 %v2149
  %v2171 = vunpack.c.l.b16 %v2150
  %v2172 = vunpack.c.h.b16 %v2150
  %v2173 = vunpack.c.l.b16 %v2151
  %v2174 = vunpack.c.h.b16 %v2151
  %v2175 = vunpack.c.l.b16 %v2152
  %v2176 = vunpack.c.h.b16 %v2152
  %v2177 = vpack.c.b16 %v2163, %v2161
  %v2178 = vpack.c.b16 %v2164, %v2162
  %v2179 = vpack.c.b16 %v2167, %v2165
  %v2180 = vpack.c.b16 %v2168, %v2166
  %v2181 = vpack.c.b16 %v2171, %v2169
  %v2182 = vpack.c.b16 %v2172, %v2170
  %v2183 = vpack.c.b16 %v2175, %v2173
  %v2184 = vpack.c.b16 %v2176, %v2174
  %v2194 = vsel %vm1437, %v2144, 0
  %2196 = vmatprep.subr.bf16.mxu0 %v2178
  %2197 = vmatpush1.bf16.msra.mxu0 %v2177
  %2198 = vmatprep.subr.bf16.mxu0 %v2180
  %2199 = vmatpush1.bf16.msra.mxu0 %v2179
  %2200 = vmatprep.subr.bf16.mxu0 %v2182
  %2201 = vmatpush1.bf16.msra.mxu0 %v2181
  %2202 = vmatprep.subr.bf16.mxu0 %v2184
  %2203 = vmatpush1.bf16.msra.mxu0 %v2183
  %2204 = vmatprep.subr.bf16.mxu0 0
  %2205 = vmatpush1.bf16.msra.mxu0 0
  %2206 = vmatprep.subr.bf16.mxu0 0
  %2207 = vmatpush1.bf16.msra.mxu0 0
  %2208 = vmatprep.subr.bf16.mxu0 0
  %2209 = vmatpush1.bf16.msra.mxu0 0
  %2210 = vmatprep.subr.bf16.mxu0 0
  %2211 = vmatpush1.bf16.msra.mxu0 0
  %2212 = vmatprep.subr.bf16.mxu0 0
  %2213 = vmatpush1.bf16.msra.mxu0 0
  %2214 = vmatprep.subr.bf16.mxu0 0
  %2215 = vmatpush1.bf16.msra.mxu0 0
  %2216 = vmatprep.subr.bf16.mxu0 0
  %2217 = vmatpush1.bf16.msra.mxu0 0
  %2218 = vmatprep.subr.bf16.mxu0 0
  %2219 = vmatpush1.bf16.msra.mxu0 0
  %2220 = vmatprep.subr.bf16.mxu0 0
  %2221 = vmatpush1.bf16.msra.mxu0 0
  %2222 = vmatprep.subr.bf16.mxu0 0
  %2223 = vmatpush1.bf16.msra.mxu0 0
  %2224 = vmatprep.subr.bf16.mxu0 0
  %2225 = vmatpush1.bf16.msra.mxu0 0
  %2226 = vmatprep.subr.bf16.mxu0 0
  %2227 = vmatpush1.bf16.msra.mxu0 0
  %2228 = vmatprep.mubr.bf16.mxu0 0
  %2229 = vmatmul.mubr.bf16.gmra.mrb[0].mxu0 %v2194
  %v2230 = vpop.f32.mrb[0].mxu0
  %v2231 = vadd.f32 0.0, %v2230
  %v2232 = vpop.f32.mrb[0].mxu0
  %v2233 = vadd.f32 0.0, %v2232
  %v2234 = vpop.f32.mrb[0].mxu0
  %v2235 = vpop.f32.mrb[0].mxu0
  %2236 = vdwg.mxu0
  %v2237 = vadd.f32 %v2142, %v2231
  %v2238 = vadd.f32 %v2143, %v2233
  %v2239 = vtanh.pop %v2237
  %v2240 = vtanh.pop %v2238
  %v2241 = vmul.f32 %v2239, 0.5
  %v2242 = vadd.f32 %v2241, 0.5
  %v2243 = vmul.f32 %v2240, 0.5
  %v2244 = vadd.f32 %v2243, 0.5
  %v2245 = vmul.f32 %v2242, %v2129
  %2247 = vrot.lane.b32.xlu0 %v2240, 64
  %v2248 = vpop.permute.xlu0 %2247
  %v2250 = vmul.f32 %v2242, %v2248
  %2252 = vrot.lane.b32.xlu0 %v2250, 64
  %v2253 = vpop.permute.xlu0 %2252
  %v2255 = vadd.f32 %v2245, %v2253
  %v2256 = vtanh.pop %v2255
  %2258 = vrot.lane.b32.xlu0 %v2256, 64
  %v2259 = vpop.permute.xlu0 %2258
  %v2261 = vmul.f32 %v2244, %v2259
  %v2262 = vsel %vm1437, %v2261, 0.0
  %s2263 = scalar_lea.vmem [#allocation9], 48
  %2264 = vst [vmem:[%s2263] sm:$0xff] %v2262
  %s2265 = smul.u32 7, 2
  %s2266 = smul.addr %s2265, 8
  %s2267 = scalar_lea.vmem [#allocation6], %s2266
  %v2268 = vld [vmem:[%s2267] sm:$0xff]
  %v2269 = vld [vmem:[%s2267 + $0x8] sm:$0xff]
  %v2270 = vpack.c.bf16 %v2261, %v2261
  %v2271 = vld [vmem:[%s2] sm:$0xff]
  %v2272 = vld [vmem:[%s2 + $0x8] sm:$0xff]
  %v2273 = vld [vmem:[%s2 + $0x10] sm:$0xff]
  %v2274 = vld [vmem:[%s2 + $0x18] sm:$0xff]
  %v2275 = vld [vmem:[%s2 + $0x20] sm:$0xff]
  %v2276 = vld [vmem:[%s2 + $0x28] sm:$0xff]
  %v2277 = vld [vmem:[%s2 + $0x30] sm:$0xff]
  %v2278 = vld [vmem:[%s2 + $0x38] sm:$0xff]
  %v2287 = vunpack.c.l.b16 %v2271
  %v2288 = vunpack.c.h.b16 %v2271
  %v2289 = vunpack.c.l.b16 %v2272
  %v2290 = vunpack.c.h.b16 %v2272
  %v2291 = vunpack.c.l.b16 %v2273
  %v2292 = vunpack.c.h.b16 %v2273
  %v2293 = vunpack.c.l.b16 %v2274
  %v2294 = vunpack.c.h.b16 %v2274
  %v2295 = vunpack.c.l.b16 %v2275
  %v2296 = vunpack.c.h.b16 %v2275
  %v2297 = vunpack.c.l.b16 %v2276
  %v2298 = vunpack.c.h.b16 %v2276
  %v2299 = vunpack.c.l.b16 %v2277
  %v2300 = vunpack.c.h.b16 %v2277
  %v2301 = vunpack.c.l.b16 %v2278
  %v2302 = vunpack.c.h.b16 %v2278
  %v2303 = vpack.c.b16 %v2289, %v2287
  %v2304 = vpack.c.b16 %v2290, %v2288
  %v2305 = vpack.c.b16 %v2293, %v2291
  %v2306 = vpack.c.b16 %v2294, %v2292
  %v2307 = vpack.c.b16 %v2297, %v2295
  %v2308 = vpack.c.b16 %v2298, %v2296
  %v2309 = vpack.c.b16 %v2301, %v2299
  %v2310 = vpack.c.b16 %v2302, %v2300
  %v2320 = vsel %vm1437, %v2270, 0
  %2322 = vmatprep.subr.bf16.mxu0 %v2304
  %2323 = vmatpush1.bf16.msra.mxu0 %v2303
  %2324 = vmatprep.subr.bf16.mxu0 %v2306
  %2325 = vmatpush1.bf16.msra.mxu0 %v2305
  %2326 = vmatprep.subr.bf16.mxu0 %v2308
  %2327 = vmatpush1.bf16.msra.mxu0 %v2307
  %2328 = vmatprep.subr.bf16.mxu0 %v2310
  %2329 = vmatpush1.bf16.msra.mxu0 %v2309
  %2330 = vmatprep.subr.bf16.mxu0 0
  %2331 = vmatpush1.bf16.msra.mxu0 0
  %2332 = vmatprep.subr.bf16.mxu0 0
  %2333 = vmatpush1.bf16.msra.mxu0 0
  %2334 = vmatprep.subr.bf16.mxu0 0
  %2335 = vmatpush1.bf16.msra.mxu0 0
  %2336 = vmatprep.subr.bf16.mxu0 0
  %2337 = vmatpush1.bf16.msra.mxu0 0
  %2338 = vmatprep.subr.bf16.mxu0 0
  %2339 = vmatpush1.bf16.msra.mxu0 0
  %2340 = vmatprep.subr.bf16.mxu0 0
  %2341 = vmatpush1.bf16.msra.mxu0 0
  %2342 = vmatprep.subr.bf16.mxu0 0
  %2343 = vmatpush1.bf16.msra.mxu0 0
  %2344 = vmatprep.subr.bf16.mxu0 0
  %2345 = vmatpush1.bf16.msra.mxu0 0
  %2346 = vmatprep.subr.bf16.mxu0 0
  %2347 = vmatpush1.bf16.msra.mxu0 0
  %2348 = vmatprep.subr.bf16.mxu0 0
  %2349 = vmatpush1.bf16.msra.mxu0 0
  %2350 = vmatprep.subr.bf16.mxu0 0
  %2351 = vmatpush1.bf16.msra.mxu0 0
  %2352 = vmatprep.subr.bf16.mxu0 0
  %2353 = vmatpush1.bf16.msra.mxu0 0
  %2354 = vmatprep.mubr.bf16.mxu0 0
  %2355 = vmatmul.mubr.bf16.gmra.mrb[0].mxu0 %v2320
  %v2356 = vpop.f32.mrb[0].mxu0
  %v2357 = vadd.f32 0.0, %v2356
  %v2358 = vpop.f32.mrb[0].mxu0
  %v2359 = vadd.f32 0.0, %v2358
  %v2360 = vpop.f32.mrb[0].mxu0
  %v2361 = vpop.f32.mrb[0].mxu0
  %2362 = vdwg.mxu0
  %v2363 = vadd.f32 %v2268, %v2357
  %v2364 = vadd.f32 %v2269, %v2359
  %v2365 = vtanh.pop %v2363
  %v2366 = vtanh.pop %v2364
  %v2367 = vmul.f32 %v2365, 0.5
  %v2368 = vadd.f32 %v2367, 0.5
  %v2369 = vmul.f32 %v2366, 0.5
  %v2370 = vadd.f32 %v2369, 0.5
  %v2371 = vmul.f32 %v2368, %v2255
  %2373 = vrot.lane.b32.xlu0 %v2366, 64
  %v2374 = vpop.permute.xlu0 %2373
  %v2376 = vmul.f32 %v2368, %v2374
  %2378 = vrot.lane.b32.xlu0 %v2376, 64
  %v2379 = vpop.permute.xlu0 %2378
  %v2381 = vadd.f32 %v2371, %v2379
  %v2382 = vtanh.pop %v2381
  %2384 = vrot.lane.b32.xlu0 %v2382, 64
  %v2385 = vpop.permute.xlu0 %2384
  %v2387 = vmul.f32 %v2370, %v2385
  %v2388 = vsel %vm1437, %v2387, 0.0
  %s2389 = scalar_lea.vmem [#allocation9], 56
  %2390 = vst [vmem:[%s2389] sm:$0xff] %v2388
  %v2391 = vld [vmem:[%s6] sm:$0x7]
  %s2392 = smul.u32 4, 16
  %s2393 = smul.u32 %s2392, 3
  %s2394 = sshll.u32 %s2393, 4
  %2395 = dma.done [#allocation10], %s2394
  %s2396 = smul.u32 4, 12
  %s2397 = smul.u32 %s2396, 3
  %s2398 = sshll.u32 %s2397, 4
  %2399 = dma.done %s270, %s2398
  %v2400 = vld [vmem:[#allocation9] sm:$0xff]
  %v2401 = vld [vmem:[#allocation9 + $0x8] sm:$0xff]
  %v2402 = vld [vmem:[#allocation9 + $0x10] sm:$0xff]
  %v2403 = vld [vmem:[#allocation9 + $0x18] sm:$0xff]
  %v2404 = vld [vmem:[#allocation9 + $0x20] sm:$0xff]
  %v2405 = vld [vmem:[#allocation9 + $0x28] sm:$0xff]
  %v2406 = vld [vmem:[#allocation9 + $0x30] sm:$0xff]
  %v2407 = vld [vmem:[#allocation9 + $0x38] sm:$0xff]
  %v2408 = vld [vmem:[#allocation2] sm:$0xff]
  %v2409 = vld [vmem:[#allocation2 + $0x8] sm:$0xff]
  %v2410 = vld [vmem:[#allocation2 + $0x10] sm:$0xff]
  %v2411 = vld [vmem:[#allocation2 + $0x18] sm:$0xff]
  %v2412 = vld [vmem:[#allocation2 + $0x20] sm:$0xff]
  %v2413 = vld [vmem:[#allocation2 + $0x28] sm:$0xff]
  %v2414 = vld [vmem:[#allocation2 + $0x30] sm:$0xff]
  %v2415 = vld [vmem:[#allocation2 + $0x38] sm:$0xff]
  %v2416 = vld [vmem:[#allocation2 + $0x40] sm:$0xff]
  %v2417 = vld [vmem:[#allocation2 + $0x48] sm:$0xff]
  %v2418 = vld [vmem:[#allocation2 + $0x50] sm:$0xff]
  %v2419 = vld [vmem:[#allocation2 + $0x58] sm:$0xff]
  %v2420 = vld [vmem:[#allocation2 + $0x60] sm:$0xff]
  %v2421 = vld [vmem:[#allocation2 + $0x68] sm:$0xff]
  %v2422 = vld [vmem:[#allocation2 + $0x70] sm:$0xff]
  %v2423 = vld [vmem:[#allocation2 + $0x78] sm:$0xff]
  %v2424 = vld [vmem:[#allocation2 + $0x80] sm:$0xff]
  %v2425 = vld [vmem:[#allocation2 + $0x88] sm:$0xff]
  %v2426 = vld [vmem:[#allocation2 + $0x90] sm:$0xff]
  %v2427 = vld [vmem:[#allocation2 + $0x98] sm:$0xff]
  %v2428 = vld [vmem:[#allocation2 + $0xa0] sm:$0xff]
  %v2429 = vld [vmem:[#allocation2 + $0xa8] sm:$0xff]
  %v2430 = vld [vmem:[#allocation2 + $0xb0] sm:$0xff]
  %v2431 = vld [vmem:[#allocation2 + $0xb8] sm:$0xff]
  %v2432 = vpack.c.bf16 %v2401, %v2400
  %v2433 = vpack.c.bf16 %v2403, %v2402
  %v2434 = vpack.c.bf16 %v2405, %v2404
  %v2435 = vpack.c.bf16 %v2407, %v2406
  %v2437 = vlaneseq
  %v2438 = vshrl.u32 %v2437, 7
  %v2439 = vsub.s32 0, %v2438
  %v2440 = vrot.slane %v2391, %v2439
  %v2441 = vlaneseq
  %v2442 = vshrl.u32 %v2441, 7
  %v2443 = vsub.s32 1, %v2442
  %v2444 = vrot.slane %v2391, %v2443
  %v2445 = vlaneseq
  %v2446 = vshrl.u32 %v2445, 7
  %v2447 = vsub.s32 2, %v2446
  %v2448 = vrot.slane %v2391, %v2447
  %2452 = vmatprep.subr.bf16.mxu0 %v2409
  %2453 = vmatpush1.bf16.msra.mxu0 %v2408
  %2454 = vmatprep.subr.bf16.mxu0 %v2412
  %2455 = vmatpush1.bf16.msra.mxu0 %v2411
  %2456 = vmatprep.subr.bf16.mxu0 %v2415
  %2457 = vmatpush1.bf16.msra.mxu0 %v2414
  %2458 = vmatprep.subr.bf16.mxu0 %v2418
  %2459 = vmatpush1.bf16.msra.mxu0 %v2417
  %2460 = vmatprep.subr.bf16.mxu0 %v2421
  %2461 = vmatpush1.bf16.msra.mxu0 %v2420
  %2462 = vmatprep.subr.bf16.mxu0 %v2424
  %2463 = vmatpush1.bf16.msra.mxu0 %v2423
  %2464 = vmatprep.subr.bf16.mxu0 %v2427
  %2465 = vmatpush1.bf16.msra.mxu0 %v2426
  %2466 = vmatprep.subr.bf16.mxu0 %v2430
  %2467 = vmatpush1.bf16.msra.mxu0 %v2429
  %2468 = vmatprep.subr.bf16.mxu0 0
  %2469 = vmatpush1.bf16.msra.mxu0 0
  %2470 = vmatprep.subr.bf16.mxu0 0
  %2471 = vmatpush1.bf16.msra.mxu0 0
  %2472 = vmatprep.subr.bf16.mxu0 0
  %2473 = vmatpush1.bf16.msra.mxu0 0
  %2474 = vmatprep.subr.bf16.mxu0 0
  %2475 = vmatpush1.bf16.msra.mxu0 0
  %2476 = vmatprep.subr.bf16.mxu0 0
  %2477 = vmatpush1.bf16.msra.mxu0 0
  %2478 = vmatprep.subr.bf16.mxu0 0
  %2479 = vmatpush1.bf16.msra.mxu0 0
  %2480 = vmatprep.subr.bf16.mxu0 0
  %2481 = vmatpush1.bf16.msra.mxu0 0
  %2482 = vmatprep.subr.bf16.mxu0 0
  %2483 = vmatpush1.bf16.msra.mxu0 0
  %2484 = vmatprep.mubr.bf16.mxu0 0
  %2485 = vmatmul.mubr.bf16.gmra.mrb[0].mxu0 %v2432
  %v2486 = vpop.f32.mrb[0].mxu0
  %v2487 = vadd.f32 %v2440, %v2486
  %v2488 = vpop.f32.mrb[0].mxu0
  %v2489 = vadd.f32 %v2444, %v2488
  %v2490 = vpop.f32.mrb[0].mxu0
  %v2491 = vadd.f32 %v2440, %v2490
  %v2492 = vpop.f32.mrb[0].mxu0
  %v2493 = vadd.f32 %v2444, %v2492
  %2494 = vmatprep.mubr.bf16.mxu0 0
  %2495 = vmatmul.mubr.bf16.gmra.mrb[0].mxu0 %v2433
  %v2496 = vpop.f32.mrb[0].mxu0
  %v2497 = vadd.f32 %v2440, %v2496
  %v2498 = vpop.f32.mrb[0].mxu0
  %v2499 = vadd.f32 %v2444, %v2498
  %v2500 = vpop.f32.mrb[0].mxu0
  %v2501 = vadd.f32 %v2440, %v2500
  %v2502 = vpop.f32.mrb[0].mxu0
  %v2503 = vadd.f32 %v2444, %v2502
  %2504 = vmatprep.mubr.bf16.mxu0 0
  %2505 = vmatmul.mubr.bf16.gmra.mrb[0].mxu0 %v2434
  %v2506 = vpop.f32.mrb[0].mxu0
  %v2507 = vadd.f32 %v2440, %v2506
  %v2508 = vpop.f32.mrb[0].mxu0
  %v2509 = vadd.f32 %v2444, %v2508
  %v2510 = vpop.f32.mrb[0].mxu0
  %v2511 = vadd.f32 %v2440, %v2510
  %v2512 = vpop.f32.mrb[0].mxu0
  %v2513 = vadd.f32 %v2444, %v2512
  %2514 = vmatprep.mubr.bf16.mxu0 0
  %2515 = vmatmul.mubr.bf16.gmra.mrb[0].mxu0 %v2435
  %v2516 = vpop.f32.mrb[0].mxu0
  %v2517 = vadd.f32 %v2440, %v2516
  %v2518 = vpop.f32.mrb[0].mxu0
  %v2519 = vadd.f32 %v2444, %v2518
  %v2520 = vpop.f32.mrb[0].mxu0
  %v2521 = vadd.f32 %v2440, %v2520
  %v2522 = vpop.f32.mrb[0].mxu0
  %v2523 = vadd.f32 %v2444, %v2522
  %2524 = vdwg.mxu0
  %2525 = vmatprep.subr.bf16.mxu0 0
  %2526 = vmatpush1.bf16.msra.mxu0 %v2410
  %2527 = vmatprep.subr.bf16.mxu0 0
  %2528 = vmatpush1.bf16.msra.mxu0 %v2413
  %2529 = vmatprep.subr.bf16.mxu0 0
  %2530 = vmatpush1.bf16.msra.mxu0 %v2416
  %2531 = vmatprep.subr.bf16.mxu0 0
  %2532 = vmatpush1.bf16.msra.mxu0 %v2419
  %2533 = vmatprep.subr.bf16.mxu0 0
  %2534 = vmatpush1.bf16.msra.mxu0 %v2422
  %2535 = vmatprep.subr.bf16.mxu0 0
  %2536 = vmatpush1.bf16.msra.mxu0 %v2425
  %2537 = vmatprep.subr.bf16.mxu0 0
  %2538 = vmatpush1.bf16.msra.mxu0 %v2428
  %2539 = vmatprep.subr.bf16.mxu0 0
  %2540 = vmatpush1.bf16.msra.mxu0 %v2431
  %2541 = vmatprep.subr.bf16.mxu0 0
  %2542 = vmatpush1.bf16.msra.mxu0 0
  %2543 = vmatprep.subr.bf16.mxu0 0
  %2544 = vmatpush1.bf16.msra.mxu0 0
  %2545 = vmatprep.subr.bf16.mxu0 0
  %2546 = vmatpush1.bf16.msra.mxu0 0
  %2547 = vmatprep.subr.bf16.mxu0 0
  %2548 = vmatpush1.bf16.msra.mxu0 0
  %2549 = vmatprep.subr.bf16.mxu0 0
  %2550 = vmatpush1.bf16.msra.mxu0 0
  %2551 = vmatprep.subr.bf16.mxu0 0
  %2552 = vmatpush1.bf16.msra.mxu0 0
  %2553 = vmatprep.subr.bf16.mxu0 0
  %2554 = vmatpush1.bf16.msra.mxu0 0
  %2555 = vmatprep.subr.bf16.mxu0 0
  %2556 = vmatpush1.bf16.msra.mxu0 0
  %2557 = vmatprep.mubr.bf16.mxu0 0
  %2558 = vmatmul.mubr.bf16.gmra.mrb[0].mxu0 %v2432
  %v2559 = vpop.f32.mrb[0].mxu0
  %v2560 = vadd.f32 %v2448, %v2559
  %v2561 = vpop.f32.mrb[0].mxu0
  %v2562 = vpop.f32.mrb[0].mxu0
  %v2563 = vadd.f32 %v2448, %v2562
  %v2564 = vpop.f32.mrb[0].mxu0
  %2565 = vmatprep.mubr.bf16.mxu0 0
  %2566 = vmatmul.mubr.bf16.gmra.mrb[0].mxu0 %v2433
  %v2567 = vpop.f32.mrb[0].mxu0
  %v2568 = vadd.f32 %v2448, %v2567
  %v2569 = vpop.f32.mrb[0].mxu0
  %v2570 = vpop.f32.mrb[0].mxu0
  %v2571 = vadd.f32 %v2448, %v2570
  %v2572 = vpop.f32.mrb[0].mxu0
  %2573 = vmatprep.mubr.bf16.mxu0 0
  %2574 = vmatmul.mubr.bf16.gmra.mrb[0].mxu0 %v2434
  %v2575 = vpop.f32.mrb[0].mxu0
  %v2576 = vadd.f32 %v2448, %v2575
  %v2577 = vpop.f32.mrb[0].mxu0
  %v2578 = vpop.f32.mrb[0].mxu0
  %v2579 = vadd.f32 %v2448, %v2578
  %v2580 = vpop.f32.mrb[0].mxu0
  %2581 = vmatprep.mubr.bf16.mxu0 0
  %2582 = vmatmul.mubr.bf16.gmra.mrb[0].mxu0 %v2435
  %v2583 = vpop.f32.mrb[0].mxu0
  %v2584 = vadd.f32 %v2448, %v2583
  %v2585 = vpop.f32.mrb[0].mxu0
  %v2586 = vpop.f32.mrb[0].mxu0
  %v2587 = vadd.f32 %v2448, %v2586
  %v2588 = vpop.f32.mrb[0].mxu0
  %2589 = vdwg.mxu0
  %2590 = vst [vmem:[#allocation7] sm:$0xff] %v2487
  %2591 = vst [vmem:[#allocation7 + $0x8] sm:$0xff] %v2489
  %2592 = vst [vmem:[#allocation7 + $0x10] sm:$0xff] %v2560
  %2593 = vst [vmem:[#allocation7 + $0x18] sm:$0xff] %v2491
  %2594 = vst [vmem:[#allocation7 + $0x20] sm:$0xff] %v2493
  %2595 = vst [vmem:[#allocation7 + $0x28] sm:$0xff] %v2563
  %2596 = vst [vmem:[#allocation7 + $0x30] sm:$0xff] %v2497
  %2597 = vst [vmem:[#allocation7 + $0x38] sm:$0xff] %v2499
  %2598 = vst [vmem:[#allocation7 + $0x40] sm:$0xff] %v2568
  %2599 = vst [vmem:[#allocation7 + $0x48] sm:$0xff] %v2501
  %2600 = vst [vmem:[#allocation7 + $0x50] sm:$0xff] %v2503
  %2601 = vst [vmem:[#allocation7 + $0x58] sm:$0xff] %v2571
  %2602 = vst [vmem:[#allocation7 + $0x60] sm:$0xff] %v2507
  %2603 = vst [vmem:[#allocation7 + $0x68] sm:$0xff] %v2509
  %2604 = vst [vmem:[#allocation7 + $0x70] sm:$0xff] %v2576
  %2605 = vst [vmem:[#allocation7 + $0x78] sm:$0xff] %v2511
  %2606 = vst [vmem:[#allocation7 + $0x80] sm:$0xff] %v2513
  %2607 = vst [vmem:[#allocation7 + $0x88] sm:$0xff] %v2579
  %2608 = vst [vmem:[#allocation7 + $0x90] sm:$0xff] %v2517
  %2609 = vst [vmem:[#allocation7 + $0x98] sm:$0xff] %v2519
  %2610 = vst [vmem:[#allocation7 + $0xa0] sm:$0xff] %v2584
  %2611 = vst [vmem:[#allocation7 + $0xa8] sm:$0xff] %v2521
  %2612 = vst [vmem:[#allocation7 + $0xb0] sm:$0xff] %v2523
  %2613 = vst [vmem:[#allocation7 + $0xb8] sm:$0xff] %v2587
  %s2614 = smul.u32 0, 3
  %s2615 = smul.addr %s2614, 8
  %s2616 = scalar_lea.vmem [#allocation7], %s2615
  %v2617 = vld [vmem:[%s2616] sm:$0xff]
  %v2618 = vld [vmem:[%s2616 + $0x8] sm:$0xff]
  %v2619 = vld [vmem:[%s2616 + $0x10] sm:$0xff]
  %v2620 = vld [vmem:[#allocation3] sm:$0xff]
  %v2621 = vld [vmem:[#allocation3 + $0x8] sm:$0xff]
  %v2622 = vld [vmem:[#allocation3 + $0x10] sm:$0xff]
  %v2623 = vld [vmem:[#allocation3 + $0x18] sm:$0xff]
  %v2624 = vld [vmem:[#allocation3 + $0x20] sm:$0xff]
  %v2625 = vld [vmem:[#allocation3 + $0x28] sm:$0xff]
  %v2626 = vld [vmem:[#allocation3 + $0x30] sm:$0xff]
  %v2627 = vld [vmem:[#allocation3 + $0x38] sm:$0xff]
  %v2628 = vld [vmem:[#allocation3 + $0x40] sm:$0xff]
  %v2629 = vld [vmem:[#allocation3 + $0x48] sm:$0xff]
  %v2630 = vld [vmem:[#allocation3 + $0x50] sm:$0xff]
  %v2631 = vld [vmem:[#allocation3 + $0x58] sm:$0xff]
  %v2632 = vld [vmem:[#allocation3 + $0x60] sm:$0xff]
  %v2633 = vld [vmem:[#allocation3 + $0x68] sm:$0xff]
  %v2634 = vld [vmem:[#allocation3 + $0x70] sm:$0xff]
  %v2635 = vld [vmem:[#allocation3 + $0x78] sm:$0xff]
  %v2636 = vld [vmem:[#allocation3 + $0x80] sm:$0xff]
  %v2637 = vld [vmem:[#allocation3 + $0x88] sm:$0xff]
  %vm2638 = vcmask 785408
  %v2639 = vsel %vm2638, 0, 0
  %2641 = vmatprep.subr.bf16.mxu0 %v2621
  %2642 = vmatpush1.bf16.msra.mxu0 %v2620
  %2643 = vmatprep.subr.bf16.mxu0 %v2624
  %2644 = vmatpush1.bf16.msra.mxu0 %v2623
  %2645 = vmatprep.subr.bf16.mxu0 %v2627
  %2646 = vmatpush1.bf16.msra.mxu0 %v2626
  %2647 = vmatprep.subr.bf16.mxu0 %v2630
  %2648 = vmatpush1.bf16.msra.mxu0 %v2629
  %2649 = vmatprep.subr.bf16.mxu0 %v2633
  %2650 = vmatpush1.bf16.msra.mxu0 %v2632
  %2651 = vmatprep.subr.bf16.mxu0 %v2636
  %2652 = vmatpush1.bf16.msra.mxu0 %v2635
  %2653 = vmatprep.subr.bf16.mxu0 0
  %2654 = vmatpush1.bf16.msra.mxu0 0
  %2655 = vmatprep.subr.bf16.mxu0 0
  %2656 = vmatpush1.bf16.msra.mxu0 0
  %2657 = vmatprep.subr.bf16.mxu0 0
  %2658 = vmatpush1.bf16.msra.mxu0 0
  %2659 = vmatprep.subr.bf16.mxu0 0
  %2660 = vmatpush1.bf16.msra.mxu0 0
  %2661 = vmatprep.subr.bf16.mxu0 0
  %2662 = vmatpush1.bf16.msra.mxu0 0
  %2663 = vmatprep.subr.bf16.mxu0 0
  %2664 = vmatpush1.bf16.msra.mxu0 0
  %2665 = vmatprep.subr.bf16.mxu0 0
  %2666 = vmatpush1.bf16.msra.mxu0 0
  %2667 = vmatprep.subr.bf16.mxu0 0
  %2668 = vmatpush1.bf16.msra.mxu0 0
  %2669 = vmatprep.subr.bf16.mxu0 0
  %2670 = vmatpush1.bf16.msra.mxu0 0
  %2671 = vmatprep.subr.bf16.mxu0 0
  %2672 = vmatpush1.bf16.msra.mxu0 0
  %2673 = vmatprep.mubr.bf16.mxu0 0
  %2674 = vmatmul.mubr.bf16.gmra.mrb[0].mxu0 %v2639
  %v2675 = vpop.f32.mrb[0].mxu0
  %v2676 = vadd.f32 0.0, %v2675
  %v2677 = vpop.f32.mrb[0].mxu0
  %v2678 = vadd.f32 0.0, %v2677
  %v2679 = vpop.f32.mrb[0].mxu0
  %v2680 = vpop.f32.mrb[0].mxu0
  %2681 = vdwg.mxu0
  %2682 = vmatprep.subr.bf16.mxu0 0
  %2683 = vmatpush1.bf16.msra.mxu0 %v2622
  %2684 = vmatprep.subr.bf16.mxu0 0
  %2685 = vmatpush1.bf16.msra.mxu0 %v2625
  %2686 = vmatprep.subr.bf16.mxu0 0
  %2687 = vmatpush1.bf16.msra.mxu0 %v2628
  %2688 = vmatprep.subr.bf16.mxu0 0
  %2689 = vmatpush1.bf16.msra.mxu0 %v2631
  %2690 = vmatprep.subr.bf16.mxu0 0
  %2691 = vmatpush1.bf16.msra.mxu0 %v2634
  %2692 = vmatprep.subr.bf16.mxu0 0
  %2693 = vmatpush1.bf16.msra.mxu0 %v2637
  %2694 = vmatprep.subr.bf16.mxu0 0
  %2695 = vmatpush1.bf16.msra.mxu0 0
  %2696 = vmatprep.subr.bf16.mxu0 0
  %2697 = vmatpush1.bf16.msra.mxu0 0
  %2698 = vmatprep.subr.bf16.mxu0 0
  %2699 = vmatpush1.bf16.msra.mxu0 0
  %2700 = vmatprep.subr.bf16.mxu0 0
  %2701 = vmatpush1.bf16.msra.mxu0 0
  %2702 = vmatprep.subr.bf16.mxu0 0
  %2703 = vmatpush1.bf16.msra.mxu0 0
  %2704 = vmatprep.subr.bf16.mxu0 0
  %2705 = vmatpush1.bf16.msra.mxu0 0
  %2706 = vmatprep.subr.bf16.mxu0 0
  %2707 = vmatpush1.bf16.msra.mxu0 0
  %2708 = vmatprep.subr.bf16.mxu0 0
  %2709 = vmatpush1.bf16.msra.mxu0 0
  %2710 = vmatprep.subr.bf16.mxu0 0
  %2711 = vmatpush1.bf16.msra.mxu0 0
  %2712 = vmatprep.subr.bf16.mxu0 0
  %2713 = vmatpush1.bf16.msra.mxu0 0
  %2714 = vmatprep.mubr.bf16.mxu0 0
  %2715 = vmatmul.mubr.bf16.gmra.mrb[0].mxu0 %v2639
  %v2716 = vpop.f32.mrb[0].mxu0
  %v2717 = vadd.f32 0.0, %v2716
  %v2718 = vpop.f32.mrb[0].mxu0
  %v2719 = vpop.f32.mrb[0].mxu0
  %v2720 = vpop.f32.mrb[0].mxu0
  %2721 = vdwg.mxu0
  %v2722 = vadd.f32 %v2617, %v2676
  %v2723 = vadd.f32 %v2618, %v2678
  %v2724 = vadd.f32 %v2619, %v2717
  %v2725 = vtanh.pop %v2722
  %v2726 = vtanh.pop %v2723
  %v2727 = vtanh.pop %v2724
  %v2728 = vmul.f32 %v2725, 0.5
  %v2729 = vadd.f32 %v2728, 0.5
  %v2730 = vmul.f32 %v2726, 0.5
  %v2731 = vadd.f32 %v2730, 0.5
  %v2732 = vmul.f32 %v2727, 0.5
  %v2733 = vadd.f32 %v2732, 0.5
  %v2734 = vmul.f32 %v2729, 0.0
  %v2735 = vmul.f32 %v2731, 0.0
  %2737 = vrot.lane.b32.xlu0 %v2727, 96
  %v2738 = vpop.permute.xlu0 %2737
  %v2740 = vmul.f32 %v2729, %v2738
  %2742 = vrot.lane.b32.xlu0 %v2740, 96
  %v2743 = vpop.permute.xlu0 %2742
  %v2745 = vadd.f32 %v2734, %v2743
  %v2746 = vadd.f32 %v2735, %v2743
  %v2747 = vtanh.pop %v2745
  %v2748 = vtanh.pop %v2746
  %2751 = vrot.lane.b32.xlu0 %v2747, 96
  %v2752 = vpop.permute.xlu0 %2751
  %2753 = vrot.lane.b32.xlu0 %v2748, 96
  %v2754 = vpop.permute.xlu0 %2753
  %v2755 = vsel %vm2638, %v2752, %v2754
  %v2758 = vmul.f32 %v2731, %v2755
  %v2759 = vmul.f32 %v2733, %v2754
  %2762 = vrot.lane.b32.xlu0 %v2758, 64
  %v2763 = vpop.permute.xlu0 %2762
  %2764 = vrot.lane.b32.xlu0 %v2759, 64
  %v2765 = vpop.permute.xlu0 %2764
  %v2766 = vsel %vm1437, %v2763, %v2765
  %v2768 = vsel %vm2638, %v2766, 0.0
  %2769 = vst [vmem:[#allocation9] sm:$0xff] %v2768
  %s2770 = smul.u32 1, 3
  %s2771 = smul.addr %s2770, 8
  %s2772 = scalar_lea.vmem [#allocation7], %s2771
  %v2773 = vld [vmem:[%s2772] sm:$0xff]
  %v2774 = vld [vmem:[%s2772 + $0x8] sm:$0xff]
  %v2775 = vld [vmem:[%s2772 + $0x10] sm:$0xff]
  %v2776 = vpack.c.bf16 %v2758, %v2758
  %v2777 = vpack.c.bf16 %v2759, %v2759
  %v2778 = vld [vmem:[#allocation3] sm:$0xff]
  %v2779 = vld [vmem:[#allocation3 + $0x8] sm:$0xff]
  %v2780 = vld [vmem:[#allocation3 + $0x10] sm:$0xff]
  %v2781 = vld [vmem:[#allocation3 + $0x18] sm:$0xff]
  %v2782 = vld [vmem:[#allocation3 + $0x20] sm:$0xff]
  %v2783 = vld [vmem:[#allocation3 + $0x28] sm:$0xff]
  %v2784 = vld [vmem:[#allocation3 + $0x30] sm:$0xff]
  %v2785 = vld [vmem:[#allocation3 + $0x38] sm:$0xff]
  %v2786 = vld [vmem:[#allocation3 + $0x40] sm:$0xff]
  %v2787 = vld [vmem:[#allocation3 + $0x48] sm:$0xff]
  %v2788 = vld [vmem:[#allocation3 + $0x50] sm:$0xff]
  %v2789 = vld [vmem:[#allocation3 + $0x58] sm:$0xff]
  %v2790 = vld [vmem:[#allocation3 + $0x60] sm:$0xff]
  %v2791 = vld [vmem:[#allocation3 + $0x68] sm:$0xff]
  %v2792 = vld [vmem:[#allocation3 + $0x70] sm:$0xff]
  %v2793 = vld [vmem:[#allocation3 + $0x78] sm:$0xff]
  %v2794 = vld [vmem:[#allocation3 + $0x80] sm:$0xff]
  %v2795 = vld [vmem:[#allocation3 + $0x88] sm:$0xff]
  %2798 = vrot.lane.b32.xlu0 %v2776, 64
  %v2799 = vpop.permute.xlu0 %2798
  %2800 = vrot.lane.b32.xlu0 %v2777, 64
  %v2801 = vpop.permute.xlu0 %2800
  %vm2802 = vcmask 523264
  %v2803 = vsel %vm2802, %v2799, %v2801
  %v2805 = vsel %vm2638, %v2803, 0
  %2807 = vmatprep.subr.bf16.mxu0 %v2779
  %2808 = vmatpush1.bf16.msra.mxu0 %v2778
  %2809 = vmatprep.subr.bf16.mxu0 %v2782
  %2810 = vmatpush1.bf16.msra.mxu0 %v2781
  %2811 = vmatprep.subr.bf16.mxu0 %v2785
  %2812 = vmatpush1.bf16.msra.mxu0 %v2784
  %2813 = vmatprep.subr.bf16.mxu0 %v2788
  %2814 = vmatpush1.bf16.msra.mxu0 %v2787
  %2815 = vmatprep.subr.bf16.mxu0 %v2791
  %2816 = vmatpush1.bf16.msra.mxu0 %v2790
  %2817 = vmatprep.subr.bf16.mxu0 %v2794
  %2818 = vmatpush1.bf16.msra.mxu0 %v2793
  %2819 = vmatprep.subr.bf16.mxu0 0
  %2820 = vmatpush1.bf16.msra.mxu0 0
  %2821 = vmatprep.subr.bf16.mxu0 0
  %2822 = vmatpush1.bf16.msra.mxu0 0
  %2823 = vmatprep.subr.bf16.mxu0 0
  %2824 = vmatpush1.bf16.msra.mxu0 0
  %2825 = vmatprep.subr.bf16.mxu0 0
  %2826 = vmatpush1.bf16.msra.mxu0 0
  %2827 = vmatprep.subr.bf16.mxu0 0
  %2828 = vmatpush1.bf16.msra.mxu0 0
  %2829 = vmatprep.subr.bf16.mxu0 0
  %2830 = vmatpush1.bf16.msra.mxu0 0
  %2831 = vmatprep.subr.bf16.mxu0 0
  %2832 = vmatpush1.bf16.msra.mxu0 0
  %2833 = vmatprep.subr.bf16.mxu0 0
  %2834 = vmatpush1.bf16.msra.mxu0 0
  %2835 = vmatprep.subr.bf16.mxu0 0
  %2836 = vmatpush1.bf16.msra.mxu0 0
  %2837 = vmatprep.subr.bf16.mxu0 0
  %2838 = vmatpush1.bf16.msra.mxu0 0
  %2839 = vmatprep.mubr.bf16.mxu0 0
  %2840 = vmatmul.mubr.bf16.gmra.mrb[0].mxu0 %v2805
  %v2841 = vpop.f32.mrb[0].mxu0
  %v2842 = vadd.f32 0.0, %v2841
  %v2843 = vpop.f32.mrb[0].mxu0
  %v2844 = vadd.f32 0.0, %v2843
  %v2845 = vpop.f32.mrb[0].mxu0
  %v2846 = vpop.f32.mrb[0].mxu0
  %2847 = vdwg.mxu0
  %2848 = vmatprep.subr.bf16.mxu0 0
  %2849 = vmatpush1.bf16.msra.mxu0 %v2780
  %2850 = vmatprep.subr.bf16.mxu0 0
  %2851 = vmatpush1.bf16.msra.mxu0 %v2783
  %2852 = vmatprep.subr.bf16.mxu0 0
  %2853 = vmatpush1.bf16.msra.mxu0 %v2786
  %2854 = vmatprep.subr.bf16.mxu0 0
  %2855 = vmatpush1.bf16.msra.mxu0 %v2789
  %2856 = vmatprep.subr.bf16.mxu0 0
  %2857 = vmatpush1.bf16.msra.mxu0 %v2792
  %2858 = vmatprep.subr.bf16.mxu0 0
  %2859 = vmatpush1.bf16.msra.mxu0 %v2795
  %2860 = vmatprep.subr.bf16.mxu0 0
  %2861 = vmatpush1.bf16.msra.mxu0 0
  %2862 = vmatprep.subr.bf16.mxu0 0
  %2863 = vmatpush1.bf16.msra.mxu0 0
  %2864 = vmatprep.subr.bf16.mxu0 0
  %2865 = vmatpush1.bf16.msra.mxu0 0
  %2866 = vmatprep.subr.bf16.mxu0 0
  %2867 = vmatpush1.bf16.msra.mxu0 0
  %2868 = vmatprep.subr.bf16.mxu0 0
  %2869 = vmatpush1.bf16.msra.mxu0 0
  %2870 = vmatprep.subr.bf16.mxu0 0
  %2871 = vmatpush1.bf16.msra.mxu0 0
  %2872 = vmatprep.subr.bf16.mxu0 0
  %2873 = vmatpush1.bf16.msra.mxu0 0
  %2874 = vmatprep.subr.bf16.mxu0 0
  %2875 = vmatpush1.bf16.msra.mxu0 0
  %2876 = vmatprep.subr.bf16.mxu0 0
  %2877 = vmatpush1.bf16.msra.mxu0 0
  %2878 = vmatprep.subr.bf16.mxu0 0
  %2879 = vmatpush1.bf16.msra.mxu0 0
  %2880 = vmatprep.mubr.bf16.mxu0 0
  %2881 = vmatmul.mubr.bf16.gmra.mrb[0].mxu0 %v2805
  %v2882 = vpop.f32.mrb[0].mxu0
  %v2883 = vadd.f32 0.0, %v2882
  %v2884 = vpop.f32.mrb[0].mxu0
  %v2885 = vpop.f32.mrb[0].mxu0
  %v2886 = vpop.f32.mrb[0].mxu0
  %2887 = vdwg.mxu0
  %v2888 = vadd.f32 %v2773, %v2842
  %v2889 = vadd.f32 %v2774, %v2844
  %v2890 = vadd.f32 %v2775, %v2883
  %v2891 = vtanh.pop %v2888
  %v2892 = vtanh.pop %v2889
  %v2893 = vtanh.pop %v2890
  %v2894 = vmul.f32 %v2891, 0.5
  %v2895 = vadd.f32 %v2894, 0.5
  %v2896 = vmul.f32 %v2892, 0.5
  %v2897 = vadd.f32 %v2896, 0.5
  %v2898 = vmul.f32 %v2893, 0.5
  %v2899 = vadd.f32 %v2898, 0.5
  %v2900 = vmul.f32 %v2895, %v2745
  %v2901 = vmul.f32 %v2897, %v2746
  %2903 = vrot.lane.b32.xlu0 %v2893, 96
  %v2904 = vpop.permute.xlu0 %2903
  %v2906 = vmul.f32 %v2895, %v2904
  %2908 = vrot.lane.b32.xlu0 %v2906, 96
  %v2909 = vpop.permute.xlu0 %2908
  %v2911 = vadd.f32 %v2900, %v2909
  %v2912 = vadd.f32 %v2901, %v2909
  %v2913 = vtanh.pop %v2911
  %v2914 = vtanh.pop %v2912
  %2917 = vrot.lane.b32.xlu0 %v2913, 96
  %v2918 = vpop.permute.xlu0 %2917
  %2919 = vrot.lane.b32.xlu0 %v2914, 96
  %v2920 = vpop.permute.xlu0 %2919
  %v2921 = vsel %vm2638, %v2918, %v2920
  %v2924 = vmul.f32 %v2897, %v2921
  %v2925 = vmul.f32 %v2899, %v2920
  %2928 = vrot.lane.b32.xlu0 %v2924, 64
  %v2929 = vpop.permute.xlu0 %2928
  %2930 = vrot.lane.b32.xlu0 %v2925, 64
  %v2931 = vpop.permute.xlu0 %2930
  %v2932 = vsel %vm1437, %v2929, %v2931
  %v2934 = vsel %vm2638, %v2932, 0.0
  %2935 = vst [vmem:[%s1633] sm:$0xff] %v2934
  %s2936 = smul.u32 2, 3
  %s2937 = smul.addr %s2936, 8
  %s2938 = scalar_lea.vmem [#allocation7], %s2937
  %v2939 = vld [vmem:[%s2938] sm:$0xff]
  %v2940 = vld [vmem:[%s2938 + $0x8] sm:$0xff]
  %v2941 = vld [vmem:[%s2938 + $0x10] sm:$0xff]
  %v2942 = vpack.c.bf16 %v2924, %v2924
  %v2943 = vpack.c.bf16 %v2925, %v2925
  %v2944 = vld [vmem:[#allocation3] sm:$0xff]
  %v2945 = vld [vmem:[#allocation3 + $0x8] sm:$0xff]
  %v2946 = vld [vmem:[#allocation3 + $0x10] sm:$0xff]
  %v2947 = vld [vmem:[#allocation3 + $0x18] sm:$0xff]
  %v2948 = vld [vmem:[#allocation3 + $0x20] sm:$0xff]
  %v2949 = vld [vmem:[#allocation3 + $0x28] sm:$0xff]
  %v2950 = vld [vmem:[#allocation3 + $0x30] sm:$0xff]
  %v2951 = vld [vmem:[#allocation3 + $0x38] sm:$0xff]
  %v2952 = vld [vmem:[#allocation3 + $0x40] sm:$0xff]
  %v2953 = vld [vmem:[#allocation3 + $0x48] sm:$0xff]
  %v2954 = vld [vmem:[#allocation3 + $0x50] sm:$0xff]
  %v2955 = vld [vmem:[#allocation3 + $0x58] sm:$0xff]
  %v2956 = vld [vmem:[#allocation3 + $0x60] sm:$0xff]
  %v2957 = vld [vmem:[#allocation3 + $0x68] sm:$0xff]
  %v2958 = vld [vmem:[#allocation3 + $0x70] sm:$0xff]
  %v2959 = vld [vmem:[#allocation3 + $0x78] sm:$0xff]
  %v2960 = vld [vmem:[#allocation3 + $0x80] sm:$0xff]
  %v2961 = vld [vmem:[#allocation3 + $0x88] sm:$0xff]
  %2964 = vrot.lane.b32.xlu0 %v2942, 64
  %v2965 = vpop.permute.xlu0 %2964
  %2966 = vrot.lane.b32.xlu0 %v2943, 64
  %v2967 = vpop.permute.xlu0 %2966
  %v2968 = vsel %vm2802, %v2965, %v2967
  %v2970 = vsel %vm2638, %v2968, 0
  %2972 = vmatprep.subr.bf16.mxu0 %v2945
  %2973 = vmatpush1.bf16.msra.mxu0 %v2944
  %2974 = vmatprep.subr.bf16.mxu0 %v2948
  %2975 = vmatpush1.bf16.msra.mxu0 %v2947
  %2976 = vmatprep.subr.bf16.mxu0 %v2951
  %2977 = vmatpush1.bf16.msra.mxu0 %v2950
  %2978 = vmatprep.subr.bf16.mxu0 %v2954
  %2979 = vmatpush1.bf16.msra.mxu0 %v2953
  %2980 = vmatprep.subr.bf16.mxu0 %v2957
  %2981 = vmatpush1.bf16.msra.mxu0 %v2956
  %2982 = vmatprep.subr.bf16.mxu0 %v2960
  %2983 = vmatpush1.bf16.msra.mxu0 %v2959
  %2984 = vmatprep.subr.bf16.mxu0 0
  %2985 = vmatpush1.bf16.msra.mxu0 0
  %2986 = vmatprep.subr.bf16.mxu0 0
  %2987 = vmatpush1.bf16.msra.mxu0 0
  %2988 = vmatprep.subr.bf16.mxu0 0
  %2989 = vmatpush1.bf16.msra.mxu0 0
  %2990 = vmatprep.subr.bf16.mxu0 0
  %2991 = vmatpush1.bf16.msra.mxu0 0
  %2992 = vmatprep.subr.bf16.mxu0 0
  %2993 = vmatpush1.bf16.msra.mxu0 0
  %2994 = vmatprep.subr.bf16.mxu0 0
  %2995 = vmatpush1.bf16.msra.mxu0 0
  %2996 = vmatprep.subr.bf16.mxu0 0
  %2997 = vmatpush1.bf16.msra.mxu0 0
  %2998 = vmatprep.subr.bf16.mxu0 0
  %2999 = vmatpush1.bf16.msra.mxu0 0
  %3000 = vmatprep.subr.bf16.mxu0 0
  %3001 = vmatpush1.bf16.msra.mxu0 0
  %3002 = vmatprep.subr.bf16.mxu0 0
  %3003 = vmatpush1.bf16.msra.mxu0 0
  %3004 = vmatprep.mubr.bf16.mxu0 0
  %3005 = vmatmul.mubr.bf16.gmra.mrb[0].mxu0 %v2970
  %v3006 = vpop.f32.mrb[0].mxu0
  %v3007 = vadd.f32 0.0, %v3006
  %v3008 = vpop.f32.mrb[0].mxu0
  %v3009 = vadd.f32 0.0, %v3008
  %v3010 = vpop.f32.mrb[0].mxu0
  %v3011 = vpop.f32.mrb[0].mxu0
  %3012 = vdwg.mxu0
  %3013 = vmatprep.subr.bf16.mxu0 0
  %3014 = vmatpush1.bf16.msra.mxu0 %v2946
  %3015 = vmatprep.subr.bf16.mxu0 0
  %3016 = vmatpush1.bf16.msra.mxu0 %v2949
  %3017 = vmatprep.subr.bf16.mxu0 0
  %3018 = vmatpush1.bf16.msra.mxu0 %v2952
  %3019 = vmatprep.subr.bf16.mxu0 0
  %3020 = vmatpush1.bf16.msra.mxu0 %v2955
  %3021 = vmatprep.subr.bf16.mxu0 0
  %3022 = vmatpush1.bf16.msra.mxu0 %v2958
  %3023 = vmatprep.subr.bf16.mxu0 0
  %3024 = vmatpush1.bf16.msra.mxu0 %v2961
  %3025 = vmatprep.subr.bf16.mxu0 0
  %3026 = vmatpush1.bf16.msra.mxu0 0
  %3027 = vmatprep.subr.bf16.mxu0 0
  %3028 = vmatpush1.bf16.msra.mxu0 0
  %3029 = vmatprep.subr.bf16.mxu0 0
  %3030 = vmatpush1.bf16.msra.mxu0 0
  %3031 = vmatprep.subr.bf16.mxu0 0
  %3032 = vmatpush1.bf16.msra.mxu0 0
  %3033 = vmatprep.subr.bf16.mxu0 0
  %3034 = vmatpush1.bf16.msra.mxu0 0
  %3035 = vmatprep.subr.bf16.mxu0 0
  %3036 = vmatpush1.bf16.msra.mxu0 0
  %3037 = vmatprep.subr.bf16.mxu0 0
  %3038 = vmatpush1.bf16.msra.mxu0 0
  %3039 = vmatprep.subr.bf16.mxu0 0
  %3040 = vmatpush1.bf16.msra.mxu0 0
  %3041 = vmatprep.subr.bf16.mxu0 0
  %3042 = vmatpush1.bf16.msra.mxu0 0
  %3043 = vmatprep.subr.bf16.mxu0 0
  %3044 = vmatpush1.bf16.msra.mxu0 0
  %3045 = vmatprep.mubr.bf16.mxu0 0
  %3046 = vmatmul.mubr.bf16.gmra.mrb[0].mxu0 %v2970
  %v3047 = vpop.f32.mrb[0].mxu0
  %v3048 = vadd.f32 0.0, %v3047
  %v3049 = vpop.f32.mrb[0].mxu0
  %v3050 = vpop.f32.mrb[0].mxu0
  %v3051 = vpop.f32.mrb[0].mxu0
  %3052 = vdwg.mxu0
  %v3053 = vadd.f32 %v2939, %v3007
  %v3054 = vadd.f32 %v2940, %v3009
  %v3055 = vadd.f32 %v2941, %v3048
  %v3056 = vtanh.pop %v3053
  %v3057 = vtanh.pop %v3054
  %v3058 = vtanh.pop %v3055
  %v3059 = vmul.f32 %v3056, 0.5
  %v3060 = vadd.f32 %v3059, 0.5
  %v3061 = vmul.f32 %v3057, 0.5
  %v3062 = vadd.f32 %v3061, 0.5
  %v3063 = vmul.f32 %v3058, 0.5
  %v3064 = vadd.f32 %v3063, 0.5
  %v3065 = vmul.f32 %v3060, %v2911
  %v3066 = vmul.f32 %v3062, %v2912
  %3068 = vrot.lane.b32.xlu0 %v3058, 96
  %v3069 = vpop.permute.xlu0 %3068
  %v3071 = vmul.f32 %v3060, %v3069
  %3073 = vrot.lane.b32.xlu0 %v3071, 96
  %v3074 = vpop.permute.xlu0 %3073
  %v3076 = vadd.f32 %v3065, %v3074
  %v3077 = vadd.f32 %v3066, %v3074
  %v3078 = vtanh.pop %v3076
  %v3079 = vtanh.pop %v3077
  %3082 = vrot.lane.b32.xlu0 %v3078, 96
  %v3083 = vpop.permute.xlu0 %3082
  %3084 = vrot.lane.b32.xlu0 %v3079, 96
  %v3085 = vpop.permute.xlu0 %3084
  %v3086 = vsel %vm2638, %v3083, %v3085
  %v3089 = vmul.f32 %v3062, %v3086
  %v3090 = vmul.f32 %v3064, %v3085
  %3093 = vrot.lane.b32.xlu0 %v3089, 64
  %v3094 = vpop.permute.xlu0 %3093
  %3095 = vrot.lane.b32.xlu0 %v3090, 64
  %v3096 = vpop.permute.xlu0 %3095
  %v3097 = vsel %vm1437, %v3094, %v3096
  %v3099 = vsel %vm2638, %v3097, 0.0
  %3100 = vst [vmem:[%s1759] sm:$0xff] %v3099
  %s3101 = smul.u32 3, 3
  %s3102 = smul.addr %s3101, 8
  %s3103 = scalar_lea.vmem [#allocation7], %s3102
  %v3104 = vld [vmem:[%s3103] sm:$0xff]
  %v3105 = vld [vmem:[%s3103 + $0x8] sm:$0xff]
  %v3106 = vld [vmem:[%s3103 + $0x10] sm:$0xff]
  %v3107 = vpack.c.bf16 %v3089, %v3089
  %v3108 = vpack.c.bf16 %v3090, %v3090
  %v3109 = vld [vmem:[#allocation3] sm:$0xff]
  %v3110 = vld [vmem:[#allocation3 + $0x8] sm:$0xff]
  %v3111 = vld [vmem:[#allocation3 + $0x10] sm:$0xff]
  %v3112 = vld [vmem:[#allocation3 + $0x18] sm:$0xff]
  %v3113 = vld [vmem:[#allocation3 + $0x20] sm:$0xff]
  %v3114 = vld [vmem:[#allocation3 + $0x28] sm:$0xff]
  %v3115 = vld [vmem:[#allocation3 + $0x30] sm:$0xff]
  %v3116 = vld [vmem:[#allocation3 + $0x38] sm:$0xff]
  %v3117 = vld [vmem:[#allocation3 + $0x40] sm:$0xff]
  %v3118 = vld [vmem:[#allocation3 + $0x48] sm:$0xff]
  %v3119 = vld [vmem:[#allocation3 + $0x50] sm:$0xff]
  %v3120 = vld [vmem:[#allocation3 + $0x58] sm:$0xff]
  %v3121 = vld [vmem:[#allocation3 + $0x60] sm:$0xff]
  %v3122 = vld [vmem:[#allocation3 + $0x68] sm:$0xff]
  %v3123 = vld [vmem:[#allocation3 + $0x70] sm:$0xff]
  %v3124 = vld [vmem:[#allocation3 + $0x78] sm:$0xff]
  %v3125 = vld [vmem:[#allocation3 + $0x80] sm:$0xff]
  %v3126 = vld [vmem:[#allocation3 + $0x88] sm:$0xff]
  %3129 = vrot.lane.b32.xlu0 %v3107, 64
  %v3130 = vpop.permute.xlu0 %3129
  %3131 = vrot.lane.b32.xlu0 %v3108, 64
  %v3132 = vpop.permute.xlu0 %3131
  %v3133 = vsel %vm2802, %v3130, %v3132
  %v3135 = vsel %vm2638, %v3133, 0
  %3137 = vmatprep.subr.bf16.mxu0 %v3110
  %3138 = vmatpush1.bf16.msra.mxu0 %v3109
  %3139 = vmatprep.subr.bf16.mxu0 %v3113
  %3140 = vmatpush1.bf16.msra.mxu0 %v3112
  %3141 = vmatprep.subr.bf16.mxu0 %v3116
  %3142 = vmatpush1.bf16.msra.mxu0 %v3115
  %3143 = vmatprep.subr.bf16.mxu0 %v3119
  %3144 = vmatpush1.bf16.msra.mxu0 %v3118
  %3145 = vmatprep.subr.bf16.mxu0 %v3122
  %3146 = vmatpush1.bf16.msra.mxu0 %v3121
  %3147 = vmatprep.subr.bf16.mxu0 %v3125
  %3148 = vmatpush1.bf16.msra.mxu0 %v3124
  %3149 = vmatprep.subr.bf16.mxu0 0
  %3150 = vmatpush1.bf16.msra.mxu0 0
  %3151 = vmatprep.subr.bf16.mxu0 0
  %3152 = vmatpush1.bf16.msra.mxu0 0
  %3153 = vmatprep.subr.bf16.mxu0 0
  %3154 = vmatpush1.bf16.msra.mxu0 0
  %3155 = vmatprep.subr.bf16.mxu0 0
  %3156 = vmatpush1.bf16.msra.mxu0 0
  %3157 = vmatprep.subr.bf16.mxu0 0
  %3158 = vmatpush1.bf16.msra.mxu0 0
  %3159 = vmatprep.subr.bf16.mxu0 0
  %3160 = vmatpush1.bf16.msra.mxu0 0
  %3161 = vmatprep.subr.bf16.mxu0 0
  %3162 = vmatpush1.bf16.msra.mxu0 0
  %3163 = vmatprep.subr.bf16.mxu0 0
  %3164 = vmatpush1.bf16.msra.mxu0 0
  %3165 = vmatprep.subr.bf16.mxu0 0
  %3166 = vmatpush1.bf16.msra.mxu0 0
  %3167 = vmatprep.subr.bf16.mxu0 0
  %3168 = vmatpush1.bf16.msra.mxu0 0
  %3169 = vmatprep.mubr.bf16.mxu0 0
  %3170 = vmatmul.mubr.bf16.gmra.mrb[0].mxu0 %v3135
  %v3171 = vpop.f32.mrb[0].mxu0
  %v3172 = vadd.f32 0.0, %v3171
  %v3173 = vpop.f32.mrb[0].mxu0
  %v3174 = vadd.f32 0.0, %v3173
  %v3175 = vpop.f32.mrb[0].mxu0
  %v3176 = vpop.f32.mrb[0].mxu0
  %3177 = vdwg.mxu0
  %3178 = vmatprep.subr.bf16.mxu0 0
  %3179 = vmatpush1.bf16.msra.mxu0 %v3111
  %3180 = vmatprep.subr.bf16.mxu0 0
  %3181 = vmatpush1.bf16.msra.mxu0 %v3114
  %3182 = vmatprep.subr.bf16.mxu0 0
  %3183 = vmatpush1.bf16.msra.mxu0 %v3117
  %3184 = vmatprep.subr.bf16.mxu0 0
  %3185 = vmatpush1.bf16.msra.mxu0 %v3120
  %3186 = vmatprep.subr.bf16.mxu0 0
  %3187 = vmatpush1.bf16.msra.mxu0 %v3123
  %3188 = vmatprep.subr.bf16.mxu0 0
  %3189 = vmatpush1.bf16.msra.mxu0 %v3126
  %3190 = vmatprep.subr.bf16.mxu0 0
  %3191 = vmatpush1.bf16.msra.mxu0 0
  %3192 = vmatprep.subr.bf16.mxu0 0
  %3193 = vmatpush1.bf16.msra.mxu0 0
  %3194 = vmatprep.subr.bf16.mxu0 0
  %3195 = vmatpush1.bf16.msra.mxu0 0
  %3196 = vmatprep.subr.bf16.mxu0 0
  %3197 = vmatpush1.bf16.msra.mxu0 0
  %3198 = vmatprep.subr.bf16.mxu0 0
  %3199 = vmatpush1.bf16.msra.mxu0 0
  %3200 = vmatprep.subr.bf16.mxu0 0
  %3201 = vmatpush1.bf16.msra.mxu0 0
  %3202 = vmatprep.subr.bf16.mxu0 0
  %3203 = vmatpush1.bf16.msra.mxu0 0
  %3204 = vmatprep.subr.bf16.mxu0 0
  %3205 = vmatpush1.bf16.msra.mxu0 0
  %3206 = vmatprep.subr.bf16.mxu0 0
  %3207 = vmatpush1.bf16.msra.mxu0 0
  %3208 = vmatprep.subr.bf16.mxu0 0
  %3209 = vmatpush1.bf16.msra.mxu0 0
  %3210 = vmatprep.mubr.bf16.mxu0 0
  %3211 = vmatmul.mubr.bf16.gmra.mrb[0].mxu0 %v3135
  %v3212 = vpop.f32.mrb[0].mxu0
  %v3213 = vadd.f32 0.0, %v3212
  %v3214 = vpop.f32.mrb[0].mxu0
  %v3215 = vpop.f32.mrb[0].mxu0
  %v3216 = vpop.f32.mrb[0].mxu0
  %3217 = vdwg.mxu0
  %v3218 = vadd.f32 %v3104, %v3172
  %v3219 = vadd.f32 %v3105, %v3174
  %v3220 = vadd.f32 %v3106, %v3213
  %v3221 = vtanh.pop %v3218
  %v3222 = vtanh.pop %v3219
  %v3223 = vtanh.pop %v3220
  %v3224 = vmul.f32 %v3221, 0.5
  %v3225 = vadd.f32 %v3224, 0.5
  %v3226 = vmul.f32 %v3222, 0.5
  %v3227 = vadd.f32 %v3226, 0.5
  %v3228 = vmul.f32 %v3223, 0.5
  %v3229 = vadd.f32 %v3228, 0.5
  %v3230 = vmul.f32 %v3225, %v3076
  %v3231 = vmul.f32 %v3227, %v3077
  %3233 = vrot.lane.b32.xlu0 %v3223, 96
  %v3234 = vpop.permute.xlu0 %3233
  %v3236 = vmul.f32 %v3225, %v3234
  %3238 = vrot.lane.b32.xlu0 %v3236, 96
  %v3239 = vpop.permute.xlu0 %3238
  %v3241 = vadd.f32 %v3230, %v3239
  %v3242 = vadd.f32 %v3231, %v3239
  %v3243 = vtanh.pop %v3241
  %v3244 = vtanh.pop %v3242
  %3247 = vrot.lane.b32.xlu0 %v3243, 96
  %v3248 = vpop.permute.xlu0 %3247
  %3249 = vrot.lane.b32.xlu0 %v3244, 96
  %v3250 = vpop.permute.xlu0 %3249
  %v3251 = vsel %vm2638, %v3248, %v3250
  %v3254 = vmul.f32 %v3227, %v3251
  %v3255 = vmul.f32 %v3229, %v3250
  %3258 = vrot.lane.b32.xlu0 %v3254, 64
  %v3259 = vpop.permute.xlu0 %3258
  %3260 = vrot.lane.b32.xlu0 %v3255, 64
  %v3261 = vpop.permute.xlu0 %3260
  %v3262 = vsel %vm1437, %v3259, %v3261
  %v3264 = vsel %vm2638, %v3262, 0.0
  %3265 = vst [vmem:[%s1885] sm:$0xff] %v3264
  %s3266 = smul.u32 4, 3
  %s3267 = smul.addr %s3266, 8
  %s3268 = scalar_lea.vmem [#allocation7], %s3267
  %v3269 = vld [vmem:[%s3268] sm:$0xff]
  %v3270 = vld [vmem:[%s3268 + $0x8] sm:$0xff]
  %v3271 = vld [vmem:[%s3268 + $0x10] sm:$0xff]
  %v3272 = vpack.c.bf16 %v3254, %v3254
  %v3273 = vpack.c.bf16 %v3255, %v3255
  %v3274 = vld [vmem:[#allocation3] sm:$0xff]
  %v3275 = vld [vmem:[#allocation3 + $0x8] sm:$0xff]
  %v3276 = vld [vmem:[#allocation3 + $0x10] sm:$0xff]
  %v3277 = vld [vmem:[#allocation3 + $0x18] sm:$0xff]
  %v3278 = vld [vmem:[#allocation3 + $0x20] sm:$0xff]
  %v3279 = vld [vmem:[#allocation3 + $0x28] sm:$0xff]
  %v3280 = vld [vmem:[#allocation3 + $0x30] sm:$0xff]
  %v3281 = vld [vmem:[#allocation3 + $0x38] sm:$0xff]
  %v3282 = vld [vmem:[#allocation3 + $0x40] sm:$0xff]
  %v3283 = vld [vmem:[#allocation3 + $0x48] sm:$0xff]
  %v3284 = vld [vmem:[#allocation3 + $0x50] sm:$0xff]
  %v3285 = vld [vmem:[#allocation3 + $0x58] sm:$0xff]
  %v3286 = vld [vmem:[#allocation3 + $0x60] sm:$0xff]
  %v3287 = vld [vmem:[#allocation3 + $0x68] sm:$0xff]
  %v3288 = vld [vmem:[#allocation3 + $0x70] sm:$0xff]
  %v3289 = vld [vmem:[#allocation3 + $0x78] sm:$0xff]
  %v3290 = vld [vmem:[#allocation3 + $0x80] sm:$0xff]
  %v3291 = vld [vmem:[#allocation3 + $0x88] sm:$0xff]
  %3294 = vrot.lane.b32.xlu0 %v3272, 64
  %v3295 = vpop.permute.xlu0 %3294
  %3296 = vrot.lane.b32.xlu0 %v3273, 64
  %v3297 = vpop.permute.xlu0 %3296
  %v3298 = vsel %vm2802, %v3295, %v3297
  %v3300 = vsel %vm2638, %v3298, 0
  %3302 = vmatprep.subr.bf16.mxu0 %v3275
  %3303 = vmatpush1.bf16.msra.mxu0 %v3274
  %3304 = vmatprep.subr.bf16.mxu0 %v3278
  %3305 = vmatpush1.bf16.msra.mxu0 %v3277
  %3306 = vmatprep.subr.bf16.mxu0 %v3281
  %3307 = vmatpush1.bf16.msra.mxu0 %v3280
  %3308 = vmatprep.subr.bf16.mxu0 %v3284
  %3309 = vmatpush1.bf16.msra.mxu0 %v3283
  %3310 = vmatprep.subr.bf16.mxu0 %v3287
  %3311 = vmatpush1.bf16.msra.mxu0 %v3286
  %3312 = vmatprep.subr.bf16.mxu0 %v3290
  %3313 = vmatpush1.bf16.msra.mxu0 %v3289
  %3314 = vmatprep.subr.bf16.mxu0 0
  %3315 = vmatpush1.bf16.msra.mxu0 0
  %3316 = vmatprep.subr.bf16.mxu0 0
  %3317 = vmatpush1.bf16.msra.mxu0 0
  %3318 = vmatprep.subr.bf16.mxu0 0
  %3319 = vmatpush1.bf16.msra.mxu0 0
  %3320 = vmatprep.subr.bf16.mxu0 0
  %3321 = vmatpush1.bf16.msra.mxu0 0
  %3322 = vmatprep.subr.bf16.mxu0 0
  %3323 = vmatpush1.bf16.msra.mxu0 0
  %3324 = vmatprep.subr.bf16.mxu0 0
  %3325 = vmatpush1.bf16.msra.mxu0 0
  %3326 = vmatprep.subr.bf16.mxu0 0
  %3327 = vmatpush1.bf16.msra.mxu0 0
  %3328 = vmatprep.subr.bf16.mxu0 0
  %3329 = vmatpush1.bf16.msra.mxu0 0
  %3330 = vmatprep.subr.bf16.mxu0 0
  %3331 = vmatpush1.bf16.msra.mxu0 0
  %3332 = vmatprep.subr.bf16.mxu0 0
  %3333 = vmatpush1.bf16.msra.mxu0 0
  %3334 = vmatprep.mubr.bf16.mxu0 0
  %3335 = vmatmul.mubr.bf16.gmra.mrb[0].mxu0 %v3300
  %v3336 = vpop.f32.mrb[0].mxu0
  %v3337 = vadd.f32 0.0, %v3336
  %v3338 = vpop.f32.mrb[0].mxu0
  %v3339 = vadd.f32 0.0, %v3338
  %v3340 = vpop.f32.mrb[0].mxu0
  %v3341 = vpop.f32.mrb[0].mxu0
  %3342 = vdwg.mxu0
  %3343 = vmatprep.subr.bf16.mxu0 0
  %3344 = vmatpush1.bf16.msra.mxu0 %v3276
  %3345 = vmatprep.subr.bf16.mxu0 0
  %3346 = vmatpush1.bf16.msra.mxu0 %v3279
  %3347 = vmatprep.subr.bf16.mxu0 0
  %3348 = vmatpush1.bf16.msra.mxu0 %v3282
  %3349 = vmatprep.subr.bf16.mxu0 0
  %3350 = vmatpush1.bf16.msra.mxu0 %v3285
  %3351 = vmatprep.subr.bf16.mxu0 0
  %3352 = vmatpush1.bf16.msra.mxu0 %v3288
  %3353 = vmatprep.subr.bf16.mxu0 0
  %3354 = vmatpush1.bf16.msra.mxu0 %v3291
  %3355 = vmatprep.subr.bf16.mxu0 0
  %3356 = vmatpush1.bf16.msra.mxu0 0
  %3357 = vmatprep.subr.bf16.mxu0 0
  %3358 = vmatpush1.bf16.msra.mxu0 0
  %3359 = vmatprep.subr.bf16.mxu0 0
  %3360 = vmatpush1.bf16.msra.mxu0 0
  %3361 = vmatprep.subr.bf16.mxu0 0
  %3362 = vmatpush1.bf16.msra.mxu0 0
  %3363 = vmatprep.subr.bf16.mxu0 0
  %3364 = vmatpush1.bf16.msra.mxu0 0
  %3365 = vmatprep.subr.bf16.mxu0 0
  %3366 = vmatpush1.bf16.msra.mxu0 0
  %3367 = vmatprep.subr.bf16.mxu0 0
  %3368 = vmatpush1.bf16.msra.mxu0 0
  %3369 = vmatprep.subr.bf16.mxu0 0
  %3370 = vmatpush1.bf16.msra.mxu0 0
  %3371 = vmatprep.subr.bf16.mxu0 0
  %3372 = vmatpush1.bf16.msra.mxu0 0
  %3373 = vmatprep.subr.bf16.mxu0 0
  %3374 = vmatpush1.bf16.msra.mxu0 0
  %3375 = vmatprep.mubr.bf16.mxu0 0
  %3376 = vmatmul.mubr.bf16.gmra.mrb[0].mxu0 %v3300
  %v3377 = vpop.f32.mrb[0].mxu0
  %v3378 = vadd.f32 0.0, %v3377
  %v3379 = vpop.f32.mrb[0].mxu0
  %v3380 = vpop.f32.mrb[0].mxu0
  %v3381 = vpop.f32.mrb[0].mxu0
  %3382 = vdwg.mxu0
  %v3383 = vadd.f32 %v3269, %v3337
  %v3384 = vadd.f32 %v3270, %v3339
  %v3385 = vadd.f32 %v3271, %v3378
  %v3386 = vtanh.pop %v3383
  %v3387 = vtanh.pop %v3384
  %v3388 = vtanh.pop %v3385
  %v3389 = vmul.f32 %v3386, 0.5
  %v3390 = vadd.f32 %v3389, 0.5
  %v3391 = vmul.f32 %v3387, 0.5
  %v3392 = vadd.f32 %v3391, 0.5
  %v3393 = vmul.f32 %v3388, 0.5
  %v3394 = vadd.f32 %v3393, 0.5
  %v3395 = vmul.f32 %v3390, %v3241
  %v3396 = vmul.f32 %v3392, %v3242
  %3398 = vrot.lane.b32.xlu0 %v3388, 96
  %v3399 = vpop.permute.xlu0 %3398
  %v3401 = vmul.f32 %v3390, %v3399
  %3403 = vrot.lane.b32.xlu0 %v3401, 96
  %v3404 = vpop.permute.xlu0 %3403
  %v3406 = vadd.f32 %v3395, %v3404
  %v3407 = vadd.f32 %v3396, %v3404
  %v3408 = vtanh.pop %v3406
  %v3409 = vtanh.pop %v3407
  %3412 = vrot.lane.b32.xlu0 %v3408, 96
  %v3413 = vpop.permute.xlu0 %3412
  %3414 = vrot.lane.b32.xlu0 %v3409, 96
  %v3415 = vpop.permute.xlu0 %3414
  %v3416 = vsel %vm2638, %v3413, %v3415
  %v3419 = vmul.f32 %v3392, %v3416
  %v3420 = vmul.f32 %v3394, %v3415
  %3423 = vrot.lane.b32.xlu0 %v3419, 64
  %v3424 = vpop.permute.xlu0 %3423
  %3425 = vrot.lane.b32.xlu0 %v3420, 64
  %v3426 = vpop.permute.xlu0 %3425
  %v3427 = vsel %vm1437, %v3424, %v3426
  %v3429 = vsel %vm2638, %v3427, 0.0
  %3430 = vst [vmem:[%s2011] sm:$0xff] %v3429
  %s3431 = smul.u32 5, 3
  %s3432 = smul.addr %s3431, 8
  %s3433 = scalar_lea.vmem [#allocation7], %s3432
  %v3434 = vld [vmem:[%s3433] sm:$0xff]
  %v3435 = vld [vmem:[%s3433 + $0x8] sm:$0xff]
  %v3436 = vld [vmem:[%s3433 + $0x10] sm:$0xff]
  %v3437 = vpack.c.bf16 %v3419, %v3419
  %v3438 = vpack.c.bf16 %v3420, %v3420
  %v3439 = vld [vmem:[#allocation3] sm:$0xff]
  %v3440 = vld [vmem:[#allocation3 + $0x8] sm:$0xff]
  %v3441 = vld [vmem:[#allocation3 + $0x10] sm:$0xff]
  %v3442 = vld [vmem:[#allocation3 + $0x18] sm:$0xff]
  %v3443 = vld [vmem:[#allocation3 + $0x20] sm:$0xff]
  %v3444 = vld [vmem:[#allocation3 + $0x28] sm:$0xff]
  %v3445 = vld [vmem:[#allocation3 + $0x30] sm:$0xff]
  %v3446 = vld [vmem:[#allocation3 + $0x38] sm:$0xff]
  %v3447 = vld [vmem:[#allocation3 + $0x40] sm:$0xff]
  %v3448 = vld [vmem:[#allocation3 + $0x48] sm:$0xff]
  %v3449 = vld [vmem:[#allocation3 + $0x50] sm:$0xff]
  %v3450 = vld [vmem:[#allocation3 + $0x58] sm:$0xff]
  %v3451 = vld [vmem:[#allocation3 + $0x60] sm:$0xff]
  %v3452 = vld [vmem:[#allocation3 + $0x68] sm:$0xff]
  %v3453 = vld [vmem:[#allocation3 + $0x70] sm:$0xff]
  %v3454 = vld [vmem:[#allocation3 + $0x78] sm:$0xff]
  %v3455 = vld [vmem:[#allocation3 + $0x80] sm:$0xff]
  %v3456 = vld [vmem:[#allocation3 + $0x88] sm:$0xff]
  %3459 = vrot.lane.b32.xlu0 %v3437, 64
  %v3460 = vpop.permute.xlu0 %3459
  %3461 = vrot.lane.b32.xlu0 %v3438, 64
  %v3462 = vpop.permute.xlu0 %3461
  %v3463 = vsel %vm2802, %v3460, %v3462
  %v3465 = vsel %vm2638, %v3463, 0
  %3467 = vmatprep.subr.bf16.mxu0 %v3440
  %3468 = vmatpush1.bf16.msra.mxu0 %v3439
  %3469 = vmatprep.subr.bf16.mxu0 %v3443
  %3470 = vmatpush1.bf16.msra.mxu0 %v3442
  %3471 = vmatprep.subr.bf16.mxu0 %v3446
  %3472 = vmatpush1.bf16.msra.mxu0 %v3445
  %3473 = vmatprep.subr.bf16.mxu0 %v3449
  %3474 = vmatpush1.bf16.msra.mxu0 %v3448
  %3475 = vmatprep.subr.bf16.mxu0 %v3452
  %3476 = vmatpush1.bf16.msra.mxu0 %v3451
  %3477 = vmatprep.subr.bf16.mxu0 %v3455
  %3478 = vmatpush1.bf16.msra.mxu0 %v3454
  %3479 = vmatprep.subr.bf16.mxu0 0
  %3480 = vmatpush1.bf16.msra.mxu0 0
  %3481 = vmatprep.subr.bf16.mxu0 0
  %3482 = vmatpush1.bf16.msra.mxu0 0
  %3483 = vmatprep.subr.bf16.mxu0 0
  %3484 = vmatpush1.bf16.msra.mxu0 0
  %3485 = vmatprep.subr.bf16.mxu0 0
  %3486 = vmatpush1.bf16.msra.mxu0 0
  %3487 = vmatprep.subr.bf16.mxu0 0
  %3488 = vmatpush1.bf16.msra.mxu0 0
  %3489 = vmatprep.subr.bf16.mxu0 0
  %3490 = vmatpush1.bf16.msra.mxu0 0
  %3491 = vmatprep.subr.bf16.mxu0 0
  %3492 = vmatpush1.bf16.msra.mxu0 0
  %3493 = vmatprep.subr.bf16.mxu0 0
  %3494 = vmatpush1.bf16.msra.mxu0 0
  %3495 = vmatprep.subr.bf16.mxu0 0
  %3496 = vmatpush1.bf16.msra.mxu0 0
  %3497 = vmatprep.subr.bf16.mxu0 0
  %3498 = vmatpush1.bf16.msra.mxu0 0
  %3499 = vmatprep.mubr.bf16.mxu0 0
  %3500 = vmatmul.mubr.bf16.gmra.mrb[0].mxu0 %v3465
  %v3501 = vpop.f32.mrb[0].mxu0
  %v3502 = vadd.f32 0.0, %v3501
  %v3503 = vpop.f32.mrb[0].mxu0
  %v3504 = vadd.f32 0.0, %v3503
  %v3505 = vpop.f32.mrb[0].mxu0
  %v3506 = vpop.f32.mrb[0].mxu0
  %3507 = vdwg.mxu0
  %3508 = vmatprep.subr.bf16.mxu0 0
  %3509 = vmatpush1.bf16.msra.mxu0 %v3441
  %3510 = vmatprep.subr.bf16.mxu0 0
  %3511 = vmatpush1.bf16.msra.mxu0 %v3444
  %3512 = vmatprep.subr.bf16.mxu0 0
  %3513 = vmatpush1.bf16.msra.mxu0 %v3447
  %3514 = vmatprep.subr.bf16.mxu0 0
  %3515 = vmatpush1.bf16.msra.mxu0 %v3450
  %3516 = vmatprep.subr.bf16.mxu0 0
  %3517 = vmatpush1.bf16.msra.mxu0 %v3453
  %3518 = vmatprep.subr.bf16.mxu0 0
  %3519 = vmatpush1.bf16.msra.mxu0 %v3456
  %3520 = vmatprep.subr.bf16.mxu0 0
  %3521 = vmatpush1.bf16.msra.mxu0 0
  %3522 = vmatprep.subr.bf16.mxu0 0
  %3523 = vmatpush1.bf16.msra.mxu0 0
  %3524 = vmatprep.subr.bf16.mxu0 0
  %3525 = vmatpush1.bf16.msra.mxu0 0
  %3526 = vmatprep.subr.bf16.mxu0 0
  %3527 = vmatpush1.bf16.msra.mxu0 0
  %3528 = vmatprep.subr.bf16.mxu0 0
  %3529 = vmatpush1.bf16.msra.mxu0 0
  %3530 = vmatprep.subr.bf16.mxu0 0
  %3531 = vmatpush1.bf16.msra.mxu0 0
  %3532 = vmatprep.subr.bf16.mxu0 0
  %3533 = vmatpush1.bf16.msra.mxu0 0
  %3534 = vmatprep.subr.bf16.mxu0 0
  %3535 = vmatpush1.bf16.msra.mxu0 0
  %3536 = vmatprep.subr.bf16.mxu0 0
  %3537 = vmatpush1.bf16.msra.mxu0 0
  %3538 = vmatprep.subr.bf16.mxu0 0
  %3539 = vmatpush1.bf16.msra.mxu0 0
  %3540 = vmatprep.mubr.bf16.mxu0 0
  %3541 = vmatmul.mubr.bf16.gmra.mrb[0].mxu0 %v3465
  %v3542 = vpop.f32.mrb[0].mxu0
  %v3543 = vadd.f32 0.0, %v3542
  %v3544 = vpop.f32.mrb[0].mxu0
  %v3545 = vpop.f32.mrb[0].mxu0
  %v3546 = vpop.f32.mrb[0].mxu0
  %3547 = vdwg.mxu0
  %v3548 = vadd.f32 %v3434, %v3502
  %v3549 = vadd.f32 %v3435, %v3504
  %v3550 = vadd.f32 %v3436, %v3543
  %v3551 = vtanh.pop %v3548
  %v3552 = vtanh.pop %v3549
  %v3553 = vtanh.pop %v3550
  %v3554 = vmul.f32 %v3551, 0.5
  %v3555 = vadd.f32 %v3554, 0.5
  %v3556 = vmul.f32 %v3552, 0.5
  %v3557 = vadd.f32 %v3556, 0.5
  %v3558 = vmul.f32 %v3553, 0.5
  %v3559 = vadd.f32 %v3558, 0.5
  %v3560 = vmul.f32 %v3555, %v3406
  %v3561 = vmul.f32 %v3557, %v3407
  %3563 = vrot.lane.b32.xlu0 %v3553, 96
  %v3564 = vpop.permute.xlu0 %3563
  %v3566 = vmul.f32 %v3555, %v3564
  %3568 = vrot.lane.b32.xlu0 %v3566, 96
  %v3569 = vpop.permute.xlu0 %3568
  %v3571 = vadd.f32 %v3560, %v3569
  %v3572 = vadd.f32 %v3561, %v3569
  %v3573 = vtanh.pop %v3571
  %v3574 = vtanh.pop %v3572
  %3577 = vrot.lane.b32.xlu0 %v3573, 96
  %v3578 = vpop.permute.xlu0 %3577
  %3579 = vrot.lane.b32.xlu0 %v3574, 96
  %v3580 = vpop.permute.xlu0 %3579
  %v3581 = vsel %vm2638, %v3578, %v3580
  %v3584 = vmul.f32 %v3557, %v3581
  %v3585 = vmul.f32 %v3559, %v3580
  %3588 = vrot.lane.b32.xlu0 %v3584, 64
  %v3589 = vpop.permute.xlu0 %3588
  %3590 = vrot.lane.b32.xlu0 %v3585, 64
  %v3591 = vpop.permute.xlu0 %3590
  %v3592 = vsel %vm1437, %v3589, %v3591
  %v3594 = vsel %vm2638, %v3592, 0.0
  %3595 = vst [vmem:[%s2137] sm:$0xff] %v3594
  %s3596 = smul.u32 6, 3
  %s3597 = smul.addr %s3596, 8
  %s3598 = scalar_lea.vmem [#allocation7], %s3597
  %v3599 = vld [vmem:[%s3598] sm:$0xff]
  %v3600 = vld [vmem:[%s3598 + $0x8] sm:$0xff]
  %v3601 = vld [vmem:[%s3598 + $0x10] sm:$0xff]
  %v3602 = vpack.c.bf16 %v3584, %v3584
  %v3603 = vpack.c.bf16 %v3585, %v3585
  %v3604 = vld [vmem:[#allocation3] sm:$0xff]
  %v3605 = vld [vmem:[#allocation3 + $0x8] sm:$0xff]
  %v3606 = vld [vmem:[#allocation3 + $0x10] sm:$0xff]
  %v3607 = vld [vmem:[#allocation3 + $0x18] sm:$0xff]
  %v3608 = vld [vmem:[#allocation3 + $0x20] sm:$0xff]
  %v3609 = vld [vmem:[#allocation3 + $0x28] sm:$0xff]
  %v3610 = vld [vmem:[#allocation3 + $0x30] sm:$0xff]
  %v3611 = vld [vmem:[#allocation3 + $0x38] sm:$0xff]
  %v3612 = vld [vmem:[#allocation3 + $0x40] sm:$0xff]
  %v3613 = vld [vmem:[#allocation3 + $0x48] sm:$0xff]
  %v3614 = vld [vmem:[#allocation3 + $0x50] sm:$0xff]
  %v3615 = vld [vmem:[#allocation3 + $0x58] sm:$0xff]
  %v3616 = vld [vmem:[#allocation3 + $0x60] sm:$0xff]
  %v3617 = vld [vmem:[#allocation3 + $0x68] sm:$0xff]
  %v3618 = vld [vmem:[#allocation3 + $0x70] sm:$0xff]
  %v3619 = vld [vmem:[#allocation3 + $0x78] sm:$0xff]
  %v3620 = vld [vmem:[#allocation3 + $0x80] sm:$0xff]
  %v3621 = vld [vmem:[#allocation3 + $0x88] sm:$0xff]
  %3624 = vrot.lane.b32.xlu0 %v3602, 64
  %v3625 = vpop.permute.xlu0 %3624
  %3626 = vrot.lane.b32.xlu0 %v3603, 64
  %v3627 = vpop.permute.xlu0 %3626
  %v3628 = vsel %vm2802, %v3625, %v3627
  %v3630 = vsel %vm2638, %v3628, 0
  %3632 = vmatprep.subr.bf16.mxu0 %v3605
  %3633 = vmatpush1.bf16.msra.mxu0 %v3604
  %3634 = vmatprep.subr.bf16.mxu0 %v3608
  %3635 = vmatpush1.bf16.msra.mxu0 %v3607
  %3636 = vmatprep.subr.bf16.mxu0 %v3611
  %3637 = vmatpush1.bf16.msra.mxu0 %v3610
  %3638 = vmatprep.subr.bf16.mxu0 %v3614
  %3639 = vmatpush1.bf16.msra.mxu0 %v3613
  %3640 = vmatprep.subr.bf16.mxu0 %v3617
  %3641 = vmatpush1.bf16.msra.mxu0 %v3616
  %3642 = vmatprep.subr.bf16.mxu0 %v3620
  %3643 = vmatpush1.bf16.msra.mxu0 %v3619
  %3644 = vmatprep.subr.bf16.mxu0 0
  %3645 = vmatpush1.bf16.msra.mxu0 0
  %3646 = vmatprep.subr.bf16.mxu0 0
  %3647 = vmatpush1.bf16.msra.mxu0 0
  %3648 = vmatprep.subr.bf16.mxu0 0
  %3649 = vmatpush1.bf16.msra.mxu0 0
  %3650 = vmatprep.subr.bf16.mxu0 0
  %3651 = vmatpush1.bf16.msra.mxu0 0
  %3652 = vmatprep.subr.bf16.mxu0 0
  %3653 = vmatpush1.bf16.msra.mxu0 0
  %3654 = vmatprep.subr.bf16.mxu0 0
  %3655 = vmatpush1.bf16.msra.mxu0 0
  %3656 = vmatprep.subr.bf16.mxu0 0
  %3657 = vmatpush1.bf16.msra.mxu0 0
  %3658 = vmatprep.subr.bf16.mxu0 0
  %3659 = vmatpush1.bf16.msra.mxu0 0
  %3660 = vmatprep.subr.bf16.mxu0 0
  %3661 = vmatpush1.bf16.msra.mxu0 0
  %3662 = vmatprep.subr.bf16.mxu0 0
  %3663 = vmatpush1.bf16.msra.mxu0 0
  %3664 = vmatprep.mubr.bf16.mxu0 0
  %3665 = vmatmul.mubr.bf16.gmra.mrb[0].mxu0 %v3630
  %v3666 = vpop.f32.mrb[0].mxu0
  %v3667 = vadd.f32 0.0, %v3666
  %v3668 = vpop.f32.mrb[0].mxu0
  %v3669 = vadd.f32 0.0, %v3668
  %v3670 = vpop.f32.mrb[0].mxu0
  %v3671 = vpop.f32.mrb[0].mxu0
  %3672 = vdwg.mxu0
  %3673 = vmatprep.subr.bf16.mxu0 0
  %3674 = vmatpush1.bf16.msra.mxu0 %v3606
  %3675 = vmatprep.subr.bf16.mxu0 0
  %3676 = vmatpush1.bf16.msra.mxu0 %v3609
  %3677 = vmatprep.subr.bf16.mxu0 0
  %3678 = vmatpush1.bf16.msra.mxu0 %v3612
  %3679 = vmatprep.subr.bf16.mxu0 0
  %3680 = vmatpush1.bf16.msra.mxu0 %v3615
  %3681 = vmatprep.subr.bf16.mxu0 0
  %3682 = vmatpush1.bf16.msra.mxu0 %v3618
  %3683 = vmatprep.subr.bf16.mxu0 0
  %3684 = vmatpush1.bf16.msra.mxu0 %v3621
  %3685 = vmatprep.subr.bf16.mxu0 0
  %3686 = vmatpush1.bf16.msra.mxu0 0
  %3687 = vmatprep.subr.bf16.mxu0 0
  %3688 = vmatpush1.bf16.msra.mxu0 0
  %3689 = vmatprep.subr.bf16.mxu0 0
  %3690 = vmatpush1.bf16.msra.mxu0 0
  %3691 = vmatprep.subr.bf16.mxu0 0
  %3692 = vmatpush1.bf16.msra.mxu0 0
  %3693 = vmatprep.subr.bf16.mxu0 0
  %3694 = vmatpush1.bf16.msra.mxu0 0
  %3695 = vmatprep.subr.bf16.mxu0 0
  %3696 = vmatpush1.bf16.msra.mxu0 0
  %3697 = vmatprep.subr.bf16.mxu0 0
  %3698 = vmatpush1.bf16.msra.mxu0 0
  %3699 = vmatprep.subr.bf16.mxu0 0
  %3700 = vmatpush1.bf16.msra.mxu0 0
  %3701 = vmatprep.subr.bf16.mxu0 0
  %3702 = vmatpush1.bf16.msra.mxu0 0
  %3703 = vmatprep.subr.bf16.mxu0 0
  %3704 = vmatpush1.bf16.msra.mxu0 0
  %3705 = vmatprep.mubr.bf16.mxu0 0
  %3706 = vmatmul.mubr.bf16.gmra.mrb[0].mxu0 %v3630
  %v3707 = vpop.f32.mrb[0].mxu0
  %v3708 = vadd.f32 0.0, %v3707
  %v3709 = vpop.f32.mrb[0].mxu0
  %v3710 = vpop.f32.mrb[0].mxu0
  %v3711 = vpop.f32.mrb[0].mxu0
  %3712 = vdwg.mxu0
  %v3713 = vadd.f32 %v3599, %v3667
  %v3714 = vadd.f32 %v3600, %v3669
  %v3715 = vadd.f32 %v3601, %v3708
  %v3716 = vtanh.pop %v3713
  %v3717 = vtanh.pop %v3714
  %v3718 = vtanh.pop %v3715
  %v3719 = vmul.f32 %v3716, 0.5
  %v3720 = vadd.f32 %v3719, 0.5
  %v3721 = vmul.f32 %v3717, 0.5
  %v3722 = vadd.f32 %v3721, 0.5
  %v3723 = vmul.f32 %v3718, 0.5
  %v3724 = vadd.f32 %v3723, 0.5
  %v3725 = vmul.f32 %v3720, %v3571
  %v3726 = vmul.f32 %v3722, %v3572
  %3728 = vrot.lane.b32.xlu0 %v3718, 96
  %v3729 = vpop.permute.xlu0 %3728
  %v3731 = vmul.f32 %v3720, %v3729
  %3733 = vrot.lane.b32.xlu0 %v3731, 96
  %v3734 = vpop.permute.xlu0 %3733
  %v3736 = vadd.f32 %v3725, %v3734
  %v3737 = vadd.f32 %v3726, %v3734
  %v3738 = vtanh.pop %v3736
  %v3739 = vtanh.pop %v3737
  %3742 = vrot.lane.b32.xlu0 %v3738, 96
  %v3743 = vpop.permute.xlu0 %3742
  %3744 = vrot.lane.b32.xlu0 %v3739, 96
  %v3745 = vpop.permute.xlu0 %3744
  %v3746 = vsel %vm2638, %v3743, %v3745
  %v3749 = vmul.f32 %v3722, %v3746
  %v3750 = vmul.f32 %v3724, %v3745
  %3753 = vrot.lane.b32.xlu0 %v3749, 64
  %v3754 = vpop.permute.xlu0 %3753
  %3755 = vrot.lane.b32.xlu0 %v3750, 64
  %v3756 = vpop.permute.xlu0 %3755
  %v3757 = vsel %vm1437, %v3754, %v3756
  %v3759 = vsel %vm2638, %v3757, 0.0
  %3760 = vst [vmem:[%s2263] sm:$0xff] %v3759
  %s3761 = smul.u32 7, 3
  %s3762 = smul.addr %s3761, 8
  %s3763 = scalar_lea.vmem [#allocation7], %s3762
  %v3764 = vld [vmem:[%s3763] sm:$0xff]
  %v3765 = vld [vmem:[%s3763 + $0x8] sm:$0xff]
  %v3766 = vld [vmem:[%s3763 + $0x10] sm:$0xff]
  %v3767 = vpack.c.bf16 %v3749, %v3749
  %v3768 = vpack.c.bf16 %v3750, %v3750
  %v3769 = vld [vmem:[#allocation3] sm:$0xff]
  %v3770 = vld [vmem:[#allocation3 + $0x8] sm:$0xff]
  %v3771 = vld [vmem:[#allocation3 + $0x10] sm:$0xff]
  %v3772 = vld [vmem:[#allocation3 + $0x18] sm:$0xff]
  %v3773 = vld [vmem:[#allocation3 + $0x20] sm:$0xff]
  %v3774 = vld [vmem:[#allocation3 + $0x28] sm:$0xff]
  %v3775 = vld [vmem:[#allocation3 + $0x30] sm:$0xff]
  %v3776 = vld [vmem:[#allocation3 + $0x38] sm:$0xff]
  %v3777 = vld [vmem:[#allocation3 + $0x40] sm:$0xff]
  %v3778 = vld [vmem:[#allocation3 + $0x48] sm:$0xff]
  %v3779 = vld [vmem:[#allocation3 + $0x50] sm:$0xff]
  %v3780 = vld [vmem:[#allocation3 + $0x58] sm:$0xff]
  %v3781 = vld [vmem:[#allocation3 + $0x60] sm:$0xff]
  %v3782 = vld [vmem:[#allocation3 + $0x68] sm:$0xff]
  %v3783 = vld [vmem:[#allocation3 + $0x70] sm:$0xff]
  %v3784 = vld [vmem:[#allocation3 + $0x78] sm:$0xff]
  %v3785 = vld [vmem:[#allocation3 + $0x80] sm:$0xff]
  %v3786 = vld [vmem:[#allocation3 + $0x88] sm:$0xff]
  %3789 = vrot.lane.b32.xlu0 %v3767, 64
  %v3790 = vpop.permute.xlu0 %3789
  %3791 = vrot.lane.b32.xlu0 %v3768, 64
  %v3792 = vpop.permute.xlu0 %3791
  %v3793 = vsel %vm2802, %v3790, %v3792
  %v3795 = vsel %vm2638, %v3793, 0
  %3797 = vmatprep.subr.bf16.mxu0 %v3770
  %3798 = vmatpush1.bf16.msra.mxu0 %v3769
  %3799 = vmatprep.subr.bf16.mxu0 %v3773
  %3800 = vmatpush1.bf16.msra.mxu0 %v3772
  %3801 = vmatprep.subr.bf16.mxu0 %v3776
  %3802 = vmatpush1.bf16.msra.mxu0 %v3775
  %3803 = vmatprep.subr.bf16.mxu0 %v3779
  %3804 = vmatpush1.bf16.msra.mxu0 %v3778
  %3805 = vmatprep.subr.bf16.mxu0 %v3782
  %3806 = vmatpush1.bf16.msra.mxu0 %v3781
  %3807 = vmatprep.subr.bf16.mxu0 %v3785
  %3808 = vmatpush1.bf16.msra.mxu0 %v3784
  %3809 = vmatprep.subr.bf16.mxu0 0
  %3810 = vmatpush1.bf16.msra.mxu0 0
  %3811 = vmatprep.subr.bf16.mxu0 0
  %3812 = vmatpush1.bf16.msra.mxu0 0
  %3813 = vmatprep.subr.bf16.mxu0 0
  %3814 = vmatpush1.bf16.msra.mxu0 0
  %3815 = vmatprep.subr.bf16.mxu0 0
  %3816 = vmatpush1.bf16.msra.mxu0 0
  %3817 = vmatprep.subr.bf16.mxu0 0
  %3818 = vmatpush1.bf16.msra.mxu0 0
  %3819 = vmatprep.subr.bf16.mxu0 0
  %3820 = vmatpush1.bf16.msra.mxu0 0
  %3821 = vmatprep.subr.bf16.mxu0 0
  %3822 = vmatpush1.bf16.msra.mxu0 0
  %3823 = vmatprep.subr.bf16.mxu0 0
  %3824 = vmatpush1.bf16.msra.mxu0 0
  %3825 = vmatprep.subr.bf16.mxu0 0
  %3826 = vmatpush1.bf16.msra.mxu0 0
  %3827 = vmatprep.subr.bf16.mxu0 0
  %3828 = vmatpush1.bf16.msra.mxu0 0
  %3829 = vmatprep.mubr.bf16.mxu0 0
  %3830 = vmatmul.mubr.bf16.gmra.mrb[0].mxu0 %v3795
  %v3831 = vpop.f32.mrb[0].mxu0
  %v3832 = vadd.f32 0.0, %v3831
  %v3833 = vpop.f32.mrb[0].mxu0
  %v3834 = vadd.f32 0.0, %v3833
  %v3835 = vpop.f32.mrb[0].mxu0
  %v3836 = vpop.f32.mrb[0].mxu0
  %3837 = vdwg.mxu0
  %3838 = vmatprep.subr.bf16.mxu0 0
  %3839 = vmatpush1.bf16.msra.mxu0 %v3771
  %3840 = vmatprep.subr.bf16.mxu0 0
  %3841 = vmatpush1.bf16.msra.mxu0 %v3774
  %3842 = vmatprep.subr.bf16.mxu0 0
  %3843 = vmatpush1.bf16.msra.mxu0 %v3777
  %3844 = vmatprep.subr.bf16.mxu0 0
  %3845 = vmatpush1.bf16.msra.mxu0 %v3780
  %3846 = vmatprep.subr.bf16.mxu0 0
  %3847 = vmatpush1.bf16.msra.mxu0 %v3783
  %3848 = vmatprep.subr.bf16.mxu0 0
  %3849 = vmatpush1.bf16.msra.mxu0 %v3786
  %3850 = vmatprep.subr.bf16.mxu0 0
  %3851 = vmatpush1.bf16.msra.mxu0 0
  %3852 = vmatprep.subr.bf16.mxu0 0
  %3853 = vmatpush1.bf16.msra.mxu0 0
  %3854 = vmatprep.subr.bf16.mxu0 0
  %3855 = vmatpush1.bf16.msra.mxu0 0
  %3856 = vmatprep.subr.bf16.mxu0 0
  %3857 = vmatpush1.bf16.msra.mxu0 0
  %3858 = vmatprep.subr.bf16.mxu0 0
  %3859 = vmatpush1.bf16.msra.mxu0 0
  %3860 = vmatprep.subr.bf16.mxu0 0
  %3861 = vmatpush1.bf16.msra.mxu0 0
  %3862 = vmatprep.subr.bf16.mxu0 0
  %3863 = vmatpush1.bf16.msra.mxu0 0
  %3864 = vmatprep.subr.bf16.mxu0 0
  %3865 = vmatpush1.bf16.msra.mxu0 0
  %3866 = vmatprep.subr.bf16.mxu0 0
  %3867 = vmatpush1.bf16.msra.mxu0 0
  %3868 = vmatprep.subr.bf16.mxu0 0
  %3869 = vmatpush1.bf16.msra.mxu0 0
  %3870 = vmatprep.mubr.bf16.mxu0 0
  %3871 = vmatmul.mubr.bf16.gmra.mrb[0].mxu0 %v3795
  %v3872 = vpop.f32.mrb[0].mxu0
  %v3873 = vadd.f32 0.0, %v3872
  %v3874 = vpop.f32.mrb[0].mxu0
  %v3875 = vpop.f32.mrb[0].mxu0
  %v3876 = vpop.f32.mrb[0].mxu0
  %3877 = vdwg.mxu0
  %v3878 = vadd.f32 %v3764, %v3832
  %v3879 = vadd.f32 %v3765, %v3834
  %v3880 = vadd.f32 %v3766, %v3873
  %v3881 = vtanh.pop %v3878
  %v3882 = vtanh.pop %v3879
  %v3883 = vtanh.pop %v3880
  %v3884 = vmul.f32 %v3881, 0.5
  %v3885 = vadd.f32 %v3884, 0.5
  %v3886 = vmul.f32 %v3882, 0.5
  %v3887 = vadd.f32 %v3886, 0.5
  %v3888 = vmul.f32 %v3883, 0.5
  %v3889 = vadd.f32 %v3888, 0.5
  %v3890 = vmul.f32 %v3885, %v3736
  %v3891 = vmul.f32 %v3887, %v3737
  %3893 = vrot.lane.b32.xlu0 %v3883, 96
  %v3894 = vpop.permute.xlu0 %3893
  %v3896 = vmul.f32 %v3885, %v3894
  %3898 = vrot.lane.b32.xlu0 %v3896, 96
  %v3899 = vpop.permute.xlu0 %3898
  %v3901 = vadd.f32 %v3890, %v3899
  %v3902 = vadd.f32 %v3891, %v3899
  %v3903 = vtanh.pop %v3901
  %v3904 = vtanh.pop %v3902
  %3907 = vrot.lane.b32.xlu0 %v3903, 96
  %v3908 = vpop.permute.xlu0 %3907
  %3909 = vrot.lane.b32.xlu0 %v3904, 96
  %v3910 = vpop.permute.xlu0 %3909
  %v3911 = vsel %vm2638, %v3908, %v3910
  %v3914 = vmul.f32 %v3887, %v3911
  %v3915 = vmul.f32 %v3889, %v3910
  %3918 = vrot.lane.b32.xlu0 %v3914, 64
  %v3919 = vpop.permute.xlu0 %3918
  %3920 = vrot.lane.b32.xlu0 %v3915, 64
  %v3921 = vpop.permute.xlu0 %3920
  %v3922 = vsel %vm1437, %v3919, %v3921
  %v3924 = vsel %vm2638, %v3922, 0.0
  %3925 = vst [vmem:[%s2389] sm:$0xff] %v3924
  %v3926 = vld [vmem:[%s9] sm:$0xf]
  %s3927 = smul.u32 %s2392, 4
  %s3928 = sshll.u32 %s3927, 4
  %3929 = dma.done %s463, %s3928
  %s3930 = sshll.u32 %s3927, 4
  %3931 = dma.done %s768, %s3930
  %v3932 = vld [vmem:[#allocation9] sm:$0xff]
  %v3933 = vld [vmem:[#allocation9 + $0x8] sm:$0xff]
  %v3934 = vld [vmem:[#allocation9 + $0x10] sm:$0xff]
  %v3935 = vld [vmem:[#allocation9 + $0x18] sm:$0xff]
  %v3936 = vld [vmem:[#allocation9 + $0x20] sm:$0xff]
  %v3937 = vld [vmem:[#allocation9 + $0x28] sm:$0xff]
  %v3938 = vld [vmem:[#allocation9 + $0x30] sm:$0xff]
  %v3939 = vld [vmem:[#allocation9 + $0x38] sm:$0xff]
  %v3940 = vld [vmem:[#allocation4] sm:$0xff]
  %v3941 = vld [vmem:[#allocation4 + $0x8] sm:$0xff]
  %v3942 = vld [vmem:[#allocation4 + $0x10] sm:$0xff]
  %v3943 = vld [vmem:[#allocation4 + $0x18] sm:$0xff]
  %v3944 = vld [vmem:[#allocation4 + $0x20] sm:$0xff]
  %v3945 = vld [vmem:[#allocation4 + $0x28] sm:$0xff]
  %v3946 = vld [vmem:[#allocation4 + $0x30] sm:$0xff]
  %v3947 = vld [vmem:[#allocation4 + $0x38] sm:$0xff]
  %v3948 = vld [vmem:[#allocation4 + $0x40] sm:$0xff]
  %v3949 = vld [vmem:[#allocation4 + $0x48] sm:$0xff]
  %v3950 = vld [vmem:[#allocation4 + $0x50] sm:$0xff]
  %v3951 = vld [vmem:[#allocation4 + $0x58] sm:$0xff]
  %v3952 = vld [vmem:[#allocation4 + $0x60] sm:$0xff]
  %v3953 = vld [vmem:[#allocation4 + $0x68] sm:$0xff]
  %v3954 = vld [vmem:[#allocation4 + $0x70] sm:$0xff]
  %v3955 = vld [vmem:[#allocation4 + $0x78] sm:$0xff]
  %v3956 = vld [vmem:[#allocation4 + $0x80] sm:$0xff]
  %v3957 = vld [vmem:[#allocation4 + $0x88] sm:$0xff]
  %v3958 = vld [vmem:[#allocation4 + $0x90] sm:$0xff]
  %v3959 = vld [vmem:[#allocation4 + $0x98] sm:$0xff]
  %v3960 = vld [vmem:[#allocation4 + $0xa0] sm:$0xff]
  %v3961 = vld [vmem:[#allocation4 + $0xa8] sm:$0xff]
  %v3962 = vld [vmem:[#allocation4 + $0xb0] sm:$0xff]
  %v3963 = vld [vmem:[#allocation4 + $0xb8] sm:$0xff]
  %v3964 = vld [vmem:[#allocation4 + $0xc0] sm:$0xff]
  %v3965 = vld [vmem:[#allocation4 + $0xc8] sm:$0xff]
  %v3966 = vld [vmem:[#allocation4 + $0xd0] sm:$0xff]
  %v3967 = vld [vmem:[#allocation4 + $0xd8] sm:$0xff]
  %v3968 = vld [vmem:[#allocation4 + $0xe0] sm:$0xff]
  %v3969 = vld [vmem:[#allocation4 + $0xe8] sm:$0xff]
  %v3970 = vld [vmem:[#allocation4 + $0xf0] sm:$0xff]
  %v3971 = vld [vmem:[#allocation4 + $0xf8] sm:$0xff]
  %v3972 = vpack.c.bf16 %v3933, %v3932
  %v3973 = vpack.c.bf16 %v3935, %v3934
  %v3974 = vpack.c.bf16 %v3937, %v3936
  %v3975 = vpack.c.bf16 %v3939, %v3938
  %v3977 = vlaneseq
  %v3978 = vshrl.u32 %v3977, 7
  %v3979 = vsub.s32 0, %v3978
  %v3980 = vrot.slane %v3926, %v3979
  %v3981 = vlaneseq
  %v3982 = vshrl.u32 %v3981, 7
  %v3983 = vsub.s32 1, %v3982
  %v3984 = vrot.slane %v3926, %v3983
  %v3985 = vlaneseq
  %v3986 = vshrl.u32 %v3985, 7
  %v3987 = vsub.s32 2, %v3986
  %v3988 = vrot.slane %v3926, %v3987
  %v3989 = vlaneseq
  %v3990 = vshrl.u32 %v3989, 7
  %v3991 = vsub.s32 3, %v3990
  %v3992 = vrot.slane %v3926, %v3991
  %3997 = vmatprep.subr.bf16.mxu0 %v3941
  %3998 = vmatpush1.bf16.msra.mxu0 %v3940
  %3999 = vmatprep.subr.bf16.mxu0 %v3945
  %4000 = vmatpush1.bf16.msra.mxu0 %v3944
  %4001 = vmatprep.subr.bf16.mxu0 %v3949
  %4002 = vmatpush1.bf16.msra.mxu0 %v3948
  %4003 = vmatprep.subr.bf16.mxu0 %v3953
  %4004 = vmatpush1.bf16.msra.mxu0 %v3952
  %4005 = vmatprep.subr.bf16.mxu0 %v3957
  %4006 = vmatpush1.bf16.msra.mxu0 %v3956
  %4007 = vmatprep.subr.bf16.mxu0 %v3961
  %4008 = vmatpush1.bf16.msra.mxu0 %v3960
  %4009 = vmatprep.subr.bf16.mxu0 %v3965
  %4010 = vmatpush1.bf16.msra.mxu0 %v3964
  %4011 = vmatprep.subr.bf16.mxu0 %v3969
  %4012 = vmatpush1.bf16.msra.mxu0 %v3968
  %4013 = vmatprep.subr.bf16.mxu0 0
  %4014 = vmatpush1.bf16.msra.mxu0 0
  %4015 = vmatprep.subr.bf16.mxu0 0
  %4016 = vmatpush1.bf16.msra.mxu0 0
  %4017 = vmatprep.subr.bf16.mxu0 0
  %4018 = vmatpush1.bf16.msra.mxu0 0
  %4019 = vmatprep.subr.bf16.mxu0 0
  %4020 = vmatpush1.bf16.msra.mxu0 0
  %4021 = vmatprep.subr.bf16.mxu0 0
  %4022 = vmatpush1.bf16.msra.mxu0 0
  %4023 = vmatprep.subr.bf16.mxu0 0
  %4024 = vmatpush1.bf16.msra.mxu0 0
  %4025 = vmatprep.subr.bf16.mxu0 0
  %4026 = vmatpush1.bf16.msra.mxu0 0
  %4027 = vmatprep.subr.bf16.mxu0 0
  %4028 = vmatpush1.bf16.msra.mxu0 0
  %4029 = vmatprep.mubr.bf16.mxu0 0
  %4030 = vmatmul.mubr.bf16.gmra.mrb[0].mxu0 %v3972
  %v4031 = vpop.f32.mrb[0].mxu0
  %v4032 = vadd.f32 %v3980, %v4031
  %v4033 = vpop.f32.mrb[0].mxu0
  %v4034 = vadd.f32 %v3984, %v4033
  %v4035 = vpop.f32.mrb[0].mxu0
  %v4036 = vadd.f32 %v3980, %v4035
  %v4037 = vpop.f32.mrb[0].mxu0
  %v4038 = vadd.f32 %v3984, %v4037
  %4039 = vmatprep.mubr.bf16.mxu0 0
  %4040 = vmatmul.mubr.bf16.gmra.mrb[0].mxu0 %v3973
  %v4041 = vpop.f32.mrb[0].mxu0
  %v4042 = vadd.f32 %v3980, %v4041
  %v4043 = vpop.f32.mrb[0].mxu0
  %v4044 = vadd.f32 %v3984, %v4043
  %v4045 = vpop.f32.mrb[0].mxu0
  %v4046 = vadd.f32 %v3980, %v4045
  %v4047 = vpop.f32.mrb[0].mxu0
  %v4048 = vadd.f32 %v3984, %v4047
  %4049 = vmatprep.mubr.bf16.mxu0 0
  %4050 = vmatmul.mubr.bf16.gmra.mrb[0].mxu0 %v3974
  %v4051 = vpop.f32.mrb[0].mxu0
  %v4052 = vadd.f32 %v3980, %v4051
  %v4053 = vpop.f32.mrb[0].mxu0
  %v4054 = vadd.f32 %v3984, %v4053
  %v4055 = vpop.f32.mrb[0].mxu0
  %v4056 = vadd.f32 %v3980, %v4055
  %v4057 = vpop.f32.mrb[0].mxu0
  %v4058 = vadd.f32 %v3984, %v4057
  %4059 = vmatprep.mubr.bf16.mxu0 0
  %4060 = vmatmul.mubr.bf16.gmra.mrb[0].mxu0 %v3975
  %v4061 = vpop.f32.mrb[0].mxu0
  %v4062 = vadd.f32 %v3980, %v4061
  %v4063 = vpop.f32.mrb[0].mxu0
  %v4064 = vadd.f32 %v3984, %v4063
  %v4065 = vpop.f32.mrb[0].mxu0
  %v4066 = vadd.f32 %v3980, %v4065
  %v4067 = vpop.f32.mrb[0].mxu0
  %v4068 = vadd.f32 %v3984, %v4067
  %4069 = vdwg.mxu0
  %4070 = vmatprep.subr.bf16.mxu0 %v3943
  %4071 = vmatpush1.bf16.msra.mxu0 %v3942
  %4072 = vmatprep.subr.bf16.mxu0 %v3947
  %4073 = vmatpush1.bf16.msra.mxu0 %v3946
  %4074 = vmatprep.subr.bf16.mxu0 %v3951
  %4075 = vmatpush1.bf16.msra.mxu0 %v3950
  %4076 = vmatprep.subr.bf16.mxu0 %v3955
  %4077 = vmatpush1.bf16.msra.mxu0 %v3954
  %4078 = vmatprep.subr.bf16.mxu0 %v3959
  %4079 = vmatpush1.bf16.msra.mxu0 %v3958
  %4080 = vmatprep.subr.bf16.mxu0 %v3963
  %4081 = vmatpush1.bf16.msra.mxu0 %v3962
  %4082 = vmatprep.subr.bf16.mxu0 %v3967
  %4083 = vmatpush1.bf16.msra.mxu0 %v3966
  %4084 = vmatprep.subr.bf16.mxu0 %v3971
  %4085 = vmatpush1.bf16.msra.mxu0 %v3970
  %4086 = vmatprep.subr.bf16.mxu0 0
  %4087 = vmatpush1.bf16.msra.mxu0 0
  %4088 = vmatprep.subr.bf16.mxu0 0
  %4089 = vmatpush1.bf16.msra.mxu0 0
  %4090 = vmatprep.subr.bf16.mxu0 0
  %4091 = vmatpush1.bf16.msra.mxu0 0
  %4092 = vmatprep.subr.bf16.mxu0 0
  %4093 = vmatpush1.bf16.msra.mxu0 0
  %4094 = vmatprep.subr.bf16.mxu0 0
  %4095 = vmatpush1.bf16.msra.mxu0 0
  %4096 = vmatprep.subr.bf16.mxu0 0
  %4097 = vmatpush1.bf16.msra.mxu0 0
  %4098 = vmatprep.subr.bf16.mxu0 0
  %4099 = vmatpush1.bf16.msra.mxu0 0
  %4100 = vmatprep.subr.bf16.mxu0 0
  %4101 = vmatpush1.bf16.msra.mxu0 0
  %4102 = vmatprep.mubr.bf16.mxu0 0
  %4103 = vmatmul.mubr.bf16.gmra.mrb[0].mxu0 %v3972
  %v4104 = vpop.f32.mrb[0].mxu0
  %v4105 = vadd.f32 %v3988, %v4104
  %v4106 = vpop.f32.mrb[0].mxu0
  %v4107 = vadd.f32 %v3992, %v4106
  %v4108 = vpop.f32.mrb[0].mxu0
  %v4109 = vadd.f32 %v3988, %v4108
  %v4110 = vpop.f32.mrb[0].mxu0
  %v4111 = vadd.f32 %v3992, %v4110
  %4112 = vmatprep.mubr.bf16.mxu0 0
  %4113 = vmatmul.mubr.bf16.gmra.mrb[0].mxu0 %v3973
  %v4114 = vpop.f32.mrb[0].mxu0
  %v4115 = vadd.f32 %v3988, %v4114
  %v4116 = vpop.f32.mrb[0].mxu0
  %v4117 = vadd.f32 %v3992, %v4116
  %v4118 = vpop.f32.mrb[0].mxu0
  %v4119 = vadd.f32 %v3988, %v4118
  %v4120 = vpop.f32.mrb[0].mxu0
  %v4121 = vadd.f32 %v3992, %v4120
  %4122 = vmatprep.mubr.bf16.mxu0 0
  %4123 = vmatmul.mubr.bf16.gmra.mrb[0].mxu0 %v3974
  %v4124 = vpop.f32.mrb[0].mxu0
  %v4125 = vadd.f32 %v3988, %v4124
  %v4126 = vpop.f32.mrb[0].mxu0
  %v4127 = vadd.f32 %v3992, %v4126
  %v4128 = vpop.f32.mrb[0].mxu0
  %v4129 = vadd.f32 %v3988, %v4128
  %v4130 = vpop.f32.mrb[0].mxu0
  %v4131 = vadd.f32 %v3992, %v4130
  %4132 = vmatprep.mubr.bf16.mxu0 0
  %4133 = vmatmul.mubr.bf16.gmra.mrb[0].mxu0 %v3975
  %v4134 = vpop.f32.mrb[0].mxu0
  %v4135 = vadd.f32 %v3988, %v4134
  %v4136 = vpop.f32.mrb[0].mxu0
  %v4137 = vadd.f32 %v3992, %v4136
  %v4138 = vpop.f32.mrb[0].mxu0
  %v4139 = vadd.f32 %v3988, %v4138
  %v4140 = vpop.f32.mrb[0].mxu0
  %v4141 = vadd.f32 %v3992, %v4140
  %4142 = vdwg.mxu0
  %4143 = vst [vmem:[#allocation8] sm:$0xff] %v4032
  %4144 = vst [vmem:[#allocation8 + $0x8] sm:$0xff] %v4034
  %4145 = vst [vmem:[#allocation8 + $0x10] sm:$0xff] %v4105
  %4146 = vst [vmem:[#allocation8 + $0x18] sm:$0xff] %v4107
  %4147 = vst [vmem:[#allocation8 + $0x20] sm:$0xff] %v4036
  %4148 = vst [vmem:[#allocation8 + $0x28] sm:$0xff] %v4038
  %4149 = vst [vmem:[#allocation8 + $0x30] sm:$0xff] %v4109
  %4150 = vst [vmem:[#allocation8 + $0x38] sm:$0xff] %v4111
  %4151 = vst [vmem:[#allocation8 + $0x40] sm:$0xff] %v4042
  %4152 = vst [vmem:[#allocation8 + $0x48] sm:$0xff] %v4044
  %4153 = vst [vmem:[#allocation8 + $0x50] sm:$0xff] %v4115
  %4154 = vst [vmem:[#allocation8 + $0x58] sm:$0xff] %v4117
  %4155 = vst [vmem:[#allocation8 + $0x60] sm:$0xff] %v4046
  %4156 = vst [vmem:[#allocation8 + $0x68] sm:$0xff] %v4048
  %4157 = vst [vmem:[#allocation8 + $0x70] sm:$0xff] %v4119
  %4158 = vst [vmem:[#allocation8 + $0x78] sm:$0xff] %v4121
  %4159 = vst [vmem:[#allocation8 + $0x80] sm:$0xff] %v4052
  %4160 = vst [vmem:[#allocation8 + $0x88] sm:$0xff] %v4054
  %4161 = vst [vmem:[#allocation8 + $0x90] sm:$0xff] %v4125
  %4162 = vst [vmem:[#allocation8 + $0x98] sm:$0xff] %v4127
  %4163 = vst [vmem:[#allocation8 + $0xa0] sm:$0xff] %v4056
  %4164 = vst [vmem:[#allocation8 + $0xa8] sm:$0xff] %v4058
  %4165 = vst [vmem:[#allocation8 + $0xb0] sm:$0xff] %v4129
  %4166 = vst [vmem:[#allocation8 + $0xb8] sm:$0xff] %v4131
  %4167 = vst [vmem:[#allocation8 + $0xc0] sm:$0xff] %v4062
  %4168 = vst [vmem:[#allocation8 + $0xc8] sm:$0xff] %v4064
  %4169 = vst [vmem:[#allocation8 + $0xd0] sm:$0xff] %v4135
  %4170 = vst [vmem:[#allocation8 + $0xd8] sm:$0xff] %v4137
  %4171 = vst [vmem:[#allocation8 + $0xe0] sm:$0xff] %v4066
  %4172 = vst [vmem:[#allocation8 + $0xe8] sm:$0xff] %v4068
  %4173 = vst [vmem:[#allocation8 + $0xf0] sm:$0xff] %v4139
  %4174 = vst [vmem:[#allocation8 + $0xf8] sm:$0xff] %v4141
  %s4175 = smul.u32 0, 4
  %s4176 = smul.addr %s4175, 8
  %s4177 = scalar_lea.vmem [#allocation8], %s4176
  %v4178 = vld [vmem:[%s4177] sm:$0xff]
  %v4179 = vld [vmem:[%s4177 + $0x8] sm:$0xff]
  %v4180 = vld [vmem:[%s4177 + $0x10] sm:$0xff]
  %v4181 = vld [vmem:[%s4177 + $0x18] sm:$0xff]
  %v4182 = vld [vmem:[#allocation5] sm:$0xff]
  %v4183 = vld [vmem:[#allocation5 + $0x8] sm:$0xff]
  %v4184 = vld [vmem:[#allocation5 + $0x10] sm:$0xff]
  %v4185 = vld [vmem:[#allocation5 + $0x18] sm:$0xff]
  %v4186 = vld [vmem:[#allocation5 + $0x20] sm:$0xff]
  %v4187 = vld [vmem:[#allocation5 + $0x28] sm:$0xff]
  %v4188 = vld [vmem:[#allocation5 + $0x30] sm:$0xff]
  %v4189 = vld [vmem:[#allocation5 + $0x38] sm:$0xff]
  %v4190 = vld [vmem:[#allocation5 + $0x40] sm:$0xff]
  %v4191 = vld [vmem:[#allocation5 + $0x48] sm:$0xff]
  %v4192 = vld [vmem:[#allocation5 + $0x50] sm:$0xff]
  %v4193 = vld [vmem:[#allocation5 + $0x58] sm:$0xff]
  %v4194 = vld [vmem:[#allocation5 + $0x60] sm:$0xff]
  %v4195 = vld [vmem:[#allocation5 + $0x68] sm:$0xff]
  %v4196 = vld [vmem:[#allocation5 + $0x70] sm:$0xff]
  %v4197 = vld [vmem:[#allocation5 + $0x78] sm:$0xff]
  %v4198 = vld [vmem:[#allocation5 + $0x80] sm:$0xff]
  %v4199 = vld [vmem:[#allocation5 + $0x88] sm:$0xff]
  %v4200 = vld [vmem:[#allocation5 + $0x90] sm:$0xff]
  %v4201 = vld [vmem:[#allocation5 + $0x98] sm:$0xff]
  %v4202 = vld [vmem:[#allocation5 + $0xa0] sm:$0xff]
  %v4203 = vld [vmem:[#allocation5 + $0xa8] sm:$0xff]
  %v4204 = vld [vmem:[#allocation5 + $0xb0] sm:$0xff]
  %v4205 = vld [vmem:[#allocation5 + $0xb8] sm:$0xff]
  %v4206 = vld [vmem:[#allocation5 + $0xc0] sm:$0xff]
  %v4207 = vld [vmem:[#allocation5 + $0xc8] sm:$0xff]
  %v4208 = vld [vmem:[#allocation5 + $0xd0] sm:$0xff]
  %v4209 = vld [vmem:[#allocation5 + $0xd8] sm:$0xff]
  %v4210 = vld [vmem:[#allocation5 + $0xe0] sm:$0xff]
  %v4211 = vld [vmem:[#allocation5 + $0xe8] sm:$0xff]
  %v4212 = vld [vmem:[#allocation5 + $0xf0] sm:$0xff]
  %v4213 = vld [vmem:[#allocation5 + $0xf8] sm:$0xff]
  %4214 = vmatprep.subr.bf16.mxu0 %v4183
  %4215 = vmatpush1.bf16.msra.mxu0 %v4182
  %4216 = vmatprep.subr.bf16.mxu0 %v4187
  %4217 = vmatpush1.bf16.msra.mxu0 %v4186
  %4218 = vmatprep.subr.bf16.mxu0 %v4191
  %4219 = vmatpush1.bf16.msra.mxu0 %v4190
  %4220 = vmatprep.subr.bf16.mxu0 %v4195
  %4221 = vmatpush1.bf16.msra.mxu0 %v4194
  %4222 = vmatprep.subr.bf16.mxu0 %v4199
  %4223 = vmatpush1.bf16.msra.mxu0 %v4198
  %4224 = vmatprep.subr.bf16.mxu0 %v4203
  %4225 = vmatpush1.bf16.msra.mxu0 %v4202
  %4226 = vmatprep.subr.bf16.mxu0 %v4207
  %4227 = vmatpush1.bf16.msra.mxu0 %v4206
  %4228 = vmatprep.subr.bf16.mxu0 %v4211
  %4229 = vmatpush1.bf16.msra.mxu0 %v4210
  %4230 = vmatprep.subr.bf16.mxu0 0
  %4231 = vmatpush1.bf16.msra.mxu0 0
  %4232 = vmatprep.subr.bf16.mxu0 0
  %4233 = vmatpush1.bf16.msra.mxu0 0
  %4234 = vmatprep.subr.bf16.mxu0 0
  %4235 = vmatpush1.bf16.msra.mxu0 0
  %4236 = vmatprep.subr.bf16.mxu0 0
  %4237 = vmatpush1.bf16.msra.mxu0 0
  %4238 = vmatprep.subr.bf16.mxu0 0
  %4239 = vmatpush1.bf16.msra.mxu0 0
  %4240 = vmatprep.subr.bf16.mxu0 0
  %4241 = vmatpush1.bf16.msra.mxu0 0
  %4242 = vmatprep.subr.bf16.mxu0 0
  %4243 = vmatpush1.bf16.msra.mxu0 0
  %4244 = vmatprep.subr.bf16.mxu0 0
  %4245 = vmatpush1.bf16.msra.mxu0 0
  %4246 = vmatprep.mubr.bf16.mxu0 0
  %4247 = vmatmul.mubr.bf16.gmra.mrb[0].mxu0 0
  %v4248 = vpop.f32.mrb[0].mxu0
  %v4249 = vadd.f32 0.0, %v4248
  %v4250 = vpop.f32.mrb[0].mxu0
  %v4251 = vadd.f32 0.0, %v4250
  %v4252 = vpop.f32.mrb[0].mxu0
  %v4253 = vpop.f32.mrb[0].mxu0
  %4254 = vdwg.mxu0
  %4255 = vmatprep.subr.bf16.mxu0 %v4185
  %4256 = vmatpush1.bf16.msra.mxu0 %v4184
  %4257 = vmatprep.subr.bf16.mxu0 %v4189
  %4258 = vmatpush1.bf16.msra.mxu0 %v4188
  %4259 = vmatprep.subr.bf16.mxu0 %v4193
  %4260 = vmatpush1.bf16.msra.mxu0 %v4192
  %4261 = vmatprep.subr.bf16.mxu0 %v4197
  %4262 = vmatpush1.bf16.msra.mxu0 %v4196
  %4263 = vmatprep.subr.bf16.mxu0 %v4201
  %4264 = vmatpush1.bf16.msra.mxu0 %v4200
  %4265 = vmatprep.subr.bf16.mxu0 %v4205
  %4266 = vmatpush1.bf16.msra.mxu0 %v4204
  %4267 = vmatprep.subr.bf16.mxu0 %v4209
  %4268 = vmatpush1.bf16.msra.mxu0 %v4208
  %4269 = vmatprep.subr.bf16.mxu0 %v4213
  %4270 = vmatpush1.bf16.msra.mxu0 %v4212
  %4271 = vmatprep.subr.bf16.mxu0 0
  %4272 = vmatpush1.bf16.msra.mxu0 0
  %4273 = vmatprep.subr.bf16.mxu0 0
  %4274 = vmatpush1.bf16.msra.mxu0 0
  %4275 = vmatprep.subr.bf16.mxu0 0
  %4276 = vmatpush1.bf16.msra.mxu0 0
  %4277 = vmatprep.subr.bf16.mxu0 0
  %4278 = vmatpush1.bf16.msra.mxu0 0
  %4279 = vmatprep.subr.bf16.mxu0 0
  %4280 = vmatpush1.bf16.msra.mxu0 0
  %4281 = vmatprep.subr.bf16.mxu0 0
  %4282 = vmatpush1.bf16.msra.mxu0 0
  %4283 = vmatprep.subr.bf16.mxu0 0
  %4284 = vmatpush1.bf16.msra.mxu0 0
  %4285 = vmatprep.subr.bf16.mxu0 0
  %4286 = vmatpush1.bf16.msra.mxu0 0
  %4287 = vmatprep.mubr.bf16.mxu0 0
  %4288 = vmatmul.mubr.bf16.gmra.mrb[0].mxu0 0
  %v4289 = vpop.f32.mrb[0].mxu0
  %v4290 = vadd.f32 0.0, %v4289
  %v4291 = vpop.f32.mrb[0].mxu0
  %v4292 = vadd.f32 0.0, %v4291
  %v4293 = vpop.f32.mrb[0].mxu0
  %v4294 = vpop.f32.mrb[0].mxu0
  %4295 = vdwg.mxu0
  %v4296 = vadd.f32 %v4178, %v4249
  %v4297 = vadd.f32 %v4179, %v4251
  %v4298 = vadd.f32 %v4180, %v4290
  %v4299 = vadd.f32 %v4181, %v4292
  %v4300 = vtanh.pop %v4296
  %v4301 = vtanh.pop %v4297
  %v4302 = vtanh.pop %v4298
  %v4303 = vtanh.pop %v4299
  %v4304 = vmul.f32 %v4300, 0.5
  %v4305 = vadd.f32 %v4304, 0.5
  %v4306 = vmul.f32 %v4301, 0.5
  %v4307 = vadd.f32 %v4306, 0.5
  %v4308 = vmul.f32 %v4302, 0.5
  %v4309 = vadd.f32 %v4308, 0.5
  %v4310 = vmul.f32 %v4307, 0.0
  %v4311 = vmul.f32 %v4305, %v4303
  %v4312 = vadd.f32 %v4310, %v4311
  %v4313 = vtanh.pop %v4312
  %v4314 = vmul.f32 %v4309, %v4313
  %4315 = vst [vmem:[%s10] sm:$0xff] %v4314
  %s4316 = smul.u32 1, 4
  %s4317 = smul.addr %s4316, 8
  %s4318 = scalar_lea.vmem [#allocation8], %s4317
  %v4319 = vld [vmem:[%s4318] sm:$0xff]
  %v4320 = vld [vmem:[%s4318 + $0x8] sm:$0xff]
  %v4321 = vld [vmem:[%s4318 + $0x10] sm:$0xff]
  %v4322 = vld [vmem:[%s4318 + $0x18] sm:$0xff]
  %v4323 = vpack.c.bf16 %v4314, %v4314
  %v4324 = vld [vmem:[#allocation5] sm:$0xff]
  %v4325 = vld [vmem:[#allocation5 + $0x8] sm:$0xff]
  %v4326 = vld [vmem:[#allocation5 + $0x10] sm:$0xff]
  %v4327 = vld [vmem:[#allocation5 + $0x18] sm:$0xff]
  %v4328 = vld [vmem:[#allocation5 + $0x20] sm:$0xff]
  %v4329 = vld [vmem:[#allocation5 + $0x28] sm:$0xff]
  %v4330 = vld [vmem:[#allocation5 + $0x30] sm:$0xff]
  %v4331 = vld [vmem:[#allocation5 + $0x38] sm:$0xff]
  %v4332 = vld [vmem:[#allocation5 + $0x40] sm:$0xff]
  %v4333 = vld [vmem:[#allocation5 + $0x48] sm:$0xff]
  %v4334 = vld [vmem:[#allocation5 + $0x50] sm:$0xff]
  %v4335 = vld [vmem:[#allocation5 + $0x58] sm:$0xff]
  %v4336 = vld [vmem:[#allocation5 + $0x60] sm:$0xff]
  %v4337 = vld [vmem:[#allocation5 + $0x68] sm:$0xff]
  %v4338 = vld [vmem:[#allocation5 + $0x70] sm:$0xff]
  %v4339 = vld [vmem:[#allocation5 + $0x78] sm:$0xff]
  %v4340 = vld [vmem:[#allocation5 + $0x80] sm:$0xff]
  %v4341 = vld [vmem:[#allocation5 + $0x88] sm:$0xff]
  %v4342 = vld [vmem:[#allocation5 + $0x90] sm:$0xff]
  %v4343 = vld [vmem:[#allocation5 + $0x98] sm:$0xff]
  %v4344 = vld [vmem:[#allocation5 + $0xa0] sm:$0xff]
  %v4345 = vld [vmem:[#allocation5 + $0xa8] sm:$0xff]
  %v4346 = vld [vmem:[#allocation5 + $0xb0] sm:$0xff]
  %v4347 = vld [vmem:[#allocation5 + $0xb8] sm:$0xff]
  %v4348 = vld [vmem:[#allocation5 + $0xc0] sm:$0xff]
  %v4349 = vld [vmem:[#allocation5 + $0xc8] sm:$0xff]
  %v4350 = vld [vmem:[#allocation5 + $0xd0] sm:$0xff]
  %v4351 = vld [vmem:[#allocation5 + $0xd8] sm:$0xff]
  %v4352 = vld [vmem:[#allocation5 + $0xe0] sm:$0xff]
  %v4353 = vld [vmem:[#allocation5 + $0xe8] sm:$0xff]
  %v4354 = vld [vmem:[#allocation5 + $0xf0] sm:$0xff]
  %v4355 = vld [vmem:[#allocation5 + $0xf8] sm:$0xff]
  %4356 = vmatprep.subr.bf16.mxu0 %v4325
  %4357 = vmatpush1.bf16.msra.mxu0 %v4324
  %4358 = vmatprep.subr.bf16.mxu0 %v4329
  %4359 = vmatpush1.bf16.msra.mxu0 %v4328
  %4360 = vmatprep.subr.bf16.mxu0 %v4333
  %4361 = vmatpush1.bf16.msra.mxu0 %v4332
  %4362 = vmatprep.subr.bf16.mxu0 %v4337
  %4363 = vmatpush1.bf16.msra.mxu0 %v4336
  %4364 = vmatprep.subr.bf16.mxu0 %v4341
  %4365 = vmatpush1.bf16.msra.mxu0 %v4340
  %4366 = vmatprep.subr.bf16.mxu0 %v4345
  %4367 = vmatpush1.bf16.msra.mxu0 %v4344
  %4368 = vmatprep.subr.bf16.mxu0 %v4349
  %4369 = vmatpush1.bf16.msra.mxu0 %v4348
  %4370 = vmatprep.subr.bf16.mxu0 %v4353
  %4371 = vmatpush1.bf16.msra.mxu0 %v4352
  %4372 = vmatprep.subr.bf16.mxu0 0
  %4373 = vmatpush1.bf16.msra.mxu0 0
  %4374 = vmatprep.subr.bf16.mxu0 0
  %4375 = vmatpush1.bf16.msra.mxu0 0
  %4376 = vmatprep.subr.bf16.mxu0 0
  %4377 = vmatpush1.bf16.msra.mxu0 0
  %4378 = vmatprep.subr.bf16.mxu0 0
  %4379 = vmatpush1.bf16.msra.mxu0 0
  %4380 = vmatprep.subr.bf16.mxu0 0
  %4381 = vmatpush1.bf16.msra.mxu0 0
  %4382 = vmatprep.subr.bf16.mxu0 0
  %4383 = vmatpush1.bf16.msra.mxu0 0
  %4384 = vmatprep.subr.bf16.mxu0 0
  %4385 = vmatpush1.bf16.msra.mxu0 0
  %4386 = vmatprep.subr.bf16.mxu0 0
  %4387 = vmatpush1.bf16.msra.mxu0 0
  %4388 = vmatprep.mubr.bf16.mxu0 0
  %4389 = vmatmul.mubr.bf16.gmra.mrb[0].mxu0 %v4323
  %v4390 = vpop.f32.mrb[0].mxu0
  %v4391 = vadd.f32 0.0, %v4390
  %v4392 = vpop.f32.mrb[0].mxu0
  %v4393 = vadd.f32 0.0, %v4392
  %v4394 = vpop.f32.mrb[0].mxu0
  %v4395 = vpop.f32.mrb[0].mxu0
  %4396 = vdwg.mxu0
  %4397 = vmatprep.subr.bf16.mxu0 %v4327
  %4398 = vmatpush1.bf16.msra.mxu0 %v4326
  %4399 = vmatprep.subr.bf16.mxu0 %v4331
  %4400 = vmatpush1.bf16.msra.mxu0 %v4330
  %4401 = vmatprep.subr.bf16.mxu0 %v4335
  %4402 = vmatpush1.bf16.msra.mxu0 %v4334
  %4403 = vmatprep.subr.bf16.mxu0 %v4339
  %4404 = vmatpush1.bf16.msra.mxu0 %v4338
  %4405 = vmatprep.subr.bf16.mxu0 %v4343
  %4406 = vmatpush1.bf16.msra.mxu0 %v4342
  %4407 = vmatprep.subr.bf16.mxu0 %v4347
  %4408 = vmatpush1.bf16.msra.mxu0 %v4346
  %4409 = vmatprep.subr.bf16.mxu0 %v4351
  %4410 = vmatpush1.bf16.msra.mxu0 %v4350
  %4411 = vmatprep.subr.bf16.mxu0 %v4355
  %4412 = vmatpush1.bf16.msra.mxu0 %v4354
  %4413 = vmatprep.subr.bf16.mxu0 0
  %4414 = vmatpush1.bf16.msra.mxu0 0
  %4415 = vmatprep.subr.bf16.mxu0 0
  %4416 = vmatpush1.bf16.msra.mxu0 0
  %4417 = vmatprep.subr.bf16.mxu0 0
  %4418 = vmatpush1.bf16.msra.mxu0 0
  %4419 = vmatprep.subr.bf16.mxu0 0
  %4420 = vmatpush1.bf16.msra.mxu0 0
  %4421 = vmatprep.subr.bf16.mxu0 0
  %4422 = vmatpush1.bf16.msra.mxu0 0
  %4423 = vmatprep.subr.bf16.mxu0 0
  %4424 = vmatpush1.bf16.msra.mxu0 0
  %4425 = vmatprep.subr.bf16.mxu0 0
  %4426 = vmatpush1.bf16.msra.mxu0 0
  %4427 = vmatprep.subr.bf16.mxu0 0
  %4428 = vmatpush1.bf16.msra.mxu0 0
  %4429 = vmatprep.mubr.bf16.mxu0 0
  %4430 = vmatmul.mubr.bf16.gmra.mrb[0].mxu0 %v4323
  %v4431 = vpop.f32.mrb[0].mxu0
  %v4432 = vadd.f32 0.0, %v4431
  %v4433 = vpop.f32.mrb[0].mxu0
  %v4434 = vadd.f32 0.0, %v4433
  %v4435 = vpop.f32.mrb[0].mxu0
  %v4436 = vpop.f32.mrb[0].mxu0
  %4437 = vdwg.mxu0
  %v4438 = vadd.f32 %v4319, %v4391
  %v4439 = vadd.f32 %v4320, %v4393
  %v4440 = vadd.f32 %v4321, %v4432
  %v4441 = vadd.f32 %v4322, %v4434
  %v4442 = vtanh.pop %v4438
  %v4443 = vtanh.pop %v4439
  %v4444 = vtanh.pop %v4440
  %v4445 = vtanh.pop %v4441
  %v4446 = vmul.f32 %v4442, 0.5
  %v4447 = vadd.f32 %v4446, 0.5
  %v4448 = vmul.f32 %v4443, 0.5
  %v4449 = vadd.f32 %v4448, 0.5
  %v4450 = vmul.f32 %v4444, 0.5
  %v4451 = vadd.f32 %v4450, 0.5
  %v4452 = vmul.f32 %v4449, %v4312
  %v4453 = vmul.f32 %v4447, %v4445
  %v4454 = vadd.f32 %v4452, %v4453
  %v4455 = vtanh.pop %v4454
  %v4456 = vmul.f32 %v4451, %v4455
  %s4457 = scalar_lea.vmem %s10, 8
  %4458 = vst [vmem:[%s4457] sm:$0xff] %v4456
  %s4459 = smul.u32 2, 4
  %s4460 = smul.addr %s4459, 8
  %s4461 = scalar_lea.vmem [#allocation8], %s4460
  %v4462 = vld [vmem:[%s4461] sm:$0xff]
  %v4463 = vld [vmem:[%s4461 + $0x8] sm:$0xff]
  %v4464 = vld [vmem:[%s4461 + $0x10] sm:$0xff]
  %v4465 = vld [vmem:[%s4461 + $0x18] sm:$0xff]
  %v4466 = vpack.c.bf16 %v4456, %v4456
  %v4467 = vld [vmem:[#allocation5] sm:$0xff]
  %v4468 = vld [vmem:[#allocation5 + $0x8] sm:$0xff]
  %v4469 = vld [vmem:[#allocation5 + $0x10] sm:$0xff]
  %v4470 = vld [vmem:[#allocation5 + $0x18] sm:$0xff]
  %v4471 = vld [vmem:[#allocation5 + $0x20] sm:$0xff]
  %v4472 = vld [vmem:[#allocation5 + $0x28] sm:$0xff]
  %v4473 = vld [vmem:[#allocation5 + $0x30] sm:$0xff]
  %v4474 = vld [vmem:[#allocation5 + $0x38] sm:$0xff]
  %v4475 = vld [vmem:[#allocation5 + $0x40] sm:$0xff]
  %v4476 = vld [vmem:[#allocation5 + $0x48] sm:$0xff]
  %v4477 = vld [vmem:[#allocation5 + $0x50] sm:$0xff]
  %v4478 = vld [vmem:[#allocation5 + $0x58] sm:$0xff]
  %v4479 = vld [vmem:[#allocation5 + $0x60] sm:$0xff]
  %v4480 = vld [vmem:[#allocation5 + $0x68] sm:$0xff]
  %v4481 = vld [vmem:[#allocation5 + $0x70] sm:$0xff]
  %v4482 = vld [vmem:[#allocation5 + $0x78] sm:$0xff]
  %v4483 = vld [vmem:[#allocation5 + $0x80] sm:$0xff]
  %v4484 = vld [vmem:[#allocation5 + $0x88] sm:$0xff]
  %v4485 = vld [vmem:[#allocation5 + $0x90] sm:$0xff]
  %v4486 = vld [vmem:[#allocation5 + $0x98] sm:$0xff]
  %v4487 = vld [vmem:[#allocation5 + $0xa0] sm:$0xff]
  %v4488 = vld [vmem:[#allocation5 + $0xa8] sm:$0xff]
  %v4489 = vld [vmem:[#allocation5 + $0xb0] sm:$0xff]
  %v4490 = vld [vmem:[#allocation5 + $0xb8] sm:$0xff]
  %v4491 = vld [vmem:[#allocation5 + $0xc0] sm:$0xff]
  %v4492 = vld [vmem:[#allocation5 + $0xc8] sm:$0xff]
  %v4493 = vld [vmem:[#allocation5 + $0xd0] sm:$0xff]
  %v4494 = vld [vmem:[#allocation5 + $0xd8] sm:$0xff]
  %v4495 = vld [vmem:[#allocation5 + $0xe0] sm:$0xff]
  %v4496 = vld [vmem:[#allocation5 + $0xe8] sm:$0xff]
  %v4497 = vld [vmem:[#allocation5 + $0xf0] sm:$0xff]
  %v4498 = vld [vmem:[#allocation5 + $0xf8] sm:$0xff]
  %4499 = vmatprep.subr.bf16.mxu0 %v4468
  %4500 = vmatpush1.bf16.msra.mxu0 %v4467
  %4501 = vmatprep.subr.bf16.mxu0 %v4472
  %4502 = vmatpush1.bf16.msra.mxu0 %v4471
  %4503 = vmatprep.subr.bf16.mxu0 %v4476
  %4504 = vmatpush1.bf16.msra.mxu0 %v4475
  %4505 = vmatprep.subr.bf16.mxu0 %v4480
  %4506 = vmatpush1.bf16.msra.mxu0 %v4479
  %4507 = vmatprep.subr.bf16.mxu0 %v4484
  %4508 = vmatpush1.bf16.msra.mxu0 %v4483
  %4509 = vmatprep.subr.bf16.mxu0 %v4488
  %4510 = vmatpush1.bf16.msra.mxu0 %v4487
  %4511 = vmatprep.subr.bf16.mxu0 %v4492
  %4512 = vmatpush1.bf16.msra.mxu0 %v4491
  %4513 = vmatprep.subr.bf16.mxu0 %v4496
  %4514 = vmatpush1.bf16.msra.mxu0 %v4495
  %4515 = vmatprep.subr.bf16.mxu0 0
  %4516 = vmatpush1.bf16.msra.mxu0 0
  %4517 = vmatprep.subr.bf16.mxu0 0
  %4518 = vmatpush1.bf16.msra.mxu0 0
  %4519 = vmatprep.subr.bf16.mxu0 0
  %4520 = vmatpush1.bf16.msra.mxu0 0
  %4521 = vmatprep.subr.bf16.mxu0 0
  %4522 = vmatpush1.bf16.msra.mxu0 0
  %4523 = vmatprep.subr.bf16.mxu0 0
  %4524 = vmatpush1.bf16.msra.mxu0 0
  %4525 = vmatprep.subr.bf16.mxu0 0
  %4526 = vmatpush1.bf16.msra.mxu0 0
  %4527 = vmatprep.subr.bf16.mxu0 0
  %4528 = vmatpush1.bf16.msra.mxu0 0
  %4529 = vmatprep.subr.bf16.mxu0 0
  %4530 = vmatpush1.bf16.msra.mxu0 0
  %4531 = vmatprep.mubr.bf16.mxu0 0
  %4532 = vmatmul.mubr.bf16.gmra.mrb[0].mxu0 %v4466
  %v4533 = vpop.f32.mrb[0].mxu0
  %v4534 = vadd.f32 0.0, %v4533
  %v4535 = vpop.f32.mrb[0].mxu0
  %v4536 = vadd.f32 0.0, %v4535
  %v4537 = vpop.f32.mrb[0].mxu0
  %v4538 = vpop.f32.mrb[0].mxu0
  %4539 = vdwg.mxu0
  %4540 = vmatprep.subr.bf16.mxu0 %v4470
  %4541 = vmatpush1.bf16.msra.mxu0 %v4469
  %4542 = vmatprep.subr.bf16.mxu0 %v4474
  %4543 = vmatpush1.bf16.msra.mxu0 %v4473
  %4544 = vmatprep.subr.bf16.mxu0 %v4478
  %4545 = vmatpush1.bf16.msra.mxu0 %v4477
  %4546 = vmatprep.subr.bf16.mxu0 %v4482
  %4547 = vmatpush1.bf16.msra.mxu0 %v4481
  %4548 = vmatprep.subr.bf16.mxu0 %v4486
  %4549 = vmatpush1.bf16.msra.mxu0 %v4485
  %4550 = vmatprep.subr.bf16.mxu0 %v4490
  %4551 = vmatpush1.bf16.msra.mxu0 %v4489
  %4552 = vmatprep.subr.bf16.mxu0 %v4494
  %4553 = vmatpush1.bf16.msra.mxu0 %v4493
  %4554 = vmatprep.subr.bf16.mxu0 %v4498
  %4555 = vmatpush1.bf16.msra.mxu0 %v4497
  %4556 = vmatprep.subr.bf16.mxu0 0
  %4557 = vmatpush1.bf16.msra.mxu0 0
  %4558 = vmatprep.subr.bf16.mxu0 0
  %4559 = vmatpush1.bf16.msra.mxu0 0
  %4560 = vmatprep.subr.bf16.mxu0 0
  %4561 = vmatpush1.bf16.msra.mxu0 0
  %4562 = vmatprep.subr.bf16.mxu0 0
  %4563 = vmatpush1.bf16.msra.mxu0 0
  %4564 = vmatprep.subr.bf16.mxu0 0
  %4565 = vmatpush1.bf16.msra.mxu0 0
  %4566 = vmatprep.subr.bf16.mxu0 0
  %4567 = vmatpush1.bf16.msra.mxu0 0
  %4568 = vmatprep.subr.bf16.mxu0 0
  %4569 = vmatpush1.bf16.msra.mxu0 0
  %4570 = vmatprep.subr.bf16.mxu0 0
  %4571 = vmatpush1.bf16.msra.mxu0 0
  %4572 = vmatprep.mubr.bf16.mxu0 0
  %4573 = vmatmul.mubr.bf16.gmra.mrb[0].mxu0 %v4466
  %v4574 = vpop.f32.mrb[0].mxu0
  %v4575 = vadd.f32 0.0, %v4574
  %v4576 = vpop.f32.mrb[0].mxu0
  %v4577 = vadd.f32 0.0, %v4576
  %v4578 = vpop.f32.mrb[0].mxu0
  %v4579 = vpop.f32.mrb[0].mxu0
  %4580 = vdwg.mxu0
  %v4581 = vadd.f32 %v4462, %v4534
  %v4582 = vadd.f32 %v4463, %v4536
  %v4583 = vadd.f32 %v4464, %v4575
  %v4584 = vadd.f32 %v4465, %v4577
  %v4585 = vtanh.pop %v4581
  %v4586 = vtanh.pop %v4582
  %v4587 = vtanh.pop %v4583
  %v4588 = vtanh.pop %v4584
  %v4589 = vmul.f32 %v4585, 0.5
  %v4590 = vadd.f32 %v4589, 0.5
  %v4591 = vmul.f32 %v4586, 0.5
  %v4592 = vadd.f32 %v4591, 0.5
  %v4593 = vmul.f32 %v4587, 0.5
  %v4594 = vadd.f32 %v4593, 0.5
  %v4595 = vmul.f32 %v4592, %v4454
  %v4596 = vmul.f32 %v4590, %v4588
  %v4597 = vadd.f32 %v4595, %v4596
  %v4598 = vtanh.pop %v4597
  %v4599 = vmul.f32 %v4594, %v4598
  %s4600 = scalar_lea.vmem %s10, 16
  %4601 = vst [vmem:[%s4600] sm:$0xff] %v4599
  %s4602 = smul.u32 3, 4
  %s4603 = smul.addr %s4602, 8
  %s4604 = scalar_lea.vmem [#allocation8], %s4603
  %v4605 = vld [vmem:[%s4604] sm:$0xff]
  %v4606 = vld [vmem:[%s4604 + $0x8] sm:$0xff]
  %v4607 = vld [vmem:[%s4604 + $0x10] sm:$0xff]
  %v4608 = vld [vmem:[%s4604 + $0x18] sm:$0xff]
  %v4609 = vpack.c.bf16 %v4599, %v4599
  %v4610 = vld [vmem:[#allocation5] sm:$0xff]
  %v4611 = vld [vmem:[#allocation5 + $0x8] sm:$0xff]
  %v4612 = vld [vmem:[#allocation5 + $0x10] sm:$0xff]
  %v4613 = vld [vmem:[#allocation5 + $0x18] sm:$0xff]
  %v4614 = vld [vmem:[#allocation5 + $0x20] sm:$0xff]
  %v4615 = vld [vmem:[#allocation5 + $0x28] sm:$0xff]
  %v4616 = vld [vmem:[#allocation5 + $0x30] sm:$0xff]
  %v4617 = vld [vmem:[#allocation5 + $0x38] sm:$0xff]
  %v4618 = vld [vmem:[#allocation5 + $0x40] sm:$0xff]
  %v4619 = vld [vmem:[#allocation5 + $0x48] sm:$0xff]
  %v4620 = vld [vmem:[#allocation5 + $0x50] sm:$0xff]
  %v4621 = vld [vmem:[#allocation5 + $0x58] sm:$0xff]
  %v4622 = vld [vmem:[#allocation5 + $0x60] sm:$0xff]
  %v4623 = vld [vmem:[#allocation5 + $0x68] sm:$0xff]
  %v4624 = vld [vmem:[#allocation5 + $0x70] sm:$0xff]
  %v4625 = vld [vmem:[#allocation5 + $0x78] sm:$0xff]
  %v4626 = vld [vmem:[#allocation5 + $0x80] sm:$0xff]
  %v4627 = vld [vmem:[#allocation5 + $0x88] sm:$0xff]
  %v4628 = vld [vmem:[#allocation5 + $0x90] sm:$0xff]
  %v4629 = vld [vmem:[#allocation5 + $0x98] sm:$0xff]
  %v4630 = vld [vmem:[#allocation5 + $0xa0] sm:$0xff]
  %v4631 = vld [vmem:[#allocation5 + $0xa8] sm:$0xff]
  %v4632 = vld [vmem:[#allocation5 + $0xb0] sm:$0xff]
  %v4633 = vld [vmem:[#allocation5 + $0xb8] sm:$0xff]
  %v4634 = vld [vmem:[#allocation5 + $0xc0] sm:$0xff]
  %v4635 = vld [vmem:[#allocation5 + $0xc8] sm:$0xff]
  %v4636 = vld [vmem:[#allocation5 + $0xd0] sm:$0xff]
  %v4637 = vld [vmem:[#allocation5 + $0xd8] sm:$0xff]
  %v4638 = vld [vmem:[#allocation5 + $0xe0] sm:$0xff]
  %v4639 = vld [vmem:[#allocation5 + $0xe8] sm:$0xff]
  %v4640 = vld [vmem:[#allocation5 + $0xf0] sm:$0xff]
  %v4641 = vld [vmem:[#allocation5 + $0xf8] sm:$0xff]
  %4642 = vmatprep.subr.bf16.mxu0 %v4611
  %4643 = vmatpush1.bf16.msra.mxu0 %v4610
  %4644 = vmatprep.subr.bf16.mxu0 %v4615
  %4645 = vmatpush1.bf16.msra.mxu0 %v4614
  %4646 = vmatprep.subr.bf16.mxu0 %v4619
  %4647 = vmatpush1.bf16.msra.mxu0 %v4618
  %4648 = vmatprep.subr.bf16.mxu0 %v4623
  %4649 = vmatpush1.bf16.msra.mxu0 %v4622
  %4650 = vmatprep.subr.bf16.mxu0 %v4627
  %4651 = vmatpush1.bf16.msra.mxu0 %v4626
  %4652 = vmatprep.subr.bf16.mxu0 %v4631
  %4653 = vmatpush1.bf16.msra.mxu0 %v4630
  %4654 = vmatprep.subr.bf16.mxu0 %v4635
  %4655 = vmatpush1.bf16.msra.mxu0 %v4634
  %4656 = vmatprep.subr.bf16.mxu0 %v4639
  %4657 = vmatpush1.bf16.msra.mxu0 %v4638
  %4658 = vmatprep.subr.bf16.mxu0 0
  %4659 = vmatpush1.bf16.msra.mxu0 0
  %4660 = vmatprep.subr.bf16.mxu0 0
  %4661 = vmatpush1.bf16.msra.mxu0 0
  %4662 = vmatprep.subr.bf16.mxu0 0
  %4663 = vmatpush1.bf16.msra.mxu0 0
  %4664 = vmatprep.subr.bf16.mxu0 0
  %4665 = vmatpush1.bf16.msra.mxu0 0
  %4666 = vmatprep.subr.bf16.mxu0 0
  %4667 = vmatpush1.bf16.msra.mxu0 0
  %4668 = vmatprep.subr.bf16.mxu0 0
  %4669 = vmatpush1.bf16.msra.mxu0 0
  %4670 = vmatprep.subr.bf16.mxu0 0
  %4671 = vmatpush1.bf16.msra.mxu0 0
  %4672 = vmatprep.subr.bf16.mxu0 0
  %4673 = vmatpush1.bf16.msra.mxu0 0
  %4674 = vmatprep.mubr.bf16.mxu0 0
  %4675 = vmatmul.mubr.bf16.gmra.mrb[0].mxu0 %v4609
  %v4676 = vpop.f32.mrb[0].mxu0
  %v4677 = vadd.f32 0.0, %v4676
  %v4678 = vpop.f32.mrb[0].mxu0
  %v4679 = vadd.f32 0.0, %v4678
  %v4680 = vpop.f32.mrb[0].mxu0
  %v4681 = vpop.f32.mrb[0].mxu0
  %4682 = vdwg.mxu0
  %4683 = vmatprep.subr.bf16.mxu0 %v4613
  %4684 = vmatpush1.bf16.msra.mxu0 %v4612
  %4685 = vmatprep.subr.bf16.mxu0 %v4617
  %4686 = vmatpush1.bf16.msra.mxu0 %v4616
  %4687 = vmatprep.subr.bf16.mxu0 %v4621
  %4688 = vmatpush1.bf16.msra.mxu0 %v4620
  %4689 = vmatprep.subr.bf16.mxu0 %v4625
  %4690 = vmatpush1.bf16.msra.mxu0 %v4624
  %4691 = vmatprep.subr.bf16.mxu0 %v4629
  %4692 = vmatpush1.bf16.msra.mxu0 %v4628
  %4693 = vmatprep.subr.bf16.mxu0 %v4633
  %4694 = vmatpush1.bf16.msra.mxu0 %v4632
  %4695 = vmatprep.subr.bf16.mxu0 %v4637
  %4696 = vmatpush1.bf16.msra.mxu0 %v4636
  %4697 = vmatprep.subr.bf16.mxu0 %v4641
  %4698 = vmatpush1.bf16.msra.mxu0 %v4640
  %4699 = vmatprep.subr.bf16.mxu0 0
  %4700 = vmatpush1.bf16.msra.mxu0 0
  %4701 = vmatprep.subr.bf16.mxu0 0
  %4702 = vmatpush1.bf16.msra.mxu0 0
  %4703 = vmatprep.subr.bf16.mxu0 0
  %4704 = vmatpush1.bf16.msra.mxu0 0
  %4705 = vmatprep.subr.bf16.mxu0 0
  %4706 = vmatpush1.bf16.msra.mxu0 0
  %4707 = vmatprep.subr.bf16.mxu0 0
  %4708 = vmatpush1.bf16.msra.mxu0 0
  %4709 = vmatprep.subr.bf16.mxu0 0
  %4710 = vmatpush1.bf16.msra.mxu0 0
  %4711 = vmatprep.subr.bf16.mxu0 0
  %4712 = vmatpush1.bf16.msra.mxu0 0
  %4713 = vmatprep.subr.bf16.mxu0 0
  %4714 = vmatpush1.bf16.msra.mxu0 0
  %4715 = vmatprep.mubr.bf16.mxu0 0
  %4716 = vmatmul.mubr.bf16.gmra.mrb[0].mxu0 %v4609
  %v4717 = vpop.f32.mrb[0].mxu0
  %v4718 = vadd.f32 0.0, %v4717
  %v4719 = vpop.f32.mrb[0].mxu0
  %v4720 = vadd.f32 0.0, %v4719
  %v4721 = vpop.f32.mrb[0].mxu0
  %v4722 = vpop.f32.mrb[0].mxu0
  %4723 = vdwg.mxu0
  %v4724 = vadd.f32 %v4605, %v4677
  %v4725 = vadd.f32 %v4606, %v4679
  %v4726 = vadd.f32 %v4607, %v4718
  %v4727 = vadd.f32 %v4608, %v4720
  %v4728 = vtanh.pop %v4724
  %v4729 = vtanh.pop %v4725
  %v4730 = vtanh.pop %v4726
  %v4731 = vtanh.pop %v4727
  %v4732 = vmul.f32 %v4728, 0.5
  %v4733 = vadd.f32 %v4732, 0.5
  %v4734 = vmul.f32 %v4729, 0.5
  %v4735 = vadd.f32 %v4734, 0.5
  %v4736 = vmul.f32 %v4730, 0.5
  %v4737 = vadd.f32 %v4736, 0.5
  %v4738 = vmul.f32 %v4735, %v4597
  %v4739 = vmul.f32 %v4733, %v4731
  %v4740 = vadd.f32 %v4738, %v4739
  %v4741 = vtanh.pop %v4740
  %v4742 = vmul.f32 %v4737, %v4741
  %s4743 = scalar_lea.vmem %s10, 24
  %4744 = vst [vmem:[%s4743] sm:$0xff] %v4742
  %s4745 = smul.u32 4, 4
  %s4746 = smul.addr %s4745, 8
  %s4747 = scalar_lea.vmem [#allocation8], %s4746
  %v4748 = vld [vmem:[%s4747] sm:$0xff]
  %v4749 = vld [vmem:[%s4747 + $0x8] sm:$0xff]
  %v4750 = vld [vmem:[%s4747 + $0x10] sm:$0xff]
  %v4751 = vld [vmem:[%s4747 + $0x18] sm:$0xff]
  %v4752 = vpack.c.bf16 %v4742, %v4742
  %v4753 = vld [vmem:[#allocation5] sm:$0xff]
  %v4754 = vld [vmem:[#allocation5 + $0x8] sm:$0xff]
  %v4755 = vld [vmem:[#allocation5 + $0x10] sm:$0xff]
  %v4756 = vld [vmem:[#allocation5 + $0x18] sm:$0xff]
  %v4757 = vld [vmem:[#allocation5 + $0x20] sm:$0xff]
  %v4758 = vld [vmem:[#allocation5 + $0x28] sm:$0xff]
  %v4759 = vld [vmem:[#allocation5 + $0x30] sm:$0xff]
  %v4760 = vld [vmem:[#allocation5 + $0x38] sm:$0xff]
  %v4761 = vld [vmem:[#allocation5 + $0x40] sm:$0xff]
  %v4762 = vld [vmem:[#allocation5 + $0x48] sm:$0xff]
  %v4763 = vld [vmem:[#allocation5 + $0x50] sm:$0xff]
  %v4764 = vld [vmem:[#allocation5 + $0x58] sm:$0xff]
  %v4765 = vld [vmem:[#allocation5 + $0x60] sm:$0xff]
  %v4766 = vld [vmem:[#allocation5 + $0x68] sm:$0xff]
  %v4767 = vld [vmem:[#allocation5 + $0x70] sm:$0xff]
  %v4768 = vld [vmem:[#allocation5 + $0x78] sm:$0xff]
  %v4769 = vld [vmem:[#allocation5 + $0x80] sm:$0xff]
  %v4770 = vld [vmem:[#allocation5 + $0x88] sm:$0xff]
  %v4771 = vld [vmem:[#allocation5 + $0x90] sm:$0xff]
  %v4772 = vld [vmem:[#allocation5 + $0x98] sm:$0xff]
  %v4773 = vld [vmem:[#allocation5 + $0xa0] sm:$0xff]
  %v4774 = vld [vmem:[#allocation5 + $0xa8] sm:$0xff]
  %v4775 = vld [vmem:[#allocation5 + $0xb0] sm:$0xff]
  %v4776 = vld [vmem:[#allocation5 + $0xb8] sm:$0xff]
  %v4777 = vld [vmem:[#allocation5 + $0xc0] sm:$0xff]
  %v4778 = vld [vmem:[#allocation5 + $0xc8] sm:$0xff]
  %v4779 = vld [vmem:[#allocation5 + $0xd0] sm:$0xff]
  %v4780 = vld [vmem:[#allocation5 + $0xd8] sm:$0xff]
  %v4781 = vld [vmem:[#allocation5 + $0xe0] sm:$0xff]
  %v4782 = vld [vmem:[#allocation5 + $0xe8] sm:$0xff]
  %v4783 = vld [vmem:[#allocation5 + $0xf0] sm:$0xff]
  %v4784 = vld [vmem:[#allocation5 + $0xf8] sm:$0xff]
  %4785 = vmatprep.subr.bf16.mxu0 %v4754
  %4786 = vmatpush1.bf16.msra.mxu0 %v4753
  %4787 = vmatprep.subr.bf16.mxu0 %v4758
  %4788 = vmatpush1.bf16.msra.mxu0 %v4757
  %4789 = vmatprep.subr.bf16.mxu0 %v4762
  %4790 = vmatpush1.bf16.msra.mxu0 %v4761
  %4791 = vmatprep.subr.bf16.mxu0 %v4766
  %4792 = vmatpush1.bf16.msra.mxu0 %v4765
  %4793 = vmatprep.subr.bf16.mxu0 %v4770
  %4794 = vmatpush1.bf16.msra.mxu0 %v4769
  %4795 = vmatprep.subr.bf16.mxu0 %v4774
  %4796 = vmatpush1.bf16.msra.mxu0 %v4773
  %4797 = vmatprep.subr.bf16.mxu0 %v4778
  %4798 = vmatpush1.bf16.msra.mxu0 %v4777
  %4799 = vmatprep.subr.bf16.mxu0 %v4782
  %4800 = vmatpush1.bf16.msra.mxu0 %v4781
  %4801 = vmatprep.subr.bf16.mxu0 0
  %4802 = vmatpush1.bf16.msra.mxu0 0
  %4803 = vmatprep.subr.bf16.mxu0 0
  %4804 = vmatpush1.bf16.msra.mxu0 0
  %4805 = vmatprep.subr.bf16.mxu0 0
  %4806 = vmatpush1.bf16.msra.mxu0 0
  %4807 = vmatprep.subr.bf16.mxu0 0
  %4808 = vmatpush1.bf16.msra.mxu0 0
  %4809 = vmatprep.subr.bf16.mxu0 0
  %4810 = vmatpush1.bf16.msra.mxu0 0
  %4811 = vmatprep.subr.bf16.mxu0 0
  %4812 = vmatpush1.bf16.msra.mxu0 0
  %4813 = vmatprep.subr.bf16.mxu0 0
  %4814 = vmatpush1.bf16.msra.mxu0 0
  %4815 = vmatprep.subr.bf16.mxu0 0
  %4816 = vmatpush1.bf16.msra.mxu0 0
  %4817 = vmatprep.mubr.bf16.mxu0 0
  %4818 = vmatmul.mubr.bf16.gmra.mrb[0].mxu0 %v4752
  %v4819 = vpop.f32.mrb[0].mxu0
  %v4820 = vadd.f32 0.0, %v4819
  %v4821 = vpop.f32.mrb[0].mxu0
  %v4822 = vadd.f32 0.0, %v4821
  %v4823 = vpop.f32.mrb[0].mxu0
  %v4824 = vpop.f32.mrb[0].mxu0
  %4825 = vdwg.mxu0
  %4826 = vmatprep.subr.bf16.mxu0 %v4756
  %4827 = vmatpush1.bf16.msra.mxu0 %v4755
  %4828 = vmatprep.subr.bf16.mxu0 %v4760
  %4829 = vmatpush1.bf16.msra.mxu0 %v4759
  %4830 = vmatprep.subr.bf16.mxu0 %v4764
  %4831 = vmatpush1.bf16.msra.mxu0 %v4763
  %4832 = vmatprep.subr.bf16.mxu0 %v4768
  %4833 = vmatpush1.bf16.msra.mxu0 %v4767
  %4834 = vmatprep.subr.bf16.mxu0 %v4772
  %4835 = vmatpush1.bf16.msra.mxu0 %v4771
  %4836 = vmatprep.subr.bf16.mxu0 %v4776
  %4837 = vmatpush1.bf16.msra.mxu0 %v4775
  %4838 = vmatprep.subr.bf16.mxu0 %v4780
  %4839 = vmatpush1.bf16.msra.mxu0 %v4779
  %4840 = vmatprep.subr.bf16.mxu0 %v4784
  %4841 = vmatpush1.bf16.msra.mxu0 %v4783
  %4842 = vmatprep.subr.bf16.mxu0 0
  %4843 = vmatpush1.bf16.msra.mxu0 0
  %4844 = vmatprep.subr.bf16.mxu0 0
  %4845 = vmatpush1.bf16.msra.mxu0 0
  %4846 = vmatprep.subr.bf16.mxu0 0
  %4847 = vmatpush1.bf16.msra.mxu0 0
  %4848 = vmatprep.subr.bf16.mxu0 0
  %4849 = vmatpush1.bf16.msra.mxu0 0
  %4850 = vmatprep.subr.bf16.mxu0 0
  %4851 = vmatpush1.bf16.msra.mxu0 0
  %4852 = vmatprep.subr.bf16.mxu0 0
  %4853 = vmatpush1.bf16.msra.mxu0 0
  %4854 = vmatprep.subr.bf16.mxu0 0
  %4855 = vmatpush1.bf16.msra.mxu0 0
  %4856 = vmatprep.subr.bf16.mxu0 0
  %4857 = vmatpush1.bf16.msra.mxu0 0
  %4858 = vmatprep.mubr.bf16.mxu0 0
  %4859 = vmatmul.mubr.bf16.gmra.mrb[0].mxu0 %v4752
  %v4860 = vpop.f32.mrb[0].mxu0
  %v4861 = vadd.f32 0.0, %v4860
  %v4862 = vpop.f32.mrb[0].mxu0
  %v4863 = vadd.f32 0.0, %v4862
  %v4864 = vpop.f32.mrb[0].mxu0
  %v4865 = vpop.f32.mrb[0].mxu0
  %4866 = vdwg.mxu0
  %v4867 = vadd.f32 %v4748, %v4820
  %v4868 = vadd.f32 %v4749, %v4822
  %v4869 = vadd.f32 %v4750, %v4861
  %v4870 = vadd.f32 %v4751, %v4863
  %v4871 = vtanh.pop %v4867
  %v4872 = vtanh.pop %v4868
  %v4873 = vtanh.pop %v4869
  %v4874 = vtanh.pop %v4870
  %v4875 = vmul.f32 %v4871, 0.5
  %v4876 = vadd.f32 %v4875, 0.5
  %v4877 = vmul.f32 %v4872, 0.5
  %v4878 = vadd.f32 %v4877, 0.5
  %v4879 = vmul.f32 %v4873, 0.5
  %v4880 = vadd.f32 %v4879, 0.5
  %v4881 = vmul.f32 %v4878, %v4740
  %v4882 = vmul.f32 %v4876, %v4874
  %v4883 = vadd.f32 %v4881, %v4882
  %v4884 = vtanh.pop %v4883
  %v4885 = vmul.f32 %v4880, %v4884
  %s4886 = scalar_lea.vmem %s10, 32
  %4887 = vst [vmem:[%s4886] sm:$0xff] %v4885
  %s4888 = smul.u32 5, 4
  %s4889 = smul.addr %s4888, 8
  %s4890 = scalar_lea.vmem [#allocation8], %s4889
  %v4891 = vld [vmem:[%s4890] sm:$0xff]
  %v4892 = vld [vmem:[%s4890 + $0x8] sm:$0xff]
  %v4893 = vld [vmem:[%s4890 + $0x10] sm:$0xff]
  %v4894 = vld [vmem:[%s4890 + $0x18] sm:$0xff]
  %v4895 = vpack.c.bf16 %v4885, %v4885
  %v4896 = vld [vmem:[#allocation5] sm:$0xff]
  %v4897 = vld [vmem:[#allocation5 + $0x8] sm:$0xff]
  %v4898 = vld [vmem:[#allocation5 + $0x10] sm:$0xff]
  %v4899 = vld [vmem:[#allocation5 + $0x18] sm:$0xff]
  %v4900 = vld [vmem:[#allocation5 + $0x20] sm:$0xff]
  %v4901 = vld [vmem:[#allocation5 + $0x28] sm:$0xff]
  %v4902 = vld [vmem:[#allocation5 + $0x30] sm:$0xff]
  %v4903 = vld [vmem:[#allocation5 + $0x38] sm:$0xff]
  %v4904 = vld [vmem:[#allocation5 + $0x40] sm:$0xff]
  %v4905 = vld [vmem:[#allocation5 + $0x48] sm:$0xff]
  %v4906 = vld [vmem:[#allocation5 + $0x50] sm:$0xff]
  %v4907 = vld [vmem:[#allocation5 + $0x58] sm:$0xff]
  %v4908 = vld [vmem:[#allocation5 + $0x60] sm:$0xff]
  %v4909 = vld [vmem:[#allocation5 + $0x68] sm:$0xff]
  %v4910 = vld [vmem:[#allocation5 + $0x70] sm:$0xff]
  %v4911 = vld [vmem:[#allocation5 + $0x78] sm:$0xff]
  %v4912 = vld [vmem:[#allocation5 + $0x80] sm:$0xff]
  %v4913 = vld [vmem:[#allocation5 + $0x88] sm:$0xff]
  %v4914 = vld [vmem:[#allocation5 + $0x90] sm:$0xff]
  %v4915 = vld [vmem:[#allocation5 + $0x98] sm:$0xff]
  %v4916 = vld [vmem:[#allocation5 + $0xa0] sm:$0xff]
  %v4917 = vld [vmem:[#allocation5 + $0xa8] sm:$0xff]
  %v4918 = vld [vmem:[#allocation5 + $0xb0] sm:$0xff]
  %v4919 = vld [vmem:[#allocation5 + $0xb8] sm:$0xff]
  %v4920 = vld [vmem:[#allocation5 + $0xc0] sm:$0xff]
  %v4921 = vld [vmem:[#allocation5 + $0xc8] sm:$0xff]
  %v4922 = vld [vmem:[#allocation5 + $0xd0] sm:$0xff]
  %v4923 = vld [vmem:[#allocation5 + $0xd8] sm:$0xff]
  %v4924 = vld [vmem:[#allocation5 + $0xe0] sm:$0xff]
  %v4925 = vld [vmem:[#allocation5 + $0xe8] sm:$0xff]
  %v4926 = vld [vmem:[#allocation5 + $0xf0] sm:$0xff]
  %v4927 = vld [vmem:[#allocation5 + $0xf8] sm:$0xff]
  %4928 = vmatprep.subr.bf16.mxu0 %v4897
  %4929 = vmatpush1.bf16.msra.mxu0 %v4896
  %4930 = vmatprep.subr.bf16.mxu0 %v4901
  %4931 = vmatpush1.bf16.msra.mxu0 %v4900
  %4932 = vmatprep.subr.bf16.mxu0 %v4905
  %4933 = vmatpush1.bf16.msra.mxu0 %v4904
  %4934 = vmatprep.subr.bf16.mxu0 %v4909
  %4935 = vmatpush1.bf16.msra.mxu0 %v4908
  %4936 = vmatprep.subr.bf16.mxu0 %v4913
  %4937 = vmatpush1.bf16.msra.mxu0 %v4912
  %4938 = vmatprep.subr.bf16.mxu0 %v4917
  %4939 = vmatpush1.bf16.msra.mxu0 %v4916
  %4940 = vmatprep.subr.bf16.mxu0 %v4921
  %4941 = vmatpush1.bf16.msra.mxu0 %v4920
  %4942 = vmatprep.subr.bf16.mxu0 %v4925
  %4943 = vmatpush1.bf16.msra.mxu0 %v4924
  %4944 = vmatprep.subr.bf16.mxu0 0
  %4945 = vmatpush1.bf16.msra.mxu0 0
  %4946 = vmatprep.subr.bf16.mxu0 0
  %4947 = vmatpush1.bf16.msra.mxu0 0
  %4948 = vmatprep.subr.bf16.mxu0 0
  %4949 = vmatpush1.bf16.msra.mxu0 0
  %4950 = vmatprep.subr.bf16.mxu0 0
  %4951 = vmatpush1.bf16.msra.mxu0 0
  %4952 = vmatprep.subr.bf16.mxu0 0
  %4953 = vmatpush1.bf16.msra.mxu0 0
  %4954 = vmatprep.subr.bf16.mxu0 0
  %4955 = vmatpush1.bf16.msra.mxu0 0
  %4956 = vmatprep.subr.bf16.mxu0 0
  %4957 = vmatpush1.bf16.msra.mxu0 0
  %4958 = vmatprep.subr.bf16.mxu0 0
  %4959 = vmatpush1.bf16.msra.mxu0 0
  %4960 = vmatprep.mubr.bf16.mxu0 0
  %4961 = vmatmul.mubr.bf16.gmra.mrb[0].mxu0 %v4895
  %v4962 = vpop.f32.mrb[0].mxu0
  %v4963 = vadd.f32 0.0, %v4962
  %v4964 = vpop.f32.mrb[0].mxu0
  %v4965 = vadd.f32 0.0, %v4964
  %v4966 = vpop.f32.mrb[0].mxu0
  %v4967 = vpop.f32.mrb[0].mxu0
  %4968 = vdwg.mxu0
  %4969 = vmatprep.subr.bf16.mxu0 %v4899
  %4970 = vmatpush1.bf16.msra.mxu0 %v4898
  %4971 = vmatprep.subr.bf16.mxu0 %v4903
  %4972 = vmatpush1.bf16.msra.mxu0 %v4902
  %4973 = vmatprep.subr.bf16.mxu0 %v4907
  %4974 = vmatpush1.bf16.msra.mxu0 %v4906
  %4975 = vmatprep.subr.bf16.mxu0 %v4911
  %4976 = vmatpush1.bf16.msra.mxu0 %v4910
  %4977 = vmatprep.subr.bf16.mxu0 %v4915
  %4978 = vmatpush1.bf16.msra.mxu0 %v4914
  %4979 = vmatprep.subr.bf16.mxu0 %v4919
  %4980 = vmatpush1.bf16.msra.mxu0 %v4918
  %4981 = vmatprep.subr.bf16.mxu0 %v4923
  %4982 = vmatpush1.bf16.msra.mxu0 %v4922
  %4983 = vmatprep.subr.bf16.mxu0 %v4927
  %4984 = vmatpush1.bf16.msra.mxu0 %v4926
  %4985 = vmatprep.subr.bf16.mxu0 0
  %4986 = vmatpush1.bf16.msra.mxu0 0
  %4987 = vmatprep.subr.bf16.mxu0 0
  %4988 = vmatpush1.bf16.msra.mxu0 0
  %4989 = vmatprep.subr.bf16.mxu0 0
  %4990 = vmatpush1.bf16.msra.mxu0 0
  %4991 = vmatprep.subr.bf16.mxu0 0
  %4992 = vmatpush1.bf16.msra.mxu0 0
  %4993 = vmatprep.subr.bf16.mxu0 0
  %4994 = vmatpush1.bf16.msra.mxu0 0
  %4995 = vmatprep.subr.bf16.mxu0 0
  %4996 = vmatpush1.bf16.msra.mxu0 0
  %4997 = vmatprep.subr.bf16.mxu0 0
  %4998 = vmatpush1.bf16.msra.mxu0 0
  %4999 = vmatprep.subr.bf16.mxu0 0
  %5000 = vmatpush1.bf16.msra.mxu0 0
  %5001 = vmatprep.mubr.bf16.mxu0 0
  %5002 = vmatmul.mubr.bf16.gmra.mrb[0].mxu0 %v4895
  %v5003 = vpop.f32.mrb[0].mxu0
  %v5004 = vadd.f32 0.0, %v5003
  %v5005 = vpop.f32.mrb[0].mxu0
  %v5006 = vadd.f32 0.0, %v5005
  %v5007 = vpop.f32.mrb[0].mxu0
  %v5008 = vpop.f32.mrb[0].mxu0
  %5009 = vdwg.mxu0
  %v5010 = vadd.f32 %v4891, %v4963
  %v5011 = vadd.f32 %v4892, %v4965
  %v5012 = vadd.f32 %v4893, %v5004
  %v5013 = vadd.f32 %v4894, %v5006
  %v5014 = vtanh.pop %v5010
  %v5015 = vtanh.pop %v5011
  %v5016 = vtanh.pop %v5012
  %v5017 = vtanh.pop %v5013
  %v5018 = vmul.f32 %v5014, 0.5
  %v5019 = vadd.f32 %v5018, 0.5
  %v5020 = vmul.f32 %v5015, 0.5
  %v5021 = vadd.f32 %v5020, 0.5
  %v5022 = vmul.f32 %v5016, 0.5
  %v5023 = vadd.f32 %v5022, 0.5
  %v5024 = vmul.f32 %v5021, %v4883
  %v5025 = vmul.f32 %v5019, %v5017
  %v5026 = vadd.f32 %v5024, %v5025
  %v5027 = vtanh.pop %v5026
  %v5028 = vmul.f32 %v5023, %v5027
  %s5029 = scalar_lea.vmem %s10, 40
  %5030 = vst [vmem:[%s5029] sm:$0xff] %v5028
  %s5031 = smul.u32 6, 4
  %s5032 = smul.addr %s5031, 8
  %s5033 = scalar_lea.vmem [#allocation8], %s5032
  %v5034 = vld [vmem:[%s5033] sm:$0xff]
  %v5035 = vld [vmem:[%s5033 + $0x8] sm:$0xff]
  %v5036 = vld [vmem:[%s5033 + $0x10] sm:$0xff]
  %v5037 = vld [vmem:[%s5033 + $0x18] sm:$0xff]
  %v5038 = vpack.c.bf16 %v5028, %v5028
  %v5039 = vld [vmem:[#allocation5] sm:$0xff]
  %v5040 = vld [vmem:[#allocation5 + $0x8] sm:$0xff]
  %v5041 = vld [vmem:[#allocation5 + $0x10] sm:$0xff]
  %v5042 = vld [vmem:[#allocation5 + $0x18] sm:$0xff]
  %v5043 = vld [vmem:[#allocation5 + $0x20] sm:$0xff]
  %v5044 = vld [vmem:[#allocation5 + $0x28] sm:$0xff]
  %v5045 = vld [vmem:[#allocation5 + $0x30] sm:$0xff]
  %v5046 = vld [vmem:[#allocation5 + $0x38] sm:$0xff]
  %v5047 = vld [vmem:[#allocation5 + $0x40] sm:$0xff]
  %v5048 = vld [vmem:[#allocation5 + $0x48] sm:$0xff]
  %v5049 = vld [vmem:[#allocation5 + $0x50] sm:$0xff]
  %v5050 = vld [vmem:[#allocation5 + $0x58] sm:$0xff]
  %v5051 = vld [vmem:[#allocation5 + $0x60] sm:$0xff]
  %v5052 = vld [vmem:[#allocation5 + $0x68] sm:$0xff]
  %v5053 = vld [vmem:[#allocation5 + $0x70] sm:$0xff]
  %v5054 = vld [vmem:[#allocation5 + $0x78] sm:$0xff]
  %v5055 = vld [vmem:[#allocation5 + $0x80] sm:$0xff]
  %v5056 = vld [vmem:[#allocation5 + $0x88] sm:$0xff]
  %v5057 = vld [vmem:[#allocation5 + $0x90] sm:$0xff]
  %v5058 = vld [vmem:[#allocation5 + $0x98] sm:$0xff]
  %v5059 = vld [vmem:[#allocation5 + $0xa0] sm:$0xff]
  %v5060 = vld [vmem:[#allocation5 + $0xa8] sm:$0xff]
  %v5061 = vld [vmem:[#allocation5 + $0xb0] sm:$0xff]
  %v5062 = vld [vmem:[#allocation5 + $0xb8] sm:$0xff]
  %v5063 = vld [vmem:[#allocation5 + $0xc0] sm:$0xff]
  %v5064 = vld [vmem:[#allocation5 + $0xc8] sm:$0xff]
  %v5065 = vld [vmem:[#allocation5 + $0xd0] sm:$0xff]
  %v5066 = vld [vmem:[#allocation5 + $0xd8] sm:$0xff]
  %v5067 = vld [vmem:[#allocation5 + $0xe0] sm:$0xff]
  %v5068 = vld [vmem:[#allocation5 + $0xe8] sm:$0xff]
  %v5069 = vld [vmem:[#allocation5 + $0xf0] sm:$0xff]
  %v5070 = vld [vmem:[#allocation5 + $0xf8] sm:$0xff]
  %5071 = vmatprep.subr.bf16.mxu0 %v5040
  %5072 = vmatpush1.bf16.msra.mxu0 %v5039
  %5073 = vmatprep.subr.bf16.mxu0 %v5044
  %5074 = vmatpush1.bf16.msra.mxu0 %v5043
  %5075 = vmatprep.subr.bf16.mxu0 %v5048
  %5076 = vmatpush1.bf16.msra.mxu0 %v5047
  %5077 = vmatprep.subr.bf16.mxu0 %v5052
  %5078 = vmatpush1.bf16.msra.mxu0 %v5051
  %5079 = vmatprep.subr.bf16.mxu0 %v5056
  %5080 = vmatpush1.bf16.msra.mxu0 %v5055
  %5081 = vmatprep.subr.bf16.mxu0 %v5060
  %5082 = vmatpush1.bf16.msra.mxu0 %v5059
  %5083 = vmatprep.subr.bf16.mxu0 %v5064
  %5084 = vmatpush1.bf16.msra.mxu0 %v5063
  %5085 = vmatprep.subr.bf16.mxu0 %v5068
  %5086 = vmatpush1.bf16.msra.mxu0 %v5067
  %5087 = vmatprep.subr.bf16.mxu0 0
  %5088 = vmatpush1.bf16.msra.mxu0 0
  %5089 = vmatprep.subr.bf16.mxu0 0
  %5090 = vmatpush1.bf16.msra.mxu0 0
  %5091 = vmatprep.subr.bf16.mxu0 0
  %5092 = vmatpush1.bf16.msra.mxu0 0
  %5093 = vmatprep.subr.bf16.mxu0 0
  %5094 = vmatpush1.bf16.msra.mxu0 0
  %5095 = vmatprep.subr.bf16.mxu0 0
  %5096 = vmatpush1.bf16.msra.mxu0 0
  %5097 = vmatprep.subr.bf16.mxu0 0
  %5098 = vmatpush1.bf16.msra.mxu0 0
  %5099 = vmatprep.subr.bf16.mxu0 0
  %5100 = vmatpush1.bf16.msra.mxu0 0
  %5101 = vmatprep.subr.bf16.mxu0 0
  %5102 = vmatpush1.bf16.msra.mxu0 0
  %5103 = vmatprep.mubr.bf16.mxu0 0
  %5104 = vmatmul.mubr.bf16.gmra.mrb[0].mxu0 %v5038
  %v5105 = vpop.f32.mrb[0].mxu0
  %v5106 = vadd.f32 0.0, %v5105
  %v5107 = vpop.f32.mrb[0].mxu0
  %v5108 = vadd.f32 0.0, %v5107
  %v5109 = vpop.f32.mrb[0].mxu0
  %v5110 = vpop.f32.mrb[0].mxu0
  %5111 = vdwg.mxu0
  %5112 = vmatprep.subr.bf16.mxu0 %v5042
  %5113 = vmatpush1.bf16.msra.mxu0 %v5041
  %5114 = vmatprep.subr.bf16.mxu0 %v5046
  %5115 = vmatpush1.bf16.msra.mxu0 %v5045
  %5116 = vmatprep.subr.bf16.mxu0 %v5050
  %5117 = vmatpush1.bf16.msra.mxu0 %v5049
  %5118 = vmatprep.subr.bf16.mxu0 %v5054
  %5119 = vmatpush1.bf16.msra.mxu0 %v5053
  %5120 = vmatprep.subr.bf16.mxu0 %v5058
  %5121 = vmatpush1.bf16.msra.mxu0 %v5057
  %5122 = vmatprep.subr.bf16.mxu0 %v5062
  %5123 = vmatpush1.bf16.msra.mxu0 %v5061
  %5124 = vmatprep.subr.bf16.mxu0 %v5066
  %5125 = vmatpush1.bf16.msra.mxu0 %v5065
  %5126 = vmatprep.subr.bf16.mxu0 %v5070
  %5127 = vmatpush1.bf16.msra.mxu0 %v5069
  %5128 = vmatprep.subr.bf16.mxu0 0
  %5129 = vmatpush1.bf16.msra.mxu0 0
  %5130 = vmatprep.subr.bf16.mxu0 0
  %5131 = vmatpush1.bf16.msra.mxu0 0
  %5132 = vmatprep.subr.bf16.mxu0 0
  %5133 = vmatpush1.bf16.msra.mxu0 0
  %5134 = vmatprep.subr.bf16.mxu0 0
  %5135 = vmatpush1.bf16.msra.mxu0 0
  %5136 = vmatprep.subr.bf16.mxu0 0
  %5137 = vmatpush1.bf16.msra.mxu0 0
  %5138 = vmatprep.subr.bf16.mxu0 0
  %5139 = vmatpush1.bf16.msra.mxu0 0
  %5140 = vmatprep.subr.bf16.mxu0 0
  %5141 = vmatpush1.bf16.msra.mxu0 0
  %5142 = vmatprep.subr.bf16.mxu0 0
  %5143 = vmatpush1.bf16.msra.mxu0 0
  %5144 = vmatprep.mubr.bf16.mxu0 0
  %5145 = vmatmul.mubr.bf16.gmra.mrb[0].mxu0 %v5038
  %v5146 = vpop.f32.mrb[0].mxu0
  %v5147 = vadd.f32 0.0, %v5146
  %v5148 = vpop.f32.mrb[0].mxu0
  %v5149 = vadd.f32 0.0, %v5148
  %v5150 = vpop.f32.mrb[0].mxu0
  %v5151 = vpop.f32.mrb[0].mxu0
  %5152 = vdwg.mxu0
  %v5153 = vadd.f32 %v5034, %v5106
  %v5154 = vadd.f32 %v5035, %v5108
  %v5155 = vadd.f32 %v5036, %v5147
  %v5156 = vadd.f32 %v5037, %v5149
  %v5157 = vtanh.pop %v5153
  %v5158 = vtanh.pop %v5154
  %v5159 = vtanh.pop %v5155
  %v5160 = vtanh.pop %v5156
  %v5161 = vmul.f32 %v5157, 0.5
  %v5162 = vadd.f32 %v5161, 0.5
  %v5163 = vmul.f32 %v5158, 0.5
  %v5164 = vadd.f32 %v5163, 0.5
  %v5165 = vmul.f32 %v5159, 0.5
  %v5166 = vadd.f32 %v5165, 0.5
  %v5167 = vmul.f32 %v5164, %v5026
  %v5168 = vmul.f32 %v5162, %v5160
  %v5169 = vadd.f32 %v5167, %v5168
  %v5170 = vtanh.pop %v5169
  %v5171 = vmul.f32 %v5166, %v5170
  %s5172 = scalar_lea.vmem %s10, 48
  %5173 = vst [vmem:[%s5172] sm:$0xff] %v5171
  %s5174 = smul.u32 7, 4
  %s5175 = smul.addr %s5174, 8
  %s5176 = scalar_lea.vmem [#allocation8], %s5175
  %v5177 = vld [vmem:[%s5176] sm:$0xff]
  %v5178 = vld [vmem:[%s5176 + $0x8] sm:$0xff]
  %v5179 = vld [vmem:[%s5176 + $0x10] sm:$0xff]
  %v5180 = vld [vmem:[%s5176 + $0x18] sm:$0xff]
  %v5181 = vpack.c.bf16 %v5171, %v5171
  %v5182 = vld [vmem:[#allocation5] sm:$0xff]
  %v5183 = vld [vmem:[#allocation5 + $0x8] sm:$0xff]
  %v5184 = vld [vmem:[#allocation5 + $0x10] sm:$0xff]
  %v5185 = vld [vmem:[#allocation5 + $0x18] sm:$0xff]
  %v5186 = vld [vmem:[#allocation5 + $0x20] sm:$0xff]
  %v5187 = vld [vmem:[#allocation5 + $0x28] sm:$0xff]
  %v5188 = vld [vmem:[#allocation5 + $0x30] sm:$0xff]
  %v5189 = vld [vmem:[#allocation5 + $0x38] sm:$0xff]
  %v5190 = vld [vmem:[#allocation5 + $0x40] sm:$0xff]
  %v5191 = vld [vmem:[#allocation5 + $0x48] sm:$0xff]
  %v5192 = vld [vmem:[#allocation5 + $0x50] sm:$0xff]
  %v5193 = vld [vmem:[#allocation5 + $0x58] sm:$0xff]
  %v5194 = vld [vmem:[#allocation5 + $0x60] sm:$0xff]
  %v5195 = vld [vmem:[#allocation5 + $0x68] sm:$0xff]
  %v5196 = vld [vmem:[#allocation5 + $0x70] sm:$0xff]
  %v5197 = vld [vmem:[#allocation5 + $0x78] sm:$0xff]
  %v5198 = vld [vmem:[#allocation5 + $0x80] sm:$0xff]
  %v5199 = vld [vmem:[#allocation5 + $0x88] sm:$0xff]
  %v5200 = vld [vmem:[#allocation5 + $0x90] sm:$0xff]
  %v5201 = vld [vmem:[#allocation5 + $0x98] sm:$0xff]
  %v5202 = vld [vmem:[#allocation5 + $0xa0] sm:$0xff]
  %v5203 = vld [vmem:[#allocation5 + $0xa8] sm:$0xff]
  %v5204 = vld [vmem:[#allocation5 + $0xb0] sm:$0xff]
  %v5205 = vld [vmem:[#allocation5 + $0xb8] sm:$0xff]
  %v5206 = vld [vmem:[#allocation5 + $0xc0] sm:$0xff]
  %v5207 = vld [vmem:[#allocation5 + $0xc8] sm:$0xff]
  %v5208 = vld [vmem:[#allocation5 + $0xd0] sm:$0xff]
  %v5209 = vld [vmem:[#allocation5 + $0xd8] sm:$0xff]
  %v5210 = vld [vmem:[#allocation5 + $0xe0] sm:$0xff]
  %v5211 = vld [vmem:[#allocation5 + $0xe8] sm:$0xff]
  %v5212 = vld [vmem:[#allocation5 + $0xf0] sm:$0xff]
  %v5213 = vld [vmem:[#allocation5 + $0xf8] sm:$0xff]
  %5214 = vmatprep.subr.bf16.mxu0 %v5183
  %5215 = vmatpush1.bf16.msra.mxu0 %v5182
  %5216 = vmatprep.subr.bf16.mxu0 %v5187
  %5217 = vmatpush1.bf16.msra.mxu0 %v5186
  %5218 = vmatprep.subr.bf16.mxu0 %v5191
  %5219 = vmatpush1.bf16.msra.mxu0 %v5190
  %5220 = vmatprep.subr.bf16.mxu0 %v5195
  %5221 = vmatpush1.bf16.msra.mxu0 %v5194
  %5222 = vmatprep.subr.bf16.mxu0 %v5199
  %5223 = vmatpush1.bf16.msra.mxu0 %v5198
  %5224 = vmatprep.subr.bf16.mxu0 %v5203
  %5225 = vmatpush1.bf16.msra.mxu0 %v5202
  %5226 = vmatprep.subr.bf16.mxu0 %v5207
  %5227 = vmatpush1.bf16.msra.mxu0 %v5206
  %5228 = vmatprep.subr.bf16.mxu0 %v5211
  %5229 = vmatpush1.bf16.msra.mxu0 %v5210
  %5230 = vmatprep.subr.bf16.mxu0 0
  %5231 = vmatpush1.bf16.msra.mxu0 0
  %5232 = vmatprep.subr.bf16.mxu0 0
  %5233 = vmatpush1.bf16.msra.mxu0 0
  %5234 = vmatprep.subr.bf16.mxu0 0
  %5235 = vmatpush1.bf16.msra.mxu0 0
  %5236 = vmatprep.subr.bf16.mxu0 0
  %5237 = vmatpush1.bf16.msra.mxu0 0
  %5238 = vmatprep.subr.bf16.mxu0 0
  %5239 = vmatpush1.bf16.msra.mxu0 0
  %5240 = vmatprep.subr.bf16.mxu0 0
  %5241 = vmatpush1.bf16.msra.mxu0 0
  %5242 = vmatprep.subr.bf16.mxu0 0
  %5243 = vmatpush1.bf16.msra.mxu0 0
  %5244 = vmatprep.subr.bf16.mxu0 0
  %5245 = vmatpush1.bf16.msra.mxu0 0
  %5246 = vmatprep.mubr.bf16.mxu0 0
  %5247 = vmatmul.mubr.bf16.gmra.mrb[0].mxu0 %v5181
  %v5248 = vpop.f32.mrb[0].mxu0
  %v5249 = vadd.f32 0.0, %v5248
  %v5250 = vpop.f32.mrb[0].mxu0
  %v5251 = vadd.f32 0.0, %v5250
  %v5252 = vpop.f32.mrb[0].mxu0
  %v5253 = vpop.f32.mrb[0].mxu0
  %5254 = vdwg.mxu0
  %5255 = vmatprep.subr.bf16.mxu0 %v5185
  %5256 = vmatpush1.bf16.msra.mxu0 %v5184
  %5257 = vmatprep.subr.bf16.mxu0 %v5189
  %5258 = vmatpush1.bf16.msra.mxu0 %v5188
  %5259 = vmatprep.subr.bf16.mxu0 %v5193
  %5260 = vmatpush1.bf16.msra.mxu0 %v5192
  %5261 = vmatprep.subr.bf16.mxu0 %v5197
  %5262 = vmatpush1.bf16.msra.mxu0 %v5196
  %5263 = vmatprep.subr.bf16.mxu0 %v5201
  %5264 = vmatpush1.bf16.msra.mxu0 %v5200
  %5265 = vmatprep.subr.bf16.mxu0 %v5205
  %5266 = vmatpush1.bf16.msra.mxu0 %v5204
  %5267 = vmatprep.subr.bf16.mxu0 %v5209
  %5268 = vmatpush1.bf16.msra.mxu0 %v5208
  %5269 = vmatprep.subr.bf16.mxu0 %v5213
  %5270 = vmatpush1.bf16.msra.mxu0 %v5212
  %5271 = vmatprep.subr.bf16.mxu0 0
  %5272 = vmatpush1.bf16.msra.mxu0 0
  %5273 = vmatprep.subr.bf16.mxu0 0
  %5274 = vmatpush1.bf16.msra.mxu0 0
  %5275 = vmatprep.subr.bf16.mxu0 0
  %5276 = vmatpush1.bf16.msra.mxu0 0
  %5277 = vmatprep.subr.bf16.mxu0 0
  %5278 = vmatpush1.bf16.msra.mxu0 0
  %5279 = vmatprep.subr.bf16.mxu0 0
  %5280 = vmatpush1.bf16.msra.mxu0 0
  %5281 = vmatprep.subr.bf16.mxu0 0
  %5282 = vmatpush1.bf16.msra.mxu0 0
  %5283 = vmatprep.subr.bf16.mxu0 0
  %5284 = vmatpush1.bf16.msra.mxu0 0
  %5285 = vmatprep.subr.bf16.mxu0 0
  %5286 = vmatpush1.bf16.msra.mxu0 0
  %5287 = vmatprep.mubr.bf16.mxu0 0
  %5288 = vmatmul.mubr.bf16.gmra.mrb[0].mxu0 %v5181
  %v5289 = vpop.f32.mrb[0].mxu0
  %v5290 = vadd.f32 0.0, %v5289
  %v5291 = vpop.f32.mrb[0].mxu0
  %v5292 = vadd.f32 0.0, %v5291
  %v5293 = vpop.f32.mrb[0].mxu0
  %v5294 = vpop.f32.mrb[0].mxu0
  %5295 = vdwg.mxu0
  %v5296 = vadd.f32 %v5177, %v5249
  %v5297 = vadd.f32 %v5178, %v5251
  %v5298 = vadd.f32 %v5179, %v5290
  %v5299 = vadd.f32 %v5180, %v5292
  %v5300 = vtanh.pop %v5296
  %v5301 = vtanh.pop %v5297
  %v5302 = vtanh.pop %v5298
  %v5303 = vtanh.pop %v5299
  %v5304 = vmul.f32 %v5300, 0.5
  %v5305 = vadd.f32 %v5304, 0.5
  %v5306 = vmul.f32 %v5301, 0.5
  %v5307 = vadd.f32 %v5306, 0.5
  %v5308 = vmul.f32 %v5302, 0.5
  %v5309 = vadd.f32 %v5308, 0.5
  %v5310 = vmul.f32 %v5307, %v5169
  %v5311 = vmul.f32 %v5305, %v5303
  %v5312 = vadd.f32 %v5310, %v5311
  %v5313 = vtanh.pop %v5312
  %v5314 = vmul.f32 %v5309, %v5313
  %s5315 = scalar_lea.vmem %s10, 56
  %5316 = vst [vmem:[%s5315] sm:$0xff] %v5314
  %5317 = vst [vmem:[%s11] sm:$0xff] %v5312
  // Predicated region
  $region174: #{convlstm_forward.1} parent=0 // pred_check
    _
  $region175: #{convlstm_forward.1} parent=0 // pred_check_branch
    %5319 = sbr.rel (0) target = $region177
  $region176: #{convlstm_forward.1} parent=0 // pred_region
    _
  $region177: #{convlstm_forward.1} parent=0 // pred_fallthru
    _
  // Predicated region
  $region178: #{convlstm_forward.1} parent=0 // pred_check
    _
  $region179: #{convlstm_forward.1} parent=0 // pred_check_branch
    %5321 = sbr.rel (0) target = $region181
  $region180: #{convlstm_forward.1} parent=0 // pred_region
    _
  $region181: #{convlstm_forward.1} parent=0 // pred_fallthru
    _
  // Predicated region
  $region182: #{convlstm_forward.1} parent=0 // pred_check
    _
  $region183: #{convlstm_forward.1} parent=0 // pred_check_branch
    %5323 = sbr.rel (0) target = $region185
  $region184: #{convlstm_forward.1} parent=0 // pred_region
    _
  $region185: #{convlstm_forward.1} parent=0 // pred_fallthru
    _
  // Predicated region
  $region186: #{convlstm_forward.1} parent=0 // pred_check
    _
  $region187: #{convlstm_forward.1} parent=0 // pred_check_branch
    %5325 = sbr.rel (0) target = $region189
  $region188: #{convlstm_forward.1} parent=0 // pred_region
    _
  $region189: #{convlstm_forward.1} parent=0 // pred_fallthru
    _
  %5326 = vsyncmov [#allocation10]
  %s5327 = vpop.sfrf %5326
  %p5328 = scmp.eq.s32.totalorder %s5327, 0
  %p5329 = pneg %p5328
  %5331 = shalt.err (%p5329)
  %s5332 = scalar_lea.sflag [#allocation10], 1
  %5333 = vsyncmov %s5332
  %s5334 = vpop.sfrf %5333
  %p5335 = scmp.eq.s32.totalorder %s5334, 0
  %p5336 = pneg %p5335
  %5338 = shalt.err (%p5336)
  %s5339 = scalar_lea.sflag [#allocation10], 2
  %5340 = vsyncmov %s5339
  %s5341 = vpop.sfrf %5340
  %p5342 = scmp.eq.s32.totalorder %s5341, 0
  %p5343 = pneg %p5342
  %5345 = shalt.err (%p5343)
  %s5346 = scalar_lea.sflag [#allocation10], 3
  %5347 = vsyncmov %s5346
  %s5348 = vpop.sfrf %5347
  %p5349 = scmp.eq.s32.totalorder %s5348, 0
  %p5350 = pneg %p5349
  %5352 = shalt.err (%p5350)

</llo_original>
